<compile_context>
chip_gen: v6e
topology: v6e:2x2x1
jax: 0.10.0
libtpu: 0.0.40
codegen_flags: <defaults>
</compile_context>

<pallas_src>
import numpy as np
import jax
import jax.numpy as jnp
from jax import lax
from jax.experimental import pallas as pl
from jax.experimental.pallas import tpu as pltpu

# ----- configuration (mirrors TGAT_nf.__init__ arguments) --------------------
NUM_LAYERS = 2
N_HEAD = 1                      # head plumbing is an identity for n_head == 1
NODE_DIM = 32
D_T = 32                        # time-encoding dim
D_MODEL = NODE_DIM + D_T        # edge_dim=None  -> d_model = node_dim + d_T
D_K = D_MODEL // N_HEAD         # constructor forces n_head*d_k == d_model
D_V = D_K
TEMPERATURE = float(np.sqrt(D_K))
LN_EPS = 1e-5                   # nn.LayerNorm default
OUT_LANES = 128                 # lane-dense output width (first NODE_DIM valid)
# args.encoding == 'temporal'

N_NODES = 256
N_NBR = 8
TB = 128                        # node-batch tile; grid=(2,) -> one step per v7x TC
                                # (at realistic N, keep >=3-4 steps per core)


# ----------------------------- Pallas kernel --------------------------------
def _tgat_layer_kernel(z_ref, self_z_ref,
                       wkv_ref, wself_ref,
                       afc_w_ref, afc_b_ref,
                       ln_g_ref, ln_b_ref,
                       fc1_x_ref, fc1_b_ref,
                       fc2_w_ref, fc2_b_ref,
                       out_ref):
    tb = self_z_ref.shape[0]
    nbr = z_ref.shape[0] // tb
    two_dm = wkv_ref.shape[1]                     # 2 * d_model (k half | v half)

    # ---- fused k/v projection: single K=64, N=128 MXU matmul over messages ----
    kv = jnp.dot(z_ref[...], wkv_ref[...],
                 preferred_element_type=jnp.float32)          # (tb*nbr, 128)
    kv3 = kv.reshape(tb, nbr, two_dm)             # leading-dim split, free view

    # ---- query + fc1 self_h term from one shared bf16 cast / one matmul ----
    self_z = self_z_ref[...]                                  # (tb, 64) f32
    self_zb = self_z.astype(jnp.bfloat16)
    qh = jnp.dot(self_zb, wself_ref[...],
                 preferred_element_type=jnp.float32)          # (tb, 160)
    q_pad = qh[:, :two_dm]        # (tb, 128); lanes 64..127 exactly zero
    h1_self = qh[:, two_dm:]      # (tb, 32); MergeLayer fc1 self_h contribution

    # ---- ScaledDotProductAttention: VPU multiply + lane/sublane reduces ----
    # zero upper q lanes kill the v half of kv3 in the score reduce.
    s = jnp.sum(q_pad[:, None, :] * kv3, axis=-1) * (1.0 / TEMPERATURE)  # (tb, nbr)
    s = s - jnp.max(s, axis=-1, keepdims=True)
    p = jnp.exp(s)
    attn = p * pl.reciprocal(jnp.sum(p, axis=-1, keepdims=True), approx=True)
    # TODO(synk): attention dropout omitted (eval-mode identity).
    ctx_kv = jnp.sum(attn[:, :, None] * kv3, axis=1)          # (tb, 128)

    # ---- attn_fc (zero rows on the k half) + residual + LayerNorm ----
    o = jnp.dot(ctx_kv.astype(jnp.bfloat16), afc_w_ref[...],
                preferred_element_type=jnp.float32) + afc_b_ref[...]     # (tb, 64)
    x = o + self_z
    mu = jnp.mean(x, axis=-1, keepdims=True)
    var = jnp.mean((x - mu) ** 2, axis=-1, keepdims=True)
    xn = (x - mu) * lax.rsqrt(var + LN_EPS) * ln_g_ref[...] + ln_b_ref[...]

    # ---- MergeLayer (fc1 split over the [ln_out, self_h] concat) ----
    h1 = (jnp.dot(xn.astype(jnp.bfloat16), fc1_x_ref[...],
                  preferred_element_type=jnp.float32)
          + h1_self + fc1_b_ref[...])
    h1 = jnp.maximum(h1, 0.0)
    # fc2 weight/bias zero-padded to 128 output lanes -> unmasked 128-lane store.
    out2 = jnp.dot(h1.astype(jnp.bfloat16), fc2_w_ref[...],
                   preferred_element_type=jnp.float32) + fc2_b_ref[...]  # (tb, 128)
    out_ref[...] = out2.astype(out_ref.dtype)


def _prep_params(p):
    """Fuse / transpose / zero-pad the PyTorch-layout params for the kernel."""
    bf16 = jnp.bfloat16
    dm = D_MODEL
    # fused [Wk; Wv] -> (d_model, 2*d_model) so kv = z @ wkv is one matmul
    wkv = jnp.transpose(jnp.concatenate([p['wk'], p['wv']], axis=0)).astype(bf16)
    # fused self_z weight: [Wq^T (64) | zeros (64, keeps q's upper lanes zero)
    #                       | fc1 self_h block padded to 64 rows (32)]
    wq_T = jnp.transpose(p['wq'])                                  # (64, 64)
    fc1_h_T = jnp.transpose(p['fc1_w'][:, dm:])                    # (32, 32)
    fc1_h_pad = jnp.pad(fc1_h_T, ((0, dm - NODE_DIM), (0, 0)))     # (64, 32)
    w_self = jnp.concatenate(
        [wq_T, jnp.zeros((dm, dm), jnp.float32), fc1_h_pad], axis=1).astype(bf16)
    # attn_fc weight with zero rows for the k half of ctx_kv
    afc_w_pad = jnp.concatenate(
        [jnp.zeros((dm, dm), jnp.float32), jnp.transpose(p['afc_w'])],
        axis=0).astype(bf16)                                        # (128, 64)
    # fc2 padded to 128 output lanes for the dense final store
    fc2_pad = jnp.pad(jnp.transpose(p['fc2_w']),
                      ((0, 0), (0, OUT_LANES - NODE_DIM))).astype(bf16)  # (32, 128)
    fc2_b_pad = jnp.pad(p['fc2_b'], ((0, 0), (0, OUT_LANES - NODE_DIM)))
    return dict(
        wkv=wkv,                                                    # (64, 128) bf16
        w_self=w_self,                                              # (64, 160) bf16
        afc_w=afc_w_pad, afc_b=p['afc_b'],
        ln_g=p['ln_g'], ln_b=p['ln_b'],
        fc1_x=jnp.transpose(p['fc1_w'][:, :dm]).astype(bf16),       # (64, 32)
        fc1_b=p['fc1_b'],
        fc2_w=fc2_pad, fc2_b=fc2_b_pad,
    )


def tgat_layer_pallas(z, self_z, p):
    """z: (B, nbr, d_model) f32 messages [src_h | t_enc]; self_z: (B, d_model)."""
    B = self_z.shape[0]
    grid_b = pl.cdiv(B, TB)
    Bp = grid_b * TB
    if Bp != B:                                   # pad node batch to a TB multiple
        pad = Bp - B
        z = jnp.pad(z, ((0, pad), (0, 0), (0, 0)))
        self_z = jnp.pad(self_z, ((0, pad), (0, 0)))

    z_flat = z.astype(jnp.bfloat16).reshape(Bp * N_NBR, D_MODEL)   # node-major rows
    pp = _prep_params(p)

    def full_spec(arr):
        nd = arr.ndim
        return pl.BlockSpec(arr.shape, lambda i, _n=nd: (0,) * _n)

    in_specs = [
        pl.BlockSpec((TB * N_NBR, D_MODEL), lambda i: (i, 0)),   # z (flattened messages)
        pl.BlockSpec((TB, D_MODEL), lambda i: (i, 0)),           # self_z
        full_spec(pp['wkv']), full_spec(pp['w_self']),
        full_spec(pp['afc_w']), full_spec(pp['afc_b']),
        full_spec(pp['ln_g']), full_spec(pp['ln_b']),
        full_spec(pp['fc1_x']), full_spec(pp['fc1_b']),
        full_spec(pp['fc2_w']), full_spec(pp['fc2_b']),
    ]
    out_specs = pl.BlockSpec((TB, OUT_LANES), lambda i: (i, 0))

    out = pl.pallas_call(
        _tgat_layer_kernel,
        out_shape=jax.ShapeDtypeStruct((Bp, OUT_LANES), jnp.float32),
        grid=(grid_b,),
        in_specs=in_specs,
        out_specs=out_specs,
        compiler_params=pltpu.CompilerParams(dimension_semantics=("parallel",)),
    )(z_flat, self_z,
      pp['wkv'], pp['w_self'],
      pp['afc_w'], pp['afc_b'],
      pp['ln_g'], pp['ln_b'],
      pp['fc1_x'], pp['fc1_b'],
      pp['fc2_w'], pp['fc2_b'])
    return out[:B, :NODE_DIM]


# --------------------------- plain-JAX reference ----------------------------
def _tgat_layer_ref(z, self_z, p):
    # n_head == 1: all head-split reshapes/permutes of the PyTorch layer are identities.
    B, nbr, _ = z.shape
    z2 = z.reshape(B * nbr, D_MODEL)
    k = (z2 @ p['wk'].T).reshape(B, nbr, D_MODEL)
    v = (z2 @ p['wv'].T).reshape(B, nbr, D_MODEL)
    q = self_z @ p['wq'].T
    attn = jax.nn.softmax(jnp.einsum('bd,bnd->bn', q, k) / TEMPERATURE, axis=-1)
    ctx = jnp.einsum('bn,bnd->bd', attn, v)
    out = ctx @ p['afc_w'].T + p['afc_b']
    x = out + self_z
    mu = jnp.mean(x, -1, keepdims=True)
    var = jnp.mean((x - mu) ** 2, -1, keepdims=True)
    xn = (x - mu) / jnp.sqrt(var + LN_EPS) * p['ln_g'] + p['ln_b']
    m_in = jnp.concatenate([xn, self_z[:, :NODE_DIM]], axis=-1)
    h1 = jnp.maximum(m_in @ p['fc1_w'].T + p['fc1_b'], 0.0)
    return h1 @ p['fc2_w'].T + p['fc2_b']


# ------------------------------ model wrapper --------------------------------
def init_layer_params(key):
    ks = jax.random.split(key, 8)
    std_qk = np.sqrt(2.0 / (D_MODEL + D_K))
    std_v = np.sqrt(2.0 / (D_MODEL + D_V))

    def xavier(k, shape):
        return jax.random.normal(k, shape, jnp.float32) * np.sqrt(2.0 / (shape[0] + shape[1]))

    return {
        'wq': jax.random.normal(ks[0], (N_HEAD * D_K, D_MODEL), jnp.float32) * std_qk,
        'wk': jax.random.normal(ks[1], (N_HEAD * D_K, D_MODEL), jnp.float32) * std_qk,
        'wv': jax.random.normal(ks[2], (N_HEAD * D_V, D_MODEL), jnp.float32) * std_v,
        'basis': jnp.asarray(1.0 / 10 ** np.linspace(0, 9, D_T),
                             jnp.float32).reshape(1, D_T),
        'phase': jnp.zeros((1, D_T), jnp.float32),
        'afc_w': xavier(ks[3], (D_MODEL, N_HEAD * D_V)),
        'afc_b': jax.random.uniform(ks[4], (1, D_MODEL), jnp.float32, -0.1, 0.1),
        'ln_g': jnp.ones((1, D_MODEL), jnp.float32),
        'ln_b': jnp.zeros((1, D_MODEL), jnp.float32),
        'fc1_w': xavier(ks[5], (NODE_DIM, D_MODEL + NODE_DIM)),
        'fc1_b': jax.random.uniform(ks[6], (1, NODE_DIM), jnp.float32, -0.1, 0.1),
        'fc2_w': xavier(ks[7], (NODE_DIM, NODE_DIM)),
        'fc2_b': jnp.zeros((1, NODE_DIM), jnp.float32),
    }


def tgat_nf_forward(node_raw_feat, adj, edge_t, t_now, layer_params, layer_fn):
    # TODO(synk): DGL NodeFlow sampling / block_compute replaced by a fixed dense
    # neighbourhood; at realistic graph sizes the gather below should move
    # in-kernel (scalar-prefetched adj + DMA gather) to avoid the 8x HBM traffic.
    node_h = node_raw_feat
    dt = t_now - edge_t                               # (N, nbr)
    n = node_h.shape[0]
    for p in layer_params:
        src_h = node_h[adj]                           # (N, nbr, node_dim)
        t_enc = jnp.cos(dt[:, :, None] * p['basis'].reshape(1, 1, D_T)
                        + p['phase'].reshape(1, 1, D_T))             # (N, nbr, d_T)
        z = jnp.concatenate([src_h, t_enc], axis=-1)                 # (N, nbr, d_model)
        self_z = jnp.concatenate(
            [node_h, jnp.broadcast_to(jnp.cos(p['phase']), (n, D_T))], axis=-1)
        node_h = layer_fn(z, self_z, p)
    return node_h


# ---------------------------------- main -------------------------------------
if __name__ == "__main__":
    key = jax.random.PRNGKey(0)
    keys = jax.random.split(key, 3 + NUM_LAYERS)
    k_feat, k_adj, k_time = keys[0], keys[1], keys[2]
    layer_keys = keys[3:]

    node_feat = jax.random.normal(k_feat, (N_NODES, NODE_DIM), jnp.float32)
    adj = jax.random.randint(k_adj, (N_NODES, N_NBR), 0, N_NODES)
    edge_t = jax.random.uniform(k_time, (N_NODES, N_NBR), jnp.float32, 0.0, 10.0)
    t_now = jnp.float32(12.0)

    params = [init_layer_params(k) for k in layer_keys]

    out = tgat_nf_forward(node_feat, adj, edge_t, t_now, params, tgat_layer_pallas)
    out = jax.block_until_ready(out)

    ref = tgat_nf_forward(node_feat, adj, edge_t, t_now, params, _tgat_layer_ref)
    ref = jax.block_until_ready(ref)

    assert out.shape == (N_NODES, NODE_DIM)
    assert bool(jnp.all(jnp.isfinite(out)))
    # bf16 MXU operands (f32 accumulation) + approx-reciprocal softmax vs f32
    # reference -> results are not bit-identical; 5e-2 tol covers it.
    np.testing.assert_allclose(np.asarray(out), np.asarray(ref), rtol=5e-2, atol=5e-2)
    print("KERNEL_OK")
</pallas_src>

<mosaic_0001>
module attributes {stable_mosaic.version = 11 : i64} {
  func.func @_tgat_layer_kernel(%arg0: i32, %arg1: memref<1024x64xbf16, #tpu.memory_space<vmem>>, %arg2: memref<128x64xf32, #tpu.memory_space<vmem>>, %arg3: memref<64x128xbf16, #tpu.memory_space<vmem>>, %arg4: memref<64x160xbf16, #tpu.memory_space<vmem>>, %arg5: memref<128x64xbf16, #tpu.memory_space<vmem>>, %arg6: memref<1x64xf32, #tpu.memory_space<vmem>>, %arg7: memref<1x64xf32, #tpu.memory_space<vmem>>, %arg8: memref<1x64xf32, #tpu.memory_space<vmem>>, %arg9: memref<64x32xbf16, #tpu.memory_space<vmem>>, %arg10: memref<1x32xf32, #tpu.memory_space<vmem>>, %arg11: memref<32x128xbf16, #tpu.memory_space<vmem>>, %arg12: memref<1x128xf32, #tpu.memory_space<vmem>>, %arg13: memref<128x128xf32, #tpu.memory_space<vmem>>) attributes {dimension_semantics = [#tpu.dimension_semantics<parallel>], iteration_bounds = array<i64: 2>, scalar_prefetch = 0 : i64, scratch_operands = 0 : i64, tpu.core_type = #tpu.core_type<tc>, window_params = [{transform_indices = @transform_0, window_bounds = array<i64: 1024, 64>}, {transform_indices = @transform_1, window_bounds = array<i64: 128, 64>}, {pipeline_mode = #tpu.pipeline_mode<synchronous>, transform_indices = @transform_2, window_bounds = array<i64: 64, 128>}, {pipeline_mode = #tpu.pipeline_mode<synchronous>, transform_indices = @transform_3, window_bounds = array<i64: 64, 160>}, {pipeline_mode = #tpu.pipeline_mode<synchronous>, transform_indices = @transform_4, window_bounds = array<i64: 128, 64>}, {pipeline_mode = #tpu.pipeline_mode<synchronous>, transform_indices = @transform_5, window_bounds = array<i64: 1, 64>}, {pipeline_mode = #tpu.pipeline_mode<synchronous>, transform_indices = @transform_6, window_bounds = array<i64: 1, 64>}, {pipeline_mode = #tpu.pipeline_mode<synchronous>, transform_indices = @transform_7, window_bounds = array<i64: 1, 64>}, {pipeline_mode = #tpu.pipeline_mode<synchronous>, transform_indices = @transform_8, window_bounds = array<i64: 64, 32>}, {pipeline_mode = #tpu.pipeline_mode<synchronous>, transform_indices = @transform_9, window_bounds = array<i64: 1, 32>}, {pipeline_mode = #tpu.pipeline_mode<synchronous>, transform_indices = @transform_10, window_bounds = array<i64: 32, 128>}, {pipeline_mode = #tpu.pipeline_mode<synchronous>, transform_indices = @transform_11, window_bounds = array<i64: 1, 128>}, {transform_indices = @transform_12, window_bounds = array<i64: 128, 128>}]} {
    %c0 = arith.constant 0 : index
    %c0_0 = arith.constant 0 : index
    %0 = vector.load %arg1[%c0, %c0_0] : memref<1024x64xbf16, #tpu.memory_space<vmem>>, vector<1024x64xbf16>
    %c0_1 = arith.constant 0 : index
    %c0_2 = arith.constant 0 : index
    %1 = vector.load %arg3[%c0_1, %c0_2] : memref<64x128xbf16, #tpu.memory_space<vmem>>, vector<64x128xbf16>
    %cst = arith.constant dense<0.000000e+00> : vector<1024x128xf32>
    %2 = tpu.matmul %0, %1, %cst {dimension_numbers = #tpu.dot_dimension_numbers<[1], [0], [0], [1], [0, 0, 1, 1], [], []>} : vector<1024x64xbf16>, vector<64x128xbf16>, vector<1024x128xf32> -> vector<1024x128xf32>
    %3 = vector.shape_cast %2 : vector<1024x128xf32> to vector<128x8x128xf32>
    %c0_3 = arith.constant 0 : index
    %c0_4 = arith.constant 0 : index
    %4 = vector.load %arg2[%c0_3, %c0_4] : memref<128x64xf32, #tpu.memory_space<vmem>>, vector<128x64xf32>
    %5 = arith.truncf %4 : vector<128x64xf32> to vector<128x64xbf16>
    %c0_5 = arith.constant 0 : index
    %c0_6 = arith.constant 0 : index
    %6 = vector.load %arg4[%c0_5, %c0_6] : memref<64x160xbf16, #tpu.memory_space<vmem>>, vector<64x160xbf16>
    %cst_7 = arith.constant dense<0.000000e+00> : vector<128x160xf32>
    %7 = tpu.matmul %5, %6, %cst_7 {dimension_numbers = #tpu.dot_dimension_numbers<[1], [0], [0], [1], [0, 0, 1, 1], [], []>} : vector<128x64xbf16>, vector<64x160xbf16>, vector<128x160xf32> -> vector<128x160xf32>
    %8 = vector.extract_strided_slice %7 {offsets = [0, 0], sizes = [128, 128], strides = [1, 1]} : vector<128x160xf32> to vector<128x128xf32>
    %9 = vector.extract_strided_slice %7 {offsets = [0, 128], sizes = [128, 32], strides = [1, 1]} : vector<128x160xf32> to vector<128x32xf32>
    %10 = vector.shape_cast %8 : vector<128x128xf32> to vector<128x1x128xf32>
    %11 = vector.broadcast %10 : vector<128x1x128xf32> to vector<128x8x128xf32>
    %12 = arith.mulf %11, %3 : vector<128x8x128xf32>
    %cst_8 = arith.constant dense<0.000000e+00> : vector<128x8xf32>
    %13 = vector.multi_reduction <add>, %12, %cst_8 [2] : vector<128x8x128xf32> to vector<128x8xf32>
    %cst_9 = arith.constant 1.250000e-01 : f32
    %14 = vector.broadcast %cst_9 : f32 to vector<128x8xf32>
    %15 = arith.mulf %13, %14 : vector<128x8xf32>
    %cst_10 = arith.constant dense<0xFF800000> : vector<128xf32>
    %16 = vector.multi_reduction <maximumf>, %15, %cst_10 [1] : vector<128x8xf32> to vector<128xf32>
    %17 = vector.shape_cast %16 : vector<128xf32> to vector<128x1xf32>
    %18 = vector.broadcast %17 : vector<128x1xf32> to vector<128x8xf32>
    %19 = arith.subf %15, %18 : vector<128x8xf32>
    %20 = math.exp %19 : vector<128x8xf32>
    %cst_11 = arith.constant dense<0.000000e+00> : vector<128xf32>
    %21 = vector.multi_reduction <add>, %20, %cst_11 [1] : vector<128x8xf32> to vector<128xf32>
    %22 = vector.shape_cast %21 : vector<128xf32> to vector<128x1xf32>
    %23 = tpu.reciprocal %22 {approx = true} : vector<128x1xf32> -> vector<128x1xf32>
    %24 = vector.broadcast %23 : vector<128x1xf32> to vector<128x8xf32>
    %25 = arith.mulf %20, %24 : vector<128x8xf32>
    %26 = vector.shape_cast %25 : vector<128x8xf32> to vector<128x8x1xf32>
    %27 = vector.broadcast %26 : vector<128x8x1xf32> to vector<128x8x128xf32>
    %28 = arith.mulf %27, %3 : vector<128x8x128xf32>
    %cst_12 = arith.constant dense<0.000000e+00> : vector<128x128xf32>
    %29 = vector.multi_reduction <add>, %28, %cst_12 [1] : vector<128x8x128xf32> to vector<128x128xf32>
    %30 = arith.truncf %29 : vector<128x128xf32> to vector<128x128xbf16>
    %c0_13 = arith.constant 0 : index
    %c0_14 = arith.constant 0 : index
    %31 = vector.load %arg5[%c0_13, %c0_14] : memref<128x64xbf16, #tpu.memory_space<vmem>>, vector<128x64xbf16>
    %cst_15 = arith.constant dense<0.000000e+00> : vector<128x64xf32>
    %32 = tpu.matmul %30, %31, %cst_15 {dimension_numbers = #tpu.dot_dimension_numbers<[1], [0], [0], [1], [0, 0, 1, 1], [], []>} : vector<128x128xbf16>, vector<128x64xbf16>, vector<128x64xf32> -> vector<128x64xf32>
    %c0_16 = arith.constant 0 : index
    %c0_17 = arith.constant 0 : index
    %33 = vector.load %arg6[%c0_16, %c0_17] : memref<1x64xf32, #tpu.memory_space<vmem>>, vector<1x64xf32>
    %34 = vector.broadcast %33 : vector<1x64xf32> to vector<128x64xf32>
    %35 = arith.addf %32, %34 : vector<128x64xf32>
    %36 = arith.addf %35, %4 : vector<128x64xf32>
    %cst_18 = arith.constant dense<0.000000e+00> : vector<128xf32>
    %37 = vector.multi_reduction <add>, %36, %cst_18 [1] : vector<128x64xf32> to vector<128xf32>
    %38 = vector.shape_cast %37 : vector<128xf32> to vector<128x1xf32>
    %cst_19 = arith.constant 6.400000e+01 : f32
    %39 = vector.broadcast %cst_19 : f32 to vector<128x1xf32>
    %40 = arith.divf %38, %39 : vector<128x1xf32>
    %41 = vector.broadcast %40 : vector<128x1xf32> to vector<128x64xf32>
    %42 = arith.subf %36, %41 : vector<128x64xf32>
    %43 = arith.mulf %42, %42 : vector<128x64xf32>
    %cst_20 = arith.constant dense<0.000000e+00> : vector<128xf32>
    %44 = vector.multi_reduction <add>, %43, %cst_20 [1] : vector<128x64xf32> to vector<128xf32>
    %45 = vector.shape_cast %44 : vector<128xf32> to vector<128x1xf32>
    %cst_21 = arith.constant 6.400000e+01 : f32
    %46 = vector.broadcast %cst_21 : f32 to vector<128x1xf32>
    %47 = arith.divf %45, %46 : vector<128x1xf32>
    %48 = vector.broadcast %40 : vector<128x1xf32> to vector<128x64xf32>
    %49 = arith.subf %36, %48 : vector<128x64xf32>
    %cst_22 = arith.constant 9.99999974E-6 : f32
    %50 = vector.broadcast %cst_22 : f32 to vector<128x1xf32>
    %51 = arith.addf %47, %50 : vector<128x1xf32>
    %52 = math.rsqrt %51 : vector<128x1xf32>
    %53 = vector.broadcast %52 : vector<128x1xf32> to vector<128x64xf32>
    %54 = arith.mulf %49, %53 : vector<128x64xf32>
    %c0_23 = arith.constant 0 : index
    %c0_24 = arith.constant 0 : index
    %55 = vector.load %arg7[%c0_23, %c0_24] : memref<1x64xf32, #tpu.memory_space<vmem>>, vector<1x64xf32>
    %56 = vector.broadcast %55 : vector<1x64xf32> to vector<128x64xf32>
    %57 = arith.mulf %54, %56 : vector<128x64xf32>
    %c0_25 = arith.constant 0 : index
    %c0_26 = arith.constant 0 : index
    %58 = vector.load %arg8[%c0_25, %c0_26] : memref<1x64xf32, #tpu.memory_space<vmem>>, vector<1x64xf32>
    %59 = vector.broadcast %58 : vector<1x64xf32> to vector<128x64xf32>
    %60 = arith.addf %57, %59 : vector<128x64xf32>
    %61 = arith.truncf %60 : vector<128x64xf32> to vector<128x64xbf16>
    %c0_27 = arith.constant 0 : index
    %c0_28 = arith.constant 0 : index
    %62 = vector.load %arg9[%c0_27, %c0_28] : memref<64x32xbf16, #tpu.memory_space<vmem>>, vector<64x32xbf16>
    %cst_29 = arith.constant dense<0.000000e+00> : vector<128x32xf32>
    %63 = tpu.matmul %61, %62, %cst_29 {dimension_numbers = #tpu.dot_dimension_numbers<[1], [0], [0], [1], [0, 0, 1, 1], [], []>} : vector<128x64xbf16>, vector<64x32xbf16>, vector<128x32xf32> -> vector<128x32xf32>
    %64 = arith.addf %63, %9 : vector<128x32xf32>
    %c0_30 = arith.constant 0 : index
    %c0_31 = arith.constant 0 : index
    %65 = vector.load %arg10[%c0_30, %c0_31] : memref<1x32xf32, #tpu.memory_space<vmem>>, vector<1x32xf32>
    %66 = vector.broadcast %65 : vector<1x32xf32> to vector<128x32xf32>
    %67 = arith.addf %64, %66 : vector<128x32xf32>
    %cst_32 = arith.constant 0.000000e+00 : f32
    %68 = vector.broadcast %cst_32 : f32 to vector<128x32xf32>
    %69 = arith.maximumf %67, %68 : vector<128x32xf32>
    %70 = arith.truncf %69 : vector<128x32xf32> to vector<128x32xbf16>
    %c0_33 = arith.constant 0 : index
    %c0_34 = arith.constant 0 : index
    %71 = vector.load %arg11[%c0_33, %c0_34] : memref<32x128xbf16, #tpu.memory_space<vmem>>, vector<32x128xbf16>
    %cst_35 = arith.constant dense<0.000000e+00> : vector<128x128xf32>
    %72 = tpu.matmul %70, %71, %cst_35 {dimension_numbers = #tpu.dot_dimension_numbers<[1], [0], [0], [1], [0, 0, 1, 1], [], []>} : vector<128x32xbf16>, vector<32x128xbf16>, vector<128x128xf32> -> vector<128x128xf32>
    %c0_36 = arith.constant 0 : index
    %c0_37 = arith.constant 0 : index
    %73 = vector.load %arg12[%c0_36, %c0_37] : memref<1x128xf32, #tpu.memory_space<vmem>>, vector<1x128xf32>
    %74 = vector.broadcast %73 : vector<1x128xf32> to vector<128x128xf32>
    %75 = arith.addf %72, %74 : vector<128x128xf32>
    %c0_38 = arith.constant 0 : index
    %c0_39 = arith.constant 0 : index
    %76 = vector.load %arg13[%c0_38, %c0_39] : memref<128x128xf32, #tpu.memory_space<vmem>>, vector<128x128xf32>
    tpu.vector_store %arg13[%c0_38, %c0_39], %75 {strides = array<i32>} : memref<128x128xf32, #tpu.memory_space<vmem>>, vector<128x128xf32>,
    return
  }
  func.func @transform_0(%arg0: i32) -> (i32, i32) {
    %c0_i32 = arith.constant 0 : i32
    %c0_i32_0 = arith.constant 0 : i32
    return %arg0, %c0_i32 : i32, i32
  }
  func.func @transform_1(%arg0: i32) -> (i32, i32) {
    %c0_i32 = arith.constant 0 : i32
    %c0_i32_0 = arith.constant 0 : i32
    return %arg0, %c0_i32 : i32, i32
  }
  func.func @transform_2(%arg0: i32) -> (i32, i32) {
    %c0_i32 = arith.constant 0 : i32
    %c0_i32_0 = arith.constant 0 : i32
    %c0_i32_1 = arith.constant 0 : i32
    return %c0_i32, %c0_i32_0 : i32, i32
  }
  func.func @transform_3(%arg0: i32) -> (i32, i32) {
    %c0_i32 = arith.constant 0 : i32
    %c0_i32_0 = arith.constant 0 : i32
    %c0_i32_1 = arith.constant 0 : i32
    return %c0_i32, %c0_i32_0 : i32, i32
  }
  func.func @transform_4(%arg0: i32) -> (i32, i32) {
    %c0_i32 = arith.constant 0 : i32
    %c0_i32_0 = arith.constant 0 : i32
    %c0_i32_1 = arith.constant 0 : i32
    return %c0_i32, %c0_i32_0 : i32, i32
  }
  func.func @transform_5(%arg0: i32) -> (i32, i32) {
    %c0_i32 = arith.constant 0 : i32
    %c0_i32_0 = arith.constant 0 : i32
    %c0_i32_1 = arith.constant 0 : i32
    return %c0_i32, %c0_i32_0 : i32, i32
  }
  func.func @transform_6(%arg0: i32) -> (i32, i32) {
    %c0_i32 = arith.constant 0 : i32
    %c0_i32_0 = arith.constant 0 : i32
    %c0_i32_1 = arith.constant 0 : i32
    return %c0_i32, %c0_i32_0 : i32, i32
  }
  func.func @transform_7(%arg0: i32) -> (i32, i32) {
    %c0_i32 = arith.constant 0 : i32
    %c0_i32_0 = arith.constant 0 : i32
    %c0_i32_1 = arith.constant 0 : i32
    return %c0_i32, %c0_i32_0 : i32, i32
  }
  func.func @transform_8(%arg0: i32) -> (i32, i32) {
    %c0_i32 = arith.constant 0 : i32
    %c0_i32_0 = arith.constant 0 : i32
    %c0_i32_1 = arith.constant 0 : i32
    return %c0_i32, %c0_i32_0 : i32, i32
  }
  func.func @transform_9(%arg0: i32) -> (i32, i32) {
    %c0_i32 = arith.constant 0 : i32
    %c0_i32_0 = arith.constant 0 : i32
    %c0_i32_1 = arith.constant 0 : i32
    return %c0_i32, %c0_i32_0 : i32, i32
  }
  func.func @transform_10(%arg0: i32) -> (i32, i32) {
    %c0_i32 = arith.constant 0 : i32
    %c0_i32_0 = arith.constant 0 : i32
    %c0_i32_1 = arith.constant 0 : i32
    return %c0_i32, %c0_i32_0 : i32, i32
  }
  func.func @transform_11(%arg0: i32) -> (i32, i32) {
    %c0_i32 = arith.constant 0 : i32
    %c0_i32_0 = arith.constant 0 : i32
    %c0_i32_1 = arith.constant 0 : i32
    return %c0_i32, %c0_i32_0 : i32, i32
  }
  func.func @transform_12(%arg0: i32) -> (i32, i32) {
    %c0_i32 = arith.constant 0 : i32
    %c0_i32_0 = arith.constant 0 : i32
    return %arg0, %c0_i32 : i32, i32
  }
}

</mosaic_0001>

<llo_original>
// kernel: tpu_custom_call.1
$region0: #{tpu_custom_call.1}
  #allocation0 [shape = 'u32[]', space=smem, size = 0x4, offset = 0x4, fixed_abs, tag = 'smem constant byte address 0x4 - core index']
  #allocation1 [shape = 'u32[144,128]{1,0:T(1,128)}', space=vmem, size = 0x12000, scoped, tag = 'internal scratch']
  %s0 = inlined_call_operand.vmem [shape: bf16[2048,64], index: 0, kind: input, shape index: {}]
  %s1 = inlined_call_operand.vmem [shape: f32[256,64], index: 1, kind: input, shape index: {}]
  %s2 = inlined_call_operand.vmem [shape: bf16[64,128], index: 2, kind: input, shape index: {}]
  %s3 = inlined_call_operand.vmem [shape: bf16[64,160], index: 3, kind: input, shape index: {}]
  %s4 = inlined_call_operand.vmem [shape: bf16[128,64], index: 4, kind: input, shape index: {}]
  %s5 = inlined_call_operand.vmem [shape: f32[1,64], index: 5, kind: input, shape index: {}]
  %s6 = inlined_call_operand.vmem [shape: f32[1,64], index: 6, kind: input, shape index: {}]
  %s7 = inlined_call_operand.vmem [shape: f32[1,64], index: 7, kind: input, shape index: {}]
  %s8 = inlined_call_operand.vmem [shape: bf16[64,32], index: 8, kind: input, shape index: {}]
  %s9 = inlined_call_operand.vmem [shape: f32[1,32], index: 9, kind: input, shape index: {}]
  %s10 = inlined_call_operand.vmem [shape: bf16[32,128], index: 10, kind: input, shape index: {}]
  %s11 = inlined_call_operand.vmem [shape: f32[1,128], index: 11, kind: input, shape index: {}]
  %s12 = inlined_call_operand.hbm [shape: f32[256,128], index: 12, kind: output, shape index: {}]
  %s13 = sld [smem:[#allocation0]]
  $region81: #{tpu_custom_call.1} parent=0
    _
  %s15 = ssub.s32 1, %s13
  %s16 = scalar_select 0, %s15, %s13
  $region1: #{tpu_custom_call.1} parent=0
    #allocation2 [shape = 'u8[131072]{0}', space=vmem, size = 0x20000, scoped, tag = 'output window, operand 0']
    #allocation3 [shape = 's32[2]{0}', space=sflag, size = 0x8, scoped, tag = 'scoped memory for tpu_custom_call.1']
    %17 = vsyncpa [#allocation3], 0
    %s18 = scalar_lea.sflag [#allocation3], 1
    %19 = vsyncpa %s18, 0
    loop: start=0, step=1, limit=4
    $region2: #{tpu_custom_call.1} parent=1 // loop_pre_header
      _
    $region3: #{tpu_custom_call.1} parent=1 // loop_header
      %s21 = sphi 0, %s25
      %p22 = scmp.ge.s32.totalorder %s21, 4
      %s31 = sphi 0, %s33
      %s34 = sphi 0, %s31
      %s35 = sphi 0, %s34
      %s51 = sphi 0, %s35
      %s57 = sphi 0, %s59
      %s60 = sphi 0, %s57
      %s61 = sphi 0, %s60
      %s77 = sphi 0, %s61
      %s81 = sphi 0, %s81
      %s83 = sphi 0, %s81
      %s84 = sphi 0, %s83
      %s98 = sphi 0, %s84
      %s102 = sphi 0, %s102
      %s104 = sphi 0, %s102
      %s105 = sphi 0, %s104
      %s119 = sphi 0, %s105
      %s123 = sphi 0, %s123
      %s125 = sphi 0, %s123
      %s126 = sphi 0, %s125
      %s140 = sphi 0, %s126
      %s144 = sphi 0, %s144
      %s146 = sphi 0, %s144
      %s147 = sphi 0, %s146
      %s161 = sphi 0, %s147
      %s165 = sphi 0, %s165
      %s167 = sphi 0, %s165
      %s168 = sphi 0, %s167
      %s182 = sphi 0, %s168
      %s186 = sphi 0, %s186
      %s188 = sphi 0, %s186
      %s189 = sphi 0, %s188
      %s203 = sphi 0, %s189
      %s207 = sphi 0, %s207
      %s209 = sphi 0, %s207
      %s210 = sphi 0, %s209
      %s224 = sphi 0, %s210
      %s228 = sphi 0, %s228
      %s230 = sphi 0, %s228
      %s231 = sphi 0, %s230
      %s245 = sphi 0, %s231
      %s249 = sphi 0, %s249
      %s251 = sphi 0, %s249
      %s252 = sphi 0, %s251
      %s266 = sphi 0, %s252
      %s270 = sphi 0, %s270
      %s272 = sphi 0, %s270
      %s273 = sphi 0, %s272
      %s287 = sphi 0, %s273
      %s293 = sphi 0, %s295
      %s296 = sphi 0, %s293
      %s297 = sphi 0, %s296
      %s313 = sphi 0, %s297
    $region4: #{tpu_custom_call.1} parent=1 // loop_header_branch
      %24 = sbr.rel (%p22) target = $region8
    $region5: #{tpu_custom_call.1} parent=1 // loop_body
      %s26 = ssub.s32 %s21, 1
      %s27 = ssub.s32 %s21, 2
      %s28 = sadd.s32 %s21, 1
      %s29 = ssub.s32 %s21, %s28
      %p30 = scmp.eq.s32.totalorder %s29, 0
      %s32 = sadd.s32 %s31, 1
      %s33 = scalar_select %p30, %s31, %s32
      %p36 = pneg %p30
      %p37 = scmp.eq.s32.totalorder %s21, 1
      %p38 = por %p36, %p37
      %p39 = scmp.ne.s32.totalorder %s31, %s34
      %p40 = scmp.eq.s32.totalorder %s21, 0
      %p41 = por %p39, %p40
      %p42 = scmp.ne.s32.totalorder %s31, %s34
      %p43 = scmp.eq.s32.totalorder %s26, 1
      %p44 = por %p42, %p43
      %p45 = scmp.ne.s32.totalorder %s34, %s35
      %p46 = scmp.eq.s32.totalorder %s26, 0
      %p47 = por %p45, %p46
      %p48 = scmp.ne.s32.totalorder %s34, %s35
      %p49 = scmp.eq.s32.totalorder %s27, 1
      %p50 = por %p48, %p49
      %p52 = scmp.ne.s32.totalorder %s35, %s51
      %p53 = scmp.eq.s32.totalorder %s27, 0
      %p54 = por %p52, %p53
      %s55 = ssub.s32 %s21, %s28
      %p56 = scmp.eq.s32.totalorder %s55, 0
      %s58 = sadd.s32 %s57, 1
      %s59 = scalar_select %p56, %s57, %s58
      %p62 = pneg %p56
      %p63 = scmp.eq.s32.totalorder %s21, 1
      %p64 = por %p62, %p63
      %p65 = scmp.ne.s32.totalorder %s57, %s60
      %p66 = scmp.eq.s32.totalorder %s21, 0
      %p67 = por %p65, %p66
      %p68 = scmp.ne.s32.totalorder %s57, %s60
      %p69 = scmp.eq.s32.totalorder %s26, 1
      %p70 = por %p68, %p69
      %p71 = scmp.ne.s32.totalorder %s60, %s61
      %p72 = scmp.eq.s32.totalorder %s26, 0
      %p73 = por %p71, %p72
      %p74 = scmp.ne.s32.totalorder %s60, %s61
      %p75 = scmp.eq.s32.totalorder %s27, 1
      %p76 = por %p74, %p75
      %p78 = scmp.ne.s32.totalorder %s61, %s77
      %p79 = scmp.eq.s32.totalorder %s27, 0
      %p80 = por %p78, %p79
      %s82 = sadd.s32 %s81, 1
      %p85 = scmp.eq.s32.totalorder %s21, 1
      %p86 = scmp.ne.s32.totalorder %s81, %s83
      %p87 = scmp.eq.s32.totalorder %s21, 0
      %p88 = por %p86, %p87
      %p89 = scmp.ne.s32.totalorder %s81, %s83
      %p90 = scmp.eq.s32.totalorder %s26, 1
      %p91 = por %p89, %p90
      %p92 = scmp.ne.s32.totalorder %s83, %s84
      %p93 = scmp.eq.s32.totalorder %s26, 0
      %p94 = por %p92, %p93
      %p95 = scmp.ne.s32.totalorder %s83, %s84
      %p96 = scmp.eq.s32.totalorder %s27, 1
      %p97 = por %p95, %p96
      %p99 = scmp.ne.s32.totalorder %s84, %s98
      %p100 = scmp.eq.s32.totalorder %s27, 0
      %p101 = por %p99, %p100
      %s103 = sadd.s32 %s102, 1
      %p106 = scmp.eq.s32.totalorder %s21, 1
      %p107 = scmp.ne.s32.totalorder %s102, %s104
      %p108 = scmp.eq.s32.totalorder %s21, 0
      %p109 = por %p107, %p108
      %p110 = scmp.ne.s32.totalorder %s102, %s104
      %p111 = scmp.eq.s32.totalorder %s26, 1
      %p112 = por %p110, %p111
      %p113 = scmp.ne.s32.totalorder %s104, %s105
      %p114 = scmp.eq.s32.totalorder %s26, 0
      %p115 = por %p113, %p114
      %p116 = scmp.ne.s32.totalorder %s104, %s105
      %p117 = scmp.eq.s32.totalorder %s27, 1
      %p118 = por %p116, %p117
      %p120 = scmp.ne.s32.totalorder %s105, %s119
      %p121 = scmp.eq.s32.totalorder %s27, 0
      %p122 = por %p120, %p121
      %s124 = sadd.s32 %s123, 1
      %p127 = scmp.eq.s32.totalorder %s21, 1
      %p128 = scmp.ne.s32.totalorder %s123, %s125
      %p129 = scmp.eq.s32.totalorder %s21, 0
      %p130 = por %p128, %p129
      %p131 = scmp.ne.s32.totalorder %s123, %s125
      %p132 = scmp.eq.s32.totalorder %s26, 1
      %p133 = por %p131, %p132
      %p134 = scmp.ne.s32.totalorder %s125, %s126
      %p135 = scmp.eq.s32.totalorder %s26, 0
      %p136 = por %p134, %p135
      %p137 = scmp.ne.s32.totalorder %s125, %s126
      %p138 = scmp.eq.s32.totalorder %s27, 1
      %p139 = por %p137, %p138
      %p141 = scmp.ne.s32.totalorder %s126, %s140
      %p142 = scmp.eq.s32.totalorder %s27, 0
      %p143 = por %p141, %p142
      %s145 = sadd.s32 %s144, 1
      %p148 = scmp.eq.s32.totalorder %s21, 1
      %p149 = scmp.ne.s32.totalorder %s144, %s146
      %p150 = scmp.eq.s32.totalorder %s21, 0
      %p151 = por %p149, %p150
      %p152 = scmp.ne.s32.totalorder %s144, %s146
      %p153 = scmp.eq.s32.totalorder %s26, 1
      %p154 = por %p152, %p153
      %p155 = scmp.ne.s32.totalorder %s146, %s147
      %p156 = scmp.eq.s32.totalorder %s26, 0
      %p157 = por %p155, %p156
      %p158 = scmp.ne.s32.totalorder %s146, %s147
      %p159 = scmp.eq.s32.totalorder %s27, 1
      %p160 = por %p158, %p159
      %p162 = scmp.ne.s32.totalorder %s147, %s161
      %p163 = scmp.eq.s32.totalorder %s27, 0
      %p164 = por %p162, %p163
      %s166 = sadd.s32 %s165, 1
      %p169 = scmp.eq.s32.totalorder %s21, 1
      %p170 = scmp.ne.s32.totalorder %s165, %s167
      %p171 = scmp.eq.s32.totalorder %s21, 0
      %p172 = por %p170, %p171
      %p173 = scmp.ne.s32.totalorder %s165, %s167
      %p174 = scmp.eq.s32.totalorder %s26, 1
      %p175 = por %p173, %p174
      %p176 = scmp.ne.s32.totalorder %s167, %s168
      %p177 = scmp.eq.s32.totalorder %s26, 0
      %p178 = por %p176, %p177
      %p179 = scmp.ne.s32.totalorder %s167, %s168
      %p180 = scmp.eq.s32.totalorder %s27, 1
      %p181 = por %p179, %p180
      %p183 = scmp.ne.s32.totalorder %s168, %s182
      %p184 = scmp.eq.s32.totalorder %s27, 0
      %p185 = por %p183, %p184
      %s187 = sadd.s32 %s186, 1
      %p190 = scmp.eq.s32.totalorder %s21, 1
      %p191 = scmp.ne.s32.totalorder %s186, %s188
      %p192 = scmp.eq.s32.totalorder %s21, 0
      %p193 = por %p191, %p192
      %p194 = scmp.ne.s32.totalorder %s186, %s188
      %p195 = scmp.eq.s32.totalorder %s26, 1
      %p196 = por %p194, %p195
      %p197 = scmp.ne.s32.totalorder %s188, %s189
      %p198 = scmp.eq.s32.totalorder %s26, 0
      %p199 = por %p197, %p198
      %p200 = scmp.ne.s32.totalorder %s188, %s189
      %p201 = scmp.eq.s32.totalorder %s27, 1
      %p202 = por %p200, %p201
      %p204 = scmp.ne.s32.totalorder %s189, %s203
      %p205 = scmp.eq.s32.totalorder %s27, 0
      %p206 = por %p204, %p205
      %s208 = sadd.s32 %s207, 1
      %p211 = scmp.eq.s32.totalorder %s21, 1
      %p212 = scmp.ne.s32.totalorder %s207, %s209
      %p213 = scmp.eq.s32.totalorder %s21, 0
      %p214 = por %p212, %p213
      %p215 = scmp.ne.s32.totalorder %s207, %s209
      %p216 = scmp.eq.s32.totalorder %s26, 1
      %p217 = por %p215, %p216
      %p218 = scmp.ne.s32.totalorder %s209, %s210
      %p219 = scmp.eq.s32.totalorder %s26, 0
      %p220 = por %p218, %p219
      %p221 = scmp.ne.s32.totalorder %s209, %s210
      %p222 = scmp.eq.s32.totalorder %s27, 1
      %p223 = por %p221, %p222
      %p225 = scmp.ne.s32.totalorder %s210, %s224
      %p226 = scmp.eq.s32.totalorder %s27, 0
      %p227 = por %p225, %p226
      %s229 = sadd.s32 %s228, 1
      %p232 = scmp.eq.s32.totalorder %s21, 1
      %p233 = scmp.ne.s32.totalorder %s228, %s230
      %p234 = scmp.eq.s32.totalorder %s21, 0
      %p235 = por %p233, %p234
      %p236 = scmp.ne.s32.totalorder %s228, %s230
      %p237 = scmp.eq.s32.totalorder %s26, 1
      %p238 = por %p236, %p237
      %p239 = scmp.ne.s32.totalorder %s230, %s231
      %p240 = scmp.eq.s32.totalorder %s26, 0
      %p241 = por %p239, %p240
      %p242 = scmp.ne.s32.totalorder %s230, %s231
      %p243 = scmp.eq.s32.totalorder %s27, 1
      %p244 = por %p242, %p243
      %p246 = scmp.ne.s32.totalorder %s231, %s245
      %p247 = scmp.eq.s32.totalorder %s27, 0
      %p248 = por %p246, %p247
      %s250 = sadd.s32 %s249, 1
      %p253 = scmp.eq.s32.totalorder %s21, 1
      %p254 = scmp.ne.s32.totalorder %s249, %s251
      %p255 = scmp.eq.s32.totalorder %s21, 0
      %p256 = por %p254, %p255
      %p257 = scmp.ne.s32.totalorder %s249, %s251
      %p258 = scmp.eq.s32.totalorder %s26, 1
      %p259 = por %p257, %p258
      %p260 = scmp.ne.s32.totalorder %s251, %s252
      %p261 = scmp.eq.s32.totalorder %s26, 0
      %p262 = por %p260, %p261
      %p263 = scmp.ne.s32.totalorder %s251, %s252
      %p264 = scmp.eq.s32.totalorder %s27, 1
      %p265 = por %p263, %p264
      %p267 = scmp.ne.s32.totalorder %s252, %s266
      %p268 = scmp.eq.s32.totalorder %s27, 0
      %p269 = por %p267, %p268
      %s271 = sadd.s32 %s270, 1
      %p274 = scmp.eq.s32.totalorder %s21, 1
      %p275 = scmp.ne.s32.totalorder %s270, %s272
      %p276 = scmp.eq.s32.totalorder %s21, 0
      %p277 = por %p275, %p276
      %p278 = scmp.ne.s32.totalorder %s270, %s272
      %p279 = scmp.eq.s32.totalorder %s26, 1
      %p280 = por %p278, %p279
      %p281 = scmp.ne.s32.totalorder %s272, %s273
      %p282 = scmp.eq.s32.totalorder %s26, 0
      %p283 = por %p281, %p282
      %p284 = scmp.ne.s32.totalorder %s272, %s273
      %p285 = scmp.eq.s32.totalorder %s27, 1
      %p286 = por %p284, %p285
      %p288 = scmp.ne.s32.totalorder %s273, %s287
      %p289 = scmp.eq.s32.totalorder %s27, 0
      %p290 = por %p288, %p289
      %s291 = ssub.s32 %s21, %s28
      %p292 = scmp.eq.s32.totalorder %s291, 0
      %s294 = sadd.s32 %s293, 1
      %s295 = scalar_select %p292, %s293, %s294
      %p298 = pneg %p292
      %p299 = scmp.eq.s32.totalorder %s21, 1
      %p300 = por %p298, %p299
      %p301 = scmp.ne.s32.totalorder %s293, %s296
      %p302 = scmp.eq.s32.totalorder %s21, 0
      %p303 = por %p301, %p302
      %p304 = scmp.ne.s32.totalorder %s293, %s296
      %p305 = scmp.eq.s32.totalorder %s26, 1
      %p306 = por %p304, %p305
      %p307 = scmp.ne.s32.totalorder %s296, %s297
      %p308 = scmp.eq.s32.totalorder %s26, 0
      %p309 = por %p307, %p308
      %p310 = scmp.ne.s32.totalorder %s296, %s297
      %p311 = scmp.eq.s32.totalorder %s27, 1
      %p312 = por %p310, %p311
      %p314 = scmp.ne.s32.totalorder %s297, %s313
      %p315 = scmp.eq.s32.totalorder %s27, 0
      %p316 = por %p314, %p315
      %p317 = scmp.le.s32.totalorder 1, %s21
      %p318 = scmp.lt.s32.totalorder %s21, 3
      %p319 = pnand %p317, %p318
      %p320 = pneg %p319
      // Predicated region
      $region9: #{tpu_custom_call.1} parent=5 // pred_check
        _
      $region10: #{tpu_custom_call.1} parent=5 // pred_check_branch
        %322 = sbr.rel (%p319) target = $region12
      $region11: #{tpu_custom_call.1} parent=5 // pred_region
        %s323 = ssub.s32 %s21, 1
        // Predicated region
        $region13: #{tpu_custom_call.1} parent=11 // pred_check
          %p324 = pneg %p94
        $region14: #{tpu_custom_call.1} parent=11 // pred_check_branch
          %326 = sbr.rel (%p324) target = $region16
        $region15: #{tpu_custom_call.1} parent=11 // pred_region
          _
        $region16: #{tpu_custom_call.1} parent=11 // pred_fallthru
          _
        // Predicated region
        $region17: #{tpu_custom_call.1} parent=11 // pred_check
          %p327 = pneg %p115
        $region18: #{tpu_custom_call.1} parent=11 // pred_check_branch
          %329 = sbr.rel (%p327) target = $region20
        $region19: #{tpu_custom_call.1} parent=11 // pred_region
          _
        $region20: #{tpu_custom_call.1} parent=11 // pred_fallthru
          _
        // Predicated region
        $region21: #{tpu_custom_call.1} parent=11 // pred_check
          %p330 = pneg %p136
        $region22: #{tpu_custom_call.1} parent=11 // pred_check_branch
          %332 = sbr.rel (%p330) target = $region24
        $region23: #{tpu_custom_call.1} parent=11 // pred_region
          _
        $region24: #{tpu_custom_call.1} parent=11 // pred_fallthru
          _
        // Predicated region
        $region25: #{tpu_custom_call.1} parent=11 // pred_check
          %p333 = pneg %p157
        $region26: #{tpu_custom_call.1} parent=11 // pred_check_branch
          %335 = sbr.rel (%p333) target = $region28
        $region27: #{tpu_custom_call.1} parent=11 // pred_region
          _
        $region28: #{tpu_custom_call.1} parent=11 // pred_fallthru
          _
        // Predicated region
        $region29: #{tpu_custom_call.1} parent=11 // pred_check
          %p336 = pneg %p178
        $region30: #{tpu_custom_call.1} parent=11 // pred_check_branch
          %338 = sbr.rel (%p336) target = $region32
        $region31: #{tpu_custom_call.1} parent=11 // pred_region
          _
        $region32: #{tpu_custom_call.1} parent=11 // pred_fallthru
          _
        // Predicated region
        $region33: #{tpu_custom_call.1} parent=11 // pred_check
          %p339 = pneg %p199
        $region34: #{tpu_custom_call.1} parent=11 // pred_check_branch
          %341 = sbr.rel (%p339) target = $region36
        $region35: #{tpu_custom_call.1} parent=11 // pred_region
          _
        $region36: #{tpu_custom_call.1} parent=11 // pred_fallthru
          _
        // Predicated region
        $region37: #{tpu_custom_call.1} parent=11 // pred_check
          %p342 = pneg %p220
        $region38: #{tpu_custom_call.1} parent=11 // pred_check_branch
          %344 = sbr.rel (%p342) target = $region40
        $region39: #{tpu_custom_call.1} parent=11 // pred_region
          _
        $region40: #{tpu_custom_call.1} parent=11 // pred_fallthru
          _
        // Predicated region
        $region41: #{tpu_custom_call.1} parent=11 // pred_check
          %p345 = pneg %p241
        $region42: #{tpu_custom_call.1} parent=11 // pred_check_branch
          %347 = sbr.rel (%p345) target = $region44
        $region43: #{tpu_custom_call.1} parent=11 // pred_region
          _
        $region44: #{tpu_custom_call.1} parent=11 // pred_fallthru
          _
        // Predicated region
        $region45: #{tpu_custom_call.1} parent=11 // pred_check
          %p348 = pneg %p262
        $region46: #{tpu_custom_call.1} parent=11 // pred_check_branch
          %350 = sbr.rel (%p348) target = $region48
        $region47: #{tpu_custom_call.1} parent=11 // pred_region
          _
        $region48: #{tpu_custom_call.1} parent=11 // pred_fallthru
          _
        // Predicated region
        $region49: #{tpu_custom_call.1} parent=11 // pred_check
          %p351 = pneg %p283
        $region50: #{tpu_custom_call.1} parent=11 // pred_check_branch
          %353 = sbr.rel (%p351) target = $region52
        $region51: #{tpu_custom_call.1} parent=11 // pred_region
          _
        $region52: #{tpu_custom_call.1} parent=11 // pred_fallthru
          _
      $region12: #{tpu_custom_call.1} parent=5 // pred_fallthru
        _
      %p354 = scmp.lt.s32.totalorder %s21, 2
      // Predicated region
      $region53: #{tpu_custom_call.1} parent=5 // pred_check
        %p355 = pneg %p354
      $region54: #{tpu_custom_call.1} parent=5 // pred_check_branch
        %357 = sbr.rel (%p355) target = $region56
      $region55: #{tpu_custom_call.1} parent=5 // pred_region
        // Predicated region
        $region57: #{tpu_custom_call.1} parent=55 // pred_check
          %p358 = pneg %p41
        $region58: #{tpu_custom_call.1} parent=55 // pred_check_branch
          %360 = sbr.rel (%p358) target = $region60
        $region59: #{tpu_custom_call.1} parent=55 // pred_region
          %s361 = smul.u32 128, %s21
          %p362 = scmp.lt.s32.totalorder %s361, 255
          %s363 = scalar_select %p362, %s361, 255
          %s364 = smul.addr %s363, 4
          %s365 = scalar_lea.vmem %s0, %s364
          %s366 = smul.u32 128, %s21
        $region60: #{tpu_custom_call.1} parent=55 // pred_fallthru
          _
        // Predicated region
        $region61: #{tpu_custom_call.1} parent=55 // pred_check
          %p367 = pneg %p67
        $region62: #{tpu_custom_call.1} parent=55 // pred_check_branch
          %369 = sbr.rel (%p367) target = $region64
        $region63: #{tpu_custom_call.1} parent=55 // pred_region
          %s370 = smul.u32 16, %s21
          %p371 = scmp.lt.s32.totalorder %s370, 31
          %s372 = scalar_select %p371, %s370, 31
          %s373 = smul.addr %s372, 8
          %s374 = scalar_lea.vmem %s1, %s373
          %s375 = smul.u32 16, %s21
        $region64: #{tpu_custom_call.1} parent=55 // pred_fallthru
          _
      $region56: #{tpu_custom_call.1} parent=5 // pred_fallthru
        _
      %p376 = scmp.le.s32.totalorder 1, %s21
      %p377 = scmp.lt.s32.totalorder %s21, 3
      %p378 = pnand %p376, %p377
      %p379 = pneg %p378
      // Predicated region
      $region65: #{tpu_custom_call.1} parent=5 // pred_check
        _
      $region66: #{tpu_custom_call.1} parent=5 // pred_check_branch
        %381 = sbr.rel (%p378) target = $region68
      $region67: #{tpu_custom_call.1} parent=5 // pred_region
        %s382 = ssub.s32 %s21, 1
        %s383 = smul.u32 128, %s26
        %p384 = scmp.lt.s32.totalorder %s383, 255
        %s385 = scalar_select %p384, %s383, 255
        %s386 = smul.addr %s385, 4
        %s387 = scalar_lea.vmem %s0, %s386
        %p388 = pneg %p47
        %p389 = pneg %p44
        %s390 = smul.u32 16, %s26
        %p391 = scmp.lt.s32.totalorder %s390, 31
        %s392 = scalar_select %p391, %s390, 31
        %s393 = smul.addr %s392, 8
        %s394 = scalar_lea.vmem %s1, %s393
        %p395 = pneg %p73
        %p396 = pneg %p70
        %p397 = pneg %p94
        %p398 = pneg %p91
        %p399 = pneg %p115
        %p400 = pneg %p112
        %p401 = pneg %p136
        %p402 = pneg %p133
        %p403 = pneg %p157
        %p404 = pneg %p154
        %p405 = pneg %p178
        %p406 = pneg %p175
        %p407 = pneg %p199
        %p408 = pneg %p196
        %p409 = pneg %p220
        %p410 = pneg %p217
        %p411 = pneg %p241
        %p412 = pneg %p238
        %p413 = pneg %p262
        %p414 = pneg %p259
        %p415 = pneg %p283
        %p416 = pneg %p280
        %p417 = pneg %p309
        %p418 = pneg %p306
        %s419 = sand.u32 %s296, 1
        %s420 = scalar_lea.sflag [#allocation3], %s419
        %s421 = sand.u32 %s296, 1
        %s422 = smul.addr %s421, 128
        %s423 = scalar_lea.vmem [#allocation2], %s422
        %s424 = smul.u32 128, %s26
        %p425 = scmp.lt.s32.totalorder %s424, 255
        %s426 = scalar_select %p425, %s424, 255
        %s427 = smul.addr %s426, 4
        %s428 = scalar_lea.vmem %s0, %s427
        %s429 = smul.u32 128, %s26
        %s430 = smul.u32 16, %s26
        %p431 = scmp.lt.s32.totalorder %s430, 31
        %s432 = scalar_select %p431, %s430, 31
        %s433 = smul.addr %s432, 8
        %s434 = scalar_lea.vmem %s1, %s433
        %s435 = smul.u32 16, %s26
        %s436 = smul.u32 16, %s26
        %v438 = vld [vmem:[%s428] sm:$0xf]
        %v439 = vld [vmem:[%s428 + $0x4] sm:$0xf]
        %v440 = vld [vmem:[%s428 + $0x8] sm:$0xf]
        %v441 = vld [vmem:[%s428 + $0xc] sm:$0xf]
        %v442 = vld [vmem:[%s428 + $0x10] sm:$0xf]
        %v443 = vld [vmem:[%s428 + $0x14] sm:$0xf]
        %v444 = vld [vmem:[%s428 + $0x18] sm:$0xf]
        %v445 = vld [vmem:[%s428 + $0x1c] sm:$0xf]
        %v446 = vld [vmem:[%s428 + $0x20] sm:$0xf]
        %v447 = vld [vmem:[%s428 + $0x24] sm:$0xf]
        %v448 = vld [vmem:[%s428 + $0x28] sm:$0xf]
        %v449 = vld [vmem:[%s428 + $0x2c] sm:$0xf]
        %v450 = vld [vmem:[%s428 + $0x30] sm:$0xf]
        %v451 = vld [vmem:[%s428 + $0x34] sm:$0xf]
        %v452 = vld [vmem:[%s428 + $0x38] sm:$0xf]
        %v453 = vld [vmem:[%s428 + $0x3c] sm:$0xf]
        %v454 = vld [vmem:[%s428 + $0x40] sm:$0xf]
        %v455 = vld [vmem:[%s428 + $0x44] sm:$0xf]
        %v456 = vld [vmem:[%s428 + $0x48] sm:$0xf]
        %v457 = vld [vmem:[%s428 + $0x4c] sm:$0xf]
        %v458 = vld [vmem:[%s428 + $0x50] sm:$0xf]
        %v459 = vld [vmem:[%s428 + $0x54] sm:$0xf]
        %v460 = vld [vmem:[%s428 + $0x58] sm:$0xf]
        %v461 = vld [vmem:[%s428 + $0x5c] sm:$0xf]
        %v462 = vld [vmem:[%s428 + $0x60] sm:$0xf]
        %v463 = vld [vmem:[%s428 + $0x64] sm:$0xf]
        %v464 = vld [vmem:[%s428 + $0x68] sm:$0xf]
        %v465 = vld [vmem:[%s428 + $0x6c] sm:$0xf]
        %v466 = vld [vmem:[%s428 + $0x70] sm:$0xf]
        %v467 = vld [vmem:[%s428 + $0x74] sm:$0xf]
        %v468 = vld [vmem:[%s428 + $0x78] sm:$0xf]
        %v469 = vld [vmem:[%s428 + $0x7c] sm:$0xf]
        %v470 = vld [vmem:[%s428 + $0x80] sm:$0xf]
        %v471 = vld [vmem:[%s428 + $0x84] sm:$0xf]
        %v472 = vld [vmem:[%s428 + $0x88] sm:$0xf]
        %v473 = vld [vmem:[%s428 + $0x8c] sm:$0xf]
        %v474 = vld [vmem:[%s428 + $0x90] sm:$0xf]
        %v475 = vld [vmem:[%s428 + $0x94] sm:$0xf]
        %v476 = vld [vmem:[%s428 + $0x98] sm:$0xf]
        %v477 = vld [vmem:[%s428 + $0x9c] sm:$0xf]
        %v478 = vld [vmem:[%s428 + $0xa0] sm:$0xf]
        %v479 = vld [vmem:[%s428 + $0xa4] sm:$0xf]
        %v480 = vld [vmem:[%s428 + $0xa8] sm:$0xf]
        %v481 = vld [vmem:[%s428 + $0xac] sm:$0xf]
        %v482 = vld [vmem:[%s428 + $0xb0] sm:$0xf]
        %v483 = vld [vmem:[%s428 + $0xb4] sm:$0xf]
        %v484 = vld [vmem:[%s428 + $0xb8] sm:$0xf]
        %v485 = vld [vmem:[%s428 + $0xbc] sm:$0xf]
        %v486 = vld [vmem:[%s428 + $0xc0] sm:$0xf]
        %v487 = vld [vmem:[%s428 + $0xc4] sm:$0xf]
        %v488 = vld [vmem:[%s428 + $0xc8] sm:$0xf]
        %v489 = vld [vmem:[%s428 + $0xcc] sm:$0xf]
        %v490 = vld [vmem:[%s428 + $0xd0] sm:$0xf]
        %v491 = vld [vmem:[%s428 + $0xd4] sm:$0xf]
        %v492 = vld [vmem:[%s428 + $0xd8] sm:$0xf]
        %v493 = vld [vmem:[%s428 + $0xdc] sm:$0xf]
        %v494 = vld [vmem:[%s428 + $0xe0] sm:$0xf]
        %v495 = vld [vmem:[%s428 + $0xe4] sm:$0xf]
        %v496 = vld [vmem:[%s428 + $0xe8] sm:$0xf]
        %v497 = vld [vmem:[%s428 + $0xec] sm:$0xf]
        %v498 = vld [vmem:[%s428 + $0xf0] sm:$0xf]
        %v499 = vld [vmem:[%s428 + $0xf4] sm:$0xf]
        %v500 = vld [vmem:[%s428 + $0xf8] sm:$0xf]
        %v501 = vld [vmem:[%s428 + $0xfc] sm:$0xf]
        %v502 = vld [vmem:[%s428 + $0x100] sm:$0xf]
        %v503 = vld [vmem:[%s428 + $0x104] sm:$0xf]
        %v504 = vld [vmem:[%s428 + $0x108] sm:$0xf]
        %v505 = vld [vmem:[%s428 + $0x10c] sm:$0xf]
        %v506 = vld [vmem:[%s428 + $0x110] sm:$0xf]
        %v507 = vld [vmem:[%s428 + $0x114] sm:$0xf]
        %v508 = vld [vmem:[%s428 + $0x118] sm:$0xf]
        %v509 = vld [vmem:[%s428 + $0x11c] sm:$0xf]
        %v510 = vld [vmem:[%s428 + $0x120] sm:$0xf]
        %v511 = vld [vmem:[%s428 + $0x124] sm:$0xf]
        %v512 = vld [vmem:[%s428 + $0x128] sm:$0xf]
        %v513 = vld [vmem:[%s428 + $0x12c] sm:$0xf]
        %v514 = vld [vmem:[%s428 + $0x130] sm:$0xf]
        %v515 = vld [vmem:[%s428 + $0x134] sm:$0xf]
        %v516 = vld [vmem:[%s428 + $0x138] sm:$0xf]
        %v517 = vld [vmem:[%s428 + $0x13c] sm:$0xf]
        %v518 = vld [vmem:[%s428 + $0x140] sm:$0xf]
        %v519 = vld [vmem:[%s428 + $0x144] sm:$0xf]
        %v520 = vld [vmem:[%s428 + $0x148] sm:$0xf]
        %v521 = vld [vmem:[%s428 + $0x14c] sm:$0xf]
        %v522 = vld [vmem:[%s428 + $0x150] sm:$0xf]
        %v523 = vld [vmem:[%s428 + $0x154] sm:$0xf]
        %v524 = vld [vmem:[%s428 + $0x158] sm:$0xf]
        %v525 = vld [vmem:[%s428 + $0x15c] sm:$0xf]
        %v526 = vld [vmem:[%s428 + $0x160] sm:$0xf]
        %v527 = vld [vmem:[%s428 + $0x164] sm:$0xf]
        %v528 = vld [vmem:[%s428 + $0x168] sm:$0xf]
        %v529 = vld [vmem:[%s428 + $0x16c] sm:$0xf]
        %v530 = vld [vmem:[%s428 + $0x170] sm:$0xf]
        %v531 = vld [vmem:[%s428 + $0x174] sm:$0xf]
        %v532 = vld [vmem:[%s428 + $0x178] sm:$0xf]
        %v533 = vld [vmem:[%s428 + $0x17c] sm:$0xf]
        %v534 = vld [vmem:[%s428 + $0x180] sm:$0xf]
        %v535 = vld [vmem:[%s428 + $0x184] sm:$0xf]
        %v536 = vld [vmem:[%s428 + $0x188] sm:$0xf]
        %v537 = vld [vmem:[%s428 + $0x18c] sm:$0xf]
        %v538 = vld [vmem:[%s428 + $0x190] sm:$0xf]
        %v539 = vld [vmem:[%s428 + $0x194] sm:$0xf]
        %v540 = vld [vmem:[%s428 + $0x198] sm:$0xf]
        %v541 = vld [vmem:[%s428 + $0x19c] sm:$0xf]
        %v542 = vld [vmem:[%s428 + $0x1a0] sm:$0xf]
        %v543 = vld [vmem:[%s428 + $0x1a4] sm:$0xf]
        %v544 = vld [vmem:[%s428 + $0x1a8] sm:$0xf]
        %v545 = vld [vmem:[%s428 + $0x1ac] sm:$0xf]
        %v546 = vld [vmem:[%s428 + $0x1b0] sm:$0xf]
        %v547 = vld [vmem:[%s428 + $0x1b4] sm:$0xf]
        %v548 = vld [vmem:[%s428 + $0x1b8] sm:$0xf]
        %v549 = vld [vmem:[%s428 + $0x1bc] sm:$0xf]
        %v550 = vld [vmem:[%s428 + $0x1c0] sm:$0xf]
        %v551 = vld [vmem:[%s428 + $0x1c4] sm:$0xf]
        %v552 = vld [vmem:[%s428 + $0x1c8] sm:$0xf]
        %v553 = vld [vmem:[%s428 + $0x1cc] sm:$0xf]
        %v554 = vld [vmem:[%s428 + $0x1d0] sm:$0xf]
        %v555 = vld [vmem:[%s428 + $0x1d4] sm:$0xf]
        %v556 = vld [vmem:[%s428 + $0x1d8] sm:$0xf]
        %v557 = vld [vmem:[%s428 + $0x1dc] sm:$0xf]
        %v558 = vld [vmem:[%s428 + $0x1e0] sm:$0xf]
        %v559 = vld [vmem:[%s428 + $0x1e4] sm:$0xf]
        %v560 = vld [vmem:[%s428 + $0x1e8] sm:$0xf]
        %v561 = vld [vmem:[%s428 + $0x1ec] sm:$0xf]
        %v562 = vld [vmem:[%s428 + $0x1f0] sm:$0xf]
        %v563 = vld [vmem:[%s428 + $0x1f4] sm:$0xf]
        %v564 = vld [vmem:[%s428 + $0x1f8] sm:$0xf]
        %v565 = vld [vmem:[%s428 + $0x1fc] sm:$0xf]
        %v566 = vld [vmem:[%s2] sm:$0xf]
        %v567 = vld [vmem:[%s2 + $0x4] sm:$0xf]
        %v568 = vld [vmem:[%s2 + $0x8] sm:$0xf]
        %v569 = vld [vmem:[%s2 + $0xc] sm:$0xf]
        %v570 = vld [vmem:[%s2 + $0x10] sm:$0xf]
        %v571 = vld [vmem:[%s2 + $0x14] sm:$0xf]
        %v572 = vld [vmem:[%s2 + $0x18] sm:$0xf]
        %v573 = vld [vmem:[%s2 + $0x1c] sm:$0xf]
        %v702 = vunpack.c.l.b16 %v438
        %v703 = vunpack.c.l.b16 %v439
        %v704 = vunpack.c.l.b16 %v440
        %v705 = vunpack.c.l.b16 %v441
        %v706 = vunpack.c.l.b16 %v442
        %v707 = vunpack.c.l.b16 %v443
        %v708 = vunpack.c.l.b16 %v444
        %v709 = vunpack.c.l.b16 %v445
        %v710 = vunpack.c.l.b16 %v446
        %v711 = vunpack.c.l.b16 %v447
        %v712 = vunpack.c.l.b16 %v448
        %v713 = vunpack.c.l.b16 %v449
        %v714 = vunpack.c.l.b16 %v450
        %v715 = vunpack.c.l.b16 %v451
        %v716 = vunpack.c.l.b16 %v452
        %v717 = vunpack.c.l.b16 %v453
        %v718 = vunpack.c.l.b16 %v454
        %v719 = vunpack.c.l.b16 %v455
        %v720 = vunpack.c.l.b16 %v456
        %v721 = vunpack.c.l.b16 %v457
        %v722 = vunpack.c.l.b16 %v458
        %v723 = vunpack.c.l.b16 %v459
        %v724 = vunpack.c.l.b16 %v460
        %v725 = vunpack.c.l.b16 %v461
        %v726 = vunpack.c.l.b16 %v462
        %v727 = vunpack.c.l.b16 %v463
        %v728 = vunpack.c.l.b16 %v464
        %v729 = vunpack.c.l.b16 %v465
        %v730 = vunpack.c.l.b16 %v466
        %v731 = vunpack.c.l.b16 %v467
        %v732 = vunpack.c.l.b16 %v468
        %v733 = vunpack.c.l.b16 %v469
        %v734 = vunpack.c.l.b16 %v470
        %v735 = vunpack.c.l.b16 %v471
        %v736 = vunpack.c.l.b16 %v472
        %v737 = vunpack.c.l.b16 %v473
        %v738 = vunpack.c.l.b16 %v474
        %v739 = vunpack.c.l.b16 %v475
        %v740 = vunpack.c.l.b16 %v476
        %v741 = vunpack.c.l.b16 %v477
        %v742 = vunpack.c.l.b16 %v478
        %v743 = vunpack.c.l.b16 %v479
        %v744 = vunpack.c.l.b16 %v480
        %v745 = vunpack.c.l.b16 %v481
        %v746 = vunpack.c.l.b16 %v482
        %v747 = vunpack.c.l.b16 %v483
        %v748 = vunpack.c.l.b16 %v484
        %v749 = vunpack.c.l.b16 %v485
        %v750 = vunpack.c.l.b16 %v486
        %v751 = vunpack.c.l.b16 %v487
        %v752 = vunpack.c.l.b16 %v488
        %v753 = vunpack.c.l.b16 %v489
        %v754 = vunpack.c.l.b16 %v490
        %v755 = vunpack.c.l.b16 %v491
        %v756 = vunpack.c.l.b16 %v492
        %v757 = vunpack.c.l.b16 %v493
        %v758 = vunpack.c.l.b16 %v494
        %v759 = vunpack.c.l.b16 %v495
        %v760 = vunpack.c.l.b16 %v496
        %v761 = vunpack.c.l.b16 %v497
        %v762 = vunpack.c.l.b16 %v498
        %v763 = vunpack.c.l.b16 %v499
        %v764 = vunpack.c.l.b16 %v500
        %v765 = vunpack.c.l.b16 %v501
        %v766 = vunpack.c.l.b16 %v502
        %v767 = vunpack.c.l.b16 %v503
        %v768 = vunpack.c.l.b16 %v504
        %v769 = vunpack.c.l.b16 %v505
        %v770 = vunpack.c.l.b16 %v506
        %v771 = vunpack.c.l.b16 %v507
        %v772 = vunpack.c.l.b16 %v508
        %v773 = vunpack.c.l.b16 %v509
        %v774 = vunpack.c.l.b16 %v510
        %v775 = vunpack.c.l.b16 %v511
        %v776 = vunpack.c.l.b16 %v512
        %v777 = vunpack.c.l.b16 %v513
        %v778 = vunpack.c.l.b16 %v514
        %v779 = vunpack.c.l.b16 %v515
        %v780 = vunpack.c.l.b16 %v516
        %v781 = vunpack.c.l.b16 %v517
        %v782 = vunpack.c.l.b16 %v518
        %v783 = vunpack.c.l.b16 %v519
        %v784 = vunpack.c.l.b16 %v520
        %v785 = vunpack.c.l.b16 %v521
        %v786 = vunpack.c.l.b16 %v522
        %v787 = vunpack.c.l.b16 %v523
        %v788 = vunpack.c.l.b16 %v524
        %v789 = vunpack.c.l.b16 %v525
        %v790 = vunpack.c.l.b16 %v526
        %v791 = vunpack.c.l.b16 %v527
        %v792 = vunpack.c.l.b16 %v528
        %v793 = vunpack.c.l.b16 %v529
        %v794 = vunpack.c.l.b16 %v530
        %v795 = vunpack.c.l.b16 %v531
        %v796 = vunpack.c.l.b16 %v532
        %v797 = vunpack.c.l.b16 %v533
        %v798 = vunpack.c.l.b16 %v534
        %v799 = vunpack.c.l.b16 %v535
        %v800 = vunpack.c.l.b16 %v536
        %v801 = vunpack.c.l.b16 %v537
        %v802 = vunpack.c.l.b16 %v538
        %v803 = vunpack.c.l.b16 %v539
        %v804 = vunpack.c.l.b16 %v540
        %v805 = vunpack.c.l.b16 %v541
        %v806 = vunpack.c.l.b16 %v542
        %v807 = vunpack.c.l.b16 %v543
        %v808 = vunpack.c.l.b16 %v544
        %v809 = vunpack.c.l.b16 %v545
        %v810 = vunpack.c.l.b16 %v546
        %v811 = vunpack.c.l.b16 %v547
        %v812 = vunpack.c.l.b16 %v548
        %v813 = vunpack.c.l.b16 %v549
        %v814 = vunpack.c.l.b16 %v550
        %v815 = vunpack.c.l.b16 %v551
        %v816 = vunpack.c.l.b16 %v552
        %v817 = vunpack.c.l.b16 %v553
        %v818 = vunpack.c.l.b16 %v554
        %v819 = vunpack.c.l.b16 %v555
        %v820 = vunpack.c.l.b16 %v556
        %v821 = vunpack.c.l.b16 %v557
        %v822 = vunpack.c.l.b16 %v558
        %v823 = vunpack.c.l.b16 %v559
        %v824 = vunpack.c.l.b16 %v560
        %v825 = vunpack.c.l.b16 %v561
        %v826 = vunpack.c.l.b16 %v562
        %v827 = vunpack.c.l.b16 %v563
        %v828 = vunpack.c.l.b16 %v564
        %v829 = vunpack.c.l.b16 %v565
        %v830 = vpack.c.b16 %v703, %v702
        %v831 = vpack.c.b16 %v705, %v704
        %v832 = vpack.c.b16 %v707, %v706
        %v833 = vpack.c.b16 %v709, %v708
        %v834 = vpack.c.b16 %v711, %v710
        %v835 = vpack.c.b16 %v713, %v712
        %v836 = vpack.c.b16 %v715, %v714
        %v837 = vpack.c.b16 %v717, %v716
        %v838 = vpack.c.b16 %v719, %v718
        %v839 = vpack.c.b16 %v721, %v720
        %v840 = vpack.c.b16 %v723, %v722
        %v841 = vpack.c.b16 %v725, %v724
        %v842 = vpack.c.b16 %v727, %v726
        %v843 = vpack.c.b16 %v729, %v728
        %v844 = vpack.c.b16 %v731, %v730
        %v845 = vpack.c.b16 %v733, %v732
        %v846 = vpack.c.b16 %v735, %v734
        %v847 = vpack.c.b16 %v737, %v736
        %v848 = vpack.c.b16 %v739, %v738
        %v849 = vpack.c.b16 %v741, %v740
        %v850 = vpack.c.b16 %v743, %v742
        %v851 = vpack.c.b16 %v745, %v744
        %v852 = vpack.c.b16 %v747, %v746
        %v853 = vpack.c.b16 %v749, %v748
        %v854 = vpack.c.b16 %v751, %v750
        %v855 = vpack.c.b16 %v753, %v752
        %v856 = vpack.c.b16 %v755, %v754
        %v857 = vpack.c.b16 %v757, %v756
        %v858 = vpack.c.b16 %v759, %v758
        %v859 = vpack.c.b16 %v761, %v760
        %v860 = vpack.c.b16 %v763, %v762
        %v861 = vpack.c.b16 %v765, %v764
        %v862 = vpack.c.b16 %v767, %v766
        %v863 = vpack.c.b16 %v769, %v768
        %v864 = vpack.c.b16 %v771, %v770
        %v865 = vpack.c.b16 %v773, %v772
        %v866 = vpack.c.b16 %v775, %v774
        %v867 = vpack.c.b16 %v777, %v776
        %v868 = vpack.c.b16 %v779, %v778
        %v869 = vpack.c.b16 %v781, %v780
        %v870 = vpack.c.b16 %v783, %v782
        %v871 = vpack.c.b16 %v785, %v784
        %v872 = vpack.c.b16 %v787, %v786
        %v873 = vpack.c.b16 %v789, %v788
        %v874 = vpack.c.b16 %v791, %v790
        %v875 = vpack.c.b16 %v793, %v792
        %v876 = vpack.c.b16 %v795, %v794
        %v877 = vpack.c.b16 %v797, %v796
        %v878 = vpack.c.b16 %v799, %v798
        %v879 = vpack.c.b16 %v801, %v800
        %v880 = vpack.c.b16 %v803, %v802
        %v881 = vpack.c.b16 %v805, %v804
        %v882 = vpack.c.b16 %v807, %v806
        %v883 = vpack.c.b16 %v809, %v808
        %v884 = vpack.c.b16 %v811, %v810
        %v885 = vpack.c.b16 %v813, %v812
        %v886 = vpack.c.b16 %v815, %v814
        %v887 = vpack.c.b16 %v817, %v816
        %v888 = vpack.c.b16 %v819, %v818
        %v889 = vpack.c.b16 %v821, %v820
        %v890 = vpack.c.b16 %v823, %v822
        %v891 = vpack.c.b16 %v825, %v824
        %v892 = vpack.c.b16 %v827, %v826
        %v893 = vpack.c.b16 %v829, %v828
        %v902 = vunpack.c.l.b16 %v566
        %v903 = vunpack.c.l.b16 %v567
        %v904 = vunpack.c.l.b16 %v568
        %v905 = vunpack.c.l.b16 %v569
        %v906 = vunpack.c.l.b16 %v570
        %v907 = vunpack.c.l.b16 %v571
        %v908 = vunpack.c.l.b16 %v572
        %v909 = vunpack.c.l.b16 %v573
        %v910 = vpack.c.b16 %v903, %v902
        %v911 = vpack.c.b16 %v905, %v904
        %v912 = vpack.c.b16 %v907, %v906
        %v913 = vpack.c.b16 %v909, %v908
        %vm918 = vcmask 523264
        %v920 = vsel %vm918, %v830, 0
        %v923 = vsel %vm918, %v831, 0
        %v926 = vsel %vm918, %v832, 0
        %v929 = vsel %vm918, %v833, 0
        %v932 = vsel %vm918, %v834, 0
        %v935 = vsel %vm918, %v835, 0
        %v938 = vsel %vm918, %v836, 0
        %v941 = vsel %vm918, %v837, 0
        %v944 = vsel %vm918, %v838, 0
        %v947 = vsel %vm918, %v839, 0
        %v950 = vsel %vm918, %v840, 0
        %v953 = vsel %vm918, %v841, 0
        %v956 = vsel %vm918, %v842, 0
        %v959 = vsel %vm918, %v843, 0
        %v962 = vsel %vm918, %v844, 0
        %v965 = vsel %vm918, %v845, 0
        %v968 = vsel %vm918, %v846, 0
        %v971 = vsel %vm918, %v847, 0
        %v974 = vsel %vm918, %v848, 0
        %v977 = vsel %vm918, %v849, 0
        %v980 = vsel %vm918, %v850, 0
        %v983 = vsel %vm918, %v851, 0
        %v986 = vsel %vm918, %v852, 0
        %v989 = vsel %vm918, %v853, 0
        %v992 = vsel %vm918, %v854, 0
        %v995 = vsel %vm918, %v855, 0
        %v998 = vsel %vm918, %v856, 0
        %v1001 = vsel %vm918, %v857, 0
        %v1004 = vsel %vm918, %v858, 0
        %v1007 = vsel %vm918, %v859, 0
        %v1010 = vsel %vm918, %v860, 0
        %v1013 = vsel %vm918, %v861, 0
        %v1016 = vsel %vm918, %v862, 0
        %v1019 = vsel %vm918, %v863, 0
        %v1022 = vsel %vm918, %v864, 0
        %v1025 = vsel %vm918, %v865, 0
        %v1028 = vsel %vm918, %v866, 0
        %v1031 = vsel %vm918, %v867, 0
        %v1034 = vsel %vm918, %v868, 0
        %v1037 = vsel %vm918, %v869, 0
        %v1040 = vsel %vm918, %v870, 0
        %v1043 = vsel %vm918, %v871, 0
        %v1046 = vsel %vm918, %v872, 0
        %v1049 = vsel %vm918, %v873, 0
        %v1052 = vsel %vm918, %v874, 0
        %v1055 = vsel %vm918, %v875, 0
        %v1058 = vsel %vm918, %v876, 0
        %v1061 = vsel %vm918, %v877, 0
        %v1064 = vsel %vm918, %v878, 0
        %v1067 = vsel %vm918, %v879, 0
        %v1070 = vsel %vm918, %v880, 0
        %v1073 = vsel %vm918, %v881, 0
        %v1076 = vsel %vm918, %v882, 0
        %v1079 = vsel %vm918, %v883, 0
        %v1082 = vsel %vm918, %v884, 0
        %v1085 = vsel %vm918, %v885, 0
        %v1088 = vsel %vm918, %v886, 0
        %v1091 = vsel %vm918, %v887, 0
        %v1094 = vsel %vm918, %v888, 0
        %v1097 = vsel %vm918, %v889, 0
        %v1100 = vsel %vm918, %v890, 0
        %v1103 = vsel %vm918, %v891, 0
        %v1106 = vsel %vm918, %v892, 0
        %v1109 = vsel %vm918, %v893, 0
        %1111 = vmatprep.subr.bf16.mxu0 0
        %1112 = vmatpush1.bf16.msra.mxu0 0
        %1113 = vmatprep.subr.bf16.mxu0 0
        %1114 = vmatpush1.bf16.msra.mxu0 0
        %1115 = vmatprep.subr.bf16.mxu0 0
        %1116 = vmatpush1.bf16.msra.mxu0 0
        %1117 = vmatprep.subr.bf16.mxu0 0
        %1118 = vmatpush1.bf16.msra.mxu0 0
        %1119 = vmatprep.subr.bf16.mxu0 0
        %1120 = vmatpush1.bf16.msra.mxu0 %v913
        %1121 = vmatprep.subr.bf16.mxu0 0
        %1122 = vmatpush1.bf16.msra.mxu0 %v912
        %1123 = vmatprep.subr.bf16.mxu0 0
        %1124 = vmatpush1.bf16.msra.mxu0 %v911
        %1125 = vmatprep.subr.bf16.mxu0 0
        %1126 = vmatpush1.bf16.msra.mxu0 %v910
        %1127 = vmatprep.subr.bf16.mxu0 0
        %1128 = vmatpush2.bf16.msra.mxu0 0
        %1129 = vmatprep.subr.bf16.mxu0 0
        %1130 = vmatpush2.bf16.msra.mxu0 0
        %1131 = vmatprep.subr.bf16.mxu0 0
        %1132 = vmatpush2.bf16.msra.mxu0 0
        %1133 = vmatprep.subr.bf16.mxu0 0
        %1134 = vmatpush2.bf16.msra.mxu0 0
        %1135 = vmatprep.subr.bf16.mxu0 0
        %1136 = vmatpush2.bf16.msra.mxu0 0
        %1137 = vmatprep.subr.bf16.mxu0 0
        %1138 = vmatpush2.bf16.msra.mxu0 0
        %1139 = vmatprep.subr.bf16.mxu0 0
        %1140 = vmatpush2.bf16.msra.mxu0 0
        %1141 = vmatprep.subr.bf16.mxu0 0
        %1142 = vmatpush2.bf16.msra.mxu0 0
        %1143 = vmatprep.mubr.bf16.mxu0 0
        %1144 = vmatmul.mubr.bf16.gmra.mxu0 %v920
        %v1145 = vpop.f32.mrf.mxu0
        %v1146 = vadd.f32 0.0, %v1145
        %v1147 = vpop.f32.mrf.mxu0
        %v1148 = vpop.f32.mrf.mxu0
        %v1149 = vadd.f32 0.0, %v1148
        %v1150 = vpop.f32.mrf.mxu0
        %1151 = vmatprep.mubr.bf16.mxu0 0
        %1152 = vmatmul.mubr.bf16.gmra.mxu0 %v923
        %v1153 = vpop.f32.mrf.mxu0
        %v1154 = vadd.f32 0.0, %v1153
        %v1155 = vpop.f32.mrf.mxu0
        %v1156 = vpop.f32.mrf.mxu0
        %v1157 = vadd.f32 0.0, %v1156
        %v1158 = vpop.f32.mrf.mxu0
        %1159 = vmatprep.mubr.bf16.mxu0 0
        %1160 = vmatmul.mubr.bf16.gmra.mxu0 %v926
        %v1161 = vpop.f32.mrf.mxu0
        %v1162 = vadd.f32 0.0, %v1161
        %v1163 = vpop.f32.mrf.mxu0
        %v1164 = vpop.f32.mrf.mxu0
        %v1165 = vadd.f32 0.0, %v1164
        %v1166 = vpop.f32.mrf.mxu0
        %1167 = vmatprep.mubr.bf16.mxu0 0
        %1168 = vmatmul.mubr.bf16.gmra.mxu0 %v929
        %v1169 = vpop.f32.mrf.mxu0
        %v1170 = vadd.f32 0.0, %v1169
        %v1171 = vpop.f32.mrf.mxu0
        %v1172 = vpop.f32.mrf.mxu0
        %v1173 = vadd.f32 0.0, %v1172
        %v1174 = vpop.f32.mrf.mxu0
        %1175 = vmatprep.mubr.bf16.mxu0 0
        %1176 = vmatmul.mubr.bf16.gmra.mxu0 %v932
        %v1177 = vpop.f32.mrf.mxu0
        %v1178 = vadd.f32 0.0, %v1177
        %v1179 = vpop.f32.mrf.mxu0
        %v1180 = vpop.f32.mrf.mxu0
        %v1181 = vadd.f32 0.0, %v1180
        %v1182 = vpop.f32.mrf.mxu0
        %1183 = vmatprep.mubr.bf16.mxu0 0
        %1184 = vmatmul.mubr.bf16.gmra.mxu0 %v935
        %v1185 = vpop.f32.mrf.mxu0
        %v1186 = vadd.f32 0.0, %v1185
        %v1187 = vpop.f32.mrf.mxu0
        %v1188 = vpop.f32.mrf.mxu0
        %v1189 = vadd.f32 0.0, %v1188
        %v1190 = vpop.f32.mrf.mxu0
        %1191 = vmatprep.mubr.bf16.mxu0 0
        %1192 = vmatmul.mubr.bf16.gmra.mxu0 %v938
        %v1193 = vpop.f32.mrf.mxu0
        %v1194 = vadd.f32 0.0, %v1193
        %v1195 = vpop.f32.mrf.mxu0
        %v1196 = vpop.f32.mrf.mxu0
        %v1197 = vadd.f32 0.0, %v1196
        %v1198 = vpop.f32.mrf.mxu0
        %1199 = vmatprep.mubr.bf16.mxu0 0
        %1200 = vmatmul.mubr.bf16.gmra.mxu0 %v941
        %v1201 = vpop.f32.mrf.mxu0
        %v1202 = vadd.f32 0.0, %v1201
        %v1203 = vpop.f32.mrf.mxu0
        %v1204 = vpop.f32.mrf.mxu0
        %v1205 = vadd.f32 0.0, %v1204
        %v1206 = vpop.f32.mrf.mxu0
        %1207 = vmatprep.mubr.bf16.mxu0 0
        %1208 = vmatmul.mubr.bf16.gmra.mxu0 %v944
        %v1209 = vpop.f32.mrf.mxu0
        %v1210 = vadd.f32 0.0, %v1209
        %v1211 = vpop.f32.mrf.mxu0
        %v1212 = vpop.f32.mrf.mxu0
        %v1213 = vadd.f32 0.0, %v1212
        %v1214 = vpop.f32.mrf.mxu0
        %1215 = vmatprep.mubr.bf16.mxu0 0
        %1216 = vmatmul.mubr.bf16.gmra.mxu0 %v947
        %v1217 = vpop.f32.mrf.mxu0
        %v1218 = vadd.f32 0.0, %v1217
        %v1219 = vpop.f32.mrf.mxu0
        %v1220 = vpop.f32.mrf.mxu0
        %v1221 = vadd.f32 0.0, %v1220
        %v1222 = vpop.f32.mrf.mxu0
        %1223 = vmatprep.mubr.bf16.mxu0 0
        %1224 = vmatmul.mubr.bf16.gmra.mxu0 %v950
        %v1225 = vpop.f32.mrf.mxu0
        %v1226 = vadd.f32 0.0, %v1225
        %v1227 = vpop.f32.mrf.mxu0
        %v1228 = vpop.f32.mrf.mxu0
        %v1229 = vadd.f32 0.0, %v1228
        %v1230 = vpop.f32.mrf.mxu0
        %1231 = vmatprep.mubr.bf16.mxu0 0
        %1232 = vmatmul.mubr.bf16.gmra.mxu0 %v953
        %v1233 = vpop.f32.mrf.mxu0
        %v1234 = vadd.f32 0.0, %v1233
        %v1235 = vpop.f32.mrf.mxu0
        %v1236 = vpop.f32.mrf.mxu0
        %v1237 = vadd.f32 0.0, %v1236
        %v1238 = vpop.f32.mrf.mxu0
        %1239 = vmatprep.mubr.bf16.mxu0 0
        %1240 = vmatmul.mubr.bf16.gmra.mxu0 %v956
        %v1241 = vpop.f32.mrf.mxu0
        %v1242 = vadd.f32 0.0, %v1241
        %v1243 = vpop.f32.mrf.mxu0
        %v1244 = vpop.f32.mrf.mxu0
        %v1245 = vadd.f32 0.0, %v1244
        %v1246 = vpop.f32.mrf.mxu0
        %1247 = vmatprep.mubr.bf16.mxu0 0
        %1248 = vmatmul.mubr.bf16.gmra.mxu0 %v959
        %v1249 = vpop.f32.mrf.mxu0
        %v1250 = vadd.f32 0.0, %v1249
        %v1251 = vpop.f32.mrf.mxu0
        %v1252 = vpop.f32.mrf.mxu0
        %v1253 = vadd.f32 0.0, %v1252
        %v1254 = vpop.f32.mrf.mxu0
        %1255 = vmatprep.mubr.bf16.mxu0 0
        %1256 = vmatmul.mubr.bf16.gmra.mxu0 %v962
        %v1257 = vpop.f32.mrf.mxu0
        %v1258 = vadd.f32 0.0, %v1257
        %v1259 = vpop.f32.mrf.mxu0
        %v1260 = vpop.f32.mrf.mxu0
        %v1261 = vadd.f32 0.0, %v1260
        %v1262 = vpop.f32.mrf.mxu0
        %1263 = vmatprep.mubr.bf16.mxu0 0
        %1264 = vmatmul.mubr.bf16.gmra.mxu0 %v965
        %v1265 = vpop.f32.mrf.mxu0
        %v1266 = vadd.f32 0.0, %v1265
        %v1267 = vpop.f32.mrf.mxu0
        %v1268 = vpop.f32.mrf.mxu0
        %v1269 = vadd.f32 0.0, %v1268
        %v1270 = vpop.f32.mrf.mxu0
        %1271 = vmatprep.mubr.bf16.mxu0 0
        %1272 = vmatmul.mubr.bf16.gmra.mxu0 %v968
        %v1273 = vpop.f32.mrf.mxu0
        %v1274 = vadd.f32 0.0, %v1273
        %v1275 = vpop.f32.mrf.mxu0
        %v1276 = vpop.f32.mrf.mxu0
        %v1277 = vadd.f32 0.0, %v1276
        %v1278 = vpop.f32.mrf.mxu0
        %1279 = vmatprep.mubr.bf16.mxu0 0
        %1280 = vmatmul.mubr.bf16.gmra.mxu0 %v971
        %v1281 = vpop.f32.mrf.mxu0
        %v1282 = vadd.f32 0.0, %v1281
        %v1283 = vpop.f32.mrf.mxu0
        %v1284 = vpop.f32.mrf.mxu0
        %v1285 = vadd.f32 0.0, %v1284
        %v1286 = vpop.f32.mrf.mxu0
        %1287 = vmatprep.mubr.bf16.mxu0 0
        %1288 = vmatmul.mubr.bf16.gmra.mxu0 %v974
        %v1289 = vpop.f32.mrf.mxu0
        %v1290 = vadd.f32 0.0, %v1289
        %v1291 = vpop.f32.mrf.mxu0
        %v1292 = vpop.f32.mrf.mxu0
        %v1293 = vadd.f32 0.0, %v1292
        %v1294 = vpop.f32.mrf.mxu0
        %1295 = vmatprep.mubr.bf16.mxu0 0
        %1296 = vmatmul.mubr.bf16.gmra.mxu0 %v977
        %v1297 = vpop.f32.mrf.mxu0
        %v1298 = vadd.f32 0.0, %v1297
        %v1299 = vpop.f32.mrf.mxu0
        %v1300 = vpop.f32.mrf.mxu0
        %v1301 = vadd.f32 0.0, %v1300
        %v1302 = vpop.f32.mrf.mxu0
        %1303 = vmatprep.mubr.bf16.mxu0 0
        %1304 = vmatmul.mubr.bf16.gmra.mxu0 %v980
        %v1305 = vpop.f32.mrf.mxu0
        %v1306 = vadd.f32 0.0, %v1305
        %v1307 = vpop.f32.mrf.mxu0
        %v1308 = vpop.f32.mrf.mxu0
        %v1309 = vadd.f32 0.0, %v1308
        %v1310 = vpop.f32.mrf.mxu0
        %1311 = vmatprep.mubr.bf16.mxu0 0
        %1312 = vmatmul.mubr.bf16.gmra.mxu0 %v983
        %v1313 = vpop.f32.mrf.mxu0
        %v1314 = vadd.f32 0.0, %v1313
        %v1315 = vpop.f32.mrf.mxu0
        %v1316 = vpop.f32.mrf.mxu0
        %v1317 = vadd.f32 0.0, %v1316
        %v1318 = vpop.f32.mrf.mxu0
        %1319 = vmatprep.mubr.bf16.mxu0 0
        %1320 = vmatmul.mubr.bf16.gmra.mxu0 %v986
        %v1321 = vpop.f32.mrf.mxu0
        %v1322 = vadd.f32 0.0, %v1321
        %v1323 = vpop.f32.mrf.mxu0
        %v1324 = vpop.f32.mrf.mxu0
        %v1325 = vadd.f32 0.0, %v1324
        %v1326 = vpop.f32.mrf.mxu0
        %1327 = vmatprep.mubr.bf16.mxu0 0
        %1328 = vmatmul.mubr.bf16.gmra.mxu0 %v989
        %v1329 = vpop.f32.mrf.mxu0
        %v1330 = vadd.f32 0.0, %v1329
        %v1331 = vpop.f32.mrf.mxu0
        %v1332 = vpop.f32.mrf.mxu0
        %v1333 = vadd.f32 0.0, %v1332
        %v1334 = vpop.f32.mrf.mxu0
        %1335 = vmatprep.mubr.bf16.mxu0 0
        %1336 = vmatmul.mubr.bf16.gmra.mxu0 %v992
        %v1337 = vpop.f32.mrf.mxu0
        %v1338 = vadd.f32 0.0, %v1337
        %v1339 = vpop.f32.mrf.mxu0
        %v1340 = vpop.f32.mrf.mxu0
        %v1341 = vadd.f32 0.0, %v1340
        %v1342 = vpop.f32.mrf.mxu0
        %1343 = vmatprep.mubr.bf16.mxu0 0
        %1344 = vmatmul.mubr.bf16.gmra.mxu0 %v995
        %v1345 = vpop.f32.mrf.mxu0
        %v1346 = vadd.f32 0.0, %v1345
        %v1347 = vpop.f32.mrf.mxu0
        %v1348 = vpop.f32.mrf.mxu0
        %v1349 = vadd.f32 0.0, %v1348
        %v1350 = vpop.f32.mrf.mxu0
        %1351 = vmatprep.mubr.bf16.mxu0 0
        %1352 = vmatmul.mubr.bf16.gmra.mxu0 %v998
        %v1353 = vpop.f32.mrf.mxu0
        %v1354 = vadd.f32 0.0, %v1353
        %v1355 = vpop.f32.mrf.mxu0
        %v1356 = vpop.f32.mrf.mxu0
        %v1357 = vadd.f32 0.0, %v1356
        %v1358 = vpop.f32.mrf.mxu0
        %1359 = vmatprep.mubr.bf16.mxu0 0
        %1360 = vmatmul.mubr.bf16.gmra.mxu0 %v1001
        %v1361 = vpop.f32.mrf.mxu0
        %v1362 = vadd.f32 0.0, %v1361
        %v1363 = vpop.f32.mrf.mxu0
        %v1364 = vpop.f32.mrf.mxu0
        %v1365 = vadd.f32 0.0, %v1364
        %v1366 = vpop.f32.mrf.mxu0
        %1367 = vmatprep.mubr.bf16.mxu0 0
        %1368 = vmatmul.mubr.bf16.gmra.mxu0 %v1004
        %v1369 = vpop.f32.mrf.mxu0
        %v1370 = vadd.f32 0.0, %v1369
        %v1371 = vpop.f32.mrf.mxu0
        %v1372 = vpop.f32.mrf.mxu0
        %v1373 = vadd.f32 0.0, %v1372
        %v1374 = vpop.f32.mrf.mxu0
        %1375 = vmatprep.mubr.bf16.mxu0 0
        %1376 = vmatmul.mubr.bf16.gmra.mxu0 %v1007
        %v1377 = vpop.f32.mrf.mxu0
        %v1378 = vadd.f32 0.0, %v1377
        %v1379 = vpop.f32.mrf.mxu0
        %v1380 = vpop.f32.mrf.mxu0
        %v1381 = vadd.f32 0.0, %v1380
        %v1382 = vpop.f32.mrf.mxu0
        %1383 = vmatprep.mubr.bf16.mxu0 0
        %1384 = vmatmul.mubr.bf16.gmra.mxu0 %v1010
        %v1385 = vpop.f32.mrf.mxu0
        %v1386 = vadd.f32 0.0, %v1385
        %v1387 = vpop.f32.mrf.mxu0
        %v1388 = vpop.f32.mrf.mxu0
        %v1389 = vadd.f32 0.0, %v1388
        %v1390 = vpop.f32.mrf.mxu0
        %1391 = vmatprep.mubr.bf16.mxu0 0
        %1392 = vmatmul.mubr.bf16.gmra.mxu0 %v1013
        %v1393 = vpop.f32.mrf.mxu0
        %v1394 = vadd.f32 0.0, %v1393
        %v1395 = vpop.f32.mrf.mxu0
        %v1396 = vpop.f32.mrf.mxu0
        %v1397 = vadd.f32 0.0, %v1396
        %v1398 = vpop.f32.mrf.mxu0
        %1399 = vmatprep.mubr.bf16.mxu0 0
        %1400 = vmatmul.mubr.bf16.gmra.mxu0 %v1016
        %v1401 = vpop.f32.mrf.mxu0
        %v1402 = vadd.f32 0.0, %v1401
        %v1403 = vpop.f32.mrf.mxu0
        %v1404 = vpop.f32.mrf.mxu0
        %v1405 = vadd.f32 0.0, %v1404
        %v1406 = vpop.f32.mrf.mxu0
        %1407 = vmatprep.mubr.bf16.mxu0 0
        %1408 = vmatmul.mubr.bf16.gmra.mxu0 %v1019
        %v1409 = vpop.f32.mrf.mxu0
        %v1410 = vadd.f32 0.0, %v1409
        %v1411 = vpop.f32.mrf.mxu0
        %v1412 = vpop.f32.mrf.mxu0
        %v1413 = vadd.f32 0.0, %v1412
        %v1414 = vpop.f32.mrf.mxu0
        %1415 = vmatprep.mubr.bf16.mxu0 0
        %1416 = vmatmul.mubr.bf16.gmra.mxu0 %v1022
        %v1417 = vpop.f32.mrf.mxu0
        %v1418 = vadd.f32 0.0, %v1417
        %v1419 = vpop.f32.mrf.mxu0
        %v1420 = vpop.f32.mrf.mxu0
        %v1421 = vadd.f32 0.0, %v1420
        %v1422 = vpop.f32.mrf.mxu0
        %1423 = vmatprep.mubr.bf16.mxu0 0
        %1424 = vmatmul.mubr.bf16.gmra.mxu0 %v1025
        %v1425 = vpop.f32.mrf.mxu0
        %v1426 = vadd.f32 0.0, %v1425
        %v1427 = vpop.f32.mrf.mxu0
        %v1428 = vpop.f32.mrf.mxu0
        %v1429 = vadd.f32 0.0, %v1428
        %v1430 = vpop.f32.mrf.mxu0
        %1431 = vmatprep.mubr.bf16.mxu0 0
        %1432 = vmatmul.mubr.bf16.gmra.mxu0 %v1028
        %v1433 = vpop.f32.mrf.mxu0
        %v1434 = vadd.f32 0.0, %v1433
        %v1435 = vpop.f32.mrf.mxu0
        %v1436 = vpop.f32.mrf.mxu0
        %v1437 = vadd.f32 0.0, %v1436
        %v1438 = vpop.f32.mrf.mxu0
        %1439 = vmatprep.mubr.bf16.mxu0 0
        %1440 = vmatmul.mubr.bf16.gmra.mxu0 %v1031
        %v1441 = vpop.f32.mrf.mxu0
        %v1442 = vadd.f32 0.0, %v1441
        %v1443 = vpop.f32.mrf.mxu0
        %v1444 = vpop.f32.mrf.mxu0
        %v1445 = vadd.f32 0.0, %v1444
        %v1446 = vpop.f32.mrf.mxu0
        %1447 = vmatprep.mubr.bf16.mxu0 0
        %1448 = vmatmul.mubr.bf16.gmra.mxu0 %v1034
        %v1449 = vpop.f32.mrf.mxu0
        %v1450 = vadd.f32 0.0, %v1449
        %v1451 = vpop.f32.mrf.mxu0
        %v1452 = vpop.f32.mrf.mxu0
        %v1453 = vadd.f32 0.0, %v1452
        %v1454 = vpop.f32.mrf.mxu0
        %1455 = vmatprep.mubr.bf16.mxu0 0
        %1456 = vmatmul.mubr.bf16.gmra.mxu0 %v1037
        %v1457 = vpop.f32.mrf.mxu0
        %v1458 = vadd.f32 0.0, %v1457
        %v1459 = vpop.f32.mrf.mxu0
        %v1460 = vpop.f32.mrf.mxu0
        %v1461 = vadd.f32 0.0, %v1460
        %v1462 = vpop.f32.mrf.mxu0
        %1463 = vmatprep.mubr.bf16.mxu0 0
        %1464 = vmatmul.mubr.bf16.gmra.mxu0 %v1040
        %v1465 = vpop.f32.mrf.mxu0
        %v1466 = vadd.f32 0.0, %v1465
        %v1467 = vpop.f32.mrf.mxu0
        %v1468 = vpop.f32.mrf.mxu0
        %v1469 = vadd.f32 0.0, %v1468
        %v1470 = vpop.f32.mrf.mxu0
        %1471 = vmatprep.mubr.bf16.mxu0 0
        %1472 = vmatmul.mubr.bf16.gmra.mxu0 %v1043
        %v1473 = vpop.f32.mrf.mxu0
        %v1474 = vadd.f32 0.0, %v1473
        %v1475 = vpop.f32.mrf.mxu0
        %v1476 = vpop.f32.mrf.mxu0
        %v1477 = vadd.f32 0.0, %v1476
        %v1478 = vpop.f32.mrf.mxu0
        %1479 = vmatprep.mubr.bf16.mxu0 0
        %1480 = vmatmul.mubr.bf16.gmra.mxu0 %v1046
        %v1481 = vpop.f32.mrf.mxu0
        %v1482 = vadd.f32 0.0, %v1481
        %v1483 = vpop.f32.mrf.mxu0
        %v1484 = vpop.f32.mrf.mxu0
        %v1485 = vadd.f32 0.0, %v1484
        %v1486 = vpop.f32.mrf.mxu0
        %1487 = vmatprep.mubr.bf16.mxu0 0
        %1488 = vmatmul.mubr.bf16.gmra.mxu0 %v1049
        %v1489 = vpop.f32.mrf.mxu0
        %v1490 = vadd.f32 0.0, %v1489
        %v1491 = vpop.f32.mrf.mxu0
        %v1492 = vpop.f32.mrf.mxu0
        %v1493 = vadd.f32 0.0, %v1492
        %v1494 = vpop.f32.mrf.mxu0
        %1495 = vmatprep.mubr.bf16.mxu0 0
        %1496 = vmatmul.mubr.bf16.gmra.mxu0 %v1052
        %v1497 = vpop.f32.mrf.mxu0
        %v1498 = vadd.f32 0.0, %v1497
        %v1499 = vpop.f32.mrf.mxu0
        %v1500 = vpop.f32.mrf.mxu0
        %v1501 = vadd.f32 0.0, %v1500
        %v1502 = vpop.f32.mrf.mxu0
        %1503 = vmatprep.mubr.bf16.mxu0 0
        %1504 = vmatmul.mubr.bf16.gmra.mxu0 %v1055
        %v1505 = vpop.f32.mrf.mxu0
        %v1506 = vadd.f32 0.0, %v1505
        %v1507 = vpop.f32.mrf.mxu0
        %v1508 = vpop.f32.mrf.mxu0
        %v1509 = vadd.f32 0.0, %v1508
        %v1510 = vpop.f32.mrf.mxu0
        %1511 = vmatprep.mubr.bf16.mxu0 0
        %1512 = vmatmul.mubr.bf16.gmra.mxu0 %v1058
        %v1513 = vpop.f32.mrf.mxu0
        %v1514 = vadd.f32 0.0, %v1513
        %v1515 = vpop.f32.mrf.mxu0
        %v1516 = vpop.f32.mrf.mxu0
        %v1517 = vadd.f32 0.0, %v1516
        %v1518 = vpop.f32.mrf.mxu0
        %1519 = vmatprep.mubr.bf16.mxu0 0
        %1520 = vmatmul.mubr.bf16.gmra.mxu0 %v1061
        %v1521 = vpop.f32.mrf.mxu0
        %v1522 = vadd.f32 0.0, %v1521
        %v1523 = vpop.f32.mrf.mxu0
        %v1524 = vpop.f32.mrf.mxu0
        %v1525 = vadd.f32 0.0, %v1524
        %v1526 = vpop.f32.mrf.mxu0
        %1527 = vmatprep.mubr.bf16.mxu0 0
        %1528 = vmatmul.mubr.bf16.gmra.mxu0 %v1064
        %v1529 = vpop.f32.mrf.mxu0
        %v1530 = vadd.f32 0.0, %v1529
        %v1531 = vpop.f32.mrf.mxu0
        %v1532 = vpop.f32.mrf.mxu0
        %v1533 = vadd.f32 0.0, %v1532
        %v1534 = vpop.f32.mrf.mxu0
        %1535 = vmatprep.mubr.bf16.mxu0 0
        %1536 = vmatmul.mubr.bf16.gmra.mxu0 %v1067
        %v1537 = vpop.f32.mrf.mxu0
        %v1538 = vadd.f32 0.0, %v1537
        %v1539 = vpop.f32.mrf.mxu0
        %v1540 = vpop.f32.mrf.mxu0
        %v1541 = vadd.f32 0.0, %v1540
        %v1542 = vpop.f32.mrf.mxu0
        %1543 = vmatprep.mubr.bf16.mxu0 0
        %1544 = vmatmul.mubr.bf16.gmra.mxu0 %v1070
        %v1545 = vpop.f32.mrf.mxu0
        %v1546 = vadd.f32 0.0, %v1545
        %v1547 = vpop.f32.mrf.mxu0
        %v1548 = vpop.f32.mrf.mxu0
        %v1549 = vadd.f32 0.0, %v1548
        %v1550 = vpop.f32.mrf.mxu0
        %1551 = vmatprep.mubr.bf16.mxu0 0
        %1552 = vmatmul.mubr.bf16.gmra.mxu0 %v1073
        %v1553 = vpop.f32.mrf.mxu0
        %v1554 = vadd.f32 0.0, %v1553
        %v1555 = vpop.f32.mrf.mxu0
        %v1556 = vpop.f32.mrf.mxu0
        %v1557 = vadd.f32 0.0, %v1556
        %v1558 = vpop.f32.mrf.mxu0
        %1559 = vmatprep.mubr.bf16.mxu0 0
        %1560 = vmatmul.mubr.bf16.gmra.mxu0 %v1076
        %v1561 = vpop.f32.mrf.mxu0
        %v1562 = vadd.f32 0.0, %v1561
        %v1563 = vpop.f32.mrf.mxu0
        %v1564 = vpop.f32.mrf.mxu0
        %v1565 = vadd.f32 0.0, %v1564
        %v1566 = vpop.f32.mrf.mxu0
        %1567 = vmatprep.mubr.bf16.mxu0 0
        %1568 = vmatmul.mubr.bf16.gmra.mxu0 %v1079
        %v1569 = vpop.f32.mrf.mxu0
        %v1570 = vadd.f32 0.0, %v1569
        %v1571 = vpop.f32.mrf.mxu0
        %v1572 = vpop.f32.mrf.mxu0
        %v1573 = vadd.f32 0.0, %v1572
        %v1574 = vpop.f32.mrf.mxu0
        %1575 = vmatprep.mubr.bf16.mxu0 0
        %1576 = vmatmul.mubr.bf16.gmra.mxu0 %v1082
        %v1577 = vpop.f32.mrf.mxu0
        %v1578 = vadd.f32 0.0, %v1577
        %v1579 = vpop.f32.mrf.mxu0
        %v1580 = vpop.f32.mrf.mxu0
        %v1581 = vadd.f32 0.0, %v1580
        %v1582 = vpop.f32.mrf.mxu0
        %1583 = vmatprep.mubr.bf16.mxu0 0
        %1584 = vmatmul.mubr.bf16.gmra.mxu0 %v1085
        %v1585 = vpop.f32.mrf.mxu0
        %v1586 = vadd.f32 0.0, %v1585
        %v1587 = vpop.f32.mrf.mxu0
        %v1588 = vpop.f32.mrf.mxu0
        %v1589 = vadd.f32 0.0, %v1588
        %v1590 = vpop.f32.mrf.mxu0
        %1591 = vmatprep.mubr.bf16.mxu0 0
        %1592 = vmatmul.mubr.bf16.gmra.mxu0 %v1088
        %v1593 = vpop.f32.mrf.mxu0
        %v1594 = vadd.f32 0.0, %v1593
        %v1595 = vpop.f32.mrf.mxu0
        %v1596 = vpop.f32.mrf.mxu0
        %v1597 = vadd.f32 0.0, %v1596
        %v1598 = vpop.f32.mrf.mxu0
        %1599 = vmatprep.mubr.bf16.mxu0 0
        %1600 = vmatmul.mubr.bf16.gmra.mxu0 %v1091
        %v1601 = vpop.f32.mrf.mxu0
        %v1602 = vadd.f32 0.0, %v1601
        %v1603 = vpop.f32.mrf.mxu0
        %v1604 = vpop.f32.mrf.mxu0
        %v1605 = vadd.f32 0.0, %v1604
        %v1606 = vpop.f32.mrf.mxu0
        %1607 = vmatprep.mubr.bf16.mxu0 0
        %1608 = vmatmul.mubr.bf16.gmra.mxu0 %v1094
        %v1609 = vpop.f32.mrf.mxu0
        %v1610 = vadd.f32 0.0, %v1609
        %v1611 = vpop.f32.mrf.mxu0
        %v1612 = vpop.f32.mrf.mxu0
        %v1613 = vadd.f32 0.0, %v1612
        %v1614 = vpop.f32.mrf.mxu0
        %1615 = vmatprep.mubr.bf16.mxu0 0
        %1616 = vmatmul.mubr.bf16.gmra.mxu0 %v1097
        %v1617 = vpop.f32.mrf.mxu0
        %v1618 = vadd.f32 0.0, %v1617
        %v1619 = vpop.f32.mrf.mxu0
        %v1620 = vpop.f32.mrf.mxu0
        %v1621 = vadd.f32 0.0, %v1620
        %v1622 = vpop.f32.mrf.mxu0
        %1623 = vmatprep.mubr.bf16.mxu0 0
        %1624 = vmatmul.mubr.bf16.gmra.mxu0 %v1100
        %v1625 = vpop.f32.mrf.mxu0
        %v1626 = vadd.f32 0.0, %v1625
        %v1627 = vpop.f32.mrf.mxu0
        %v1628 = vpop.f32.mrf.mxu0
        %v1629 = vadd.f32 0.0, %v1628
        %v1630 = vpop.f32.mrf.mxu0
        %1631 = vmatprep.mubr.bf16.mxu0 0
        %1632 = vmatmul.mubr.bf16.gmra.mxu0 %v1103
        %v1633 = vpop.f32.mrf.mxu0
        %v1634 = vadd.f32 0.0, %v1633
        %v1635 = vpop.f32.mrf.mxu0
        %v1636 = vpop.f32.mrf.mxu0
        %v1637 = vadd.f32 0.0, %v1636
        %v1638 = vpop.f32.mrf.mxu0
        %1639 = vmatprep.mubr.bf16.mxu0 0
        %1640 = vmatmul.mubr.bf16.gmra.mxu0 %v1106
        %v1641 = vpop.f32.mrf.mxu0
        %v1642 = vadd.f32 0.0, %v1641
        %v1643 = vpop.f32.mrf.mxu0
        %v1644 = vpop.f32.mrf.mxu0
        %v1645 = vadd.f32 0.0, %v1644
        %v1646 = vpop.f32.mrf.mxu0
        %1647 = vmatprep.mubr.bf16.mxu0 0
        %1648 = vmatmul.mubr.bf16.gmra.mxu0 %v1109
        %v1649 = vpop.f32.mrf.mxu0
        %v1650 = vadd.f32 0.0, %v1649
        %v1651 = vpop.f32.mrf.mxu0
        %v1652 = vpop.f32.mrf.mxu0
        %v1653 = vadd.f32 0.0, %v1652
        %v1654 = vpop.f32.mrf.mxu0
        %1655 = vdwg.mxu0
        %v1656 = vld [vmem:[%s434] sm:$0xff]
        %v1657 = vld [vmem:[%s434 + $0x8] sm:$0xff]
        %v1658 = vld [vmem:[%s434 + $0x10] sm:$0xff]
        %v1659 = vld [vmem:[%s434 + $0x18] sm:$0xff]
        %v1660 = vld [vmem:[%s434 + $0x20] sm:$0xff]
        %v1661 = vld [vmem:[%s434 + $0x28] sm:$0xff]
        %v1662 = vld [vmem:[%s434 + $0x30] sm:$0xff]
        %v1663 = vld [vmem:[%s434 + $0x38] sm:$0xff]
        %v1664 = vld [vmem:[%s434 + $0x40] sm:$0xff]
        %v1665 = vld [vmem:[%s434 + $0x48] sm:$0xff]
        %v1666 = vld [vmem:[%s434 + $0x50] sm:$0xff]
        %v1667 = vld [vmem:[%s434 + $0x58] sm:$0xff]
        %v1668 = vld [vmem:[%s434 + $0x60] sm:$0xff]
        %v1669 = vld [vmem:[%s434 + $0x68] sm:$0xff]
        %v1670 = vld [vmem:[%s434 + $0x70] sm:$0xff]
        %v1671 = vld [vmem:[%s434 + $0x78] sm:$0xff]
        %v1672 = vpack.c.bf16 %v1657, %v1656
        %v1673 = vpack.c.bf16 %v1659, %v1658
        %v1674 = vpack.c.bf16 %v1661, %v1660
        %v1675 = vpack.c.bf16 %v1663, %v1662
        %v1676 = vpack.c.bf16 %v1665, %v1664
        %v1677 = vpack.c.bf16 %v1667, %v1666
        %v1678 = vpack.c.bf16 %v1669, %v1668
        %v1679 = vpack.c.bf16 %v1671, %v1670
        %v1680 = vld [vmem:[%s3] sm:$0xff]
        %v1681 = vld [vmem:[%s3 + $0x8] sm:$0xff]
        %v1682 = vld [vmem:[%s3 + $0x10] sm:$0xff]
        %v1683 = vld [vmem:[%s3 + $0x18] sm:$0xff]
        %v1684 = vld [vmem:[%s3 + $0x20] sm:$0xff]
        %v1685 = vld [vmem:[%s3 + $0x28] sm:$0xff]
        %v1686 = vld [vmem:[%s3 + $0x30] sm:$0xff]
        %v1687 = vld [vmem:[%s3 + $0x38] sm:$0xff]
        %v1696 = vunpack.c.l.b16 %v1680
        %v1697 = vunpack.c.h.b16 %v1680
        %v1698 = vunpack.c.l.b16 %v1681
        %v1699 = vunpack.c.h.b16 %v1681
        %v1700 = vunpack.c.l.b16 %v1682
        %v1701 = vunpack.c.h.b16 %v1682
        %v1702 = vunpack.c.l.b16 %v1683
        %v1703 = vunpack.c.h.b16 %v1683
        %v1704 = vunpack.c.l.b16 %v1684
        %v1705 = vunpack.c.h.b16 %v1684
        %v1706 = vunpack.c.l.b16 %v1685
        %v1707 = vunpack.c.h.b16 %v1685
        %v1708 = vunpack.c.l.b16 %v1686
        %v1709 = vunpack.c.h.b16 %v1686
        %v1710 = vunpack.c.l.b16 %v1687
        %v1711 = vunpack.c.h.b16 %v1687
        %v1712 = vpack.c.b16 %v1698, %v1696
        %v1713 = vpack.c.b16 %v1699, %v1697
        %v1714 = vpack.c.b16 %v1702, %v1700
        %v1715 = vpack.c.b16 %v1703, %v1701
        %v1716 = vpack.c.b16 %v1706, %v1704
        %v1717 = vpack.c.b16 %v1707, %v1705
        %v1718 = vpack.c.b16 %v1710, %v1708
        %v1719 = vpack.c.b16 %v1711, %v1709
        %v1729 = vsel %vm918, %v1672, 0
        %v1732 = vsel %vm918, %v1673, 0
        %v1735 = vsel %vm918, %v1674, 0
        %v1738 = vsel %vm918, %v1675, 0
        %v1741 = vsel %vm918, %v1676, 0
        %v1744 = vsel %vm918, %v1677, 0
        %v1747 = vsel %vm918, %v1678, 0
        %v1750 = vsel %vm918, %v1679, 0
        %1752 = vmatprep.subr.bf16.mxu0 0
        %1753 = vmatpush1.bf16.msra.mxu0 0
        %1754 = vmatprep.subr.bf16.mxu0 0
        %1755 = vmatpush1.bf16.msra.mxu0 0
        %1756 = vmatprep.subr.bf16.mxu0 0
        %1757 = vmatpush1.bf16.msra.mxu0 0
        %1758 = vmatprep.subr.bf16.mxu0 0
        %1759 = vmatpush1.bf16.msra.mxu0 0
        %1760 = vmatprep.subr.bf16.mxu0 %v1719
        %1761 = vmatpush1.bf16.msra.mxu0 %v1718
        %1762 = vmatprep.subr.bf16.mxu0 %v1717
        %1763 = vmatpush1.bf16.msra.mxu0 %v1716
        %1764 = vmatprep.subr.bf16.mxu0 %v1715
        %1765 = vmatpush1.bf16.msra.mxu0 %v1714
        %1766 = vmatprep.subr.bf16.mxu0 %v1713
        %1767 = vmatpush1.bf16.msra.mxu0 %v1712
        %1768 = vmatprep.subr.bf16.mxu0 0
        %1769 = vmatpush2.bf16.msra.mxu0 0
        %1770 = vmatprep.subr.bf16.mxu0 0
        %1771 = vmatpush2.bf16.msra.mxu0 0
        %1772 = vmatprep.subr.bf16.mxu0 0
        %1773 = vmatpush2.bf16.msra.mxu0 0
        %1774 = vmatprep.subr.bf16.mxu0 0
        %1775 = vmatpush2.bf16.msra.mxu0 0
        %1776 = vmatprep.subr.bf16.mxu0 0
        %1777 = vmatpush2.bf16.msra.mxu0 0
        %1778 = vmatprep.subr.bf16.mxu0 0
        %1779 = vmatpush2.bf16.msra.mxu0 0
        %1780 = vmatprep.subr.bf16.mxu0 0
        %1781 = vmatpush2.bf16.msra.mxu0 0
        %1782 = vmatprep.subr.bf16.mxu0 0
        %1783 = vmatpush2.bf16.msra.mxu0 0
        %1784 = vmatprep.mubr.bf16.mxu0 0
        %1785 = vmatmul.mubr.bf16.gmra.mxu0 %v1729
        %v1786 = vpop.f32.mrf.mxu0
        %v1787 = vadd.f32 0.0, %v1786
        %v1788 = vpop.f32.mrf.mxu0
        %v1789 = vadd.f32 0.0, %v1788
        %v1790 = vpop.f32.mrf.mxu0
        %v1791 = vadd.f32 0.0, %v1790
        %v1792 = vpop.f32.mrf.mxu0
        %v1793 = vadd.f32 0.0, %v1792
        %1794 = vmatprep.mubr.bf16.mxu0 0
        %1795 = vmatmul.mubr.bf16.gmra.mxu0 %v1732
        %v1796 = vpop.f32.mrf.mxu0
        %v1797 = vadd.f32 0.0, %v1796
        %v1798 = vpop.f32.mrf.mxu0
        %v1799 = vadd.f32 0.0, %v1798
        %v1800 = vpop.f32.mrf.mxu0
        %v1801 = vadd.f32 0.0, %v1800
        %v1802 = vpop.f32.mrf.mxu0
        %v1803 = vadd.f32 0.0, %v1802
        %1804 = vmatprep.mubr.bf16.mxu0 0
        %1805 = vmatmul.mubr.bf16.gmra.mxu0 %v1735
        %v1806 = vpop.f32.mrf.mxu0
        %v1807 = vadd.f32 0.0, %v1806
        %v1808 = vpop.f32.mrf.mxu0
        %v1809 = vadd.f32 0.0, %v1808
        %v1810 = vpop.f32.mrf.mxu0
        %v1811 = vadd.f32 0.0, %v1810
        %v1812 = vpop.f32.mrf.mxu0
        %v1813 = vadd.f32 0.0, %v1812
        %1814 = vmatprep.mubr.bf16.mxu0 0
        %1815 = vmatmul.mubr.bf16.gmra.mxu0 %v1738
        %v1816 = vpop.f32.mrf.mxu0
        %v1817 = vadd.f32 0.0, %v1816
        %v1818 = vpop.f32.mrf.mxu0
        %v1819 = vadd.f32 0.0, %v1818
        %v1820 = vpop.f32.mrf.mxu0
        %v1821 = vadd.f32 0.0, %v1820
        %v1822 = vpop.f32.mrf.mxu0
        %v1823 = vadd.f32 0.0, %v1822
        %1824 = vmatprep.mubr.bf16.mxu0 0
        %1825 = vmatmul.mubr.bf16.gmra.mxu0 %v1741
        %v1826 = vpop.f32.mrf.mxu0
        %v1827 = vadd.f32 0.0, %v1826
        %v1828 = vpop.f32.mrf.mxu0
        %v1829 = vadd.f32 0.0, %v1828
        %v1830 = vpop.f32.mrf.mxu0
        %v1831 = vadd.f32 0.0, %v1830
        %v1832 = vpop.f32.mrf.mxu0
        %v1833 = vadd.f32 0.0, %v1832
        %1834 = vmatprep.mubr.bf16.mxu0 0
        %1835 = vmatmul.mubr.bf16.gmra.mxu0 %v1744
        %v1836 = vpop.f32.mrf.mxu0
        %v1837 = vadd.f32 0.0, %v1836
        %v1838 = vpop.f32.mrf.mxu0
        %v1839 = vadd.f32 0.0, %v1838
        %v1840 = vpop.f32.mrf.mxu0
        %v1841 = vadd.f32 0.0, %v1840
        %v1842 = vpop.f32.mrf.mxu0
        %v1843 = vadd.f32 0.0, %v1842
        %1844 = vmatprep.mubr.bf16.mxu0 0
        %1845 = vmatmul.mubr.bf16.gmra.mxu0 %v1747
        %v1846 = vpop.f32.mrf.mxu0
        %v1847 = vadd.f32 0.0, %v1846
        %v1848 = vpop.f32.mrf.mxu0
        %v1849 = vadd.f32 0.0, %v1848
        %v1850 = vpop.f32.mrf.mxu0
        %v1851 = vadd.f32 0.0, %v1850
        %v1852 = vpop.f32.mrf.mxu0
        %v1853 = vadd.f32 0.0, %v1852
        %1854 = vmatprep.mubr.bf16.mxu0 0
        %1855 = vmatmul.mubr.bf16.gmra.mxu0 %v1750
        %v1856 = vpop.f32.mrf.mxu0
        %v1857 = vadd.f32 0.0, %v1856
        %v1858 = vpop.f32.mrf.mxu0
        %v1859 = vadd.f32 0.0, %v1858
        %v1860 = vpop.f32.mrf.mxu0
        %v1861 = vadd.f32 0.0, %v1860
        %v1862 = vpop.f32.mrf.mxu0
        %v1863 = vadd.f32 0.0, %v1862
        %1864 = vdwg.mxu0
        %v1881 = vcombine.high %v1787, %v1787
        %v1883 = vunpack.c.l.s4 1966171168
        %v1884 = vunpack.c.0.s8 %v1883
        %v1885 = vlaneseq
        %v1886 = vshrl.u32 %v1885, 7
        %v1887 = vsub.s32 %v1884, %v1886
        %v1888 = vrot.slane %v1787, %v1887
        %v1890 = vunpack.c.l.s4 1966171168
        %v1891 = vunpack.c.0.s8 %v1890
        %v1892 = vlaneseq
        %v1893 = vshrl.u32 %v1892, 7
        %v1894 = vsub.s32 %v1891, %v1893
        %v1895 = vrot.slane %v1881, %v1894
        %v1896 = vcombine.high %v1888, %v1888
        %v1897 = vcombine.high %v1895, %v1895
        %v1899 = vunpack.c.l.s4 1966171168
        %v1900 = vunpack.c.0.s8 %v1899
        %v1901 = vlaneseq
        %v1902 = vshrl.u32 %v1901, 7
        %v1903 = vsub.s32 %v1900, %v1902
        %v1904 = vrot.slane %v1888, %v1903
        %v1906 = vunpack.c.l.s4 1966171168
        %v1907 = vunpack.c.0.s8 %v1906
        %v1908 = vlaneseq
        %v1909 = vshrl.u32 %v1908, 7
        %v1910 = vsub.s32 %v1907, %v1909
        %v1911 = vrot.slane %v1895, %v1910
        %v1913 = vunpack.c.l.s4 1966171168
        %v1914 = vunpack.c.0.s8 %v1913
        %v1915 = vlaneseq
        %v1916 = vshrl.u32 %v1915, 7
        %v1917 = vsub.s32 %v1914, %v1916
        %v1918 = vrot.slane %v1896, %v1917
        %v1920 = vunpack.c.l.s4 1966171168
        %v1921 = vunpack.c.0.s8 %v1920
        %v1922 = vlaneseq
        %v1923 = vshrl.u32 %v1922, 7
        %v1924 = vsub.s32 %v1921, %v1923
        %v1925 = vrot.slane %v1897, %v1924
        %v1926 = vcombine.high %v1904, %v1904
        %v1927 = vcombine.high %v1911, %v1911
        %v1928 = vcombine.high %v1918, %v1918
        %v1929 = vcombine.high %v1925, %v1925
        %v1930 = vcombine.high %v1791, %v1791
        %v1932 = vunpack.c.l.s4 1966171168
        %v1933 = vunpack.c.0.s8 %v1932
        %v1934 = vlaneseq
        %v1935 = vshrl.u32 %v1934, 7
        %v1936 = vsub.s32 %v1933, %v1935
        %v1937 = vrot.slane %v1791, %v1936
        %v1939 = vunpack.c.l.s4 1966171168
        %v1940 = vunpack.c.0.s8 %v1939
        %v1941 = vlaneseq
        %v1942 = vshrl.u32 %v1941, 7
        %v1943 = vsub.s32 %v1940, %v1942
        %v1944 = vrot.slane %v1930, %v1943
        %v1945 = vcombine.high %v1937, %v1937
        %v1946 = vcombine.high %v1944, %v1944
        %v1948 = vunpack.c.l.s4 1966171168
        %v1949 = vunpack.c.0.s8 %v1948
        %v1950 = vlaneseq
        %v1951 = vshrl.u32 %v1950, 7
        %v1952 = vsub.s32 %v1949, %v1951
        %v1953 = vrot.slane %v1937, %v1952
        %v1955 = vunpack.c.l.s4 1966171168
        %v1956 = vunpack.c.0.s8 %v1955
        %v1957 = vlaneseq
        %v1958 = vshrl.u32 %v1957, 7
        %v1959 = vsub.s32 %v1956, %v1958
        %v1960 = vrot.slane %v1944, %v1959
        %v1962 = vunpack.c.l.s4 1966171168
        %v1963 = vunpack.c.0.s8 %v1962
        %v1964 = vlaneseq
        %v1965 = vshrl.u32 %v1964, 7
        %v1966 = vsub.s32 %v1963, %v1965
        %v1967 = vrot.slane %v1945, %v1966
        %v1969 = vunpack.c.l.s4 1966171168
        %v1970 = vunpack.c.0.s8 %v1969
        %v1971 = vlaneseq
        %v1972 = vshrl.u32 %v1971, 7
        %v1973 = vsub.s32 %v1970, %v1972
        %v1974 = vrot.slane %v1946, %v1973
        %v1975 = vcombine.high %v1953, %v1953
        %v1976 = vcombine.high %v1960, %v1960
        %v1977 = vcombine.high %v1967, %v1967
        %v1978 = vcombine.high %v1974, %v1974
        %v1979 = vcombine.high %v1797, %v1797
        %v1981 = vunpack.c.l.s4 1966171168
        %v1982 = vunpack.c.0.s8 %v1981
        %v1983 = vlaneseq
        %v1984 = vshrl.u32 %v1983, 7
        %v1985 = vsub.s32 %v1982, %v1984
        %v1986 = vrot.slane %v1797, %v1985
        %v1988 = vunpack.c.l.s4 1966171168
        %v1989 = vunpack.c.0.s8 %v1988
        %v1990 = vlaneseq
        %v1991 = vshrl.u32 %v1990, 7
        %v1992 = vsub.s32 %v1989, %v1991
        %v1993 = vrot.slane %v1979, %v1992
        %v1994 = vcombine.high %v1986, %v1986
        %v1995 = vcombine.high %v1993, %v1993
        %v1997 = vunpack.c.l.s4 1966171168
        %v1998 = vunpack.c.0.s8 %v1997
        %v1999 = vlaneseq
        %v2000 = vshrl.u32 %v1999, 7
        %v2001 = vsub.s32 %v1998, %v2000
        %v2002 = vrot.slane %v1986, %v2001
        %v2004 = vunpack.c.l.s4 1966171168
        %v2005 = vunpack.c.0.s8 %v2004
        %v2006 = vlaneseq
        %v2007 = vshrl.u32 %v2006, 7
        %v2008 = vsub.s32 %v2005, %v2007
        %v2009 = vrot.slane %v1993, %v2008
        %v2011 = vunpack.c.l.s4 1966171168
        %v2012 = vunpack.c.0.s8 %v2011
        %v2013 = vlaneseq
        %v2014 = vshrl.u32 %v2013, 7
        %v2015 = vsub.s32 %v2012, %v2014
        %v2016 = vrot.slane %v1994, %v2015
        %v2018 = vunpack.c.l.s4 1966171168
        %v2019 = vunpack.c.0.s8 %v2018
        %v2020 = vlaneseq
        %v2021 = vshrl.u32 %v2020, 7
        %v2022 = vsub.s32 %v2019, %v2021
        %v2023 = vrot.slane %v1995, %v2022
        %v2024 = vcombine.high %v2002, %v2002
        %v2025 = vcombine.high %v2009, %v2009
        %v2026 = vcombine.high %v2016, %v2016
        %v2027 = vcombine.high %v2023, %v2023
        %v2028 = vcombine.high %v1801, %v1801
        %v2030 = vunpack.c.l.s4 1966171168
        %v2031 = vunpack.c.0.s8 %v2030
        %v2032 = vlaneseq
        %v2033 = vshrl.u32 %v2032, 7
        %v2034 = vsub.s32 %v2031, %v2033
        %v2035 = vrot.slane %v1801, %v2034
        %v2037 = vunpack.c.l.s4 1966171168
        %v2038 = vunpack.c.0.s8 %v2037
        %v2039 = vlaneseq
        %v2040 = vshrl.u32 %v2039, 7
        %v2041 = vsub.s32 %v2038, %v2040
        %v2042 = vrot.slane %v2028, %v2041
        %v2043 = vcombine.high %v2035, %v2035
        %v2044 = vcombine.high %v2042, %v2042
        %v2046 = vunpack.c.l.s4 1966171168
        %v2047 = vunpack.c.0.s8 %v2046
        %v2048 = vlaneseq
        %v2049 = vshrl.u32 %v2048, 7
        %v2050 = vsub.s32 %v2047, %v2049
        %v2051 = vrot.slane %v2035, %v2050
        %v2053 = vunpack.c.l.s4 1966171168
        %v2054 = vunpack.c.0.s8 %v2053
        %v2055 = vlaneseq
        %v2056 = vshrl.u32 %v2055, 7
        %v2057 = vsub.s32 %v2054, %v2056
        %v2058 = vrot.slane %v2042, %v2057
        %v2060 = vunpack.c.l.s4 1966171168
        %v2061 = vunpack.c.0.s8 %v2060
        %v2062 = vlaneseq
        %v2063 = vshrl.u32 %v2062, 7
        %v2064 = vsub.s32 %v2061, %v2063
        %v2065 = vrot.slane %v2043, %v2064
        %v2067 = vunpack.c.l.s4 1966171168
        %v2068 = vunpack.c.0.s8 %v2067
        %v2069 = vlaneseq
        %v2070 = vshrl.u32 %v2069, 7
        %v2071 = vsub.s32 %v2068, %v2070
        %v2072 = vrot.slane %v2044, %v2071
        %v2073 = vcombine.high %v2051, %v2051
        %v2074 = vcombine.high %v2058, %v2058
        %v2075 = vcombine.high %v2065, %v2065
        %v2076 = vcombine.high %v2072, %v2072
        %v2077 = vcombine.high %v1807, %v1807
        %v2079 = vunpack.c.l.s4 1966171168
        %v2080 = vunpack.c.0.s8 %v2079
        %v2081 = vlaneseq
        %v2082 = vshrl.u32 %v2081, 7
        %v2083 = vsub.s32 %v2080, %v2082
        %v2084 = vrot.slane %v1807, %v2083
        %v2086 = vunpack.c.l.s4 1966171168
        %v2087 = vunpack.c.0.s8 %v2086
        %v2088 = vlaneseq
        %v2089 = vshrl.u32 %v2088, 7
        %v2090 = vsub.s32 %v2087, %v2089
        %v2091 = vrot.slane %v2077, %v2090
        %v2092 = vcombine.high %v2084, %v2084
        %v2093 = vcombine.high %v2091, %v2091
        %v2095 = vunpack.c.l.s4 1966171168
        %v2096 = vunpack.c.0.s8 %v2095
        %v2097 = vlaneseq
        %v2098 = vshrl.u32 %v2097, 7
        %v2099 = vsub.s32 %v2096, %v2098
        %v2100 = vrot.slane %v2084, %v2099
        %v2102 = vunpack.c.l.s4 1966171168
        %v2103 = vunpack.c.0.s8 %v2102
        %v2104 = vlaneseq
        %v2105 = vshrl.u32 %v2104, 7
        %v2106 = vsub.s32 %v2103, %v2105
        %v2107 = vrot.slane %v2091, %v2106
        %v2109 = vunpack.c.l.s4 1966171168
        %v2110 = vunpack.c.0.s8 %v2109
        %v2111 = vlaneseq
        %v2112 = vshrl.u32 %v2111, 7
        %v2113 = vsub.s32 %v2110, %v2112
        %v2114 = vrot.slane %v2092, %v2113
        %v2116 = vunpack.c.l.s4 1966171168
        %v2117 = vunpack.c.0.s8 %v2116
        %v2118 = vlaneseq
        %v2119 = vshrl.u32 %v2118, 7
        %v2120 = vsub.s32 %v2117, %v2119
        %v2121 = vrot.slane %v2093, %v2120
        %v2122 = vcombine.high %v2100, %v2100
        %v2123 = vcombine.high %v2107, %v2107
        %v2124 = vcombine.high %v2114, %v2114
        %v2125 = vcombine.high %v2121, %v2121
        %v2126 = vcombine.high %v1811, %v1811
        %v2128 = vunpack.c.l.s4 1966171168
        %v2129 = vunpack.c.0.s8 %v2128
        %v2130 = vlaneseq
        %v2131 = vshrl.u32 %v2130, 7
        %v2132 = vsub.s32 %v2129, %v2131
        %v2133 = vrot.slane %v1811, %v2132
        %v2135 = vunpack.c.l.s4 1966171168
        %v2136 = vunpack.c.0.s8 %v2135
        %v2137 = vlaneseq
        %v2138 = vshrl.u32 %v2137, 7
        %v2139 = vsub.s32 %v2136, %v2138
        %v2140 = vrot.slane %v2126, %v2139
        %v2141 = vcombine.high %v2133, %v2133
        %v2142 = vcombine.high %v2140, %v2140
        %v2144 = vunpack.c.l.s4 1966171168
        %v2145 = vunpack.c.0.s8 %v2144
        %v2146 = vlaneseq
        %v2147 = vshrl.u32 %v2146, 7
        %v2148 = vsub.s32 %v2145, %v2147
        %v2149 = vrot.slane %v2133, %v2148
        %v2151 = vunpack.c.l.s4 1966171168
        %v2152 = vunpack.c.0.s8 %v2151
        %v2153 = vlaneseq
        %v2154 = vshrl.u32 %v2153, 7
        %v2155 = vsub.s32 %v2152, %v2154
        %v2156 = vrot.slane %v2140, %v2155
        %v2158 = vunpack.c.l.s4 1966171168
        %v2159 = vunpack.c.0.s8 %v2158
        %v2160 = vlaneseq
        %v2161 = vshrl.u32 %v2160, 7
        %v2162 = vsub.s32 %v2159, %v2161
        %v2163 = vrot.slane %v2141, %v2162
        %v2165 = vunpack.c.l.s4 1966171168
        %v2166 = vunpack.c.0.s8 %v2165
        %v2167 = vlaneseq
        %v2168 = vshrl.u32 %v2167, 7
        %v2169 = vsub.s32 %v2166, %v2168
        %v2170 = vrot.slane %v2142, %v2169
        %v2171 = vcombine.high %v2149, %v2149
        %v2172 = vcombine.high %v2156, %v2156
        %v2173 = vcombine.high %v2163, %v2163
        %v2174 = vcombine.high %v2170, %v2170
        %v2175 = vcombine.high %v1817, %v1817
        %v2177 = vunpack.c.l.s4 1966171168
        %v2178 = vunpack.c.0.s8 %v2177
        %v2179 = vlaneseq
        %v2180 = vshrl.u32 %v2179, 7
        %v2181 = vsub.s32 %v2178, %v2180
        %v2182 = vrot.slane %v1817, %v2181
        %v2184 = vunpack.c.l.s4 1966171168
        %v2185 = vunpack.c.0.s8 %v2184
        %v2186 = vlaneseq
        %v2187 = vshrl.u32 %v2186, 7
        %v2188 = vsub.s32 %v2185, %v2187
        %v2189 = vrot.slane %v2175, %v2188
        %v2190 = vcombine.high %v2182, %v2182
        %v2191 = vcombine.high %v2189, %v2189
        %v2193 = vunpack.c.l.s4 1966171168
        %v2194 = vunpack.c.0.s8 %v2193
        %v2195 = vlaneseq
        %v2196 = vshrl.u32 %v2195, 7
        %v2197 = vsub.s32 %v2194, %v2196
        %v2198 = vrot.slane %v2182, %v2197
        %v2200 = vunpack.c.l.s4 1966171168
        %v2201 = vunpack.c.0.s8 %v2200
        %v2202 = vlaneseq
        %v2203 = vshrl.u32 %v2202, 7
        %v2204 = vsub.s32 %v2201, %v2203
        %v2205 = vrot.slane %v2189, %v2204
        %v2207 = vunpack.c.l.s4 1966171168
        %v2208 = vunpack.c.0.s8 %v2207
        %v2209 = vlaneseq
        %v2210 = vshrl.u32 %v2209, 7
        %v2211 = vsub.s32 %v2208, %v2210
        %v2212 = vrot.slane %v2190, %v2211
        %v2214 = vunpack.c.l.s4 1966171168
        %v2215 = vunpack.c.0.s8 %v2214
        %v2216 = vlaneseq
        %v2217 = vshrl.u32 %v2216, 7
        %v2218 = vsub.s32 %v2215, %v2217
        %v2219 = vrot.slane %v2191, %v2218
        %v2220 = vcombine.high %v2198, %v2198
        %v2221 = vcombine.high %v2205, %v2205
        %v2222 = vcombine.high %v2212, %v2212
        %v2223 = vcombine.high %v2219, %v2219
        %v2224 = vcombine.high %v1821, %v1821
        %v2226 = vunpack.c.l.s4 1966171168
        %v2227 = vunpack.c.0.s8 %v2226
        %v2228 = vlaneseq
        %v2229 = vshrl.u32 %v2228, 7
        %v2230 = vsub.s32 %v2227, %v2229
        %v2231 = vrot.slane %v1821, %v2230
        %v2233 = vunpack.c.l.s4 1966171168
        %v2234 = vunpack.c.0.s8 %v2233
        %v2235 = vlaneseq
        %v2236 = vshrl.u32 %v2235, 7
        %v2237 = vsub.s32 %v2234, %v2236
        %v2238 = vrot.slane %v2224, %v2237
        %v2239 = vcombine.high %v2231, %v2231
        %v2240 = vcombine.high %v2238, %v2238
        %v2242 = vunpack.c.l.s4 1966171168
        %v2243 = vunpack.c.0.s8 %v2242
        %v2244 = vlaneseq
        %v2245 = vshrl.u32 %v2244, 7
        %v2246 = vsub.s32 %v2243, %v2245
        %v2247 = vrot.slane %v2231, %v2246
        %v2249 = vunpack.c.l.s4 1966171168
        %v2250 = vunpack.c.0.s8 %v2249
        %v2251 = vlaneseq
        %v2252 = vshrl.u32 %v2251, 7
        %v2253 = vsub.s32 %v2250, %v2252
        %v2254 = vrot.slane %v2238, %v2253
        %v2256 = vunpack.c.l.s4 1966171168
        %v2257 = vunpack.c.0.s8 %v2256
        %v2258 = vlaneseq
        %v2259 = vshrl.u32 %v2258, 7
        %v2260 = vsub.s32 %v2257, %v2259
        %v2261 = vrot.slane %v2239, %v2260
        %v2263 = vunpack.c.l.s4 1966171168
        %v2264 = vunpack.c.0.s8 %v2263
        %v2265 = vlaneseq
        %v2266 = vshrl.u32 %v2265, 7
        %v2267 = vsub.s32 %v2264, %v2266
        %v2268 = vrot.slane %v2240, %v2267
        %v2269 = vcombine.high %v2247, %v2247
        %v2270 = vcombine.high %v2254, %v2254
        %v2271 = vcombine.high %v2261, %v2261
        %v2272 = vcombine.high %v2268, %v2268
        %v2273 = vcombine.high %v1827, %v1827
        %v2275 = vunpack.c.l.s4 1966171168
        %v2276 = vunpack.c.0.s8 %v2275
        %v2277 = vlaneseq
        %v2278 = vshrl.u32 %v2277, 7
        %v2279 = vsub.s32 %v2276, %v2278
        %v2280 = vrot.slane %v1827, %v2279
        %v2282 = vunpack.c.l.s4 1966171168
        %v2283 = vunpack.c.0.s8 %v2282
        %v2284 = vlaneseq
        %v2285 = vshrl.u32 %v2284, 7
        %v2286 = vsub.s32 %v2283, %v2285
        %v2287 = vrot.slane %v2273, %v2286
        %v2288 = vcombine.high %v2280, %v2280
        %v2289 = vcombine.high %v2287, %v2287
        %v2291 = vunpack.c.l.s4 1966171168
        %v2292 = vunpack.c.0.s8 %v2291
        %v2293 = vlaneseq
        %v2294 = vshrl.u32 %v2293, 7
        %v2295 = vsub.s32 %v2292, %v2294
        %v2296 = vrot.slane %v2280, %v2295
        %v2298 = vunpack.c.l.s4 1966171168
        %v2299 = vunpack.c.0.s8 %v2298
        %v2300 = vlaneseq
        %v2301 = vshrl.u32 %v2300, 7
        %v2302 = vsub.s32 %v2299, %v2301
        %v2303 = vrot.slane %v2287, %v2302
        %v2305 = vunpack.c.l.s4 1966171168
        %v2306 = vunpack.c.0.s8 %v2305
        %v2307 = vlaneseq
        %v2308 = vshrl.u32 %v2307, 7
        %v2309 = vsub.s32 %v2306, %v2308
        %v2310 = vrot.slane %v2288, %v2309
        %v2312 = vunpack.c.l.s4 1966171168
        %v2313 = vunpack.c.0.s8 %v2312
        %v2314 = vlaneseq
        %v2315 = vshrl.u32 %v2314, 7
        %v2316 = vsub.s32 %v2313, %v2315
        %v2317 = vrot.slane %v2289, %v2316
        %v2318 = vcombine.high %v2296, %v2296
        %v2319 = vcombine.high %v2303, %v2303
        %v2320 = vcombine.high %v2310, %v2310
        %v2321 = vcombine.high %v2317, %v2317
        %v2322 = vcombine.high %v1831, %v1831
        %v2324 = vunpack.c.l.s4 1966171168
        %v2325 = vunpack.c.0.s8 %v2324
        %v2326 = vlaneseq
        %v2327 = vshrl.u32 %v2326, 7
        %v2328 = vsub.s32 %v2325, %v2327
        %v2329 = vrot.slane %v1831, %v2328
        %v2331 = vunpack.c.l.s4 1966171168
        %v2332 = vunpack.c.0.s8 %v2331
        %v2333 = vlaneseq
        %v2334 = vshrl.u32 %v2333, 7
        %v2335 = vsub.s32 %v2332, %v2334
        %v2336 = vrot.slane %v2322, %v2335
        %v2337 = vcombine.high %v2329, %v2329
        %v2338 = vcombine.high %v2336, %v2336
        %v2340 = vunpack.c.l.s4 1966171168
        %v2341 = vunpack.c.0.s8 %v2340
        %v2342 = vlaneseq
        %v2343 = vshrl.u32 %v2342, 7
        %v2344 = vsub.s32 %v2341, %v2343
        %v2345 = vrot.slane %v2329, %v2344
        %v2347 = vunpack.c.l.s4 1966171168
        %v2348 = vunpack.c.0.s8 %v2347
        %v2349 = vlaneseq
        %v2350 = vshrl.u32 %v2349, 7
        %v2351 = vsub.s32 %v2348, %v2350
        %v2352 = vrot.slane %v2336, %v2351
        %v2354 = vunpack.c.l.s4 1966171168
        %v2355 = vunpack.c.0.s8 %v2354
        %v2356 = vlaneseq
        %v2357 = vshrl.u32 %v2356, 7
        %v2358 = vsub.s32 %v2355, %v2357
        %v2359 = vrot.slane %v2337, %v2358
        %v2361 = vunpack.c.l.s4 1966171168
        %v2362 = vunpack.c.0.s8 %v2361
        %v2363 = vlaneseq
        %v2364 = vshrl.u32 %v2363, 7
        %v2365 = vsub.s32 %v2362, %v2364
        %v2366 = vrot.slane %v2338, %v2365
        %v2367 = vcombine.high %v2345, %v2345
        %v2368 = vcombine.high %v2352, %v2352
        %v2369 = vcombine.high %v2359, %v2359
        %v2370 = vcombine.high %v2366, %v2366
        %v2371 = vcombine.high %v1837, %v1837
        %v2373 = vunpack.c.l.s4 1966171168
        %v2374 = vunpack.c.0.s8 %v2373
        %v2375 = vlaneseq
        %v2376 = vshrl.u32 %v2375, 7
        %v2377 = vsub.s32 %v2374, %v2376
        %v2378 = vrot.slane %v1837, %v2377
        %v2380 = vunpack.c.l.s4 1966171168
        %v2381 = vunpack.c.0.s8 %v2380
        %v2382 = vlaneseq
        %v2383 = vshrl.u32 %v2382, 7
        %v2384 = vsub.s32 %v2381, %v2383
        %v2385 = vrot.slane %v2371, %v2384
        %v2386 = vcombine.high %v2378, %v2378
        %v2387 = vcombine.high %v2385, %v2385
        %v2389 = vunpack.c.l.s4 1966171168
        %v2390 = vunpack.c.0.s8 %v2389
        %v2391 = vlaneseq
        %v2392 = vshrl.u32 %v2391, 7
        %v2393 = vsub.s32 %v2390, %v2392
        %v2394 = vrot.slane %v2378, %v2393
        %v2396 = vunpack.c.l.s4 1966171168
        %v2397 = vunpack.c.0.s8 %v2396
        %v2398 = vlaneseq
        %v2399 = vshrl.u32 %v2398, 7
        %v2400 = vsub.s32 %v2397, %v2399
        %v2401 = vrot.slane %v2385, %v2400
        %v2403 = vunpack.c.l.s4 1966171168
        %v2404 = vunpack.c.0.s8 %v2403
        %v2405 = vlaneseq
        %v2406 = vshrl.u32 %v2405, 7
        %v2407 = vsub.s32 %v2404, %v2406
        %v2408 = vrot.slane %v2386, %v2407
        %v2410 = vunpack.c.l.s4 1966171168
        %v2411 = vunpack.c.0.s8 %v2410
        %v2412 = vlaneseq
        %v2413 = vshrl.u32 %v2412, 7
        %v2414 = vsub.s32 %v2411, %v2413
        %v2415 = vrot.slane %v2387, %v2414
        %v2416 = vcombine.high %v2394, %v2394
        %v2417 = vcombine.high %v2401, %v2401
        %v2418 = vcombine.high %v2408, %v2408
        %v2419 = vcombine.high %v2415, %v2415
        %v2420 = vcombine.high %v1841, %v1841
        %v2422 = vunpack.c.l.s4 1966171168
        %v2423 = vunpack.c.0.s8 %v2422
        %v2424 = vlaneseq
        %v2425 = vshrl.u32 %v2424, 7
        %v2426 = vsub.s32 %v2423, %v2425
        %v2427 = vrot.slane %v1841, %v2426
        %v2429 = vunpack.c.l.s4 1966171168
        %v2430 = vunpack.c.0.s8 %v2429
        %v2431 = vlaneseq
        %v2432 = vshrl.u32 %v2431, 7
        %v2433 = vsub.s32 %v2430, %v2432
        %v2434 = vrot.slane %v2420, %v2433
        %v2435 = vcombine.high %v2427, %v2427
        %v2436 = vcombine.high %v2434, %v2434
        %v2438 = vunpack.c.l.s4 1966171168
        %v2439 = vunpack.c.0.s8 %v2438
        %v2440 = vlaneseq
        %v2441 = vshrl.u32 %v2440, 7
        %v2442 = vsub.s32 %v2439, %v2441
        %v2443 = vrot.slane %v2427, %v2442
        %v2445 = vunpack.c.l.s4 1966171168
        %v2446 = vunpack.c.0.s8 %v2445
        %v2447 = vlaneseq
        %v2448 = vshrl.u32 %v2447, 7
        %v2449 = vsub.s32 %v2446, %v2448
        %v2450 = vrot.slane %v2434, %v2449
        %v2452 = vunpack.c.l.s4 1966171168
        %v2453 = vunpack.c.0.s8 %v2452
        %v2454 = vlaneseq
        %v2455 = vshrl.u32 %v2454, 7
        %v2456 = vsub.s32 %v2453, %v2455
        %v2457 = vrot.slane %v2435, %v2456
        %v2459 = vunpack.c.l.s4 1966171168
        %v2460 = vunpack.c.0.s8 %v2459
        %v2461 = vlaneseq
        %v2462 = vshrl.u32 %v2461, 7
        %v2463 = vsub.s32 %v2460, %v2462
        %v2464 = vrot.slane %v2436, %v2463
        %v2465 = vcombine.high %v2443, %v2443
        %v2466 = vcombine.high %v2450, %v2450
        %v2467 = vcombine.high %v2457, %v2457
        %v2468 = vcombine.high %v2464, %v2464
        %v2469 = vcombine.high %v1847, %v1847
        %v2471 = vunpack.c.l.s4 1966171168
        %v2472 = vunpack.c.0.s8 %v2471
        %v2473 = vlaneseq
        %v2474 = vshrl.u32 %v2473, 7
        %v2475 = vsub.s32 %v2472, %v2474
        %v2476 = vrot.slane %v1847, %v2475
        %v2478 = vunpack.c.l.s4 1966171168
        %v2479 = vunpack.c.0.s8 %v2478
        %v2480 = vlaneseq
        %v2481 = vshrl.u32 %v2480, 7
        %v2482 = vsub.s32 %v2479, %v2481
        %v2483 = vrot.slane %v2469, %v2482
        %v2484 = vcombine.high %v2476, %v2476
        %v2485 = vcombine.high %v2483, %v2483
        %v2487 = vunpack.c.l.s4 1966171168
        %v2488 = vunpack.c.0.s8 %v2487
        %v2489 = vlaneseq
        %v2490 = vshrl.u32 %v2489, 7
        %v2491 = vsub.s32 %v2488, %v2490
        %v2492 = vrot.slane %v2476, %v2491
        %v2494 = vunpack.c.l.s4 1966171168
        %v2495 = vunpack.c.0.s8 %v2494
        %v2496 = vlaneseq
        %v2497 = vshrl.u32 %v2496, 7
        %v2498 = vsub.s32 %v2495, %v2497
        %v2499 = vrot.slane %v2483, %v2498
        %v2501 = vunpack.c.l.s4 1966171168
        %v2502 = vunpack.c.0.s8 %v2501
        %v2503 = vlaneseq
        %v2504 = vshrl.u32 %v2503, 7
        %v2505 = vsub.s32 %v2502, %v2504
        %v2506 = vrot.slane %v2484, %v2505
        %v2508 = vunpack.c.l.s4 1966171168
        %v2509 = vunpack.c.0.s8 %v2508
        %v2510 = vlaneseq
        %v2511 = vshrl.u32 %v2510, 7
        %v2512 = vsub.s32 %v2509, %v2511
        %v2513 = vrot.slane %v2485, %v2512
        %v2514 = vcombine.high %v2492, %v2492
        %v2515 = vcombine.high %v2499, %v2499
        %v2516 = vcombine.high %v2506, %v2506
        %v2517 = vcombine.high %v2513, %v2513
        %v2518 = vcombine.high %v1851, %v1851
        %v2520 = vunpack.c.l.s4 1966171168
        %v2521 = vunpack.c.0.s8 %v2520
        %v2522 = vlaneseq
        %v2523 = vshrl.u32 %v2522, 7
        %v2524 = vsub.s32 %v2521, %v2523
        %v2525 = vrot.slane %v1851, %v2524
        %v2527 = vunpack.c.l.s4 1966171168
        %v2528 = vunpack.c.0.s8 %v2527
        %v2529 = vlaneseq
        %v2530 = vshrl.u32 %v2529, 7
        %v2531 = vsub.s32 %v2528, %v2530
        %v2532 = vrot.slane %v2518, %v2531
        %v2533 = vcombine.high %v2525, %v2525
        %v2534 = vcombine.high %v2532, %v2532
        %v2536 = vunpack.c.l.s4 1966171168
        %v2537 = vunpack.c.0.s8 %v2536
        %v2538 = vlaneseq
        %v2539 = vshrl.u32 %v2538, 7
        %v2540 = vsub.s32 %v2537, %v2539
        %v2541 = vrot.slane %v2525, %v2540
        %v2543 = vunpack.c.l.s4 1966171168
        %v2544 = vunpack.c.0.s8 %v2543
        %v2545 = vlaneseq
        %v2546 = vshrl.u32 %v2545, 7
        %v2547 = vsub.s32 %v2544, %v2546
        %v2548 = vrot.slane %v2532, %v2547
        %v2550 = vunpack.c.l.s4 1966171168
        %v2551 = vunpack.c.0.s8 %v2550
        %v2552 = vlaneseq
        %v2553 = vshrl.u32 %v2552, 7
        %v2554 = vsub.s32 %v2551, %v2553
        %v2555 = vrot.slane %v2533, %v2554
        %v2557 = vunpack.c.l.s4 1966171168
        %v2558 = vunpack.c.0.s8 %v2557
        %v2559 = vlaneseq
        %v2560 = vshrl.u32 %v2559, 7
        %v2561 = vsub.s32 %v2558, %v2560
        %v2562 = vrot.slane %v2534, %v2561
        %v2563 = vcombine.high %v2541, %v2541
        %v2564 = vcombine.high %v2548, %v2548
        %v2565 = vcombine.high %v2555, %v2555
        %v2566 = vcombine.high %v2562, %v2562
        %v2567 = vcombine.high %v1857, %v1857
        %v2569 = vunpack.c.l.s4 1966171168
        %v2570 = vunpack.c.0.s8 %v2569
        %v2571 = vlaneseq
        %v2572 = vshrl.u32 %v2571, 7
        %v2573 = vsub.s32 %v2570, %v2572
        %v2574 = vrot.slane %v1857, %v2573
        %v2576 = vunpack.c.l.s4 1966171168
        %v2577 = vunpack.c.0.s8 %v2576
        %v2578 = vlaneseq
        %v2579 = vshrl.u32 %v2578, 7
        %v2580 = vsub.s32 %v2577, %v2579
        %v2581 = vrot.slane %v2567, %v2580
        %v2582 = vcombine.high %v2574, %v2574
        %v2583 = vcombine.high %v2581, %v2581
        %v2585 = vunpack.c.l.s4 1966171168
        %v2586 = vunpack.c.0.s8 %v2585
        %v2587 = vlaneseq
        %v2588 = vshrl.u32 %v2587, 7
        %v2589 = vsub.s32 %v2586, %v2588
        %v2590 = vrot.slane %v2574, %v2589
        %v2592 = vunpack.c.l.s4 1966171168
        %v2593 = vunpack.c.0.s8 %v2592
        %v2594 = vlaneseq
        %v2595 = vshrl.u32 %v2594, 7
        %v2596 = vsub.s32 %v2593, %v2595
        %v2597 = vrot.slane %v2581, %v2596
        %v2599 = vunpack.c.l.s4 1966171168
        %v2600 = vunpack.c.0.s8 %v2599
        %v2601 = vlaneseq
        %v2602 = vshrl.u32 %v2601, 7
        %v2603 = vsub.s32 %v2600, %v2602
        %v2604 = vrot.slane %v2582, %v2603
        %v2606 = vunpack.c.l.s4 1966171168
        %v2607 = vunpack.c.0.s8 %v2606
        %v2608 = vlaneseq
        %v2609 = vshrl.u32 %v2608, 7
        %v2610 = vsub.s32 %v2607, %v2609
        %v2611 = vrot.slane %v2583, %v2610
        %v2612 = vcombine.high %v2590, %v2590
        %v2613 = vcombine.high %v2597, %v2597
        %v2614 = vcombine.high %v2604, %v2604
        %v2615 = vcombine.high %v2611, %v2611
        %v2616 = vcombine.high %v1861, %v1861
        %v2618 = vunpack.c.l.s4 1966171168
        %v2619 = vunpack.c.0.s8 %v2618
        %v2620 = vlaneseq
        %v2621 = vshrl.u32 %v2620, 7
        %v2622 = vsub.s32 %v2619, %v2621
        %v2623 = vrot.slane %v1861, %v2622
        %v2625 = vunpack.c.l.s4 1966171168
        %v2626 = vunpack.c.0.s8 %v2625
        %v2627 = vlaneseq
        %v2628 = vshrl.u32 %v2627, 7
        %v2629 = vsub.s32 %v2626, %v2628
        %v2630 = vrot.slane %v2616, %v2629
        %v2631 = vcombine.high %v2623, %v2623
        %v2632 = vcombine.high %v2630, %v2630
        %v2634 = vunpack.c.l.s4 1966171168
        %v2635 = vunpack.c.0.s8 %v2634
        %v2636 = vlaneseq
        %v2637 = vshrl.u32 %v2636, 7
        %v2638 = vsub.s32 %v2635, %v2637
        %v2639 = vrot.slane %v2623, %v2638
        %v2641 = vunpack.c.l.s4 1966171168
        %v2642 = vunpack.c.0.s8 %v2641
        %v2643 = vlaneseq
        %v2644 = vshrl.u32 %v2643, 7
        %v2645 = vsub.s32 %v2642, %v2644
        %v2646 = vrot.slane %v2630, %v2645
        %v2648 = vunpack.c.l.s4 1966171168
        %v2649 = vunpack.c.0.s8 %v2648
        %v2650 = vlaneseq
        %v2651 = vshrl.u32 %v2650, 7
        %v2652 = vsub.s32 %v2649, %v2651
        %v2653 = vrot.slane %v2631, %v2652
        %v2655 = vunpack.c.l.s4 1966171168
        %v2656 = vunpack.c.0.s8 %v2655
        %v2657 = vlaneseq
        %v2658 = vshrl.u32 %v2657, 7
        %v2659 = vsub.s32 %v2656, %v2658
        %v2660 = vrot.slane %v2632, %v2659
        %v2661 = vcombine.high %v2639, %v2639
        %v2662 = vcombine.high %v2646, %v2646
        %v2663 = vcombine.high %v2653, %v2653
        %v2664 = vcombine.high %v2660, %v2660
        %v2665 = vlaneseq
        %v2666 = vshrl.u32 %v2665, 7
        %v2667 = vsub.s32 0, %v2666
        %v2668 = vrot.slane %v1904, %v2667
        %v2669 = vlaneseq
        %v2670 = vshrl.u32 %v2669, 7
        %v2671 = vsub.s32 0, %v2670
        %v2672 = vrot.slane %v1918, %v2671
        %v2673 = vlaneseq
        %v2674 = vshrl.u32 %v2673, 7
        %v2675 = vsub.s32 0, %v2674
        %v2676 = vrot.slane %v1926, %v2675
        %v2677 = vlaneseq
        %v2678 = vshrl.u32 %v2677, 7
        %v2679 = vsub.s32 0, %v2678
        %v2680 = vrot.slane %v1928, %v2679
        %v2681 = vlaneseq
        %v2682 = vshrl.u32 %v2681, 7
        %v2683 = vsub.s32 0, %v2682
        %v2684 = vrot.slane %v1911, %v2683
        %v2685 = vlaneseq
        %v2686 = vshrl.u32 %v2685, 7
        %v2687 = vsub.s32 0, %v2686
        %v2688 = vrot.slane %v1925, %v2687
        %v2689 = vlaneseq
        %v2690 = vshrl.u32 %v2689, 7
        %v2691 = vsub.s32 0, %v2690
        %v2692 = vrot.slane %v1927, %v2691
        %v2693 = vlaneseq
        %v2694 = vshrl.u32 %v2693, 7
        %v2695 = vsub.s32 0, %v2694
        %v2696 = vrot.slane %v1929, %v2695
        %v2697 = vlaneseq
        %v2698 = vshrl.u32 %v2697, 7
        %v2699 = vsub.s32 0, %v2698
        %v2700 = vrot.slane %v1953, %v2699
        %v2701 = vlaneseq
        %v2702 = vshrl.u32 %v2701, 7
        %v2703 = vsub.s32 0, %v2702
        %v2704 = vrot.slane %v1967, %v2703
        %v2705 = vlaneseq
        %v2706 = vshrl.u32 %v2705, 7
        %v2707 = vsub.s32 0, %v2706
        %v2708 = vrot.slane %v1975, %v2707
        %v2709 = vlaneseq
        %v2710 = vshrl.u32 %v2709, 7
        %v2711 = vsub.s32 0, %v2710
        %v2712 = vrot.slane %v1977, %v2711
        %v2713 = vlaneseq
        %v2714 = vshrl.u32 %v2713, 7
        %v2715 = vsub.s32 0, %v2714
        %v2716 = vrot.slane %v1960, %v2715
        %v2717 = vlaneseq
        %v2718 = vshrl.u32 %v2717, 7
        %v2719 = vsub.s32 0, %v2718
        %v2720 = vrot.slane %v1974, %v2719
        %v2721 = vlaneseq
        %v2722 = vshrl.u32 %v2721, 7
        %v2723 = vsub.s32 0, %v2722
        %v2724 = vrot.slane %v1976, %v2723
        %v2725 = vlaneseq
        %v2726 = vshrl.u32 %v2725, 7
        %v2727 = vsub.s32 0, %v2726
        %v2728 = vrot.slane %v1978, %v2727
        %v2729 = vlaneseq
        %v2730 = vshrl.u32 %v2729, 7
        %v2731 = vsub.s32 0, %v2730
        %v2732 = vrot.slane %v2002, %v2731
        %v2733 = vlaneseq
        %v2734 = vshrl.u32 %v2733, 7
        %v2735 = vsub.s32 0, %v2734
        %v2736 = vrot.slane %v2016, %v2735
        %v2737 = vlaneseq
        %v2738 = vshrl.u32 %v2737, 7
        %v2739 = vsub.s32 0, %v2738
        %v2740 = vrot.slane %v2024, %v2739
        %v2741 = vlaneseq
        %v2742 = vshrl.u32 %v2741, 7
        %v2743 = vsub.s32 0, %v2742
        %v2744 = vrot.slane %v2026, %v2743
        %v2745 = vlaneseq
        %v2746 = vshrl.u32 %v2745, 7
        %v2747 = vsub.s32 0, %v2746
        %v2748 = vrot.slane %v2009, %v2747
        %v2749 = vlaneseq
        %v2750 = vshrl.u32 %v2749, 7
        %v2751 = vsub.s32 0, %v2750
        %v2752 = vrot.slane %v2023, %v2751
        %v2753 = vlaneseq
        %v2754 = vshrl.u32 %v2753, 7
        %v2755 = vsub.s32 0, %v2754
        %v2756 = vrot.slane %v2025, %v2755
        %v2757 = vlaneseq
        %v2758 = vshrl.u32 %v2757, 7
        %v2759 = vsub.s32 0, %v2758
        %v2760 = vrot.slane %v2027, %v2759
        %v2761 = vlaneseq
        %v2762 = vshrl.u32 %v2761, 7
        %v2763 = vsub.s32 0, %v2762
        %v2764 = vrot.slane %v2051, %v2763
        %v2765 = vlaneseq
        %v2766 = vshrl.u32 %v2765, 7
        %v2767 = vsub.s32 0, %v2766
        %v2768 = vrot.slane %v2065, %v2767
        %v2769 = vlaneseq
        %v2770 = vshrl.u32 %v2769, 7
        %v2771 = vsub.s32 0, %v2770
        %v2772 = vrot.slane %v2073, %v2771
        %v2773 = vlaneseq
        %v2774 = vshrl.u32 %v2773, 7
        %v2775 = vsub.s32 0, %v2774
        %v2776 = vrot.slane %v2075, %v2775
        %v2777 = vlaneseq
        %v2778 = vshrl.u32 %v2777, 7
        %v2779 = vsub.s32 0, %v2778
        %v2780 = vrot.slane %v2058, %v2779
        %v2781 = vlaneseq
        %v2782 = vshrl.u32 %v2781, 7
        %v2783 = vsub.s32 0, %v2782
        %v2784 = vrot.slane %v2072, %v2783
        %v2785 = vlaneseq
        %v2786 = vshrl.u32 %v2785, 7
        %v2787 = vsub.s32 0, %v2786
        %v2788 = vrot.slane %v2074, %v2787
        %v2789 = vlaneseq
        %v2790 = vshrl.u32 %v2789, 7
        %v2791 = vsub.s32 0, %v2790
        %v2792 = vrot.slane %v2076, %v2791
        %v2793 = vlaneseq
        %v2794 = vshrl.u32 %v2793, 7
        %v2795 = vsub.s32 0, %v2794
        %v2796 = vrot.slane %v2100, %v2795
        %v2797 = vlaneseq
        %v2798 = vshrl.u32 %v2797, 7
        %v2799 = vsub.s32 0, %v2798
        %v2800 = vrot.slane %v2114, %v2799
        %v2801 = vlaneseq
        %v2802 = vshrl.u32 %v2801, 7
        %v2803 = vsub.s32 0, %v2802
        %v2804 = vrot.slane %v2122, %v2803
        %v2805 = vlaneseq
        %v2806 = vshrl.u32 %v2805, 7
        %v2807 = vsub.s32 0, %v2806
        %v2808 = vrot.slane %v2124, %v2807
        %v2809 = vlaneseq
        %v2810 = vshrl.u32 %v2809, 7
        %v2811 = vsub.s32 0, %v2810
        %v2812 = vrot.slane %v2107, %v2811
        %v2813 = vlaneseq
        %v2814 = vshrl.u32 %v2813, 7
        %v2815 = vsub.s32 0, %v2814
        %v2816 = vrot.slane %v2121, %v2815
        %v2817 = vlaneseq
        %v2818 = vshrl.u32 %v2817, 7
        %v2819 = vsub.s32 0, %v2818
        %v2820 = vrot.slane %v2123, %v2819
        %v2821 = vlaneseq
        %v2822 = vshrl.u32 %v2821, 7
        %v2823 = vsub.s32 0, %v2822
        %v2824 = vrot.slane %v2125, %v2823
        %v2825 = vlaneseq
        %v2826 = vshrl.u32 %v2825, 7
        %v2827 = vsub.s32 0, %v2826
        %v2828 = vrot.slane %v2149, %v2827
        %v2829 = vlaneseq
        %v2830 = vshrl.u32 %v2829, 7
        %v2831 = vsub.s32 0, %v2830
        %v2832 = vrot.slane %v2163, %v2831
        %v2833 = vlaneseq
        %v2834 = vshrl.u32 %v2833, 7
        %v2835 = vsub.s32 0, %v2834
        %v2836 = vrot.slane %v2171, %v2835
        %v2837 = vlaneseq
        %v2838 = vshrl.u32 %v2837, 7
        %v2839 = vsub.s32 0, %v2838
        %v2840 = vrot.slane %v2173, %v2839
        %v2841 = vlaneseq
        %v2842 = vshrl.u32 %v2841, 7
        %v2843 = vsub.s32 0, %v2842
        %v2844 = vrot.slane %v2156, %v2843
        %v2845 = vlaneseq
        %v2846 = vshrl.u32 %v2845, 7
        %v2847 = vsub.s32 0, %v2846
        %v2848 = vrot.slane %v2170, %v2847
        %v2849 = vlaneseq
        %v2850 = vshrl.u32 %v2849, 7
        %v2851 = vsub.s32 0, %v2850
        %v2852 = vrot.slane %v2172, %v2851
        %v2853 = vlaneseq
        %v2854 = vshrl.u32 %v2853, 7
        %v2855 = vsub.s32 0, %v2854
        %v2856 = vrot.slane %v2174, %v2855
        %v2857 = vlaneseq
        %v2858 = vshrl.u32 %v2857, 7
        %v2859 = vsub.s32 0, %v2858
        %v2860 = vrot.slane %v2198, %v2859
        %v2861 = vlaneseq
        %v2862 = vshrl.u32 %v2861, 7
        %v2863 = vsub.s32 0, %v2862
        %v2864 = vrot.slane %v2212, %v2863
        %v2865 = vlaneseq
        %v2866 = vshrl.u32 %v2865, 7
        %v2867 = vsub.s32 0, %v2866
        %v2868 = vrot.slane %v2220, %v2867
        %v2869 = vlaneseq
        %v2870 = vshrl.u32 %v2869, 7
        %v2871 = vsub.s32 0, %v2870
        %v2872 = vrot.slane %v2222, %v2871
        %v2873 = vlaneseq
        %v2874 = vshrl.u32 %v2873, 7
        %v2875 = vsub.s32 0, %v2874
        %v2876 = vrot.slane %v2205, %v2875
        %v2877 = vlaneseq
        %v2878 = vshrl.u32 %v2877, 7
        %v2879 = vsub.s32 0, %v2878
        %v2880 = vrot.slane %v2219, %v2879
        %v2881 = vlaneseq
        %v2882 = vshrl.u32 %v2881, 7
        %v2883 = vsub.s32 0, %v2882
        %v2884 = vrot.slane %v2221, %v2883
        %v2885 = vlaneseq
        %v2886 = vshrl.u32 %v2885, 7
        %v2887 = vsub.s32 0, %v2886
        %v2888 = vrot.slane %v2223, %v2887
        %v2889 = vlaneseq
        %v2890 = vshrl.u32 %v2889, 7
        %v2891 = vsub.s32 0, %v2890
        %v2892 = vrot.slane %v2247, %v2891
        %v2893 = vlaneseq
        %v2894 = vshrl.u32 %v2893, 7
        %v2895 = vsub.s32 0, %v2894
        %v2896 = vrot.slane %v2261, %v2895
        %v2897 = vlaneseq
        %v2898 = vshrl.u32 %v2897, 7
        %v2899 = vsub.s32 0, %v2898
        %v2900 = vrot.slane %v2269, %v2899
        %v2901 = vlaneseq
        %v2902 = vshrl.u32 %v2901, 7
        %v2903 = vsub.s32 0, %v2902
        %v2904 = vrot.slane %v2271, %v2903
        %v2905 = vlaneseq
        %v2906 = vshrl.u32 %v2905, 7
        %v2907 = vsub.s32 0, %v2906
        %v2908 = vrot.slane %v2254, %v2907
        %v2909 = vlaneseq
        %v2910 = vshrl.u32 %v2909, 7
        %v2911 = vsub.s32 0, %v2910
        %v2912 = vrot.slane %v2268, %v2911
        %v2913 = vlaneseq
        %v2914 = vshrl.u32 %v2913, 7
        %v2915 = vsub.s32 0, %v2914
        %v2916 = vrot.slane %v2270, %v2915
        %v2917 = vlaneseq
        %v2918 = vshrl.u32 %v2917, 7
        %v2919 = vsub.s32 0, %v2918
        %v2920 = vrot.slane %v2272, %v2919
        %v2921 = vlaneseq
        %v2922 = vshrl.u32 %v2921, 7
        %v2923 = vsub.s32 0, %v2922
        %v2924 = vrot.slane %v2296, %v2923
        %v2925 = vlaneseq
        %v2926 = vshrl.u32 %v2925, 7
        %v2927 = vsub.s32 0, %v2926
        %v2928 = vrot.slane %v2310, %v2927
        %v2929 = vlaneseq
        %v2930 = vshrl.u32 %v2929, 7
        %v2931 = vsub.s32 0, %v2930
        %v2932 = vrot.slane %v2318, %v2931
        %v2933 = vlaneseq
        %v2934 = vshrl.u32 %v2933, 7
        %v2935 = vsub.s32 0, %v2934
        %v2936 = vrot.slane %v2320, %v2935
        %v2937 = vlaneseq
        %v2938 = vshrl.u32 %v2937, 7
        %v2939 = vsub.s32 0, %v2938
        %v2940 = vrot.slane %v2303, %v2939
        %v2941 = vlaneseq
        %v2942 = vshrl.u32 %v2941, 7
        %v2943 = vsub.s32 0, %v2942
        %v2944 = vrot.slane %v2317, %v2943
        %v2945 = vlaneseq
        %v2946 = vshrl.u32 %v2945, 7
        %v2947 = vsub.s32 0, %v2946
        %v2948 = vrot.slane %v2319, %v2947
        %v2949 = vlaneseq
        %v2950 = vshrl.u32 %v2949, 7
        %v2951 = vsub.s32 0, %v2950
        %v2952 = vrot.slane %v2321, %v2951
        %v2953 = vlaneseq
        %v2954 = vshrl.u32 %v2953, 7
        %v2955 = vsub.s32 0, %v2954
        %v2956 = vrot.slane %v2345, %v2955
        %v2957 = vlaneseq
        %v2958 = vshrl.u32 %v2957, 7
        %v2959 = vsub.s32 0, %v2958
        %v2960 = vrot.slane %v2359, %v2959
        %v2961 = vlaneseq
        %v2962 = vshrl.u32 %v2961, 7
        %v2963 = vsub.s32 0, %v2962
        %v2964 = vrot.slane %v2367, %v2963
        %v2965 = vlaneseq
        %v2966 = vshrl.u32 %v2965, 7
        %v2967 = vsub.s32 0, %v2966
        %v2968 = vrot.slane %v2369, %v2967
        %v2969 = vlaneseq
        %v2970 = vshrl.u32 %v2969, 7
        %v2971 = vsub.s32 0, %v2970
        %v2972 = vrot.slane %v2352, %v2971
        %v2973 = vlaneseq
        %v2974 = vshrl.u32 %v2973, 7
        %v2975 = vsub.s32 0, %v2974
        %v2976 = vrot.slane %v2366, %v2975
        %v2977 = vlaneseq
        %v2978 = vshrl.u32 %v2977, 7
        %v2979 = vsub.s32 0, %v2978
        %v2980 = vrot.slane %v2368, %v2979
        %v2981 = vlaneseq
        %v2982 = vshrl.u32 %v2981, 7
        %v2983 = vsub.s32 0, %v2982
        %v2984 = vrot.slane %v2370, %v2983
        %v2985 = vlaneseq
        %v2986 = vshrl.u32 %v2985, 7
        %v2987 = vsub.s32 0, %v2986
        %v2988 = vrot.slane %v2394, %v2987
        %v2989 = vlaneseq
        %v2990 = vshrl.u32 %v2989, 7
        %v2991 = vsub.s32 0, %v2990
        %v2992 = vrot.slane %v2408, %v2991
        %v2993 = vlaneseq
        %v2994 = vshrl.u32 %v2993, 7
        %v2995 = vsub.s32 0, %v2994
        %v2996 = vrot.slane %v2416, %v2995
        %v2997 = vlaneseq
        %v2998 = vshrl.u32 %v2997, 7
        %v2999 = vsub.s32 0, %v2998
        %v3000 = vrot.slane %v2418, %v2999
        %v3001 = vlaneseq
        %v3002 = vshrl.u32 %v3001, 7
        %v3003 = vsub.s32 0, %v3002
        %v3004 = vrot.slane %v2401, %v3003
        %v3005 = vlaneseq
        %v3006 = vshrl.u32 %v3005, 7
        %v3007 = vsub.s32 0, %v3006
        %v3008 = vrot.slane %v2415, %v3007
        %v3009 = vlaneseq
        %v3010 = vshrl.u32 %v3009, 7
        %v3011 = vsub.s32 0, %v3010
        %v3012 = vrot.slane %v2417, %v3011
        %v3013 = vlaneseq
        %v3014 = vshrl.u32 %v3013, 7
        %v3015 = vsub.s32 0, %v3014
        %v3016 = vrot.slane %v2419, %v3015
        %v3017 = vlaneseq
        %v3018 = vshrl.u32 %v3017, 7
        %v3019 = vsub.s32 0, %v3018
        %v3020 = vrot.slane %v2443, %v3019
        %v3021 = vlaneseq
        %v3022 = vshrl.u32 %v3021, 7
        %v3023 = vsub.s32 0, %v3022
        %v3024 = vrot.slane %v2457, %v3023
        %v3025 = vlaneseq
        %v3026 = vshrl.u32 %v3025, 7
        %v3027 = vsub.s32 0, %v3026
        %v3028 = vrot.slane %v2465, %v3027
        %v3029 = vlaneseq
        %v3030 = vshrl.u32 %v3029, 7
        %v3031 = vsub.s32 0, %v3030
        %v3032 = vrot.slane %v2467, %v3031
        %v3033 = vlaneseq
        %v3034 = vshrl.u32 %v3033, 7
        %v3035 = vsub.s32 0, %v3034
        %v3036 = vrot.slane %v2450, %v3035
        %v3037 = vlaneseq
        %v3038 = vshrl.u32 %v3037, 7
        %v3039 = vsub.s32 0, %v3038
        %v3040 = vrot.slane %v2464, %v3039
        %v3041 = vlaneseq
        %v3042 = vshrl.u32 %v3041, 7
        %v3043 = vsub.s32 0, %v3042
        %v3044 = vrot.slane %v2466, %v3043
        %v3045 = vlaneseq
        %v3046 = vshrl.u32 %v3045, 7
        %v3047 = vsub.s32 0, %v3046
        %v3048 = vrot.slane %v2468, %v3047
        %v3049 = vlaneseq
        %v3050 = vshrl.u32 %v3049, 7
        %v3051 = vsub.s32 0, %v3050
        %v3052 = vrot.slane %v2492, %v3051
        %v3053 = vlaneseq
        %v3054 = vshrl.u32 %v3053, 7
        %v3055 = vsub.s32 0, %v3054
        %v3056 = vrot.slane %v2506, %v3055
        %v3057 = vlaneseq
        %v3058 = vshrl.u32 %v3057, 7
        %v3059 = vsub.s32 0, %v3058
        %v3060 = vrot.slane %v2514, %v3059
        %v3061 = vlaneseq
        %v3062 = vshrl.u32 %v3061, 7
        %v3063 = vsub.s32 0, %v3062
        %v3064 = vrot.slane %v2516, %v3063
        %v3065 = vlaneseq
        %v3066 = vshrl.u32 %v3065, 7
        %v3067 = vsub.s32 0, %v3066
        %v3068 = vrot.slane %v2499, %v3067
        %v3069 = vlaneseq
        %v3070 = vshrl.u32 %v3069, 7
        %v3071 = vsub.s32 0, %v3070
        %v3072 = vrot.slane %v2513, %v3071
        %v3073 = vlaneseq
        %v3074 = vshrl.u32 %v3073, 7
        %v3075 = vsub.s32 0, %v3074
        %v3076 = vrot.slane %v2515, %v3075
        %v3077 = vlaneseq
        %v3078 = vshrl.u32 %v3077, 7
        %v3079 = vsub.s32 0, %v3078
        %v3080 = vrot.slane %v2517, %v3079
        %v3081 = vlaneseq
        %v3082 = vshrl.u32 %v3081, 7
        %v3083 = vsub.s32 0, %v3082
        %v3084 = vrot.slane %v2541, %v3083
        %v3085 = vlaneseq
        %v3086 = vshrl.u32 %v3085, 7
        %v3087 = vsub.s32 0, %v3086
        %v3088 = vrot.slane %v2555, %v3087
        %v3089 = vlaneseq
        %v3090 = vshrl.u32 %v3089, 7
        %v3091 = vsub.s32 0, %v3090
        %v3092 = vrot.slane %v2563, %v3091
        %v3093 = vlaneseq
        %v3094 = vshrl.u32 %v3093, 7
        %v3095 = vsub.s32 0, %v3094
        %v3096 = vrot.slane %v2565, %v3095
        %v3097 = vlaneseq
        %v3098 = vshrl.u32 %v3097, 7
        %v3099 = vsub.s32 0, %v3098
        %v3100 = vrot.slane %v2548, %v3099
        %v3101 = vlaneseq
        %v3102 = vshrl.u32 %v3101, 7
        %v3103 = vsub.s32 0, %v3102
        %v3104 = vrot.slane %v2562, %v3103
        %v3105 = vlaneseq
        %v3106 = vshrl.u32 %v3105, 7
        %v3107 = vsub.s32 0, %v3106
        %v3108 = vrot.slane %v2564, %v3107
        %v3109 = vlaneseq
        %v3110 = vshrl.u32 %v3109, 7
        %v3111 = vsub.s32 0, %v3110
        %v3112 = vrot.slane %v2566, %v3111
        %v3113 = vlaneseq
        %v3114 = vshrl.u32 %v3113, 7
        %v3115 = vsub.s32 0, %v3114
        %v3116 = vrot.slane %v2590, %v3115
        %v3117 = vlaneseq
        %v3118 = vshrl.u32 %v3117, 7
        %v3119 = vsub.s32 0, %v3118
        %v3120 = vrot.slane %v2604, %v3119
        %v3121 = vlaneseq
        %v3122 = vshrl.u32 %v3121, 7
        %v3123 = vsub.s32 0, %v3122
        %v3124 = vrot.slane %v2612, %v3123
        %v3125 = vlaneseq
        %v3126 = vshrl.u32 %v3125, 7
        %v3127 = vsub.s32 0, %v3126
        %v3128 = vrot.slane %v2614, %v3127
        %v3129 = vlaneseq
        %v3130 = vshrl.u32 %v3129, 7
        %v3131 = vsub.s32 0, %v3130
        %v3132 = vrot.slane %v2597, %v3131
        %v3133 = vlaneseq
        %v3134 = vshrl.u32 %v3133, 7
        %v3135 = vsub.s32 0, %v3134
        %v3136 = vrot.slane %v2611, %v3135
        %v3137 = vlaneseq
        %v3138 = vshrl.u32 %v3137, 7
        %v3139 = vsub.s32 0, %v3138
        %v3140 = vrot.slane %v2613, %v3139
        %v3141 = vlaneseq
        %v3142 = vshrl.u32 %v3141, 7
        %v3143 = vsub.s32 0, %v3142
        %v3144 = vrot.slane %v2615, %v3143
        %v3145 = vlaneseq
        %v3146 = vshrl.u32 %v3145, 7
        %v3147 = vsub.s32 0, %v3146
        %v3148 = vrot.slane %v2639, %v3147
        %v3149 = vlaneseq
        %v3150 = vshrl.u32 %v3149, 7
        %v3151 = vsub.s32 0, %v3150
        %v3152 = vrot.slane %v2653, %v3151
        %v3153 = vlaneseq
        %v3154 = vshrl.u32 %v3153, 7
        %v3155 = vsub.s32 0, %v3154
        %v3156 = vrot.slane %v2661, %v3155
        %v3157 = vlaneseq
        %v3158 = vshrl.u32 %v3157, 7
        %v3159 = vsub.s32 0, %v3158
        %v3160 = vrot.slane %v2663, %v3159
        %v3161 = vlaneseq
        %v3162 = vshrl.u32 %v3161, 7
        %v3163 = vsub.s32 0, %v3162
        %v3164 = vrot.slane %v2646, %v3163
        %v3165 = vlaneseq
        %v3166 = vshrl.u32 %v3165, 7
        %v3167 = vsub.s32 0, %v3166
        %v3168 = vrot.slane %v2660, %v3167
        %v3169 = vlaneseq
        %v3170 = vshrl.u32 %v3169, 7
        %v3171 = vsub.s32 0, %v3170
        %v3172 = vrot.slane %v2662, %v3171
        %v3173 = vlaneseq
        %v3174 = vshrl.u32 %v3173, 7
        %v3175 = vsub.s32 0, %v3174
        %v3176 = vrot.slane %v2664, %v3175
        %v3305 = vmul.f32 %v2668, %v1146
        %v3306 = vmul.f32 %v2672, %v1149
        %v3307 = vmul.f32 %v2676, %v1154
        %v3308 = vmul.f32 %v2680, %v1157
        %v3309 = vmul.f32 %v2684, %v1162
        %v3310 = vmul.f32 %v2688, %v1165
        %v3311 = vmul.f32 %v2692, %v1170
        %v3312 = vmul.f32 %v2696, %v1173
        %v3313 = vmul.f32 %v2700, %v1178
        %v3314 = vmul.f32 %v2704, %v1181
        %v3315 = vmul.f32 %v2708, %v1186
        %v3316 = vmul.f32 %v2712, %v1189
        %v3317 = vmul.f32 %v2716, %v1194
        %v3318 = vmul.f32 %v2720, %v1197
        %v3319 = vmul.f32 %v2724, %v1202
        %v3320 = vmul.f32 %v2728, %v1205
        %v3321 = vmul.f32 %v2732, %v1210
        %v3322 = vmul.f32 %v2736, %v1213
        %v3323 = vmul.f32 %v2740, %v1218
        %v3324 = vmul.f32 %v2744, %v1221
        %v3325 = vmul.f32 %v2748, %v1226
        %v3326 = vmul.f32 %v2752, %v1229
        %v3327 = vmul.f32 %v2756, %v1234
        %v3328 = vmul.f32 %v2760, %v1237
        %v3329 = vmul.f32 %v2764, %v1242
        %v3330 = vmul.f32 %v2768, %v1245
        %v3331 = vmul.f32 %v2772, %v1250
        %v3332 = vmul.f32 %v2776, %v1253
        %v3333 = vmul.f32 %v2780, %v1258
        %v3334 = vmul.f32 %v2784, %v1261
        %v3335 = vmul.f32 %v2788, %v1266
        %v3336 = vmul.f32 %v2792, %v1269
        %v3337 = vmul.f32 %v2796, %v1274
        %v3338 = vmul.f32 %v2800, %v1277
        %v3339 = vmul.f32 %v2804, %v1282
        %v3340 = vmul.f32 %v2808, %v1285
        %v3341 = vmul.f32 %v2812, %v1290
        %v3342 = vmul.f32 %v2816, %v1293
        %v3343 = vmul.f32 %v2820, %v1298
        %v3344 = vmul.f32 %v2824, %v1301
        %v3345 = vmul.f32 %v2828, %v1306
        %v3346 = vmul.f32 %v2832, %v1309
        %v3347 = vmul.f32 %v2836, %v1314
        %v3348 = vmul.f32 %v2840, %v1317
        %v3349 = vmul.f32 %v2844, %v1322
        %v3350 = vmul.f32 %v2848, %v1325
        %v3351 = vmul.f32 %v2852, %v1330
        %v3352 = vmul.f32 %v2856, %v1333
        %v3353 = vmul.f32 %v2860, %v1338
        %v3354 = vmul.f32 %v2864, %v1341
        %v3355 = vmul.f32 %v2868, %v1346
        %v3356 = vmul.f32 %v2872, %v1349
        %v3357 = vmul.f32 %v2876, %v1354
        %v3358 = vmul.f32 %v2880, %v1357
        %v3359 = vmul.f32 %v2884, %v1362
        %v3360 = vmul.f32 %v2888, %v1365
        %v3361 = vmul.f32 %v2892, %v1370
        %v3362 = vmul.f32 %v2896, %v1373
        %v3363 = vmul.f32 %v2900, %v1378
        %v3364 = vmul.f32 %v2904, %v1381
        %v3365 = vmul.f32 %v2908, %v1386
        %v3366 = vmul.f32 %v2912, %v1389
        %v3367 = vmul.f32 %v2916, %v1394
        %v3368 = vmul.f32 %v2920, %v1397
        %v3369 = vmul.f32 %v2924, %v1402
        %v3370 = vmul.f32 %v2928, %v1405
        %v3371 = vmul.f32 %v2932, %v1410
        %v3372 = vmul.f32 %v2936, %v1413
        %v3373 = vmul.f32 %v2940, %v1418
        %v3374 = vmul.f32 %v2944, %v1421
        %v3375 = vmul.f32 %v2948, %v1426
        %v3376 = vmul.f32 %v2952, %v1429
        %v3377 = vmul.f32 %v2956, %v1434
        %v3378 = vmul.f32 %v2960, %v1437
        %v3379 = vmul.f32 %v2964, %v1442
        %v3380 = vmul.f32 %v2968, %v1445
        %v3381 = vmul.f32 %v2972, %v1450
        %v3382 = vmul.f32 %v2976, %v1453
        %v3383 = vmul.f32 %v2980, %v1458
        %v3384 = vmul.f32 %v2984, %v1461
        %v3385 = vmul.f32 %v2988, %v1466
        %v3386 = vmul.f32 %v2992, %v1469
        %v3387 = vmul.f32 %v2996, %v1474
        %v3388 = vmul.f32 %v3000, %v1477
        %v3389 = vmul.f32 %v3004, %v1482
        %v3390 = vmul.f32 %v3008, %v1485
        %v3391 = vmul.f32 %v3012, %v1490
        %v3392 = vmul.f32 %v3016, %v1493
        %v3393 = vmul.f32 %v3020, %v1498
        %v3394 = vmul.f32 %v3024, %v1501
        %v3395 = vmul.f32 %v3028, %v1506
        %v3396 = vmul.f32 %v3032, %v1509
        %v3397 = vmul.f32 %v3036, %v1514
        %v3398 = vmul.f32 %v3040, %v1517
        %v3399 = vmul.f32 %v3044, %v1522
        %v3400 = vmul.f32 %v3048, %v1525
        %v3401 = vmul.f32 %v3052, %v1530
        %v3402 = vmul.f32 %v3056, %v1533
        %v3403 = vmul.f32 %v3060, %v1538
        %v3404 = vmul.f32 %v3064, %v1541
        %v3405 = vmul.f32 %v3068, %v1546
        %v3406 = vmul.f32 %v3072, %v1549
        %v3407 = vmul.f32 %v3076, %v1554
        %v3408 = vmul.f32 %v3080, %v1557
        %v3409 = vmul.f32 %v3084, %v1562
        %v3410 = vmul.f32 %v3088, %v1565
        %v3411 = vmul.f32 %v3092, %v1570
        %v3412 = vmul.f32 %v3096, %v1573
        %v3413 = vmul.f32 %v3100, %v1578
        %v3414 = vmul.f32 %v3104, %v1581
        %v3415 = vmul.f32 %v3108, %v1586
        %v3416 = vmul.f32 %v3112, %v1589
        %v3417 = vmul.f32 %v3116, %v1594
        %v3418 = vmul.f32 %v3120, %v1597
        %v3419 = vmul.f32 %v3124, %v1602
        %v3420 = vmul.f32 %v3128, %v1605
        %v3421 = vmul.f32 %v3132, %v1610
        %v3422 = vmul.f32 %v3136, %v1613
        %v3423 = vmul.f32 %v3140, %v1618
        %v3424 = vmul.f32 %v3144, %v1621
        %v3425 = vmul.f32 %v3148, %v1626
        %v3426 = vmul.f32 %v3152, %v1629
        %v3427 = vmul.f32 %v3156, %v1634
        %v3428 = vmul.f32 %v3160, %v1637
        %v3429 = vmul.f32 %v3164, %v1642
        %v3430 = vmul.f32 %v3168, %v1645
        %v3431 = vmul.f32 %v3172, %v1650
        %v3432 = vmul.f32 %v3176, %v1653
        %3433 = vadd.xlane.f32.xlu0 %v3305
        %v3434 = vpop.xlane.xlu0 %3433
        %3435 = vadd.xlane.f32.xlu0 %v3306
        %v3436 = vpop.xlane.xlu0 %3435
        %3437 = vadd.xlane.f32.xlu0 %v3307
        %v3438 = vpop.xlane.xlu0 %3437
        %3439 = vadd.xlane.f32.xlu0 %v3308
        %v3440 = vpop.xlane.xlu0 %3439
        %3441 = vadd.xlane.f32.xlu0 %v3309
        %v3442 = vpop.xlane.xlu0 %3441
        %3443 = vadd.xlane.f32.xlu0 %v3310
        %v3444 = vpop.xlane.xlu0 %3443
        %3445 = vadd.xlane.f32.xlu0 %v3311
        %v3446 = vpop.xlane.xlu0 %3445
        %3447 = vadd.xlane.f32.xlu0 %v3312
        %v3448 = vpop.xlane.xlu0 %3447
        %3449 = vadd.xlane.f32.xlu0 %v3313
        %v3450 = vpop.xlane.xlu0 %3449
        %3451 = vadd.xlane.f32.xlu0 %v3314
        %v3452 = vpop.xlane.xlu0 %3451
        %3453 = vadd.xlane.f32.xlu0 %v3315
        %v3454 = vpop.xlane.xlu0 %3453
        %3455 = vadd.xlane.f32.xlu0 %v3316
        %v3456 = vpop.xlane.xlu0 %3455
        %3457 = vadd.xlane.f32.xlu0 %v3317
        %v3458 = vpop.xlane.xlu0 %3457
        %3459 = vadd.xlane.f32.xlu0 %v3318
        %v3460 = vpop.xlane.xlu0 %3459
        %3461 = vadd.xlane.f32.xlu0 %v3319
        %v3462 = vpop.xlane.xlu0 %3461
        %3463 = vadd.xlane.f32.xlu0 %v3320
        %v3464 = vpop.xlane.xlu0 %3463
        %3465 = vadd.xlane.f32.xlu0 %v3321
        %v3466 = vpop.xlane.xlu0 %3465
        %3467 = vadd.xlane.f32.xlu0 %v3322
        %v3468 = vpop.xlane.xlu0 %3467
        %3469 = vadd.xlane.f32.xlu0 %v3323
        %v3470 = vpop.xlane.xlu0 %3469
        %3471 = vadd.xlane.f32.xlu0 %v3324
        %v3472 = vpop.xlane.xlu0 %3471
        %3473 = vadd.xlane.f32.xlu0 %v3325
        %v3474 = vpop.xlane.xlu0 %3473
        %3475 = vadd.xlane.f32.xlu0 %v3326
        %v3476 = vpop.xlane.xlu0 %3475
        %3477 = vadd.xlane.f32.xlu0 %v3327
        %v3478 = vpop.xlane.xlu0 %3477
        %3479 = vadd.xlane.f32.xlu0 %v3328
        %v3480 = vpop.xlane.xlu0 %3479
        %3481 = vadd.xlane.f32.xlu0 %v3329
        %v3482 = vpop.xlane.xlu0 %3481
        %3483 = vadd.xlane.f32.xlu0 %v3330
        %v3484 = vpop.xlane.xlu0 %3483
        %3485 = vadd.xlane.f32.xlu0 %v3331
        %v3486 = vpop.xlane.xlu0 %3485
        %3487 = vadd.xlane.f32.xlu0 %v3332
        %v3488 = vpop.xlane.xlu0 %3487
        %3489 = vadd.xlane.f32.xlu0 %v3333
        %v3490 = vpop.xlane.xlu0 %3489
        %3491 = vadd.xlane.f32.xlu0 %v3334
        %v3492 = vpop.xlane.xlu0 %3491
        %3493 = vadd.xlane.f32.xlu0 %v3335
        %v3494 = vpop.xlane.xlu0 %3493
        %3495 = vadd.xlane.f32.xlu0 %v3336
        %v3496 = vpop.xlane.xlu0 %3495
        %3497 = vadd.xlane.f32.xlu0 %v3337
        %v3498 = vpop.xlane.xlu0 %3497
        %3499 = vadd.xlane.f32.xlu0 %v3338
        %v3500 = vpop.xlane.xlu0 %3499
        %3501 = vadd.xlane.f32.xlu0 %v3339
        %v3502 = vpop.xlane.xlu0 %3501
        %3503 = vadd.xlane.f32.xlu0 %v3340
        %v3504 = vpop.xlane.xlu0 %3503
        %3505 = vadd.xlane.f32.xlu0 %v3341
        %v3506 = vpop.xlane.xlu0 %3505
        %3507 = vadd.xlane.f32.xlu0 %v3342
        %v3508 = vpop.xlane.xlu0 %3507
        %3509 = vadd.xlane.f32.xlu0 %v3343
        %v3510 = vpop.xlane.xlu0 %3509
        %3511 = vadd.xlane.f32.xlu0 %v3344
        %v3512 = vpop.xlane.xlu0 %3511
        %3513 = vadd.xlane.f32.xlu0 %v3345
        %v3514 = vpop.xlane.xlu0 %3513
        %3515 = vadd.xlane.f32.xlu0 %v3346
        %v3516 = vpop.xlane.xlu0 %3515
        %3517 = vadd.xlane.f32.xlu0 %v3347
        %v3518 = vpop.xlane.xlu0 %3517
        %3519 = vadd.xlane.f32.xlu0 %v3348
        %v3520 = vpop.xlane.xlu0 %3519
        %3521 = vadd.xlane.f32.xlu0 %v3349
        %v3522 = vpop.xlane.xlu0 %3521
        %3523 = vadd.xlane.f32.xlu0 %v3350
        %v3524 = vpop.xlane.xlu0 %3523
        %3525 = vadd.xlane.f32.xlu0 %v3351
        %v3526 = vpop.xlane.xlu0 %3525
        %3527 = vadd.xlane.f32.xlu0 %v3352
        %v3528 = vpop.xlane.xlu0 %3527
        %3529 = vadd.xlane.f32.xlu0 %v3353
        %v3530 = vpop.xlane.xlu0 %3529
        %3531 = vadd.xlane.f32.xlu0 %v3354
        %v3532 = vpop.xlane.xlu0 %3531
        %3533 = vadd.xlane.f32.xlu0 %v3355
        %v3534 = vpop.xlane.xlu0 %3533
        %3535 = vadd.xlane.f32.xlu0 %v3356
        %v3536 = vpop.xlane.xlu0 %3535
        %3537 = vadd.xlane.f32.xlu0 %v3357
        %v3538 = vpop.xlane.xlu0 %3537
        %3539 = vadd.xlane.f32.xlu0 %v3358
        %v3540 = vpop.xlane.xlu0 %3539
        %3541 = vadd.xlane.f32.xlu0 %v3359
        %v3542 = vpop.xlane.xlu0 %3541
        %3543 = vadd.xlane.f32.xlu0 %v3360
        %v3544 = vpop.xlane.xlu0 %3543
        %3545 = vadd.xlane.f32.xlu0 %v3361
        %v3546 = vpop.xlane.xlu0 %3545
        %3547 = vadd.xlane.f32.xlu0 %v3362
        %v3548 = vpop.xlane.xlu0 %3547
        %3549 = vadd.xlane.f32.xlu0 %v3363
        %v3550 = vpop.xlane.xlu0 %3549
        %3551 = vadd.xlane.f32.xlu0 %v3364
        %v3552 = vpop.xlane.xlu0 %3551
        %3553 = vadd.xlane.f32.xlu0 %v3365
        %v3554 = vpop.xlane.xlu0 %3553
        %3555 = vadd.xlane.f32.xlu0 %v3366
        %v3556 = vpop.xlane.xlu0 %3555
        %3557 = vadd.xlane.f32.xlu0 %v3367
        %v3558 = vpop.xlane.xlu0 %3557
        %3559 = vadd.xlane.f32.xlu0 %v3368
        %v3560 = vpop.xlane.xlu0 %3559
        %3561 = vadd.xlane.f32.xlu0 %v3369
        %v3562 = vpop.xlane.xlu0 %3561
        %3563 = vadd.xlane.f32.xlu0 %v3370
        %v3564 = vpop.xlane.xlu0 %3563
        %3565 = vadd.xlane.f32.xlu0 %v3371
        %v3566 = vpop.xlane.xlu0 %3565
        %3567 = vadd.xlane.f32.xlu0 %v3372
        %v3568 = vpop.xlane.xlu0 %3567
        %3569 = vadd.xlane.f32.xlu0 %v3373
        %v3570 = vpop.xlane.xlu0 %3569
        %3571 = vadd.xlane.f32.xlu0 %v3374
        %v3572 = vpop.xlane.xlu0 %3571
        %3573 = vadd.xlane.f32.xlu0 %v3375
        %v3574 = vpop.xlane.xlu0 %3573
        %3575 = vadd.xlane.f32.xlu0 %v3376
        %v3576 = vpop.xlane.xlu0 %3575
        %3577 = vadd.xlane.f32.xlu0 %v3377
        %v3578 = vpop.xlane.xlu0 %3577
        %3579 = vadd.xlane.f32.xlu0 %v3378
        %v3580 = vpop.xlane.xlu0 %3579
        %3581 = vadd.xlane.f32.xlu0 %v3379
        %v3582 = vpop.xlane.xlu0 %3581
        %3583 = vadd.xlane.f32.xlu0 %v3380
        %v3584 = vpop.xlane.xlu0 %3583
        %3585 = vadd.xlane.f32.xlu0 %v3381
        %v3586 = vpop.xlane.xlu0 %3585
        %3587 = vadd.xlane.f32.xlu0 %v3382
        %v3588 = vpop.xlane.xlu0 %3587
        %3589 = vadd.xlane.f32.xlu0 %v3383
        %v3590 = vpop.xlane.xlu0 %3589
        %3591 = vadd.xlane.f32.xlu0 %v3384
        %v3592 = vpop.xlane.xlu0 %3591
        %3593 = vadd.xlane.f32.xlu0 %v3385
        %v3594 = vpop.xlane.xlu0 %3593
        %3595 = vadd.xlane.f32.xlu0 %v3386
        %v3596 = vpop.xlane.xlu0 %3595
        %3597 = vadd.xlane.f32.xlu0 %v3387
        %v3598 = vpop.xlane.xlu0 %3597
        %3599 = vadd.xlane.f32.xlu0 %v3388
        %v3600 = vpop.xlane.xlu0 %3599
        %3601 = vadd.xlane.f32.xlu0 %v3389
        %v3602 = vpop.xlane.xlu0 %3601
        %3603 = vadd.xlane.f32.xlu0 %v3390
        %v3604 = vpop.xlane.xlu0 %3603
        %3605 = vadd.xlane.f32.xlu0 %v3391
        %v3606 = vpop.xlane.xlu0 %3605
        %3607 = vadd.xlane.f32.xlu0 %v3392
        %v3608 = vpop.xlane.xlu0 %3607
        %3609 = vadd.xlane.f32.xlu0 %v3393
        %v3610 = vpop.xlane.xlu0 %3609
        %3611 = vadd.xlane.f32.xlu0 %v3394
        %v3612 = vpop.xlane.xlu0 %3611
        %3613 = vadd.xlane.f32.xlu0 %v3395
        %v3614 = vpop.xlane.xlu0 %3613
        %3615 = vadd.xlane.f32.xlu0 %v3396
        %v3616 = vpop.xlane.xlu0 %3615
        %3617 = vadd.xlane.f32.xlu0 %v3397
        %v3618 = vpop.xlane.xlu0 %3617
        %3619 = vadd.xlane.f32.xlu0 %v3398
        %v3620 = vpop.xlane.xlu0 %3619
        %3621 = vadd.xlane.f32.xlu0 %v3399
        %v3622 = vpop.xlane.xlu0 %3621
        %3623 = vadd.xlane.f32.xlu0 %v3400
        %v3624 = vpop.xlane.xlu0 %3623
        %3625 = vadd.xlane.f32.xlu0 %v3401
        %v3626 = vpop.xlane.xlu0 %3625
        %3627 = vadd.xlane.f32.xlu0 %v3402
        %v3628 = vpop.xlane.xlu0 %3627
        %3629 = vadd.xlane.f32.xlu0 %v3403
        %v3630 = vpop.xlane.xlu0 %3629
        %3631 = vadd.xlane.f32.xlu0 %v3404
        %v3632 = vpop.xlane.xlu0 %3631
        %3633 = vadd.xlane.f32.xlu0 %v3405
        %v3634 = vpop.xlane.xlu0 %3633
        %3635 = vadd.xlane.f32.xlu0 %v3406
        %v3636 = vpop.xlane.xlu0 %3635
        %3637 = vadd.xlane.f32.xlu0 %v3407
        %v3638 = vpop.xlane.xlu0 %3637
        %3639 = vadd.xlane.f32.xlu0 %v3408
        %v3640 = vpop.xlane.xlu0 %3639
        %3641 = vadd.xlane.f32.xlu0 %v3409
        %v3642 = vpop.xlane.xlu0 %3641
        %3643 = vadd.xlane.f32.xlu0 %v3410
        %v3644 = vpop.xlane.xlu0 %3643
        %3645 = vadd.xlane.f32.xlu0 %v3411
        %v3646 = vpop.xlane.xlu0 %3645
        %3647 = vadd.xlane.f32.xlu0 %v3412
        %v3648 = vpop.xlane.xlu0 %3647
        %3649 = vadd.xlane.f32.xlu0 %v3413
        %v3650 = vpop.xlane.xlu0 %3649
        %3651 = vadd.xlane.f32.xlu0 %v3414
        %v3652 = vpop.xlane.xlu0 %3651
        %3653 = vadd.xlane.f32.xlu0 %v3415
        %v3654 = vpop.xlane.xlu0 %3653
        %3655 = vadd.xlane.f32.xlu0 %v3416
        %v3656 = vpop.xlane.xlu0 %3655
        %3657 = vadd.xlane.f32.xlu0 %v3417
        %v3658 = vpop.xlane.xlu0 %3657
        %3659 = vadd.xlane.f32.xlu0 %v3418
        %v3660 = vpop.xlane.xlu0 %3659
        %3661 = vadd.xlane.f32.xlu0 %v3419
        %v3662 = vpop.xlane.xlu0 %3661
        %3663 = vadd.xlane.f32.xlu0 %v3420
        %v3664 = vpop.xlane.xlu0 %3663
        %3665 = vadd.xlane.f32.xlu0 %v3421
        %v3666 = vpop.xlane.xlu0 %3665
        %3667 = vadd.xlane.f32.xlu0 %v3422
        %v3668 = vpop.xlane.xlu0 %3667
        %3669 = vadd.xlane.f32.xlu0 %v3423
        %v3670 = vpop.xlane.xlu0 %3669
        %3671 = vadd.xlane.f32.xlu0 %v3424
        %v3672 = vpop.xlane.xlu0 %3671
        %3673 = vadd.xlane.f32.xlu0 %v3425
        %v3674 = vpop.xlane.xlu0 %3673
        %3675 = vadd.xlane.f32.xlu0 %v3426
        %v3676 = vpop.xlane.xlu0 %3675
        %3677 = vadd.xlane.f32.xlu0 %v3427
        %v3678 = vpop.xlane.xlu0 %3677
        %3679 = vadd.xlane.f32.xlu0 %v3428
        %v3680 = vpop.xlane.xlu0 %3679
        %3681 = vadd.xlane.f32.xlu0 %v3429
        %v3682 = vpop.xlane.xlu0 %3681
        %3683 = vadd.xlane.f32.xlu0 %v3430
        %v3684 = vpop.xlane.xlu0 %3683
        %3685 = vadd.xlane.f32.xlu0 %v3431
        %v3686 = vpop.xlane.xlu0 %3685
        %3687 = vadd.xlane.f32.xlu0 %v3432
        %v3688 = vpop.xlane.xlu0 %3687
        %v3689 = vmul.f32 %v3434, 0.125
        %v3690 = vmul.f32 %v3436, 0.125
        %v3691 = vmul.f32 %v3438, 0.125
        %v3692 = vmul.f32 %v3440, 0.125
        %v3693 = vmul.f32 %v3442, 0.125
        %v3694 = vmul.f32 %v3444, 0.125
        %v3695 = vmul.f32 %v3446, 0.125
        %v3696 = vmul.f32 %v3448, 0.125
        %v3697 = vmul.f32 %v3450, 0.125
        %v3698 = vmul.f32 %v3452, 0.125
        %v3699 = vmul.f32 %v3454, 0.125
        %v3700 = vmul.f32 %v3456, 0.125
        %v3701 = vmul.f32 %v3458, 0.125
        %v3702 = vmul.f32 %v3460, 0.125
        %v3703 = vmul.f32 %v3462, 0.125
        %v3704 = vmul.f32 %v3464, 0.125
        %v3705 = vmul.f32 %v3466, 0.125
        %v3706 = vmul.f32 %v3468, 0.125
        %v3707 = vmul.f32 %v3470, 0.125
        %v3708 = vmul.f32 %v3472, 0.125
        %v3709 = vmul.f32 %v3474, 0.125
        %v3710 = vmul.f32 %v3476, 0.125
        %v3711 = vmul.f32 %v3478, 0.125
        %v3712 = vmul.f32 %v3480, 0.125
        %v3713 = vmul.f32 %v3482, 0.125
        %v3714 = vmul.f32 %v3484, 0.125
        %v3715 = vmul.f32 %v3486, 0.125
        %v3716 = vmul.f32 %v3488, 0.125
        %v3717 = vmul.f32 %v3490, 0.125
        %v3718 = vmul.f32 %v3492, 0.125
        %v3719 = vmul.f32 %v3494, 0.125
        %v3720 = vmul.f32 %v3496, 0.125
        %v3721 = vmul.f32 %v3498, 0.125
        %v3722 = vmul.f32 %v3500, 0.125
        %v3723 = vmul.f32 %v3502, 0.125
        %v3724 = vmul.f32 %v3504, 0.125
        %v3725 = vmul.f32 %v3506, 0.125
        %v3726 = vmul.f32 %v3508, 0.125
        %v3727 = vmul.f32 %v3510, 0.125
        %v3728 = vmul.f32 %v3512, 0.125
        %v3729 = vmul.f32 %v3514, 0.125
        %v3730 = vmul.f32 %v3516, 0.125
        %v3731 = vmul.f32 %v3518, 0.125
        %v3732 = vmul.f32 %v3520, 0.125
        %v3733 = vmul.f32 %v3522, 0.125
        %v3734 = vmul.f32 %v3524, 0.125
        %v3735 = vmul.f32 %v3526, 0.125
        %v3736 = vmul.f32 %v3528, 0.125
        %v3737 = vmul.f32 %v3530, 0.125
        %v3738 = vmul.f32 %v3532, 0.125
        %v3739 = vmul.f32 %v3534, 0.125
        %v3740 = vmul.f32 %v3536, 0.125
        %v3741 = vmul.f32 %v3538, 0.125
        %v3742 = vmul.f32 %v3540, 0.125
        %v3743 = vmul.f32 %v3542, 0.125
        %v3744 = vmul.f32 %v3544, 0.125
        %v3745 = vmul.f32 %v3546, 0.125
        %v3746 = vmul.f32 %v3548, 0.125
        %v3747 = vmul.f32 %v3550, 0.125
        %v3748 = vmul.f32 %v3552, 0.125
        %v3749 = vmul.f32 %v3554, 0.125
        %v3750 = vmul.f32 %v3556, 0.125
        %v3751 = vmul.f32 %v3558, 0.125
        %v3752 = vmul.f32 %v3560, 0.125
        %v3753 = vmul.f32 %v3562, 0.125
        %v3754 = vmul.f32 %v3564, 0.125
        %v3755 = vmul.f32 %v3566, 0.125
        %v3756 = vmul.f32 %v3568, 0.125
        %v3757 = vmul.f32 %v3570, 0.125
        %v3758 = vmul.f32 %v3572, 0.125
        %v3759 = vmul.f32 %v3574, 0.125
        %v3760 = vmul.f32 %v3576, 0.125
        %v3761 = vmul.f32 %v3578, 0.125
        %v3762 = vmul.f32 %v3580, 0.125
        %v3763 = vmul.f32 %v3582, 0.125
        %v3764 = vmul.f32 %v3584, 0.125
        %v3765 = vmul.f32 %v3586, 0.125
        %v3766 = vmul.f32 %v3588, 0.125
        %v3767 = vmul.f32 %v3590, 0.125
        %v3768 = vmul.f32 %v3592, 0.125
        %v3769 = vmul.f32 %v3594, 0.125
        %v3770 = vmul.f32 %v3596, 0.125
        %v3771 = vmul.f32 %v3598, 0.125
        %v3772 = vmul.f32 %v3600, 0.125
        %v3773 = vmul.f32 %v3602, 0.125
        %v3774 = vmul.f32 %v3604, 0.125
        %v3775 = vmul.f32 %v3606, 0.125
        %v3776 = vmul.f32 %v3608, 0.125
        %v3777 = vmul.f32 %v3610, 0.125
        %v3778 = vmul.f32 %v3612, 0.125
        %v3779 = vmul.f32 %v3614, 0.125
        %v3780 = vmul.f32 %v3616, 0.125
        %v3781 = vmul.f32 %v3618, 0.125
        %v3782 = vmul.f32 %v3620, 0.125
        %v3783 = vmul.f32 %v3622, 0.125
        %v3784 = vmul.f32 %v3624, 0.125
        %v3785 = vmul.f32 %v3626, 0.125
        %v3786 = vmul.f32 %v3628, 0.125
        %v3787 = vmul.f32 %v3630, 0.125
        %v3788 = vmul.f32 %v3632, 0.125
        %v3789 = vmul.f32 %v3634, 0.125
        %v3790 = vmul.f32 %v3636, 0.125
        %v3791 = vmul.f32 %v3638, 0.125
        %v3792 = vmul.f32 %v3640, 0.125
        %v3793 = vmul.f32 %v3642, 0.125
        %v3794 = vmul.f32 %v3644, 0.125
        %v3795 = vmul.f32 %v3646, 0.125
        %v3796 = vmul.f32 %v3648, 0.125
        %v3797 = vmul.f32 %v3650, 0.125
        %v3798 = vmul.f32 %v3652, 0.125
        %v3799 = vmul.f32 %v3654, 0.125
        %v3800 = vmul.f32 %v3656, 0.125
        %v3801 = vmul.f32 %v3658, 0.125
        %v3802 = vmul.f32 %v3660, 0.125
        %v3803 = vmul.f32 %v3662, 0.125
        %v3804 = vmul.f32 %v3664, 0.125
        %v3805 = vmul.f32 %v3666, 0.125
        %v3806 = vmul.f32 %v3668, 0.125
        %v3807 = vmul.f32 %v3670, 0.125
        %v3808 = vmul.f32 %v3672, 0.125
        %v3809 = vmul.f32 %v3674, 0.125
        %v3810 = vmul.f32 %v3676, 0.125
        %v3811 = vmul.f32 %v3678, 0.125
        %v3812 = vmul.f32 %v3680, 0.125
        %v3813 = vmul.f32 %v3682, 0.125
        %v3814 = vmul.f32 %v3684, 0.125
        %v3815 = vmul.f32 %v3686, 0.125
        %v3816 = vmul.f32 %v3688, 0.125
        %v3945 = vlaneseq
        %v3946 = vand.u32 %v3945, 127
        %v3947 = vlaneseq
        %v3948 = vshrl.u32 %v3947, 7
        %v3949 = vsub.s32 %v3946, %v3948
        %v3950 = vrot.slane %v3689, %v3949
        %v3951 = vlaneseq
        %v3952 = vshrl.u32 %v3951, 7
        %v3953 = vsub.s32 %v3946, %v3952
        %v3954 = vrot.slane %v3690, %v3953
        %v3955 = vlaneseq
        %v3956 = vshrl.u32 %v3955, 7
        %v3957 = vsub.s32 %v3946, %v3956
        %v3958 = vrot.slane %v3691, %v3957
        %v3959 = vlaneseq
        %v3960 = vshrl.u32 %v3959, 7
        %v3961 = vsub.s32 %v3946, %v3960
        %v3962 = vrot.slane %v3692, %v3961
        %v3963 = vlaneseq
        %v3964 = vshrl.u32 %v3963, 7
        %v3965 = vsub.s32 %v3946, %v3964
        %v3966 = vrot.slane %v3693, %v3965
        %v3967 = vlaneseq
        %v3968 = vshrl.u32 %v3967, 7
        %v3969 = vsub.s32 %v3946, %v3968
        %v3970 = vrot.slane %v3694, %v3969
        %v3971 = vlaneseq
        %v3972 = vshrl.u32 %v3971, 7
        %v3973 = vsub.s32 %v3946, %v3972
        %v3974 = vrot.slane %v3695, %v3973
        %v3975 = vlaneseq
        %v3976 = vshrl.u32 %v3975, 7
        %v3977 = vsub.s32 %v3946, %v3976
        %v3978 = vrot.slane %v3696, %v3977
        %v3979 = vlaneseq
        %v3980 = vshrl.u32 %v3979, 7
        %v3981 = vsub.s32 %v3946, %v3980
        %v3982 = vrot.slane %v3697, %v3981
        %v3983 = vlaneseq
        %v3984 = vshrl.u32 %v3983, 7
        %v3985 = vsub.s32 %v3946, %v3984
        %v3986 = vrot.slane %v3698, %v3985
        %v3987 = vlaneseq
        %v3988 = vshrl.u32 %v3987, 7
        %v3989 = vsub.s32 %v3946, %v3988
        %v3990 = vrot.slane %v3699, %v3989
        %v3991 = vlaneseq
        %v3992 = vshrl.u32 %v3991, 7
        %v3993 = vsub.s32 %v3946, %v3992
        %v3994 = vrot.slane %v3700, %v3993
        %v3995 = vlaneseq
        %v3996 = vshrl.u32 %v3995, 7
        %v3997 = vsub.s32 %v3946, %v3996
        %v3998 = vrot.slane %v3701, %v3997
        %v3999 = vlaneseq
        %v4000 = vshrl.u32 %v3999, 7
        %v4001 = vsub.s32 %v3946, %v4000
        %v4002 = vrot.slane %v3702, %v4001
        %v4003 = vlaneseq
        %v4004 = vshrl.u32 %v4003, 7
        %v4005 = vsub.s32 %v3946, %v4004
        %v4006 = vrot.slane %v3703, %v4005
        %v4007 = vlaneseq
        %v4008 = vshrl.u32 %v4007, 7
        %v4009 = vsub.s32 %v3946, %v4008
        %v4010 = vrot.slane %v3704, %v4009
        %v4011 = vlaneseq
        %v4012 = vshrl.u32 %v4011, 7
        %v4013 = vsub.s32 %v3946, %v4012
        %v4014 = vrot.slane %v3705, %v4013
        %v4015 = vlaneseq
        %v4016 = vshrl.u32 %v4015, 7
        %v4017 = vsub.s32 %v3946, %v4016
        %v4018 = vrot.slane %v3706, %v4017
        %v4019 = vlaneseq
        %v4020 = vshrl.u32 %v4019, 7
        %v4021 = vsub.s32 %v3946, %v4020
        %v4022 = vrot.slane %v3707, %v4021
        %v4023 = vlaneseq
        %v4024 = vshrl.u32 %v4023, 7
        %v4025 = vsub.s32 %v3946, %v4024
        %v4026 = vrot.slane %v3708, %v4025
        %v4027 = vlaneseq
        %v4028 = vshrl.u32 %v4027, 7
        %v4029 = vsub.s32 %v3946, %v4028
        %v4030 = vrot.slane %v3709, %v4029
        %v4031 = vlaneseq
        %v4032 = vshrl.u32 %v4031, 7
        %v4033 = vsub.s32 %v3946, %v4032
        %v4034 = vrot.slane %v3710, %v4033
        %v4035 = vlaneseq
        %v4036 = vshrl.u32 %v4035, 7
        %v4037 = vsub.s32 %v3946, %v4036
        %v4038 = vrot.slane %v3711, %v4037
        %v4039 = vlaneseq
        %v4040 = vshrl.u32 %v4039, 7
        %v4041 = vsub.s32 %v3946, %v4040
        %v4042 = vrot.slane %v3712, %v4041
        %v4043 = vlaneseq
        %v4044 = vshrl.u32 %v4043, 7
        %v4045 = vsub.s32 %v3946, %v4044
        %v4046 = vrot.slane %v3713, %v4045
        %v4047 = vlaneseq
        %v4048 = vshrl.u32 %v4047, 7
        %v4049 = vsub.s32 %v3946, %v4048
        %v4050 = vrot.slane %v3714, %v4049
        %v4051 = vlaneseq
        %v4052 = vshrl.u32 %v4051, 7
        %v4053 = vsub.s32 %v3946, %v4052
        %v4054 = vrot.slane %v3715, %v4053
        %v4055 = vlaneseq
        %v4056 = vshrl.u32 %v4055, 7
        %v4057 = vsub.s32 %v3946, %v4056
        %v4058 = vrot.slane %v3716, %v4057
        %v4059 = vlaneseq
        %v4060 = vshrl.u32 %v4059, 7
        %v4061 = vsub.s32 %v3946, %v4060
        %v4062 = vrot.slane %v3717, %v4061
        %v4063 = vlaneseq
        %v4064 = vshrl.u32 %v4063, 7
        %v4065 = vsub.s32 %v3946, %v4064
        %v4066 = vrot.slane %v3718, %v4065
        %v4067 = vlaneseq
        %v4068 = vshrl.u32 %v4067, 7
        %v4069 = vsub.s32 %v3946, %v4068
        %v4070 = vrot.slane %v3719, %v4069
        %v4071 = vlaneseq
        %v4072 = vshrl.u32 %v4071, 7
        %v4073 = vsub.s32 %v3946, %v4072
        %v4074 = vrot.slane %v3720, %v4073
        %v4075 = vlaneseq
        %v4076 = vshrl.u32 %v4075, 7
        %v4077 = vsub.s32 %v3946, %v4076
        %v4078 = vrot.slane %v3721, %v4077
        %v4079 = vlaneseq
        %v4080 = vshrl.u32 %v4079, 7
        %v4081 = vsub.s32 %v3946, %v4080
        %v4082 = vrot.slane %v3722, %v4081
        %v4083 = vlaneseq
        %v4084 = vshrl.u32 %v4083, 7
        %v4085 = vsub.s32 %v3946, %v4084
        %v4086 = vrot.slane %v3723, %v4085
        %v4087 = vlaneseq
        %v4088 = vshrl.u32 %v4087, 7
        %v4089 = vsub.s32 %v3946, %v4088
        %v4090 = vrot.slane %v3724, %v4089
        %v4091 = vlaneseq
        %v4092 = vshrl.u32 %v4091, 7
        %v4093 = vsub.s32 %v3946, %v4092
        %v4094 = vrot.slane %v3725, %v4093
        %v4095 = vlaneseq
        %v4096 = vshrl.u32 %v4095, 7
        %v4097 = vsub.s32 %v3946, %v4096
        %v4098 = vrot.slane %v3726, %v4097
        %v4099 = vlaneseq
        %v4100 = vshrl.u32 %v4099, 7
        %v4101 = vsub.s32 %v3946, %v4100
        %v4102 = vrot.slane %v3727, %v4101
        %v4103 = vlaneseq
        %v4104 = vshrl.u32 %v4103, 7
        %v4105 = vsub.s32 %v3946, %v4104
        %v4106 = vrot.slane %v3728, %v4105
        %v4107 = vlaneseq
        %v4108 = vshrl.u32 %v4107, 7
        %v4109 = vsub.s32 %v3946, %v4108
        %v4110 = vrot.slane %v3729, %v4109
        %v4111 = vlaneseq
        %v4112 = vshrl.u32 %v4111, 7
        %v4113 = vsub.s32 %v3946, %v4112
        %v4114 = vrot.slane %v3730, %v4113
        %v4115 = vlaneseq
        %v4116 = vshrl.u32 %v4115, 7
        %v4117 = vsub.s32 %v3946, %v4116
        %v4118 = vrot.slane %v3731, %v4117
        %v4119 = vlaneseq
        %v4120 = vshrl.u32 %v4119, 7
        %v4121 = vsub.s32 %v3946, %v4120
        %v4122 = vrot.slane %v3732, %v4121
        %v4123 = vlaneseq
        %v4124 = vshrl.u32 %v4123, 7
        %v4125 = vsub.s32 %v3946, %v4124
        %v4126 = vrot.slane %v3733, %v4125
        %v4127 = vlaneseq
        %v4128 = vshrl.u32 %v4127, 7
        %v4129 = vsub.s32 %v3946, %v4128
        %v4130 = vrot.slane %v3734, %v4129
        %v4131 = vlaneseq
        %v4132 = vshrl.u32 %v4131, 7
        %v4133 = vsub.s32 %v3946, %v4132
        %v4134 = vrot.slane %v3735, %v4133
        %v4135 = vlaneseq
        %v4136 = vshrl.u32 %v4135, 7
        %v4137 = vsub.s32 %v3946, %v4136
        %v4138 = vrot.slane %v3736, %v4137
        %v4139 = vlaneseq
        %v4140 = vshrl.u32 %v4139, 7
        %v4141 = vsub.s32 %v3946, %v4140
        %v4142 = vrot.slane %v3737, %v4141
        %v4143 = vlaneseq
        %v4144 = vshrl.u32 %v4143, 7
        %v4145 = vsub.s32 %v3946, %v4144
        %v4146 = vrot.slane %v3738, %v4145
        %v4147 = vlaneseq
        %v4148 = vshrl.u32 %v4147, 7
        %v4149 = vsub.s32 %v3946, %v4148
        %v4150 = vrot.slane %v3739, %v4149
        %v4151 = vlaneseq
        %v4152 = vshrl.u32 %v4151, 7
        %v4153 = vsub.s32 %v3946, %v4152
        %v4154 = vrot.slane %v3740, %v4153
        %v4155 = vlaneseq
        %v4156 = vshrl.u32 %v4155, 7
        %v4157 = vsub.s32 %v3946, %v4156
        %v4158 = vrot.slane %v3741, %v4157
        %v4159 = vlaneseq
        %v4160 = vshrl.u32 %v4159, 7
        %v4161 = vsub.s32 %v3946, %v4160
        %v4162 = vrot.slane %v3742, %v4161
        %v4163 = vlaneseq
        %v4164 = vshrl.u32 %v4163, 7
        %v4165 = vsub.s32 %v3946, %v4164
        %v4166 = vrot.slane %v3743, %v4165
        %v4167 = vlaneseq
        %v4168 = vshrl.u32 %v4167, 7
        %v4169 = vsub.s32 %v3946, %v4168
        %v4170 = vrot.slane %v3744, %v4169
        %v4171 = vlaneseq
        %v4172 = vshrl.u32 %v4171, 7
        %v4173 = vsub.s32 %v3946, %v4172
        %v4174 = vrot.slane %v3745, %v4173
        %v4175 = vlaneseq
        %v4176 = vshrl.u32 %v4175, 7
        %v4177 = vsub.s32 %v3946, %v4176
        %v4178 = vrot.slane %v3746, %v4177
        %v4179 = vlaneseq
        %v4180 = vshrl.u32 %v4179, 7
        %v4181 = vsub.s32 %v3946, %v4180
        %v4182 = vrot.slane %v3747, %v4181
        %v4183 = vlaneseq
        %v4184 = vshrl.u32 %v4183, 7
        %v4185 = vsub.s32 %v3946, %v4184
        %v4186 = vrot.slane %v3748, %v4185
        %v4187 = vlaneseq
        %v4188 = vshrl.u32 %v4187, 7
        %v4189 = vsub.s32 %v3946, %v4188
        %v4190 = vrot.slane %v3749, %v4189
        %v4191 = vlaneseq
        %v4192 = vshrl.u32 %v4191, 7
        %v4193 = vsub.s32 %v3946, %v4192
        %v4194 = vrot.slane %v3750, %v4193
        %v4195 = vlaneseq
        %v4196 = vshrl.u32 %v4195, 7
        %v4197 = vsub.s32 %v3946, %v4196
        %v4198 = vrot.slane %v3751, %v4197
        %v4199 = vlaneseq
        %v4200 = vshrl.u32 %v4199, 7
        %v4201 = vsub.s32 %v3946, %v4200
        %v4202 = vrot.slane %v3752, %v4201
        %v4203 = vlaneseq
        %v4204 = vshrl.u32 %v4203, 7
        %v4205 = vsub.s32 %v3946, %v4204
        %v4206 = vrot.slane %v3753, %v4205
        %v4207 = vlaneseq
        %v4208 = vshrl.u32 %v4207, 7
        %v4209 = vsub.s32 %v3946, %v4208
        %v4210 = vrot.slane %v3754, %v4209
        %v4211 = vlaneseq
        %v4212 = vshrl.u32 %v4211, 7
        %v4213 = vsub.s32 %v3946, %v4212
        %v4214 = vrot.slane %v3755, %v4213
        %v4215 = vlaneseq
        %v4216 = vshrl.u32 %v4215, 7
        %v4217 = vsub.s32 %v3946, %v4216
        %v4218 = vrot.slane %v3756, %v4217
        %v4219 = vlaneseq
        %v4220 = vshrl.u32 %v4219, 7
        %v4221 = vsub.s32 %v3946, %v4220
        %v4222 = vrot.slane %v3757, %v4221
        %v4223 = vlaneseq
        %v4224 = vshrl.u32 %v4223, 7
        %v4225 = vsub.s32 %v3946, %v4224
        %v4226 = vrot.slane %v3758, %v4225
        %v4227 = vlaneseq
        %v4228 = vshrl.u32 %v4227, 7
        %v4229 = vsub.s32 %v3946, %v4228
        %v4230 = vrot.slane %v3759, %v4229
        %v4231 = vlaneseq
        %v4232 = vshrl.u32 %v4231, 7
        %v4233 = vsub.s32 %v3946, %v4232
        %v4234 = vrot.slane %v3760, %v4233
        %v4235 = vlaneseq
        %v4236 = vshrl.u32 %v4235, 7
        %v4237 = vsub.s32 %v3946, %v4236
        %v4238 = vrot.slane %v3761, %v4237
        %v4239 = vlaneseq
        %v4240 = vshrl.u32 %v4239, 7
        %v4241 = vsub.s32 %v3946, %v4240
        %v4242 = vrot.slane %v3762, %v4241
        %v4243 = vlaneseq
        %v4244 = vshrl.u32 %v4243, 7
        %v4245 = vsub.s32 %v3946, %v4244
        %v4246 = vrot.slane %v3763, %v4245
        %v4247 = vlaneseq
        %v4248 = vshrl.u32 %v4247, 7
        %v4249 = vsub.s32 %v3946, %v4248
        %v4250 = vrot.slane %v3764, %v4249
        %v4251 = vlaneseq
        %v4252 = vshrl.u32 %v4251, 7
        %v4253 = vsub.s32 %v3946, %v4252
        %v4254 = vrot.slane %v3765, %v4253
        %v4255 = vlaneseq
        %v4256 = vshrl.u32 %v4255, 7
        %v4257 = vsub.s32 %v3946, %v4256
        %v4258 = vrot.slane %v3766, %v4257
        %v4259 = vlaneseq
        %v4260 = vshrl.u32 %v4259, 7
        %v4261 = vsub.s32 %v3946, %v4260
        %v4262 = vrot.slane %v3767, %v4261
        %v4263 = vlaneseq
        %v4264 = vshrl.u32 %v4263, 7
        %v4265 = vsub.s32 %v3946, %v4264
        %v4266 = vrot.slane %v3768, %v4265
        %v4267 = vlaneseq
        %v4268 = vshrl.u32 %v4267, 7
        %v4269 = vsub.s32 %v3946, %v4268
        %v4270 = vrot.slane %v3769, %v4269
        %v4271 = vlaneseq
        %v4272 = vshrl.u32 %v4271, 7
        %v4273 = vsub.s32 %v3946, %v4272
        %v4274 = vrot.slane %v3770, %v4273
        %v4275 = vlaneseq
        %v4276 = vshrl.u32 %v4275, 7
        %v4277 = vsub.s32 %v3946, %v4276
        %v4278 = vrot.slane %v3771, %v4277
        %v4279 = vlaneseq
        %v4280 = vshrl.u32 %v4279, 7
        %v4281 = vsub.s32 %v3946, %v4280
        %v4282 = vrot.slane %v3772, %v4281
        %v4283 = vlaneseq
        %v4284 = vshrl.u32 %v4283, 7
        %v4285 = vsub.s32 %v3946, %v4284
        %v4286 = vrot.slane %v3773, %v4285
        %v4287 = vlaneseq
        %v4288 = vshrl.u32 %v4287, 7
        %v4289 = vsub.s32 %v3946, %v4288
        %v4290 = vrot.slane %v3774, %v4289
        %v4291 = vlaneseq
        %v4292 = vshrl.u32 %v4291, 7
        %v4293 = vsub.s32 %v3946, %v4292
        %v4294 = vrot.slane %v3775, %v4293
        %v4295 = vlaneseq
        %v4296 = vshrl.u32 %v4295, 7
        %v4297 = vsub.s32 %v3946, %v4296
        %v4298 = vrot.slane %v3776, %v4297
        %v4299 = vlaneseq
        %v4300 = vshrl.u32 %v4299, 7
        %v4301 = vsub.s32 %v3946, %v4300
        %v4302 = vrot.slane %v3777, %v4301
        %v4303 = vlaneseq
        %v4304 = vshrl.u32 %v4303, 7
        %v4305 = vsub.s32 %v3946, %v4304
        %v4306 = vrot.slane %v3778, %v4305
        %v4307 = vlaneseq
        %v4308 = vshrl.u32 %v4307, 7
        %v4309 = vsub.s32 %v3946, %v4308
        %v4310 = vrot.slane %v3779, %v4309
        %v4311 = vlaneseq
        %v4312 = vshrl.u32 %v4311, 7
        %v4313 = vsub.s32 %v3946, %v4312
        %v4314 = vrot.slane %v3780, %v4313
        %v4315 = vlaneseq
        %v4316 = vshrl.u32 %v4315, 7
        %v4317 = vsub.s32 %v3946, %v4316
        %v4318 = vrot.slane %v3781, %v4317
        %v4319 = vlaneseq
        %v4320 = vshrl.u32 %v4319, 7
        %v4321 = vsub.s32 %v3946, %v4320
        %v4322 = vrot.slane %v3782, %v4321
        %v4323 = vlaneseq
        %v4324 = vshrl.u32 %v4323, 7
        %v4325 = vsub.s32 %v3946, %v4324
        %v4326 = vrot.slane %v3783, %v4325
        %v4327 = vlaneseq
        %v4328 = vshrl.u32 %v4327, 7
        %v4329 = vsub.s32 %v3946, %v4328
        %v4330 = vrot.slane %v3784, %v4329
        %v4331 = vlaneseq
        %v4332 = vshrl.u32 %v4331, 7
        %v4333 = vsub.s32 %v3946, %v4332
        %v4334 = vrot.slane %v3785, %v4333
        %v4335 = vlaneseq
        %v4336 = vshrl.u32 %v4335, 7
        %v4337 = vsub.s32 %v3946, %v4336
        %v4338 = vrot.slane %v3786, %v4337
        %v4339 = vlaneseq
        %v4340 = vshrl.u32 %v4339, 7
        %v4341 = vsub.s32 %v3946, %v4340
        %v4342 = vrot.slane %v3787, %v4341
        %v4343 = vlaneseq
        %v4344 = vshrl.u32 %v4343, 7
        %v4345 = vsub.s32 %v3946, %v4344
        %v4346 = vrot.slane %v3788, %v4345
        %v4347 = vlaneseq
        %v4348 = vshrl.u32 %v4347, 7
        %v4349 = vsub.s32 %v3946, %v4348
        %v4350 = vrot.slane %v3789, %v4349
        %v4351 = vlaneseq
        %v4352 = vshrl.u32 %v4351, 7
        %v4353 = vsub.s32 %v3946, %v4352
        %v4354 = vrot.slane %v3790, %v4353
        %v4355 = vlaneseq
        %v4356 = vshrl.u32 %v4355, 7
        %v4357 = vsub.s32 %v3946, %v4356
        %v4358 = vrot.slane %v3791, %v4357
        %v4359 = vlaneseq
        %v4360 = vshrl.u32 %v4359, 7
        %v4361 = vsub.s32 %v3946, %v4360
        %v4362 = vrot.slane %v3792, %v4361
        %v4363 = vlaneseq
        %v4364 = vshrl.u32 %v4363, 7
        %v4365 = vsub.s32 %v3946, %v4364
        %v4366 = vrot.slane %v3793, %v4365
        %v4367 = vlaneseq
        %v4368 = vshrl.u32 %v4367, 7
        %v4369 = vsub.s32 %v3946, %v4368
        %v4370 = vrot.slane %v3794, %v4369
        %v4371 = vlaneseq
        %v4372 = vshrl.u32 %v4371, 7
        %v4373 = vsub.s32 %v3946, %v4372
        %v4374 = vrot.slane %v3795, %v4373
        %v4375 = vlaneseq
        %v4376 = vshrl.u32 %v4375, 7
        %v4377 = vsub.s32 %v3946, %v4376
        %v4378 = vrot.slane %v3796, %v4377
        %v4379 = vlaneseq
        %v4380 = vshrl.u32 %v4379, 7
        %v4381 = vsub.s32 %v3946, %v4380
        %v4382 = vrot.slane %v3797, %v4381
        %v4383 = vlaneseq
        %v4384 = vshrl.u32 %v4383, 7
        %v4385 = vsub.s32 %v3946, %v4384
        %v4386 = vrot.slane %v3798, %v4385
        %v4387 = vlaneseq
        %v4388 = vshrl.u32 %v4387, 7
        %v4389 = vsub.s32 %v3946, %v4388
        %v4390 = vrot.slane %v3799, %v4389
        %v4391 = vlaneseq
        %v4392 = vshrl.u32 %v4391, 7
        %v4393 = vsub.s32 %v3946, %v4392
        %v4394 = vrot.slane %v3800, %v4393
        %v4395 = vlaneseq
        %v4396 = vshrl.u32 %v4395, 7
        %v4397 = vsub.s32 %v3946, %v4396
        %v4398 = vrot.slane %v3801, %v4397
        %v4399 = vlaneseq
        %v4400 = vshrl.u32 %v4399, 7
        %v4401 = vsub.s32 %v3946, %v4400
        %v4402 = vrot.slane %v3802, %v4401
        %v4403 = vlaneseq
        %v4404 = vshrl.u32 %v4403, 7
        %v4405 = vsub.s32 %v3946, %v4404
        %v4406 = vrot.slane %v3803, %v4405
        %v4407 = vlaneseq
        %v4408 = vshrl.u32 %v4407, 7
        %v4409 = vsub.s32 %v3946, %v4408
        %v4410 = vrot.slane %v3804, %v4409
        %v4411 = vlaneseq
        %v4412 = vshrl.u32 %v4411, 7
        %v4413 = vsub.s32 %v3946, %v4412
        %v4414 = vrot.slane %v3805, %v4413
        %v4415 = vlaneseq
        %v4416 = vshrl.u32 %v4415, 7
        %v4417 = vsub.s32 %v3946, %v4416
        %v4418 = vrot.slane %v3806, %v4417
        %v4419 = vlaneseq
        %v4420 = vshrl.u32 %v4419, 7
        %v4421 = vsub.s32 %v3946, %v4420
        %v4422 = vrot.slane %v3807, %v4421
        %v4423 = vlaneseq
        %v4424 = vshrl.u32 %v4423, 7
        %v4425 = vsub.s32 %v3946, %v4424
        %v4426 = vrot.slane %v3808, %v4425
        %v4427 = vlaneseq
        %v4428 = vshrl.u32 %v4427, 7
        %v4429 = vsub.s32 %v3946, %v4428
        %v4430 = vrot.slane %v3809, %v4429
        %v4431 = vlaneseq
        %v4432 = vshrl.u32 %v4431, 7
        %v4433 = vsub.s32 %v3946, %v4432
        %v4434 = vrot.slane %v3810, %v4433
        %v4435 = vlaneseq
        %v4436 = vshrl.u32 %v4435, 7
        %v4437 = vsub.s32 %v3946, %v4436
        %v4438 = vrot.slane %v3811, %v4437
        %v4439 = vlaneseq
        %v4440 = vshrl.u32 %v4439, 7
        %v4441 = vsub.s32 %v3946, %v4440
        %v4442 = vrot.slane %v3812, %v4441
        %v4443 = vlaneseq
        %v4444 = vshrl.u32 %v4443, 7
        %v4445 = vsub.s32 %v3946, %v4444
        %v4446 = vrot.slane %v3813, %v4445
        %v4447 = vlaneseq
        %v4448 = vshrl.u32 %v4447, 7
        %v4449 = vsub.s32 %v3946, %v4448
        %v4450 = vrot.slane %v3814, %v4449
        %v4451 = vlaneseq
        %v4452 = vshrl.u32 %v4451, 7
        %v4453 = vsub.s32 %v3946, %v4452
        %v4454 = vrot.slane %v3815, %v4453
        %v4455 = vlaneseq
        %v4456 = vshrl.u32 %v4455, 7
        %v4457 = vsub.s32 %v3946, %v4456
        %v4458 = vrot.slane %v3816, %v4457
        %vm4459 = vcmask 1041409
        %v4460 = vsel %vm4459, %v3954, %v3950
        %vm4461 = vcmask 1042434
        %v4462 = vsel %vm4461, %v3958, %v4460
        %vm4463 = vcmask 1043459
        %v4464 = vsel %vm4463, %v3962, %v4462
        %vm4465 = vcmask 1044484
        %v4466 = vsel %vm4465, %v3966, %v4464
        %vm4467 = vcmask 1045509
        %v4468 = vsel %vm4467, %v3970, %v4466
        %vm4469 = vcmask 1046534
        %v4470 = vsel %vm4469, %v3974, %v4468
        %vm4471 = vcmask 1047559
        %v4472 = vsel %vm4471, %v3978, %v4470
        %v4473 = vsel %vm4459, %v3986, %v3982
        %v4474 = vsel %vm4461, %v3990, %v4473
        %v4475 = vsel %vm4463, %v3994, %v4474
        %v4476 = vsel %vm4465, %v3998, %v4475
        %v4477 = vsel %vm4467, %v4002, %v4476
        %v4478 = vsel %vm4469, %v4006, %v4477
        %v4479 = vsel %vm4471, %v4010, %v4478
        %v4480 = vsel %vm4459, %v4018, %v4014
        %v4481 = vsel %vm4461, %v4022, %v4480
        %v4482 = vsel %vm4463, %v4026, %v4481
        %v4483 = vsel %vm4465, %v4030, %v4482
        %v4484 = vsel %vm4467, %v4034, %v4483
        %v4485 = vsel %vm4469, %v4038, %v4484
        %v4486 = vsel %vm4471, %v4042, %v4485
        %v4487 = vsel %vm4459, %v4050, %v4046
        %v4488 = vsel %vm4461, %v4054, %v4487
        %v4489 = vsel %vm4463, %v4058, %v4488
        %v4490 = vsel %vm4465, %v4062, %v4489
        %v4491 = vsel %vm4467, %v4066, %v4490
        %v4492 = vsel %vm4469, %v4070, %v4491
        %v4493 = vsel %vm4471, %v4074, %v4492
        %v4494 = vsel %vm4459, %v4082, %v4078
        %v4495 = vsel %vm4461, %v4086, %v4494
        %v4496 = vsel %vm4463, %v4090, %v4495
        %v4497 = vsel %vm4465, %v4094, %v4496
        %v4498 = vsel %vm4467, %v4098, %v4497
        %v4499 = vsel %vm4469, %v4102, %v4498
        %v4500 = vsel %vm4471, %v4106, %v4499
        %v4501 = vsel %vm4459, %v4114, %v4110
        %v4502 = vsel %vm4461, %v4118, %v4501
        %v4503 = vsel %vm4463, %v4122, %v4502
        %v4504 = vsel %vm4465, %v4126, %v4503
        %v4505 = vsel %vm4467, %v4130, %v4504
        %v4506 = vsel %vm4469, %v4134, %v4505
        %v4507 = vsel %vm4471, %v4138, %v4506
        %v4508 = vsel %vm4459, %v4146, %v4142
        %v4509 = vsel %vm4461, %v4150, %v4508
        %v4510 = vsel %vm4463, %v4154, %v4509
        %v4511 = vsel %vm4465, %v4158, %v4510
        %v4512 = vsel %vm4467, %v4162, %v4511
        %v4513 = vsel %vm4469, %v4166, %v4512
        %v4514 = vsel %vm4471, %v4170, %v4513
        %v4515 = vsel %vm4459, %v4178, %v4174
        %v4516 = vsel %vm4461, %v4182, %v4515
        %v4517 = vsel %vm4463, %v4186, %v4516
        %v4518 = vsel %vm4465, %v4190, %v4517
        %v4519 = vsel %vm4467, %v4194, %v4518
        %v4520 = vsel %vm4469, %v4198, %v4519
        %v4521 = vsel %vm4471, %v4202, %v4520
        %v4522 = vsel %vm4459, %v4210, %v4206
        %v4523 = vsel %vm4461, %v4214, %v4522
        %v4524 = vsel %vm4463, %v4218, %v4523
        %v4525 = vsel %vm4465, %v4222, %v4524
        %v4526 = vsel %vm4467, %v4226, %v4525
        %v4527 = vsel %vm4469, %v4230, %v4526
        %v4528 = vsel %vm4471, %v4234, %v4527
        %v4529 = vsel %vm4459, %v4242, %v4238
        %v4530 = vsel %vm4461, %v4246, %v4529
        %v4531 = vsel %vm4463, %v4250, %v4530
        %v4532 = vsel %vm4465, %v4254, %v4531
        %v4533 = vsel %vm4467, %v4258, %v4532
        %v4534 = vsel %vm4469, %v4262, %v4533
        %v4535 = vsel %vm4471, %v4266, %v4534
        %v4536 = vsel %vm4459, %v4274, %v4270
        %v4537 = vsel %vm4461, %v4278, %v4536
        %v4538 = vsel %vm4463, %v4282, %v4537
        %v4539 = vsel %vm4465, %v4286, %v4538
        %v4540 = vsel %vm4467, %v4290, %v4539
        %v4541 = vsel %vm4469, %v4294, %v4540
        %v4542 = vsel %vm4471, %v4298, %v4541
        %v4543 = vsel %vm4459, %v4306, %v4302
        %v4544 = vsel %vm4461, %v4310, %v4543
        %v4545 = vsel %vm4463, %v4314, %v4544
        %v4546 = vsel %vm4465, %v4318, %v4545
        %v4547 = vsel %vm4467, %v4322, %v4546
        %v4548 = vsel %vm4469, %v4326, %v4547
        %v4549 = vsel %vm4471, %v4330, %v4548
        %v4550 = vsel %vm4459, %v4338, %v4334
        %v4551 = vsel %vm4461, %v4342, %v4550
        %v4552 = vsel %vm4463, %v4346, %v4551
        %v4553 = vsel %vm4465, %v4350, %v4552
        %v4554 = vsel %vm4467, %v4354, %v4553
        %v4555 = vsel %vm4469, %v4358, %v4554
        %v4556 = vsel %vm4471, %v4362, %v4555
        %v4557 = vsel %vm4459, %v4370, %v4366
        %v4558 = vsel %vm4461, %v4374, %v4557
        %v4559 = vsel %vm4463, %v4378, %v4558
        %v4560 = vsel %vm4465, %v4382, %v4559
        %v4561 = vsel %vm4467, %v4386, %v4560
        %v4562 = vsel %vm4469, %v4390, %v4561
        %v4563 = vsel %vm4471, %v4394, %v4562
        %v4564 = vsel %vm4459, %v4402, %v4398
        %v4565 = vsel %vm4461, %v4406, %v4564
        %v4566 = vsel %vm4463, %v4410, %v4565
        %v4567 = vsel %vm4465, %v4414, %v4566
        %v4568 = vsel %vm4467, %v4418, %v4567
        %v4569 = vsel %vm4469, %v4422, %v4568
        %v4570 = vsel %vm4471, %v4426, %v4569
        %v4571 = vsel %vm4459, %v4434, %v4430
        %v4572 = vsel %vm4461, %v4438, %v4571
        %v4573 = vsel %vm4463, %v4442, %v4572
        %v4574 = vsel %vm4465, %v4446, %v4573
        %v4575 = vsel %vm4467, %v4450, %v4574
        %v4576 = vsel %vm4469, %v4454, %v4575
        %v4577 = vsel %vm4471, %v4458, %v4576
        %vm4594 = vcmask 64512
        %v4595 = vsel %vm4594, %v4472, -inf
        %4596 = vmax.xlane.f32.xlu0 %v4595
        %v4597 = vpop.xlane.xlu0 %4596
        %v4598 = vsel %vm4594, %v4479, -inf
        %4599 = vmax.xlane.f32.xlu0 %v4598
        %v4600 = vpop.xlane.xlu0 %4599
        %v4601 = vsel %vm4594, %v4486, -inf
        %4602 = vmax.xlane.f32.xlu0 %v4601
        %v4603 = vpop.xlane.xlu0 %4602
        %v4604 = vsel %vm4594, %v4493, -inf
        %4605 = vmax.xlane.f32.xlu0 %v4604
        %v4606 = vpop.xlane.xlu0 %4605
        %v4607 = vsel %vm4594, %v4500, -inf
        %4608 = vmax.xlane.f32.xlu0 %v4607
        %v4609 = vpop.xlane.xlu0 %4608
        %v4610 = vsel %vm4594, %v4507, -inf
        %4611 = vmax.xlane.f32.xlu0 %v4610
        %v4612 = vpop.xlane.xlu0 %4611
        %v4613 = vsel %vm4594, %v4514, -inf
        %4614 = vmax.xlane.f32.xlu0 %v4613
        %v4615 = vpop.xlane.xlu0 %4614
        %v4616 = vsel %vm4594, %v4521, -inf
        %4617 = vmax.xlane.f32.xlu0 %v4616
        %v4618 = vpop.xlane.xlu0 %4617
        %v4619 = vsel %vm4594, %v4528, -inf
        %4620 = vmax.xlane.f32.xlu0 %v4619
        %v4621 = vpop.xlane.xlu0 %4620
        %v4622 = vsel %vm4594, %v4535, -inf
        %4623 = vmax.xlane.f32.xlu0 %v4622
        %v4624 = vpop.xlane.xlu0 %4623
        %v4625 = vsel %vm4594, %v4542, -inf
        %4626 = vmax.xlane.f32.xlu0 %v4625
        %v4627 = vpop.xlane.xlu0 %4626
        %v4628 = vsel %vm4594, %v4549, -inf
        %4629 = vmax.xlane.f32.xlu0 %v4628
        %v4630 = vpop.xlane.xlu0 %4629
        %v4631 = vsel %vm4594, %v4556, -inf
        %4632 = vmax.xlane.f32.xlu0 %v4631
        %v4633 = vpop.xlane.xlu0 %4632
        %v4634 = vsel %vm4594, %v4563, -inf
        %4635 = vmax.xlane.f32.xlu0 %v4634
        %v4636 = vpop.xlane.xlu0 %4635
        %v4637 = vsel %vm4594, %v4570, -inf
        %4638 = vmax.xlane.f32.xlu0 %v4637
        %v4639 = vpop.xlane.xlu0 %4638
        %v4640 = vsel %vm4594, %v4577, -inf
        %4641 = vmax.xlane.f32.xlu0 %v4640
        %v4642 = vpop.xlane.xlu0 %4641
        %v4659 = vlaneseq
        %v4660 = vshrl.u32 %v4659, 7
        %v4661 = vsub.s32 0, %v4660
        %v4662 = vrot.slane %v4597, %v4661
        %v4663 = vlaneseq
        %v4664 = vshrl.u32 %v4663, 7
        %v4665 = vsub.s32 1, %v4664
        %v4666 = vrot.slane %v4597, %v4665
        %v4667 = vlaneseq
        %v4668 = vshrl.u32 %v4667, 7
        %v4669 = vsub.s32 2, %v4668
        %v4670 = vrot.slane %v4597, %v4669
        %v4671 = vlaneseq
        %v4672 = vshrl.u32 %v4671, 7
        %v4673 = vsub.s32 3, %v4672
        %v4674 = vrot.slane %v4597, %v4673
        %v4675 = vlaneseq
        %v4676 = vshrl.u32 %v4675, 7
        %v4677 = vsub.s32 4, %v4676
        %v4678 = vrot.slane %v4597, %v4677
        %v4679 = vlaneseq
        %v4680 = vshrl.u32 %v4679, 7
        %v4681 = vsub.s32 5, %v4680
        %v4682 = vrot.slane %v4597, %v4681
        %v4683 = vlaneseq
        %v4684 = vshrl.u32 %v4683, 7
        %v4685 = vsub.s32 6, %v4684
        %v4686 = vrot.slane %v4597, %v4685
        %v4687 = vlaneseq
        %v4688 = vshrl.u32 %v4687, 7
        %v4689 = vsub.s32 7, %v4688
        %v4690 = vrot.slane %v4597, %v4689
        %v4691 = vlaneseq
        %v4692 = vshrl.u32 %v4691, 7
        %v4693 = vsub.s32 0, %v4692
        %v4694 = vrot.slane %v4600, %v4693
        %v4695 = vlaneseq
        %v4696 = vshrl.u32 %v4695, 7
        %v4697 = vsub.s32 1, %v4696
        %v4698 = vrot.slane %v4600, %v4697
        %v4699 = vlaneseq
        %v4700 = vshrl.u32 %v4699, 7
        %v4701 = vsub.s32 2, %v4700
        %v4702 = vrot.slane %v4600, %v4701
        %v4703 = vlaneseq
        %v4704 = vshrl.u32 %v4703, 7
        %v4705 = vsub.s32 3, %v4704
        %v4706 = vrot.slane %v4600, %v4705
        %v4707 = vlaneseq
        %v4708 = vshrl.u32 %v4707, 7
        %v4709 = vsub.s32 4, %v4708
        %v4710 = vrot.slane %v4600, %v4709
        %v4711 = vlaneseq
        %v4712 = vshrl.u32 %v4711, 7
        %v4713 = vsub.s32 5, %v4712
        %v4714 = vrot.slane %v4600, %v4713
        %v4715 = vlaneseq
        %v4716 = vshrl.u32 %v4715, 7
        %v4717 = vsub.s32 6, %v4716
        %v4718 = vrot.slane %v4600, %v4717
        %v4719 = vlaneseq
        %v4720 = vshrl.u32 %v4719, 7
        %v4721 = vsub.s32 7, %v4720
        %v4722 = vrot.slane %v4600, %v4721
        %v4723 = vlaneseq
        %v4724 = vshrl.u32 %v4723, 7
        %v4725 = vsub.s32 0, %v4724
        %v4726 = vrot.slane %v4603, %v4725
        %v4727 = vlaneseq
        %v4728 = vshrl.u32 %v4727, 7
        %v4729 = vsub.s32 1, %v4728
        %v4730 = vrot.slane %v4603, %v4729
        %v4731 = vlaneseq
        %v4732 = vshrl.u32 %v4731, 7
        %v4733 = vsub.s32 2, %v4732
        %v4734 = vrot.slane %v4603, %v4733
        %v4735 = vlaneseq
        %v4736 = vshrl.u32 %v4735, 7
        %v4737 = vsub.s32 3, %v4736
        %v4738 = vrot.slane %v4603, %v4737
        %v4739 = vlaneseq
        %v4740 = vshrl.u32 %v4739, 7
        %v4741 = vsub.s32 4, %v4740
        %v4742 = vrot.slane %v4603, %v4741
        %v4743 = vlaneseq
        %v4744 = vshrl.u32 %v4743, 7
        %v4745 = vsub.s32 5, %v4744
        %v4746 = vrot.slane %v4603, %v4745
        %v4747 = vlaneseq
        %v4748 = vshrl.u32 %v4747, 7
        %v4749 = vsub.s32 6, %v4748
        %v4750 = vrot.slane %v4603, %v4749
        %v4751 = vlaneseq
        %v4752 = vshrl.u32 %v4751, 7
        %v4753 = vsub.s32 7, %v4752
        %v4754 = vrot.slane %v4603, %v4753
        %v4755 = vlaneseq
        %v4756 = vshrl.u32 %v4755, 7
        %v4757 = vsub.s32 0, %v4756
        %v4758 = vrot.slane %v4606, %v4757
        %v4759 = vlaneseq
        %v4760 = vshrl.u32 %v4759, 7
        %v4761 = vsub.s32 1, %v4760
        %v4762 = vrot.slane %v4606, %v4761
        %v4763 = vlaneseq
        %v4764 = vshrl.u32 %v4763, 7
        %v4765 = vsub.s32 2, %v4764
        %v4766 = vrot.slane %v4606, %v4765
        %v4767 = vlaneseq
        %v4768 = vshrl.u32 %v4767, 7
        %v4769 = vsub.s32 3, %v4768
        %v4770 = vrot.slane %v4606, %v4769
        %v4771 = vlaneseq
        %v4772 = vshrl.u32 %v4771, 7
        %v4773 = vsub.s32 4, %v4772
        %v4774 = vrot.slane %v4606, %v4773
        %v4775 = vlaneseq
        %v4776 = vshrl.u32 %v4775, 7
        %v4777 = vsub.s32 5, %v4776
        %v4778 = vrot.slane %v4606, %v4777
        %v4779 = vlaneseq
        %v4780 = vshrl.u32 %v4779, 7
        %v4781 = vsub.s32 6, %v4780
        %v4782 = vrot.slane %v4606, %v4781
        %v4783 = vlaneseq
        %v4784 = vshrl.u32 %v4783, 7
        %v4785 = vsub.s32 7, %v4784
        %v4786 = vrot.slane %v4606, %v4785
        %v4787 = vlaneseq
        %v4788 = vshrl.u32 %v4787, 7
        %v4789 = vsub.s32 0, %v4788
        %v4790 = vrot.slane %v4609, %v4789
        %v4791 = vlaneseq
        %v4792 = vshrl.u32 %v4791, 7
        %v4793 = vsub.s32 1, %v4792
        %v4794 = vrot.slane %v4609, %v4793
        %v4795 = vlaneseq
        %v4796 = vshrl.u32 %v4795, 7
        %v4797 = vsub.s32 2, %v4796
        %v4798 = vrot.slane %v4609, %v4797
        %v4799 = vlaneseq
        %v4800 = vshrl.u32 %v4799, 7
        %v4801 = vsub.s32 3, %v4800
        %v4802 = vrot.slane %v4609, %v4801
        %v4803 = vlaneseq
        %v4804 = vshrl.u32 %v4803, 7
        %v4805 = vsub.s32 4, %v4804
        %v4806 = vrot.slane %v4609, %v4805
        %v4807 = vlaneseq
        %v4808 = vshrl.u32 %v4807, 7
        %v4809 = vsub.s32 5, %v4808
        %v4810 = vrot.slane %v4609, %v4809
        %v4811 = vlaneseq
        %v4812 = vshrl.u32 %v4811, 7
        %v4813 = vsub.s32 6, %v4812
        %v4814 = vrot.slane %v4609, %v4813
        %v4815 = vlaneseq
        %v4816 = vshrl.u32 %v4815, 7
        %v4817 = vsub.s32 7, %v4816
        %v4818 = vrot.slane %v4609, %v4817
        %v4819 = vlaneseq
        %v4820 = vshrl.u32 %v4819, 7
        %v4821 = vsub.s32 0, %v4820
        %v4822 = vrot.slane %v4612, %v4821
        %v4823 = vlaneseq
        %v4824 = vshrl.u32 %v4823, 7
        %v4825 = vsub.s32 1, %v4824
        %v4826 = vrot.slane %v4612, %v4825
        %v4827 = vlaneseq
        %v4828 = vshrl.u32 %v4827, 7
        %v4829 = vsub.s32 2, %v4828
        %v4830 = vrot.slane %v4612, %v4829
        %v4831 = vlaneseq
        %v4832 = vshrl.u32 %v4831, 7
        %v4833 = vsub.s32 3, %v4832
        %v4834 = vrot.slane %v4612, %v4833
        %v4835 = vlaneseq
        %v4836 = vshrl.u32 %v4835, 7
        %v4837 = vsub.s32 4, %v4836
        %v4838 = vrot.slane %v4612, %v4837
        %v4839 = vlaneseq
        %v4840 = vshrl.u32 %v4839, 7
        %v4841 = vsub.s32 5, %v4840
        %v4842 = vrot.slane %v4612, %v4841
        %v4843 = vlaneseq
        %v4844 = vshrl.u32 %v4843, 7
        %v4845 = vsub.s32 6, %v4844
        %v4846 = vrot.slane %v4612, %v4845
        %v4847 = vlaneseq
        %v4848 = vshrl.u32 %v4847, 7
        %v4849 = vsub.s32 7, %v4848
        %v4850 = vrot.slane %v4612, %v4849
        %v4851 = vlaneseq
        %v4852 = vshrl.u32 %v4851, 7
        %v4853 = vsub.s32 0, %v4852
        %v4854 = vrot.slane %v4615, %v4853
        %v4855 = vlaneseq
        %v4856 = vshrl.u32 %v4855, 7
        %v4857 = vsub.s32 1, %v4856
        %v4858 = vrot.slane %v4615, %v4857
        %v4859 = vlaneseq
        %v4860 = vshrl.u32 %v4859, 7
        %v4861 = vsub.s32 2, %v4860
        %v4862 = vrot.slane %v4615, %v4861
        %v4863 = vlaneseq
        %v4864 = vshrl.u32 %v4863, 7
        %v4865 = vsub.s32 3, %v4864
        %v4866 = vrot.slane %v4615, %v4865
        %v4867 = vlaneseq
        %v4868 = vshrl.u32 %v4867, 7
        %v4869 = vsub.s32 4, %v4868
        %v4870 = vrot.slane %v4615, %v4869
        %v4871 = vlaneseq
        %v4872 = vshrl.u32 %v4871, 7
        %v4873 = vsub.s32 5, %v4872
        %v4874 = vrot.slane %v4615, %v4873
        %v4875 = vlaneseq
        %v4876 = vshrl.u32 %v4875, 7
        %v4877 = vsub.s32 6, %v4876
        %v4878 = vrot.slane %v4615, %v4877
        %v4879 = vlaneseq
        %v4880 = vshrl.u32 %v4879, 7
        %v4881 = vsub.s32 7, %v4880
        %v4882 = vrot.slane %v4615, %v4881
        %v4883 = vlaneseq
        %v4884 = vshrl.u32 %v4883, 7
        %v4885 = vsub.s32 0, %v4884
        %v4886 = vrot.slane %v4618, %v4885
        %v4887 = vlaneseq
        %v4888 = vshrl.u32 %v4887, 7
        %v4889 = vsub.s32 1, %v4888
        %v4890 = vrot.slane %v4618, %v4889
        %v4891 = vlaneseq
        %v4892 = vshrl.u32 %v4891, 7
        %v4893 = vsub.s32 2, %v4892
        %v4894 = vrot.slane %v4618, %v4893
        %v4895 = vlaneseq
        %v4896 = vshrl.u32 %v4895, 7
        %v4897 = vsub.s32 3, %v4896
        %v4898 = vrot.slane %v4618, %v4897
        %v4899 = vlaneseq
        %v4900 = vshrl.u32 %v4899, 7
        %v4901 = vsub.s32 4, %v4900
        %v4902 = vrot.slane %v4618, %v4901
        %v4903 = vlaneseq
        %v4904 = vshrl.u32 %v4903, 7
        %v4905 = vsub.s32 5, %v4904
        %v4906 = vrot.slane %v4618, %v4905
        %v4907 = vlaneseq
        %v4908 = vshrl.u32 %v4907, 7
        %v4909 = vsub.s32 6, %v4908
        %v4910 = vrot.slane %v4618, %v4909
        %v4911 = vlaneseq
        %v4912 = vshrl.u32 %v4911, 7
        %v4913 = vsub.s32 7, %v4912
        %v4914 = vrot.slane %v4618, %v4913
        %v4915 = vlaneseq
        %v4916 = vshrl.u32 %v4915, 7
        %v4917 = vsub.s32 0, %v4916
        %v4918 = vrot.slane %v4621, %v4917
        %v4919 = vlaneseq
        %v4920 = vshrl.u32 %v4919, 7
        %v4921 = vsub.s32 1, %v4920
        %v4922 = vrot.slane %v4621, %v4921
        %v4923 = vlaneseq
        %v4924 = vshrl.u32 %v4923, 7
        %v4925 = vsub.s32 2, %v4924
        %v4926 = vrot.slane %v4621, %v4925
        %v4927 = vlaneseq
        %v4928 = vshrl.u32 %v4927, 7
        %v4929 = vsub.s32 3, %v4928
        %v4930 = vrot.slane %v4621, %v4929
        %v4931 = vlaneseq
        %v4932 = vshrl.u32 %v4931, 7
        %v4933 = vsub.s32 4, %v4932
        %v4934 = vrot.slane %v4621, %v4933
        %v4935 = vlaneseq
        %v4936 = vshrl.u32 %v4935, 7
        %v4937 = vsub.s32 5, %v4936
        %v4938 = vrot.slane %v4621, %v4937
        %v4939 = vlaneseq
        %v4940 = vshrl.u32 %v4939, 7
        %v4941 = vsub.s32 6, %v4940
        %v4942 = vrot.slane %v4621, %v4941
        %v4943 = vlaneseq
        %v4944 = vshrl.u32 %v4943, 7
        %v4945 = vsub.s32 7, %v4944
        %v4946 = vrot.slane %v4621, %v4945
        %v4947 = vlaneseq
        %v4948 = vshrl.u32 %v4947, 7
        %v4949 = vsub.s32 0, %v4948
        %v4950 = vrot.slane %v4624, %v4949
        %v4951 = vlaneseq
        %v4952 = vshrl.u32 %v4951, 7
        %v4953 = vsub.s32 1, %v4952
        %v4954 = vrot.slane %v4624, %v4953
        %v4955 = vlaneseq
        %v4956 = vshrl.u32 %v4955, 7
        %v4957 = vsub.s32 2, %v4956
        %v4958 = vrot.slane %v4624, %v4957
        %v4959 = vlaneseq
        %v4960 = vshrl.u32 %v4959, 7
        %v4961 = vsub.s32 3, %v4960
        %v4962 = vrot.slane %v4624, %v4961
        %v4963 = vlaneseq
        %v4964 = vshrl.u32 %v4963, 7
        %v4965 = vsub.s32 4, %v4964
        %v4966 = vrot.slane %v4624, %v4965
        %v4967 = vlaneseq
        %v4968 = vshrl.u32 %v4967, 7
        %v4969 = vsub.s32 5, %v4968
        %v4970 = vrot.slane %v4624, %v4969
        %v4971 = vlaneseq
        %v4972 = vshrl.u32 %v4971, 7
        %v4973 = vsub.s32 6, %v4972
        %v4974 = vrot.slane %v4624, %v4973
        %v4975 = vlaneseq
        %v4976 = vshrl.u32 %v4975, 7
        %v4977 = vsub.s32 7, %v4976
        %v4978 = vrot.slane %v4624, %v4977
        %v4979 = vlaneseq
        %v4980 = vshrl.u32 %v4979, 7
        %v4981 = vsub.s32 0, %v4980
        %v4982 = vrot.slane %v4627, %v4981
        %v4983 = vlaneseq
        %v4984 = vshrl.u32 %v4983, 7
        %v4985 = vsub.s32 1, %v4984
        %v4986 = vrot.slane %v4627, %v4985
        %v4987 = vlaneseq
        %v4988 = vshrl.u32 %v4987, 7
        %v4989 = vsub.s32 2, %v4988
        %v4990 = vrot.slane %v4627, %v4989
        %v4991 = vlaneseq
        %v4992 = vshrl.u32 %v4991, 7
        %v4993 = vsub.s32 3, %v4992
        %v4994 = vrot.slane %v4627, %v4993
        %v4995 = vlaneseq
        %v4996 = vshrl.u32 %v4995, 7
        %v4997 = vsub.s32 4, %v4996
        %v4998 = vrot.slane %v4627, %v4997
        %v4999 = vlaneseq
        %v5000 = vshrl.u32 %v4999, 7
        %v5001 = vsub.s32 5, %v5000
        %v5002 = vrot.slane %v4627, %v5001
        %v5003 = vlaneseq
        %v5004 = vshrl.u32 %v5003, 7
        %v5005 = vsub.s32 6, %v5004
        %v5006 = vrot.slane %v4627, %v5005
        %v5007 = vlaneseq
        %v5008 = vshrl.u32 %v5007, 7
        %v5009 = vsub.s32 7, %v5008
        %v5010 = vrot.slane %v4627, %v5009
        %v5011 = vlaneseq
        %v5012 = vshrl.u32 %v5011, 7
        %v5013 = vsub.s32 0, %v5012
        %v5014 = vrot.slane %v4630, %v5013
        %v5015 = vlaneseq
        %v5016 = vshrl.u32 %v5015, 7
        %v5017 = vsub.s32 1, %v5016
        %v5018 = vrot.slane %v4630, %v5017
        %v5019 = vlaneseq
        %v5020 = vshrl.u32 %v5019, 7
        %v5021 = vsub.s32 2, %v5020
        %v5022 = vrot.slane %v4630, %v5021
        %v5023 = vlaneseq
        %v5024 = vshrl.u32 %v5023, 7
        %v5025 = vsub.s32 3, %v5024
        %v5026 = vrot.slane %v4630, %v5025
        %v5027 = vlaneseq
        %v5028 = vshrl.u32 %v5027, 7
        %v5029 = vsub.s32 4, %v5028
        %v5030 = vrot.slane %v4630, %v5029
        %v5031 = vlaneseq
        %v5032 = vshrl.u32 %v5031, 7
        %v5033 = vsub.s32 5, %v5032
        %v5034 = vrot.slane %v4630, %v5033
        %v5035 = vlaneseq
        %v5036 = vshrl.u32 %v5035, 7
        %v5037 = vsub.s32 6, %v5036
        %v5038 = vrot.slane %v4630, %v5037
        %v5039 = vlaneseq
        %v5040 = vshrl.u32 %v5039, 7
        %v5041 = vsub.s32 7, %v5040
        %v5042 = vrot.slane %v4630, %v5041
        %v5043 = vlaneseq
        %v5044 = vshrl.u32 %v5043, 7
        %v5045 = vsub.s32 0, %v5044
        %v5046 = vrot.slane %v4633, %v5045
        %v5047 = vlaneseq
        %v5048 = vshrl.u32 %v5047, 7
        %v5049 = vsub.s32 1, %v5048
        %v5050 = vrot.slane %v4633, %v5049
        %v5051 = vlaneseq
        %v5052 = vshrl.u32 %v5051, 7
        %v5053 = vsub.s32 2, %v5052
        %v5054 = vrot.slane %v4633, %v5053
        %v5055 = vlaneseq
        %v5056 = vshrl.u32 %v5055, 7
        %v5057 = vsub.s32 3, %v5056
        %v5058 = vrot.slane %v4633, %v5057
        %v5059 = vlaneseq
        %v5060 = vshrl.u32 %v5059, 7
        %v5061 = vsub.s32 4, %v5060
        %v5062 = vrot.slane %v4633, %v5061
        %v5063 = vlaneseq
        %v5064 = vshrl.u32 %v5063, 7
        %v5065 = vsub.s32 5, %v5064
        %v5066 = vrot.slane %v4633, %v5065
        %v5067 = vlaneseq
        %v5068 = vshrl.u32 %v5067, 7
        %v5069 = vsub.s32 6, %v5068
        %v5070 = vrot.slane %v4633, %v5069
        %v5071 = vlaneseq
        %v5072 = vshrl.u32 %v5071, 7
        %v5073 = vsub.s32 7, %v5072
        %v5074 = vrot.slane %v4633, %v5073
        %v5075 = vlaneseq
        %v5076 = vshrl.u32 %v5075, 7
        %v5077 = vsub.s32 0, %v5076
        %v5078 = vrot.slane %v4636, %v5077
        %v5079 = vlaneseq
        %v5080 = vshrl.u32 %v5079, 7
        %v5081 = vsub.s32 1, %v5080
        %v5082 = vrot.slane %v4636, %v5081
        %v5083 = vlaneseq
        %v5084 = vshrl.u32 %v5083, 7
        %v5085 = vsub.s32 2, %v5084
        %v5086 = vrot.slane %v4636, %v5085
        %v5087 = vlaneseq
        %v5088 = vshrl.u32 %v5087, 7
        %v5089 = vsub.s32 3, %v5088
        %v5090 = vrot.slane %v4636, %v5089
        %v5091 = vlaneseq
        %v5092 = vshrl.u32 %v5091, 7
        %v5093 = vsub.s32 4, %v5092
        %v5094 = vrot.slane %v4636, %v5093
        %v5095 = vlaneseq
        %v5096 = vshrl.u32 %v5095, 7
        %v5097 = vsub.s32 5, %v5096
        %v5098 = vrot.slane %v4636, %v5097
        %v5099 = vlaneseq
        %v5100 = vshrl.u32 %v5099, 7
        %v5101 = vsub.s32 6, %v5100
        %v5102 = vrot.slane %v4636, %v5101
        %v5103 = vlaneseq
        %v5104 = vshrl.u32 %v5103, 7
        %v5105 = vsub.s32 7, %v5104
        %v5106 = vrot.slane %v4636, %v5105
        %v5107 = vlaneseq
        %v5108 = vshrl.u32 %v5107, 7
        %v5109 = vsub.s32 0, %v5108
        %v5110 = vrot.slane %v4639, %v5109
        %v5111 = vlaneseq
        %v5112 = vshrl.u32 %v5111, 7
        %v5113 = vsub.s32 1, %v5112
        %v5114 = vrot.slane %v4639, %v5113
        %v5115 = vlaneseq
        %v5116 = vshrl.u32 %v5115, 7
        %v5117 = vsub.s32 2, %v5116
        %v5118 = vrot.slane %v4639, %v5117
        %v5119 = vlaneseq
        %v5120 = vshrl.u32 %v5119, 7
        %v5121 = vsub.s32 3, %v5120
        %v5122 = vrot.slane %v4639, %v5121
        %v5123 = vlaneseq
        %v5124 = vshrl.u32 %v5123, 7
        %v5125 = vsub.s32 4, %v5124
        %v5126 = vrot.slane %v4639, %v5125
        %v5127 = vlaneseq
        %v5128 = vshrl.u32 %v5127, 7
        %v5129 = vsub.s32 5, %v5128
        %v5130 = vrot.slane %v4639, %v5129
        %v5131 = vlaneseq
        %v5132 = vshrl.u32 %v5131, 7
        %v5133 = vsub.s32 6, %v5132
        %v5134 = vrot.slane %v4639, %v5133
        %v5135 = vlaneseq
        %v5136 = vshrl.u32 %v5135, 7
        %v5137 = vsub.s32 7, %v5136
        %v5138 = vrot.slane %v4639, %v5137
        %v5139 = vlaneseq
        %v5140 = vshrl.u32 %v5139, 7
        %v5141 = vsub.s32 0, %v5140
        %v5142 = vrot.slane %v4642, %v5141
        %v5143 = vlaneseq
        %v5144 = vshrl.u32 %v5143, 7
        %v5145 = vsub.s32 1, %v5144
        %v5146 = vrot.slane %v4642, %v5145
        %v5147 = vlaneseq
        %v5148 = vshrl.u32 %v5147, 7
        %v5149 = vsub.s32 2, %v5148
        %v5150 = vrot.slane %v4642, %v5149
        %v5151 = vlaneseq
        %v5152 = vshrl.u32 %v5151, 7
        %v5153 = vsub.s32 3, %v5152
        %v5154 = vrot.slane %v4642, %v5153
        %v5155 = vlaneseq
        %v5156 = vshrl.u32 %v5155, 7
        %v5157 = vsub.s32 4, %v5156
        %v5158 = vrot.slane %v4642, %v5157
        %v5159 = vlaneseq
        %v5160 = vshrl.u32 %v5159, 7
        %v5161 = vsub.s32 5, %v5160
        %v5162 = vrot.slane %v4642, %v5161
        %v5163 = vlaneseq
        %v5164 = vshrl.u32 %v5163, 7
        %v5165 = vsub.s32 6, %v5164
        %v5166 = vrot.slane %v4642, %v5165
        %v5167 = vlaneseq
        %v5168 = vshrl.u32 %v5167, 7
        %v5169 = vsub.s32 7, %v5168
        %v5170 = vrot.slane %v4642, %v5169
        %v5299 = vsub.f32 %v3689, %v4662
        %v5300 = vsub.f32 %v3690, %v4666
        %v5301 = vsub.f32 %v3691, %v4670
        %v5302 = vsub.f32 %v3692, %v4674
        %v5303 = vsub.f32 %v3693, %v4678
        %v5304 = vsub.f32 %v3694, %v4682
        %v5305 = vsub.f32 %v3695, %v4686
        %v5306 = vsub.f32 %v3696, %v4690
        %v5307 = vsub.f32 %v3697, %v4694
        %v5308 = vsub.f32 %v3698, %v4698
        %v5309 = vsub.f32 %v3699, %v4702
        %v5310 = vsub.f32 %v3700, %v4706
        %v5311 = vsub.f32 %v3701, %v4710
        %v5312 = vsub.f32 %v3702, %v4714
        %v5313 = vsub.f32 %v3703, %v4718
        %v5314 = vsub.f32 %v3704, %v4722
        %v5315 = vsub.f32 %v3705, %v4726
        %v5316 = vsub.f32 %v3706, %v4730
        %v5317 = vsub.f32 %v3707, %v4734
        %v5318 = vsub.f32 %v3708, %v4738
        %v5319 = vsub.f32 %v3709, %v4742
        %v5320 = vsub.f32 %v3710, %v4746
        %v5321 = vsub.f32 %v3711, %v4750
        %v5322 = vsub.f32 %v3712, %v4754
        %v5323 = vsub.f32 %v3713, %v4758
        %v5324 = vsub.f32 %v3714, %v4762
        %v5325 = vsub.f32 %v3715, %v4766
        %v5326 = vsub.f32 %v3716, %v4770
        %v5327 = vsub.f32 %v3717, %v4774
        %v5328 = vsub.f32 %v3718, %v4778
        %v5329 = vsub.f32 %v3719, %v4782
        %v5330 = vsub.f32 %v3720, %v4786
        %v5331 = vsub.f32 %v3721, %v4790
        %v5332 = vsub.f32 %v3722, %v4794
        %v5333 = vsub.f32 %v3723, %v4798
        %v5334 = vsub.f32 %v3724, %v4802
        %v5335 = vsub.f32 %v3725, %v4806
        %v5336 = vsub.f32 %v3726, %v4810
        %v5337 = vsub.f32 %v3727, %v4814
        %v5338 = vsub.f32 %v3728, %v4818
        %v5339 = vsub.f32 %v3729, %v4822
        %v5340 = vsub.f32 %v3730, %v4826
        %v5341 = vsub.f32 %v3731, %v4830
        %v5342 = vsub.f32 %v3732, %v4834
        %v5343 = vsub.f32 %v3733, %v4838
        %v5344 = vsub.f32 %v3734, %v4842
        %v5345 = vsub.f32 %v3735, %v4846
        %v5346 = vsub.f32 %v3736, %v4850
        %v5347 = vsub.f32 %v3737, %v4854
        %v5348 = vsub.f32 %v3738, %v4858
        %v5349 = vsub.f32 %v3739, %v4862
        %v5350 = vsub.f32 %v3740, %v4866
        %v5351 = vsub.f32 %v3741, %v4870
        %v5352 = vsub.f32 %v3742, %v4874
        %v5353 = vsub.f32 %v3743, %v4878
        %v5354 = vsub.f32 %v3744, %v4882
        %v5355 = vsub.f32 %v3745, %v4886
        %v5356 = vsub.f32 %v3746, %v4890
        %v5357 = vsub.f32 %v3747, %v4894
        %v5358 = vsub.f32 %v3748, %v4898
        %v5359 = vsub.f32 %v3749, %v4902
        %v5360 = vsub.f32 %v3750, %v4906
        %v5361 = vsub.f32 %v3751, %v4910
        %v5362 = vsub.f32 %v3752, %v4914
        %v5363 = vsub.f32 %v3753, %v4918
        %v5364 = vsub.f32 %v3754, %v4922
        %v5365 = vsub.f32 %v3755, %v4926
        %v5366 = vsub.f32 %v3756, %v4930
        %v5367 = vsub.f32 %v3757, %v4934
        %v5368 = vsub.f32 %v3758, %v4938
        %v5369 = vsub.f32 %v3759, %v4942
        %v5370 = vsub.f32 %v3760, %v4946
        %v5371 = vsub.f32 %v3761, %v4950
        %v5372 = vsub.f32 %v3762, %v4954
        %v5373 = vsub.f32 %v3763, %v4958
        %v5374 = vsub.f32 %v3764, %v4962
        %v5375 = vsub.f32 %v3765, %v4966
        %v5376 = vsub.f32 %v3766, %v4970
        %v5377 = vsub.f32 %v3767, %v4974
        %v5378 = vsub.f32 %v3768, %v4978
        %v5379 = vsub.f32 %v3769, %v4982
        %v5380 = vsub.f32 %v3770, %v4986
        %v5381 = vsub.f32 %v3771, %v4990
        %v5382 = vsub.f32 %v3772, %v4994
        %v5383 = vsub.f32 %v3773, %v4998
        %v5384 = vsub.f32 %v3774, %v5002
        %v5385 = vsub.f32 %v3775, %v5006
        %v5386 = vsub.f32 %v3776, %v5010
        %v5387 = vsub.f32 %v3777, %v5014
        %v5388 = vsub.f32 %v3778, %v5018
        %v5389 = vsub.f32 %v3779, %v5022
        %v5390 = vsub.f32 %v3780, %v5026
        %v5391 = vsub.f32 %v3781, %v5030
        %v5392 = vsub.f32 %v3782, %v5034
        %v5393 = vsub.f32 %v3783, %v5038
        %v5394 = vsub.f32 %v3784, %v5042
        %v5395 = vsub.f32 %v3785, %v5046
        %v5396 = vsub.f32 %v3786, %v5050
        %v5397 = vsub.f32 %v3787, %v5054
        %v5398 = vsub.f32 %v3788, %v5058
        %v5399 = vsub.f32 %v3789, %v5062
        %v5400 = vsub.f32 %v3790, %v5066
        %v5401 = vsub.f32 %v3791, %v5070
        %v5402 = vsub.f32 %v3792, %v5074
        %v5403 = vsub.f32 %v3793, %v5078
        %v5404 = vsub.f32 %v3794, %v5082
        %v5405 = vsub.f32 %v3795, %v5086
        %v5406 = vsub.f32 %v3796, %v5090
        %v5407 = vsub.f32 %v3797, %v5094
        %v5408 = vsub.f32 %v3798, %v5098
        %v5409 = vsub.f32 %v3799, %v5102
        %v5410 = vsub.f32 %v3800, %v5106
        %v5411 = vsub.f32 %v3801, %v5110
        %v5412 = vsub.f32 %v3802, %v5114
        %v5413 = vsub.f32 %v3803, %v5118
        %v5414 = vsub.f32 %v3804, %v5122
        %v5415 = vsub.f32 %v3805, %v5126
        %v5416 = vsub.f32 %v3806, %v5130
        %v5417 = vsub.f32 %v3807, %v5134
        %v5418 = vsub.f32 %v3808, %v5138
        %v5419 = vsub.f32 %v3809, %v5142
        %v5420 = vsub.f32 %v3810, %v5146
        %v5421 = vsub.f32 %v3811, %v5150
        %v5422 = vsub.f32 %v3812, %v5154
        %v5423 = vsub.f32 %v3813, %v5158
        %v5424 = vsub.f32 %v3814, %v5162
        %v5425 = vsub.f32 %v3815, %v5166
        %v5426 = vsub.f32 %v3816, %v5170
        %v5427 = vmul.f32 %v5299, 1.442695
        %v5428 = vpow.pop %v5427
        %v5429 = vmul.f32 %v5300, 1.442695
        %v5430 = vpow.pop %v5429
        %v5431 = vmul.f32 %v5301, 1.442695
        %v5432 = vpow.pop %v5431
        %v5433 = vmul.f32 %v5302, 1.442695
        %v5434 = vpow.pop %v5433
        %v5435 = vmul.f32 %v5303, 1.442695
        %v5436 = vpow.pop %v5435
        %v5437 = vmul.f32 %v5304, 1.442695
        %v5438 = vpow.pop %v5437
        %v5439 = vmul.f32 %v5305, 1.442695
        %v5440 = vpow.pop %v5439
        %v5441 = vmul.f32 %v5306, 1.442695
        %v5442 = vpow.pop %v5441
        %v5443 = vmul.f32 %v5307, 1.442695
        %v5444 = vpow.pop %v5443
        %v5445 = vmul.f32 %v5308, 1.442695
        %v5446 = vpow.pop %v5445
        %v5447 = vmul.f32 %v5309, 1.442695
        %v5448 = vpow.pop %v5447
        %v5449 = vmul.f32 %v5310, 1.442695
        %v5450 = vpow.pop %v5449
        %v5451 = vmul.f32 %v5311, 1.442695
        %v5452 = vpow.pop %v5451
        %v5453 = vmul.f32 %v5312, 1.442695
        %v5454 = vpow.pop %v5453
        %v5455 = vmul.f32 %v5313, 1.442695
        %v5456 = vpow.pop %v5455
        %v5457 = vmul.f32 %v5314, 1.442695
        %v5458 = vpow.pop %v5457
        %v5459 = vmul.f32 %v5315, 1.442695
        %v5460 = vpow.pop %v5459
        %v5461 = vmul.f32 %v5316, 1.442695
        %v5462 = vpow.pop %v5461
        %v5463 = vmul.f32 %v5317, 1.442695
        %v5464 = vpow.pop %v5463
        %v5465 = vmul.f32 %v5318, 1.442695
        %v5466 = vpow.pop %v5465
        %v5467 = vmul.f32 %v5319, 1.442695
        %v5468 = vpow.pop %v5467
        %v5469 = vmul.f32 %v5320, 1.442695
        %v5470 = vpow.pop %v5469
        %v5471 = vmul.f32 %v5321, 1.442695
        %v5472 = vpow.pop %v5471
        %v5473 = vmul.f32 %v5322, 1.442695
        %v5474 = vpow.pop %v5473
        %v5475 = vmul.f32 %v5323, 1.442695
        %v5476 = vpow.pop %v5475
        %v5477 = vmul.f32 %v5324, 1.442695
        %v5478 = vpow.pop %v5477
        %v5479 = vmul.f32 %v5325, 1.442695
        %v5480 = vpow.pop %v5479
        %v5481 = vmul.f32 %v5326, 1.442695
        %v5482 = vpow.pop %v5481
        %v5483 = vmul.f32 %v5327, 1.442695
        %v5484 = vpow.pop %v5483
        %v5485 = vmul.f32 %v5328, 1.442695
        %v5486 = vpow.pop %v5485
        %v5487 = vmul.f32 %v5329, 1.442695
        %v5488 = vpow.pop %v5487
        %v5489 = vmul.f32 %v5330, 1.442695
        %v5490 = vpow.pop %v5489
        %v5491 = vmul.f32 %v5331, 1.442695
        %v5492 = vpow.pop %v5491
        %v5493 = vmul.f32 %v5332, 1.442695
        %v5494 = vpow.pop %v5493
        %v5495 = vmul.f32 %v5333, 1.442695
        %v5496 = vpow.pop %v5495
        %v5497 = vmul.f32 %v5334, 1.442695
        %v5498 = vpow.pop %v5497
        %v5499 = vmul.f32 %v5335, 1.442695
        %v5500 = vpow.pop %v5499
        %v5501 = vmul.f32 %v5336, 1.442695
        %v5502 = vpow.pop %v5501
        %v5503 = vmul.f32 %v5337, 1.442695
        %v5504 = vpow.pop %v5503
        %v5505 = vmul.f32 %v5338, 1.442695
        %v5506 = vpow.pop %v5505
        %v5507 = vmul.f32 %v5339, 1.442695
        %v5508 = vpow.pop %v5507
        %v5509 = vmul.f32 %v5340, 1.442695
        %v5510 = vpow.pop %v5509
        %v5511 = vmul.f32 %v5341, 1.442695
        %v5512 = vpow.pop %v5511
        %v5513 = vmul.f32 %v5342, 1.442695
        %v5514 = vpow.pop %v5513
        %v5515 = vmul.f32 %v5343, 1.442695
        %v5516 = vpow.pop %v5515
        %v5517 = vmul.f32 %v5344, 1.442695
        %v5518 = vpow.pop %v5517
        %v5519 = vmul.f32 %v5345, 1.442695
        %v5520 = vpow.pop %v5519
        %v5521 = vmul.f32 %v5346, 1.442695
        %v5522 = vpow.pop %v5521
        %v5523 = vmul.f32 %v5347, 1.442695
        %v5524 = vpow.pop %v5523
        %v5525 = vmul.f32 %v5348, 1.442695
        %v5526 = vpow.pop %v5525
        %v5527 = vmul.f32 %v5349, 1.442695
        %v5528 = vpow.pop %v5527
        %v5529 = vmul.f32 %v5350, 1.442695
        %v5530 = vpow.pop %v5529
        %v5531 = vmul.f32 %v5351, 1.442695
        %v5532 = vpow.pop %v5531
        %v5533 = vmul.f32 %v5352, 1.442695
        %v5534 = vpow.pop %v5533
        %v5535 = vmul.f32 %v5353, 1.442695
        %v5536 = vpow.pop %v5535
        %v5537 = vmul.f32 %v5354, 1.442695
        %v5538 = vpow.pop %v5537
        %v5539 = vmul.f32 %v5355, 1.442695
        %v5540 = vpow.pop %v5539
        %v5541 = vmul.f32 %v5356, 1.442695
        %v5542 = vpow.pop %v5541
        %v5543 = vmul.f32 %v5357, 1.442695
        %v5544 = vpow.pop %v5543
        %v5545 = vmul.f32 %v5358, 1.442695
        %v5546 = vpow.pop %v5545
        %v5547 = vmul.f32 %v5359, 1.442695
        %v5548 = vpow.pop %v5547
        %v5549 = vmul.f32 %v5360, 1.442695
        %v5550 = vpow.pop %v5549
        %v5551 = vmul.f32 %v5361, 1.442695
        %v5552 = vpow.pop %v5551
        %v5553 = vmul.f32 %v5362, 1.442695
        %v5554 = vpow.pop %v5553
        %v5555 = vmul.f32 %v5363, 1.442695
        %v5556 = vpow.pop %v5555
        %v5557 = vmul.f32 %v5364, 1.442695
        %v5558 = vpow.pop %v5557
        %v5559 = vmul.f32 %v5365, 1.442695
        %v5560 = vpow.pop %v5559
        %v5561 = vmul.f32 %v5366, 1.442695
        %v5562 = vpow.pop %v5561
        %v5563 = vmul.f32 %v5367, 1.442695
        %v5564 = vpow.pop %v5563
        %v5565 = vmul.f32 %v5368, 1.442695
        %v5566 = vpow.pop %v5565
        %v5567 = vmul.f32 %v5369, 1.442695
        %v5568 = vpow.pop %v5567
        %v5569 = vmul.f32 %v5370, 1.442695
        %v5570 = vpow.pop %v5569
        %v5571 = vmul.f32 %v5371, 1.442695
        %v5572 = vpow.pop %v5571
        %v5573 = vmul.f32 %v5372, 1.442695
        %v5574 = vpow.pop %v5573
        %v5575 = vmul.f32 %v5373, 1.442695
        %v5576 = vpow.pop %v5575
        %v5577 = vmul.f32 %v5374, 1.442695
        %v5578 = vpow.pop %v5577
        %v5579 = vmul.f32 %v5375, 1.442695
        %v5580 = vpow.pop %v5579
        %v5581 = vmul.f32 %v5376, 1.442695
        %v5582 = vpow.pop %v5581
        %v5583 = vmul.f32 %v5377, 1.442695
        %v5584 = vpow.pop %v5583
        %v5585 = vmul.f32 %v5378, 1.442695
        %v5586 = vpow.pop %v5585
        %v5587 = vmul.f32 %v5379, 1.442695
        %v5588 = vpow.pop %v5587
        %v5589 = vmul.f32 %v5380, 1.442695
        %v5590 = vpow.pop %v5589
        %v5591 = vmul.f32 %v5381, 1.442695
        %v5592 = vpow.pop %v5591
        %v5593 = vmul.f32 %v5382, 1.442695
        %v5594 = vpow.pop %v5593
        %v5595 = vmul.f32 %v5383, 1.442695
        %v5596 = vpow.pop %v5595
        %v5597 = vmul.f32 %v5384, 1.442695
        %v5598 = vpow.pop %v5597
        %v5599 = vmul.f32 %v5385, 1.442695
        %v5600 = vpow.pop %v5599
        %v5601 = vmul.f32 %v5386, 1.442695
        %v5602 = vpow.pop %v5601
        %v5603 = vmul.f32 %v5387, 1.442695
        %v5604 = vpow.pop %v5603
        %v5605 = vmul.f32 %v5388, 1.442695
        %v5606 = vpow.pop %v5605
        %v5607 = vmul.f32 %v5389, 1.442695
        %v5608 = vpow.pop %v5607
        %v5609 = vmul.f32 %v5390, 1.442695
        %v5610 = vpow.pop %v5609
        %v5611 = vmul.f32 %v5391, 1.442695
        %v5612 = vpow.pop %v5611
        %v5613 = vmul.f32 %v5392, 1.442695
        %v5614 = vpow.pop %v5613
        %v5615 = vmul.f32 %v5393, 1.442695
        %v5616 = vpow.pop %v5615
        %v5617 = vmul.f32 %v5394, 1.442695
        %v5618 = vpow.pop %v5617
        %v5619 = vmul.f32 %v5395, 1.442695
        %v5620 = vpow.pop %v5619
        %v5621 = vmul.f32 %v5396, 1.442695
        %v5622 = vpow.pop %v5621
        %v5623 = vmul.f32 %v5397, 1.442695
        %v5624 = vpow.pop %v5623
        %v5625 = vmul.f32 %v5398, 1.442695
        %v5626 = vpow.pop %v5625
        %v5627 = vmul.f32 %v5399, 1.442695
        %v5628 = vpow.pop %v5627
        %v5629 = vmul.f32 %v5400, 1.442695
        %v5630 = vpow.pop %v5629
        %v5631 = vmul.f32 %v5401, 1.442695
        %v5632 = vpow.pop %v5631
        %v5633 = vmul.f32 %v5402, 1.442695
        %v5634 = vpow.pop %v5633
        %v5635 = vmul.f32 %v5403, 1.442695
        %v5636 = vpow.pop %v5635
        %v5637 = vmul.f32 %v5404, 1.442695
        %v5638 = vpow.pop %v5637
        %v5639 = vmul.f32 %v5405, 1.442695
        %v5640 = vpow.pop %v5639
        %v5641 = vmul.f32 %v5406, 1.442695
        %v5642 = vpow.pop %v5641
        %v5643 = vmul.f32 %v5407, 1.442695
        %v5644 = vpow.pop %v5643
        %v5645 = vmul.f32 %v5408, 1.442695
        %v5646 = vpow.pop %v5645
        %v5647 = vmul.f32 %v5409, 1.442695
        %v5648 = vpow.pop %v5647
        %v5649 = vmul.f32 %v5410, 1.442695
        %v5650 = vpow.pop %v5649
        %v5651 = vmul.f32 %v5411, 1.442695
        %v5652 = vpow.pop %v5651
        %v5653 = vmul.f32 %v5412, 1.442695
        %v5654 = vpow.pop %v5653
        %v5655 = vmul.f32 %v5413, 1.442695
        %v5656 = vpow.pop %v5655
        %v5657 = vmul.f32 %v5414, 1.442695
        %v5658 = vpow.pop %v5657
        %v5659 = vmul.f32 %v5415, 1.442695
        %v5660 = vpow.pop %v5659
        %v5661 = vmul.f32 %v5416, 1.442695
        %v5662 = vpow.pop %v5661
        %v5663 = vmul.f32 %v5417, 1.442695
        %v5664 = vpow.pop %v5663
        %v5665 = vmul.f32 %v5418, 1.442695
        %v5666 = vpow.pop %v5665
        %v5667 = vmul.f32 %v5419, 1.442695
        %v5668 = vpow.pop %v5667
        %v5669 = vmul.f32 %v5420, 1.442695
        %v5670 = vpow.pop %v5669
        %v5671 = vmul.f32 %v5421, 1.442695
        %v5672 = vpow.pop %v5671
        %v5673 = vmul.f32 %v5422, 1.442695
        %v5674 = vpow.pop %v5673
        %v5675 = vmul.f32 %v5423, 1.442695
        %v5676 = vpow.pop %v5675
        %v5677 = vmul.f32 %v5424, 1.442695
        %v5678 = vpow.pop %v5677
        %v5679 = vmul.f32 %v5425, 1.442695
        %v5680 = vpow.pop %v5679
        %v5681 = vmul.f32 %v5426, 1.442695
        %v5682 = vpow.pop %v5681
        %5811 = vset.pattern.permute.xlu0 0
        %5812 = vperm.xlu0 %5811, %v5428
        %v5813 = vpop.permute.xlu0 %5812
        %5814 = vset.pattern.permute.xlu0 0
        %5815 = vperm.xlu0 %5814, %v5430
        %v5816 = vpop.permute.xlu0 %5815
        %5817 = vset.pattern.permute.xlu0 0
        %5818 = vperm.xlu0 %5817, %v5432
        %v5819 = vpop.permute.xlu0 %5818
        %5820 = vset.pattern.permute.xlu0 0
        %5821 = vperm.xlu0 %5820, %v5434
        %v5822 = vpop.permute.xlu0 %5821
        %5823 = vset.pattern.permute.xlu0 0
        %5824 = vperm.xlu0 %5823, %v5436
        %v5825 = vpop.permute.xlu0 %5824
        %5826 = vset.pattern.permute.xlu0 0
        %5827 = vperm.xlu0 %5826, %v5438
        %v5828 = vpop.permute.xlu0 %5827
        %5829 = vset.pattern.permute.xlu0 0
        %5830 = vperm.xlu0 %5829, %v5440
        %v5831 = vpop.permute.xlu0 %5830
        %5832 = vset.pattern.permute.xlu0 0
        %5833 = vperm.xlu0 %5832, %v5442
        %v5834 = vpop.permute.xlu0 %5833
        %5835 = vset.pattern.permute.xlu0 0
        %5836 = vperm.xlu0 %5835, %v5444
        %v5837 = vpop.permute.xlu0 %5836
        %5838 = vset.pattern.permute.xlu0 0
        %5839 = vperm.xlu0 %5838, %v5446
        %v5840 = vpop.permute.xlu0 %5839
        %5841 = vset.pattern.permute.xlu0 0
        %5842 = vperm.xlu0 %5841, %v5448
        %v5843 = vpop.permute.xlu0 %5842
        %5844 = vset.pattern.permute.xlu0 0
        %5845 = vperm.xlu0 %5844, %v5450
        %v5846 = vpop.permute.xlu0 %5845
        %5847 = vset.pattern.permute.xlu0 0
        %5848 = vperm.xlu0 %5847, %v5452
        %v5849 = vpop.permute.xlu0 %5848
        %5850 = vset.pattern.permute.xlu0 0
        %5851 = vperm.xlu0 %5850, %v5454
        %v5852 = vpop.permute.xlu0 %5851
        %5853 = vset.pattern.permute.xlu0 0
        %5854 = vperm.xlu0 %5853, %v5456
        %v5855 = vpop.permute.xlu0 %5854
        %5856 = vset.pattern.permute.xlu0 0
        %5857 = vperm.xlu0 %5856, %v5458
        %v5858 = vpop.permute.xlu0 %5857
        %5859 = vset.pattern.permute.xlu0 0
        %5860 = vperm.xlu0 %5859, %v5460
        %v5861 = vpop.permute.xlu0 %5860
        %5862 = vset.pattern.permute.xlu0 0
        %5863 = vperm.xlu0 %5862, %v5462
        %v5864 = vpop.permute.xlu0 %5863
        %5865 = vset.pattern.permute.xlu0 0
        %5866 = vperm.xlu0 %5865, %v5464
        %v5867 = vpop.permute.xlu0 %5866
        %5868 = vset.pattern.permute.xlu0 0
        %5869 = vperm.xlu0 %5868, %v5466
        %v5870 = vpop.permute.xlu0 %5869
        %5871 = vset.pattern.permute.xlu0 0
        %5872 = vperm.xlu0 %5871, %v5468
        %v5873 = vpop.permute.xlu0 %5872
        %5874 = vset.pattern.permute.xlu0 0
        %5875 = vperm.xlu0 %5874, %v5470
        %v5876 = vpop.permute.xlu0 %5875
        %5877 = vset.pattern.permute.xlu0 0
        %5878 = vperm.xlu0 %5877, %v5472
        %v5879 = vpop.permute.xlu0 %5878
        %5880 = vset.pattern.permute.xlu0 0
        %5881 = vperm.xlu0 %5880, %v5474
        %v5882 = vpop.permute.xlu0 %5881
        %5883 = vset.pattern.permute.xlu0 0
        %5884 = vperm.xlu0 %5883, %v5476
        %v5885 = vpop.permute.xlu0 %5884
        %5886 = vset.pattern.permute.xlu0 0
        %5887 = vperm.xlu0 %5886, %v5478
        %v5888 = vpop.permute.xlu0 %5887
        %5889 = vset.pattern.permute.xlu0 0
        %5890 = vperm.xlu0 %5889, %v5480
        %v5891 = vpop.permute.xlu0 %5890
        %5892 = vset.pattern.permute.xlu0 0
        %5893 = vperm.xlu0 %5892, %v5482
        %v5894 = vpop.permute.xlu0 %5893
        %5895 = vset.pattern.permute.xlu0 0
        %5896 = vperm.xlu0 %5895, %v5484
        %v5897 = vpop.permute.xlu0 %5896
        %5898 = vset.pattern.permute.xlu0 0
        %5899 = vperm.xlu0 %5898, %v5486
        %v5900 = vpop.permute.xlu0 %5899
        %5901 = vset.pattern.permute.xlu0 0
        %5902 = vperm.xlu0 %5901, %v5488
        %v5903 = vpop.permute.xlu0 %5902
        %5904 = vset.pattern.permute.xlu0 0
        %5905 = vperm.xlu0 %5904, %v5490
        %v5906 = vpop.permute.xlu0 %5905
        %5907 = vset.pattern.permute.xlu0 0
        %5908 = vperm.xlu0 %5907, %v5492
        %v5909 = vpop.permute.xlu0 %5908
        %5910 = vset.pattern.permute.xlu0 0
        %5911 = vperm.xlu0 %5910, %v5494
        %v5912 = vpop.permute.xlu0 %5911
        %5913 = vset.pattern.permute.xlu0 0
        %5914 = vperm.xlu0 %5913, %v5496
        %v5915 = vpop.permute.xlu0 %5914
        %5916 = vset.pattern.permute.xlu0 0
        %5917 = vperm.xlu0 %5916, %v5498
        %v5918 = vpop.permute.xlu0 %5917
        %5919 = vset.pattern.permute.xlu0 0
        %5920 = vperm.xlu0 %5919, %v5500
        %v5921 = vpop.permute.xlu0 %5920
        %5922 = vset.pattern.permute.xlu0 0
        %5923 = vperm.xlu0 %5922, %v5502
        %v5924 = vpop.permute.xlu0 %5923
        %5925 = vset.pattern.permute.xlu0 0
        %5926 = vperm.xlu0 %5925, %v5504
        %v5927 = vpop.permute.xlu0 %5926
        %5928 = vset.pattern.permute.xlu0 0
        %5929 = vperm.xlu0 %5928, %v5506
        %v5930 = vpop.permute.xlu0 %5929
        %5931 = vset.pattern.permute.xlu0 0
        %5932 = vperm.xlu0 %5931, %v5508
        %v5933 = vpop.permute.xlu0 %5932
        %5934 = vset.pattern.permute.xlu0 0
        %5935 = vperm.xlu0 %5934, %v5510
        %v5936 = vpop.permute.xlu0 %5935
        %5937 = vset.pattern.permute.xlu0 0
        %5938 = vperm.xlu0 %5937, %v5512
        %v5939 = vpop.permute.xlu0 %5938
        %5940 = vset.pattern.permute.xlu0 0
        %5941 = vperm.xlu0 %5940, %v5514
        %v5942 = vpop.permute.xlu0 %5941
        %5943 = vset.pattern.permute.xlu0 0
        %5944 = vperm.xlu0 %5943, %v5516
        %v5945 = vpop.permute.xlu0 %5944
        %5946 = vset.pattern.permute.xlu0 0
        %5947 = vperm.xlu0 %5946, %v5518
        %v5948 = vpop.permute.xlu0 %5947
        %5949 = vset.pattern.permute.xlu0 0
        %5950 = vperm.xlu0 %5949, %v5520
        %v5951 = vpop.permute.xlu0 %5950
        %5952 = vset.pattern.permute.xlu0 0
        %5953 = vperm.xlu0 %5952, %v5522
        %v5954 = vpop.permute.xlu0 %5953
        %5955 = vset.pattern.permute.xlu0 0
        %5956 = vperm.xlu0 %5955, %v5524
        %v5957 = vpop.permute.xlu0 %5956
        %5958 = vset.pattern.permute.xlu0 0
        %5959 = vperm.xlu0 %5958, %v5526
        %v5960 = vpop.permute.xlu0 %5959
        %5961 = vset.pattern.permute.xlu0 0
        %5962 = vperm.xlu0 %5961, %v5528
        %v5963 = vpop.permute.xlu0 %5962
        %5964 = vset.pattern.permute.xlu0 0
        %5965 = vperm.xlu0 %5964, %v5530
        %v5966 = vpop.permute.xlu0 %5965
        %5967 = vset.pattern.permute.xlu0 0
        %5968 = vperm.xlu0 %5967, %v5532
        %v5969 = vpop.permute.xlu0 %5968
        %5970 = vset.pattern.permute.xlu0 0
        %5971 = vperm.xlu0 %5970, %v5534
        %v5972 = vpop.permute.xlu0 %5971
        %5973 = vset.pattern.permute.xlu0 0
        %5974 = vperm.xlu0 %5973, %v5536
        %v5975 = vpop.permute.xlu0 %5974
        %5976 = vset.pattern.permute.xlu0 0
        %5977 = vperm.xlu0 %5976, %v5538
        %v5978 = vpop.permute.xlu0 %5977
        %5979 = vset.pattern.permute.xlu0 0
        %5980 = vperm.xlu0 %5979, %v5540
        %v5981 = vpop.permute.xlu0 %5980
        %5982 = vset.pattern.permute.xlu0 0
        %5983 = vperm.xlu0 %5982, %v5542
        %v5984 = vpop.permute.xlu0 %5983
        %5985 = vset.pattern.permute.xlu0 0
        %5986 = vperm.xlu0 %5985, %v5544
        %v5987 = vpop.permute.xlu0 %5986
        %5988 = vset.pattern.permute.xlu0 0
        %5989 = vperm.xlu0 %5988, %v5546
        %v5990 = vpop.permute.xlu0 %5989
        %5991 = vset.pattern.permute.xlu0 0
        %5992 = vperm.xlu0 %5991, %v5548
        %v5993 = vpop.permute.xlu0 %5992
        %5994 = vset.pattern.permute.xlu0 0
        %5995 = vperm.xlu0 %5994, %v5550
        %v5996 = vpop.permute.xlu0 %5995
        %5997 = vset.pattern.permute.xlu0 0
        %5998 = vperm.xlu0 %5997, %v5552
        %v5999 = vpop.permute.xlu0 %5998
        %6000 = vset.pattern.permute.xlu0 0
        %6001 = vperm.xlu0 %6000, %v5554
        %v6002 = vpop.permute.xlu0 %6001
        %6003 = vset.pattern.permute.xlu0 0
        %6004 = vperm.xlu0 %6003, %v5556
        %v6005 = vpop.permute.xlu0 %6004
        %6006 = vset.pattern.permute.xlu0 0
        %6007 = vperm.xlu0 %6006, %v5558
        %v6008 = vpop.permute.xlu0 %6007
        %6009 = vset.pattern.permute.xlu0 0
        %6010 = vperm.xlu0 %6009, %v5560
        %v6011 = vpop.permute.xlu0 %6010
        %6012 = vset.pattern.permute.xlu0 0
        %6013 = vperm.xlu0 %6012, %v5562
        %v6014 = vpop.permute.xlu0 %6013
        %6015 = vset.pattern.permute.xlu0 0
        %6016 = vperm.xlu0 %6015, %v5564
        %v6017 = vpop.permute.xlu0 %6016
        %6018 = vset.pattern.permute.xlu0 0
        %6019 = vperm.xlu0 %6018, %v5566
        %v6020 = vpop.permute.xlu0 %6019
        %6021 = vset.pattern.permute.xlu0 0
        %6022 = vperm.xlu0 %6021, %v5568
        %v6023 = vpop.permute.xlu0 %6022
        %6024 = vset.pattern.permute.xlu0 0
        %6025 = vperm.xlu0 %6024, %v5570
        %v6026 = vpop.permute.xlu0 %6025
        %6027 = vset.pattern.permute.xlu0 0
        %6028 = vperm.xlu0 %6027, %v5572
        %v6029 = vpop.permute.xlu0 %6028
        %6030 = vset.pattern.permute.xlu0 0
        %6031 = vperm.xlu0 %6030, %v5574
        %v6032 = vpop.permute.xlu0 %6031
        %6033 = vset.pattern.permute.xlu0 0
        %6034 = vperm.xlu0 %6033, %v5576
        %v6035 = vpop.permute.xlu0 %6034
        %6036 = vset.pattern.permute.xlu0 0
        %6037 = vperm.xlu0 %6036, %v5578
        %v6038 = vpop.permute.xlu0 %6037
        %6039 = vset.pattern.permute.xlu0 0
        %6040 = vperm.xlu0 %6039, %v5580
        %v6041 = vpop.permute.xlu0 %6040
        %6042 = vset.pattern.permute.xlu0 0
        %6043 = vperm.xlu0 %6042, %v5582
        %v6044 = vpop.permute.xlu0 %6043
        %6045 = vset.pattern.permute.xlu0 0
        %6046 = vperm.xlu0 %6045, %v5584
        %v6047 = vpop.permute.xlu0 %6046
        %6048 = vset.pattern.permute.xlu0 0
        %6049 = vperm.xlu0 %6048, %v5586
        %v6050 = vpop.permute.xlu0 %6049
        %6051 = vset.pattern.permute.xlu0 0
        %6052 = vperm.xlu0 %6051, %v5588
        %v6053 = vpop.permute.xlu0 %6052
        %6054 = vset.pattern.permute.xlu0 0
        %6055 = vperm.xlu0 %6054, %v5590
        %v6056 = vpop.permute.xlu0 %6055
        %6057 = vset.pattern.permute.xlu0 0
        %6058 = vperm.xlu0 %6057, %v5592
        %v6059 = vpop.permute.xlu0 %6058
        %6060 = vset.pattern.permute.xlu0 0
        %6061 = vperm.xlu0 %6060, %v5594
        %v6062 = vpop.permute.xlu0 %6061
        %6063 = vset.pattern.permute.xlu0 0
        %6064 = vperm.xlu0 %6063, %v5596
        %v6065 = vpop.permute.xlu0 %6064
        %6066 = vset.pattern.permute.xlu0 0
        %6067 = vperm.xlu0 %6066, %v5598
        %v6068 = vpop.permute.xlu0 %6067
        %6069 = vset.pattern.permute.xlu0 0
        %6070 = vperm.xlu0 %6069, %v5600
        %v6071 = vpop.permute.xlu0 %6070
        %6072 = vset.pattern.permute.xlu0 0
        %6073 = vperm.xlu0 %6072, %v5602
        %v6074 = vpop.permute.xlu0 %6073
        %6075 = vset.pattern.permute.xlu0 0
        %6076 = vperm.xlu0 %6075, %v5604
        %v6077 = vpop.permute.xlu0 %6076
        %6078 = vset.pattern.permute.xlu0 0
        %6079 = vperm.xlu0 %6078, %v5606
        %v6080 = vpop.permute.xlu0 %6079
        %6081 = vset.pattern.permute.xlu0 0
        %6082 = vperm.xlu0 %6081, %v5608
        %v6083 = vpop.permute.xlu0 %6082
        %6084 = vset.pattern.permute.xlu0 0
        %6085 = vperm.xlu0 %6084, %v5610
        %v6086 = vpop.permute.xlu0 %6085
        %6087 = vset.pattern.permute.xlu0 0
        %6088 = vperm.xlu0 %6087, %v5612
        %v6089 = vpop.permute.xlu0 %6088
        %6090 = vset.pattern.permute.xlu0 0
        %6091 = vperm.xlu0 %6090, %v5614
        %v6092 = vpop.permute.xlu0 %6091
        %6093 = vset.pattern.permute.xlu0 0
        %6094 = vperm.xlu0 %6093, %v5616
        %v6095 = vpop.permute.xlu0 %6094
        %6096 = vset.pattern.permute.xlu0 0
        %6097 = vperm.xlu0 %6096, %v5618
        %v6098 = vpop.permute.xlu0 %6097
        %6099 = vset.pattern.permute.xlu0 0
        %6100 = vperm.xlu0 %6099, %v5620
        %v6101 = vpop.permute.xlu0 %6100
        %6102 = vset.pattern.permute.xlu0 0
        %6103 = vperm.xlu0 %6102, %v5622
        %v6104 = vpop.permute.xlu0 %6103
        %6105 = vset.pattern.permute.xlu0 0
        %6106 = vperm.xlu0 %6105, %v5624
        %v6107 = vpop.permute.xlu0 %6106
        %6108 = vset.pattern.permute.xlu0 0
        %6109 = vperm.xlu0 %6108, %v5626
        %v6110 = vpop.permute.xlu0 %6109
        %6111 = vset.pattern.permute.xlu0 0
        %6112 = vperm.xlu0 %6111, %v5628
        %v6113 = vpop.permute.xlu0 %6112
        %6114 = vset.pattern.permute.xlu0 0
        %6115 = vperm.xlu0 %6114, %v5630
        %v6116 = vpop.permute.xlu0 %6115
        %6117 = vset.pattern.permute.xlu0 0
        %6118 = vperm.xlu0 %6117, %v5632
        %v6119 = vpop.permute.xlu0 %6118
        %6120 = vset.pattern.permute.xlu0 0
        %6121 = vperm.xlu0 %6120, %v5634
        %v6122 = vpop.permute.xlu0 %6121
        %6123 = vset.pattern.permute.xlu0 0
        %6124 = vperm.xlu0 %6123, %v5636
        %v6125 = vpop.permute.xlu0 %6124
        %6126 = vset.pattern.permute.xlu0 0
        %6127 = vperm.xlu0 %6126, %v5638
        %v6128 = vpop.permute.xlu0 %6127
        %6129 = vset.pattern.permute.xlu0 0
        %6130 = vperm.xlu0 %6129, %v5640
        %v6131 = vpop.permute.xlu0 %6130
        %6132 = vset.pattern.permute.xlu0 0
        %6133 = vperm.xlu0 %6132, %v5642
        %v6134 = vpop.permute.xlu0 %6133
        %6135 = vset.pattern.permute.xlu0 0
        %6136 = vperm.xlu0 %6135, %v5644
        %v6137 = vpop.permute.xlu0 %6136
        %6138 = vset.pattern.permute.xlu0 0
        %6139 = vperm.xlu0 %6138, %v5646
        %v6140 = vpop.permute.xlu0 %6139
        %6141 = vset.pattern.permute.xlu0 0
        %6142 = vperm.xlu0 %6141, %v5648
        %v6143 = vpop.permute.xlu0 %6142
        %6144 = vset.pattern.permute.xlu0 0
        %6145 = vperm.xlu0 %6144, %v5650
        %v6146 = vpop.permute.xlu0 %6145
        %6147 = vset.pattern.permute.xlu0 0
        %6148 = vperm.xlu0 %6147, %v5652
        %v6149 = vpop.permute.xlu0 %6148
        %6150 = vset.pattern.permute.xlu0 0
        %6151 = vperm.xlu0 %6150, %v5654
        %v6152 = vpop.permute.xlu0 %6151
        %6153 = vset.pattern.permute.xlu0 0
        %6154 = vperm.xlu0 %6153, %v5656
        %v6155 = vpop.permute.xlu0 %6154
        %6156 = vset.pattern.permute.xlu0 0
        %6157 = vperm.xlu0 %6156, %v5658
        %v6158 = vpop.permute.xlu0 %6157
        %6159 = vset.pattern.permute.xlu0 0
        %6160 = vperm.xlu0 %6159, %v5660
        %v6161 = vpop.permute.xlu0 %6160
        %6162 = vset.pattern.permute.xlu0 0
        %6163 = vperm.xlu0 %6162, %v5662
        %v6164 = vpop.permute.xlu0 %6163
        %6165 = vset.pattern.permute.xlu0 0
        %6166 = vperm.xlu0 %6165, %v5664
        %v6167 = vpop.permute.xlu0 %6166
        %6168 = vset.pattern.permute.xlu0 0
        %6169 = vperm.xlu0 %6168, %v5666
        %v6170 = vpop.permute.xlu0 %6169
        %6171 = vset.pattern.permute.xlu0 0
        %6172 = vperm.xlu0 %6171, %v5668
        %v6173 = vpop.permute.xlu0 %6172
        %6174 = vset.pattern.permute.xlu0 0
        %6175 = vperm.xlu0 %6174, %v5670
        %v6176 = vpop.permute.xlu0 %6175
        %6177 = vset.pattern.permute.xlu0 0
        %6178 = vperm.xlu0 %6177, %v5672
        %v6179 = vpop.permute.xlu0 %6178
        %6180 = vset.pattern.permute.xlu0 0
        %6181 = vperm.xlu0 %6180, %v5674
        %v6182 = vpop.permute.xlu0 %6181
        %6183 = vset.pattern.permute.xlu0 0
        %6184 = vperm.xlu0 %6183, %v5676
        %v6185 = vpop.permute.xlu0 %6184
        %6186 = vset.pattern.permute.xlu0 0
        %6187 = vperm.xlu0 %6186, %v5678
        %v6188 = vpop.permute.xlu0 %6187
        %6189 = vset.pattern.permute.xlu0 0
        %6190 = vperm.xlu0 %6189, %v5680
        %v6191 = vpop.permute.xlu0 %6190
        %6192 = vset.pattern.permute.xlu0 0
        %6193 = vperm.xlu0 %6192, %v5682
        %v6194 = vpop.permute.xlu0 %6193
        %v6195 = vlaneseq
        %v6196 = vshrl.u32 %v6195, 7
        %v6197 = vsub.s32 %v3946, %v6196
        %v6198 = vrot.slane %v5813, %v6197
        %v6199 = vlaneseq
        %v6200 = vshrl.u32 %v6199, 7
        %v6201 = vsub.s32 %v3946, %v6200
        %v6202 = vrot.slane %v5816, %v6201
        %v6203 = vlaneseq
        %v6204 = vshrl.u32 %v6203, 7
        %v6205 = vsub.s32 %v3946, %v6204
        %v6206 = vrot.slane %v5819, %v6205
        %v6207 = vlaneseq
        %v6208 = vshrl.u32 %v6207, 7
        %v6209 = vsub.s32 %v3946, %v6208
        %v6210 = vrot.slane %v5822, %v6209
        %v6211 = vlaneseq
        %v6212 = vshrl.u32 %v6211, 7
        %v6213 = vsub.s32 %v3946, %v6212
        %v6214 = vrot.slane %v5825, %v6213
        %v6215 = vlaneseq
        %v6216 = vshrl.u32 %v6215, 7
        %v6217 = vsub.s32 %v3946, %v6216
        %v6218 = vrot.slane %v5828, %v6217
        %v6219 = vlaneseq
        %v6220 = vshrl.u32 %v6219, 7
        %v6221 = vsub.s32 %v3946, %v6220
        %v6222 = vrot.slane %v5831, %v6221
        %v6223 = vlaneseq
        %v6224 = vshrl.u32 %v6223, 7
        %v6225 = vsub.s32 %v3946, %v6224
        %v6226 = vrot.slane %v5834, %v6225
        %v6227 = vlaneseq
        %v6228 = vshrl.u32 %v6227, 7
        %v6229 = vsub.s32 %v3946, %v6228
        %v6230 = vrot.slane %v5837, %v6229
        %v6231 = vlaneseq
        %v6232 = vshrl.u32 %v6231, 7
        %v6233 = vsub.s32 %v3946, %v6232
        %v6234 = vrot.slane %v5840, %v6233
        %v6235 = vlaneseq
        %v6236 = vshrl.u32 %v6235, 7
        %v6237 = vsub.s32 %v3946, %v6236
        %v6238 = vrot.slane %v5843, %v6237
        %v6239 = vlaneseq
        %v6240 = vshrl.u32 %v6239, 7
        %v6241 = vsub.s32 %v3946, %v6240
        %v6242 = vrot.slane %v5846, %v6241
        %v6243 = vlaneseq
        %v6244 = vshrl.u32 %v6243, 7
        %v6245 = vsub.s32 %v3946, %v6244
        %v6246 = vrot.slane %v5849, %v6245
        %v6247 = vlaneseq
        %v6248 = vshrl.u32 %v6247, 7
        %v6249 = vsub.s32 %v3946, %v6248
        %v6250 = vrot.slane %v5852, %v6249
        %v6251 = vlaneseq
        %v6252 = vshrl.u32 %v6251, 7
        %v6253 = vsub.s32 %v3946, %v6252
        %v6254 = vrot.slane %v5855, %v6253
        %v6255 = vlaneseq
        %v6256 = vshrl.u32 %v6255, 7
        %v6257 = vsub.s32 %v3946, %v6256
        %v6258 = vrot.slane %v5858, %v6257
        %v6259 = vlaneseq
        %v6260 = vshrl.u32 %v6259, 7
        %v6261 = vsub.s32 %v3946, %v6260
        %v6262 = vrot.slane %v5861, %v6261
        %v6263 = vlaneseq
        %v6264 = vshrl.u32 %v6263, 7
        %v6265 = vsub.s32 %v3946, %v6264
        %v6266 = vrot.slane %v5864, %v6265
        %v6267 = vlaneseq
        %v6268 = vshrl.u32 %v6267, 7
        %v6269 = vsub.s32 %v3946, %v6268
        %v6270 = vrot.slane %v5867, %v6269
        %v6271 = vlaneseq
        %v6272 = vshrl.u32 %v6271, 7
        %v6273 = vsub.s32 %v3946, %v6272
        %v6274 = vrot.slane %v5870, %v6273
        %v6275 = vlaneseq
        %v6276 = vshrl.u32 %v6275, 7
        %v6277 = vsub.s32 %v3946, %v6276
        %v6278 = vrot.slane %v5873, %v6277
        %v6279 = vlaneseq
        %v6280 = vshrl.u32 %v6279, 7
        %v6281 = vsub.s32 %v3946, %v6280
        %v6282 = vrot.slane %v5876, %v6281
        %v6283 = vlaneseq
        %v6284 = vshrl.u32 %v6283, 7
        %v6285 = vsub.s32 %v3946, %v6284
        %v6286 = vrot.slane %v5879, %v6285
        %v6287 = vlaneseq
        %v6288 = vshrl.u32 %v6287, 7
        %v6289 = vsub.s32 %v3946, %v6288
        %v6290 = vrot.slane %v5882, %v6289
        %v6291 = vlaneseq
        %v6292 = vshrl.u32 %v6291, 7
        %v6293 = vsub.s32 %v3946, %v6292
        %v6294 = vrot.slane %v5885, %v6293
        %v6295 = vlaneseq
        %v6296 = vshrl.u32 %v6295, 7
        %v6297 = vsub.s32 %v3946, %v6296
        %v6298 = vrot.slane %v5888, %v6297
        %v6299 = vlaneseq
        %v6300 = vshrl.u32 %v6299, 7
        %v6301 = vsub.s32 %v3946, %v6300
        %v6302 = vrot.slane %v5891, %v6301
        %v6303 = vlaneseq
        %v6304 = vshrl.u32 %v6303, 7
        %v6305 = vsub.s32 %v3946, %v6304
        %v6306 = vrot.slane %v5894, %v6305
        %v6307 = vlaneseq
        %v6308 = vshrl.u32 %v6307, 7
        %v6309 = vsub.s32 %v3946, %v6308
        %v6310 = vrot.slane %v5897, %v6309
        %v6311 = vlaneseq
        %v6312 = vshrl.u32 %v6311, 7
        %v6313 = vsub.s32 %v3946, %v6312
        %v6314 = vrot.slane %v5900, %v6313
        %v6315 = vlaneseq
        %v6316 = vshrl.u32 %v6315, 7
        %v6317 = vsub.s32 %v3946, %v6316
        %v6318 = vrot.slane %v5903, %v6317
        %v6319 = vlaneseq
        %v6320 = vshrl.u32 %v6319, 7
        %v6321 = vsub.s32 %v3946, %v6320
        %v6322 = vrot.slane %v5906, %v6321
        %v6323 = vlaneseq
        %v6324 = vshrl.u32 %v6323, 7
        %v6325 = vsub.s32 %v3946, %v6324
        %v6326 = vrot.slane %v5909, %v6325
        %v6327 = vlaneseq
        %v6328 = vshrl.u32 %v6327, 7
        %v6329 = vsub.s32 %v3946, %v6328
        %v6330 = vrot.slane %v5912, %v6329
        %v6331 = vlaneseq
        %v6332 = vshrl.u32 %v6331, 7
        %v6333 = vsub.s32 %v3946, %v6332
        %v6334 = vrot.slane %v5915, %v6333
        %v6335 = vlaneseq
        %v6336 = vshrl.u32 %v6335, 7
        %v6337 = vsub.s32 %v3946, %v6336
        %v6338 = vrot.slane %v5918, %v6337
        %v6339 = vlaneseq
        %v6340 = vshrl.u32 %v6339, 7
        %v6341 = vsub.s32 %v3946, %v6340
        %v6342 = vrot.slane %v5921, %v6341
        %v6343 = vlaneseq
        %v6344 = vshrl.u32 %v6343, 7
        %v6345 = vsub.s32 %v3946, %v6344
        %v6346 = vrot.slane %v5924, %v6345
        %v6347 = vlaneseq
        %v6348 = vshrl.u32 %v6347, 7
        %v6349 = vsub.s32 %v3946, %v6348
        %v6350 = vrot.slane %v5927, %v6349
        %v6351 = vlaneseq
        %v6352 = vshrl.u32 %v6351, 7
        %v6353 = vsub.s32 %v3946, %v6352
        %v6354 = vrot.slane %v5930, %v6353
        %v6355 = vlaneseq
        %v6356 = vshrl.u32 %v6355, 7
        %v6357 = vsub.s32 %v3946, %v6356
        %v6358 = vrot.slane %v5933, %v6357
        %v6359 = vlaneseq
        %v6360 = vshrl.u32 %v6359, 7
        %v6361 = vsub.s32 %v3946, %v6360
        %v6362 = vrot.slane %v5936, %v6361
        %v6363 = vlaneseq
        %v6364 = vshrl.u32 %v6363, 7
        %v6365 = vsub.s32 %v3946, %v6364
        %v6366 = vrot.slane %v5939, %v6365
        %v6367 = vlaneseq
        %v6368 = vshrl.u32 %v6367, 7
        %v6369 = vsub.s32 %v3946, %v6368
        %v6370 = vrot.slane %v5942, %v6369
        %v6371 = vlaneseq
        %v6372 = vshrl.u32 %v6371, 7
        %v6373 = vsub.s32 %v3946, %v6372
        %v6374 = vrot.slane %v5945, %v6373
        %v6375 = vlaneseq
        %v6376 = vshrl.u32 %v6375, 7
        %v6377 = vsub.s32 %v3946, %v6376
        %v6378 = vrot.slane %v5948, %v6377
        %v6379 = vlaneseq
        %v6380 = vshrl.u32 %v6379, 7
        %v6381 = vsub.s32 %v3946, %v6380
        %v6382 = vrot.slane %v5951, %v6381
        %v6383 = vlaneseq
        %v6384 = vshrl.u32 %v6383, 7
        %v6385 = vsub.s32 %v3946, %v6384
        %v6386 = vrot.slane %v5954, %v6385
        %v6387 = vlaneseq
        %v6388 = vshrl.u32 %v6387, 7
        %v6389 = vsub.s32 %v3946, %v6388
        %v6390 = vrot.slane %v5957, %v6389
        %v6391 = vlaneseq
        %v6392 = vshrl.u32 %v6391, 7
        %v6393 = vsub.s32 %v3946, %v6392
        %v6394 = vrot.slane %v5960, %v6393
        %v6395 = vlaneseq
        %v6396 = vshrl.u32 %v6395, 7
        %v6397 = vsub.s32 %v3946, %v6396
        %v6398 = vrot.slane %v5963, %v6397
        %v6399 = vlaneseq
        %v6400 = vshrl.u32 %v6399, 7
        %v6401 = vsub.s32 %v3946, %v6400
        %v6402 = vrot.slane %v5966, %v6401
        %v6403 = vlaneseq
        %v6404 = vshrl.u32 %v6403, 7
        %v6405 = vsub.s32 %v3946, %v6404
        %v6406 = vrot.slane %v5969, %v6405
        %v6407 = vlaneseq
        %v6408 = vshrl.u32 %v6407, 7
        %v6409 = vsub.s32 %v3946, %v6408
        %v6410 = vrot.slane %v5972, %v6409
        %v6411 = vlaneseq
        %v6412 = vshrl.u32 %v6411, 7
        %v6413 = vsub.s32 %v3946, %v6412
        %v6414 = vrot.slane %v5975, %v6413
        %v6415 = vlaneseq
        %v6416 = vshrl.u32 %v6415, 7
        %v6417 = vsub.s32 %v3946, %v6416
        %v6418 = vrot.slane %v5978, %v6417
        %v6419 = vlaneseq
        %v6420 = vshrl.u32 %v6419, 7
        %v6421 = vsub.s32 %v3946, %v6420
        %v6422 = vrot.slane %v5981, %v6421
        %v6423 = vlaneseq
        %v6424 = vshrl.u32 %v6423, 7
        %v6425 = vsub.s32 %v3946, %v6424
        %v6426 = vrot.slane %v5984, %v6425
        %v6427 = vlaneseq
        %v6428 = vshrl.u32 %v6427, 7
        %v6429 = vsub.s32 %v3946, %v6428
        %v6430 = vrot.slane %v5987, %v6429
        %v6431 = vlaneseq
        %v6432 = vshrl.u32 %v6431, 7
        %v6433 = vsub.s32 %v3946, %v6432
        %v6434 = vrot.slane %v5990, %v6433
        %v6435 = vlaneseq
        %v6436 = vshrl.u32 %v6435, 7
        %v6437 = vsub.s32 %v3946, %v6436
        %v6438 = vrot.slane %v5993, %v6437
        %v6439 = vlaneseq
        %v6440 = vshrl.u32 %v6439, 7
        %v6441 = vsub.s32 %v3946, %v6440
        %v6442 = vrot.slane %v5996, %v6441
        %v6443 = vlaneseq
        %v6444 = vshrl.u32 %v6443, 7
        %v6445 = vsub.s32 %v3946, %v6444
        %v6446 = vrot.slane %v5999, %v6445
        %v6447 = vlaneseq
        %v6448 = vshrl.u32 %v6447, 7
        %v6449 = vsub.s32 %v3946, %v6448
        %v6450 = vrot.slane %v6002, %v6449
        %v6451 = vlaneseq
        %v6452 = vshrl.u32 %v6451, 7
        %v6453 = vsub.s32 %v3946, %v6452
        %v6454 = vrot.slane %v6005, %v6453
        %v6455 = vlaneseq
        %v6456 = vshrl.u32 %v6455, 7
        %v6457 = vsub.s32 %v3946, %v6456
        %v6458 = vrot.slane %v6008, %v6457
        %v6459 = vlaneseq
        %v6460 = vshrl.u32 %v6459, 7
        %v6461 = vsub.s32 %v3946, %v6460
        %v6462 = vrot.slane %v6011, %v6461
        %v6463 = vlaneseq
        %v6464 = vshrl.u32 %v6463, 7
        %v6465 = vsub.s32 %v3946, %v6464
        %v6466 = vrot.slane %v6014, %v6465
        %v6467 = vlaneseq
        %v6468 = vshrl.u32 %v6467, 7
        %v6469 = vsub.s32 %v3946, %v6468
        %v6470 = vrot.slane %v6017, %v6469
        %v6471 = vlaneseq
        %v6472 = vshrl.u32 %v6471, 7
        %v6473 = vsub.s32 %v3946, %v6472
        %v6474 = vrot.slane %v6020, %v6473
        %v6475 = vlaneseq
        %v6476 = vshrl.u32 %v6475, 7
        %v6477 = vsub.s32 %v3946, %v6476
        %v6478 = vrot.slane %v6023, %v6477
        %v6479 = vlaneseq
        %v6480 = vshrl.u32 %v6479, 7
        %v6481 = vsub.s32 %v3946, %v6480
        %v6482 = vrot.slane %v6026, %v6481
        %v6483 = vlaneseq
        %v6484 = vshrl.u32 %v6483, 7
        %v6485 = vsub.s32 %v3946, %v6484
        %v6486 = vrot.slane %v6029, %v6485
        %v6487 = vlaneseq
        %v6488 = vshrl.u32 %v6487, 7
        %v6489 = vsub.s32 %v3946, %v6488
        %v6490 = vrot.slane %v6032, %v6489
        %v6491 = vlaneseq
        %v6492 = vshrl.u32 %v6491, 7
        %v6493 = vsub.s32 %v3946, %v6492
        %v6494 = vrot.slane %v6035, %v6493
        %v6495 = vlaneseq
        %v6496 = vshrl.u32 %v6495, 7
        %v6497 = vsub.s32 %v3946, %v6496
        %v6498 = vrot.slane %v6038, %v6497
        %v6499 = vlaneseq
        %v6500 = vshrl.u32 %v6499, 7
        %v6501 = vsub.s32 %v3946, %v6500
        %v6502 = vrot.slane %v6041, %v6501
        %v6503 = vlaneseq
        %v6504 = vshrl.u32 %v6503, 7
        %v6505 = vsub.s32 %v3946, %v6504
        %v6506 = vrot.slane %v6044, %v6505
        %v6507 = vlaneseq
        %v6508 = vshrl.u32 %v6507, 7
        %v6509 = vsub.s32 %v3946, %v6508
        %v6510 = vrot.slane %v6047, %v6509
        %v6511 = vlaneseq
        %v6512 = vshrl.u32 %v6511, 7
        %v6513 = vsub.s32 %v3946, %v6512
        %v6514 = vrot.slane %v6050, %v6513
        %v6515 = vlaneseq
        %v6516 = vshrl.u32 %v6515, 7
        %v6517 = vsub.s32 %v3946, %v6516
        %v6518 = vrot.slane %v6053, %v6517
        %v6519 = vlaneseq
        %v6520 = vshrl.u32 %v6519, 7
        %v6521 = vsub.s32 %v3946, %v6520
        %v6522 = vrot.slane %v6056, %v6521
        %v6523 = vlaneseq
        %v6524 = vshrl.u32 %v6523, 7
        %v6525 = vsub.s32 %v3946, %v6524
        %v6526 = vrot.slane %v6059, %v6525
        %v6527 = vlaneseq
        %v6528 = vshrl.u32 %v6527, 7
        %v6529 = vsub.s32 %v3946, %v6528
        %v6530 = vrot.slane %v6062, %v6529
        %v6531 = vlaneseq
        %v6532 = vshrl.u32 %v6531, 7
        %v6533 = vsub.s32 %v3946, %v6532
        %v6534 = vrot.slane %v6065, %v6533
        %v6535 = vlaneseq
        %v6536 = vshrl.u32 %v6535, 7
        %v6537 = vsub.s32 %v3946, %v6536
        %v6538 = vrot.slane %v6068, %v6537
        %v6539 = vlaneseq
        %v6540 = vshrl.u32 %v6539, 7
        %v6541 = vsub.s32 %v3946, %v6540
        %v6542 = vrot.slane %v6071, %v6541
        %v6543 = vlaneseq
        %v6544 = vshrl.u32 %v6543, 7
        %v6545 = vsub.s32 %v3946, %v6544
        %v6546 = vrot.slane %v6074, %v6545
        %v6547 = vlaneseq
        %v6548 = vshrl.u32 %v6547, 7
        %v6549 = vsub.s32 %v3946, %v6548
        %v6550 = vrot.slane %v6077, %v6549
        %v6551 = vlaneseq
        %v6552 = vshrl.u32 %v6551, 7
        %v6553 = vsub.s32 %v3946, %v6552
        %v6554 = vrot.slane %v6080, %v6553
        %v6555 = vlaneseq
        %v6556 = vshrl.u32 %v6555, 7
        %v6557 = vsub.s32 %v3946, %v6556
        %v6558 = vrot.slane %v6083, %v6557
        %v6559 = vlaneseq
        %v6560 = vshrl.u32 %v6559, 7
        %v6561 = vsub.s32 %v3946, %v6560
        %v6562 = vrot.slane %v6086, %v6561
        %v6563 = vlaneseq
        %v6564 = vshrl.u32 %v6563, 7
        %v6565 = vsub.s32 %v3946, %v6564
        %v6566 = vrot.slane %v6089, %v6565
        %v6567 = vlaneseq
        %v6568 = vshrl.u32 %v6567, 7
        %v6569 = vsub.s32 %v3946, %v6568
        %v6570 = vrot.slane %v6092, %v6569
        %v6571 = vlaneseq
        %v6572 = vshrl.u32 %v6571, 7
        %v6573 = vsub.s32 %v3946, %v6572
        %v6574 = vrot.slane %v6095, %v6573
        %v6575 = vlaneseq
        %v6576 = vshrl.u32 %v6575, 7
        %v6577 = vsub.s32 %v3946, %v6576
        %v6578 = vrot.slane %v6098, %v6577
        %v6579 = vlaneseq
        %v6580 = vshrl.u32 %v6579, 7
        %v6581 = vsub.s32 %v3946, %v6580
        %v6582 = vrot.slane %v6101, %v6581
        %v6583 = vlaneseq
        %v6584 = vshrl.u32 %v6583, 7
        %v6585 = vsub.s32 %v3946, %v6584
        %v6586 = vrot.slane %v6104, %v6585
        %v6587 = vlaneseq
        %v6588 = vshrl.u32 %v6587, 7
        %v6589 = vsub.s32 %v3946, %v6588
        %v6590 = vrot.slane %v6107, %v6589
        %v6591 = vlaneseq
        %v6592 = vshrl.u32 %v6591, 7
        %v6593 = vsub.s32 %v3946, %v6592
        %v6594 = vrot.slane %v6110, %v6593
        %v6595 = vlaneseq
        %v6596 = vshrl.u32 %v6595, 7
        %v6597 = vsub.s32 %v3946, %v6596
        %v6598 = vrot.slane %v6113, %v6597
        %v6599 = vlaneseq
        %v6600 = vshrl.u32 %v6599, 7
        %v6601 = vsub.s32 %v3946, %v6600
        %v6602 = vrot.slane %v6116, %v6601
        %v6603 = vlaneseq
        %v6604 = vshrl.u32 %v6603, 7
        %v6605 = vsub.s32 %v3946, %v6604
        %v6606 = vrot.slane %v6119, %v6605
        %v6607 = vlaneseq
        %v6608 = vshrl.u32 %v6607, 7
        %v6609 = vsub.s32 %v3946, %v6608
        %v6610 = vrot.slane %v6122, %v6609
        %v6611 = vlaneseq
        %v6612 = vshrl.u32 %v6611, 7
        %v6613 = vsub.s32 %v3946, %v6612
        %v6614 = vrot.slane %v6125, %v6613
        %v6615 = vlaneseq
        %v6616 = vshrl.u32 %v6615, 7
        %v6617 = vsub.s32 %v3946, %v6616
        %v6618 = vrot.slane %v6128, %v6617
        %v6619 = vlaneseq
        %v6620 = vshrl.u32 %v6619, 7
        %v6621 = vsub.s32 %v3946, %v6620
        %v6622 = vrot.slane %v6131, %v6621
        %v6623 = vlaneseq
        %v6624 = vshrl.u32 %v6623, 7
        %v6625 = vsub.s32 %v3946, %v6624
        %v6626 = vrot.slane %v6134, %v6625
        %v6627 = vlaneseq
        %v6628 = vshrl.u32 %v6627, 7
        %v6629 = vsub.s32 %v3946, %v6628
        %v6630 = vrot.slane %v6137, %v6629
        %v6631 = vlaneseq
        %v6632 = vshrl.u32 %v6631, 7
        %v6633 = vsub.s32 %v3946, %v6632
        %v6634 = vrot.slane %v6140, %v6633
        %v6635 = vlaneseq
        %v6636 = vshrl.u32 %v6635, 7
        %v6637 = vsub.s32 %v3946, %v6636
        %v6638 = vrot.slane %v6143, %v6637
        %v6639 = vlaneseq
        %v6640 = vshrl.u32 %v6639, 7
        %v6641 = vsub.s32 %v3946, %v6640
        %v6642 = vrot.slane %v6146, %v6641
        %v6643 = vlaneseq
        %v6644 = vshrl.u32 %v6643, 7
        %v6645 = vsub.s32 %v3946, %v6644
        %v6646 = vrot.slane %v6149, %v6645
        %v6647 = vlaneseq
        %v6648 = vshrl.u32 %v6647, 7
        %v6649 = vsub.s32 %v3946, %v6648
        %v6650 = vrot.slane %v6152, %v6649
        %v6651 = vlaneseq
        %v6652 = vshrl.u32 %v6651, 7
        %v6653 = vsub.s32 %v3946, %v6652
        %v6654 = vrot.slane %v6155, %v6653
        %v6655 = vlaneseq
        %v6656 = vshrl.u32 %v6655, 7
        %v6657 = vsub.s32 %v3946, %v6656
        %v6658 = vrot.slane %v6158, %v6657
        %v6659 = vlaneseq
        %v6660 = vshrl.u32 %v6659, 7
        %v6661 = vsub.s32 %v3946, %v6660
        %v6662 = vrot.slane %v6161, %v6661
        %v6663 = vlaneseq
        %v6664 = vshrl.u32 %v6663, 7
        %v6665 = vsub.s32 %v3946, %v6664
        %v6666 = vrot.slane %v6164, %v6665
        %v6667 = vlaneseq
        %v6668 = vshrl.u32 %v6667, 7
        %v6669 = vsub.s32 %v3946, %v6668
        %v6670 = vrot.slane %v6167, %v6669
        %v6671 = vlaneseq
        %v6672 = vshrl.u32 %v6671, 7
        %v6673 = vsub.s32 %v3946, %v6672
        %v6674 = vrot.slane %v6170, %v6673
        %v6675 = vlaneseq
        %v6676 = vshrl.u32 %v6675, 7
        %v6677 = vsub.s32 %v3946, %v6676
        %v6678 = vrot.slane %v6173, %v6677
        %v6679 = vlaneseq
        %v6680 = vshrl.u32 %v6679, 7
        %v6681 = vsub.s32 %v3946, %v6680
        %v6682 = vrot.slane %v6176, %v6681
        %v6683 = vlaneseq
        %v6684 = vshrl.u32 %v6683, 7
        %v6685 = vsub.s32 %v3946, %v6684
        %v6686 = vrot.slane %v6179, %v6685
        %v6687 = vlaneseq
        %v6688 = vshrl.u32 %v6687, 7
        %v6689 = vsub.s32 %v3946, %v6688
        %v6690 = vrot.slane %v6182, %v6689
        %v6691 = vlaneseq
        %v6692 = vshrl.u32 %v6691, 7
        %v6693 = vsub.s32 %v3946, %v6692
        %v6694 = vrot.slane %v6185, %v6693
        %v6695 = vlaneseq
        %v6696 = vshrl.u32 %v6695, 7
        %v6697 = vsub.s32 %v3946, %v6696
        %v6698 = vrot.slane %v6188, %v6697
        %v6699 = vlaneseq
        %v6700 = vshrl.u32 %v6699, 7
        %v6701 = vsub.s32 %v3946, %v6700
        %v6702 = vrot.slane %v6191, %v6701
        %v6703 = vlaneseq
        %v6704 = vshrl.u32 %v6703, 7
        %v6705 = vsub.s32 %v3946, %v6704
        %v6706 = vrot.slane %v6194, %v6705
        %v6707 = vsel %vm4459, %v6202, %v6198
        %v6708 = vsel %vm4461, %v6206, %v6707
        %v6709 = vsel %vm4463, %v6210, %v6708
        %v6710 = vsel %vm4465, %v6214, %v6709
        %v6711 = vsel %vm4467, %v6218, %v6710
        %v6712 = vsel %vm4469, %v6222, %v6711
        %v6713 = vsel %vm4471, %v6226, %v6712
        %v6714 = vsel %vm4459, %v6234, %v6230
        %v6715 = vsel %vm4461, %v6238, %v6714
        %v6716 = vsel %vm4463, %v6242, %v6715
        %v6717 = vsel %vm4465, %v6246, %v6716
        %v6718 = vsel %vm4467, %v6250, %v6717
        %v6719 = vsel %vm4469, %v6254, %v6718
        %v6720 = vsel %vm4471, %v6258, %v6719
        %v6721 = vsel %vm4459, %v6266, %v6262
        %v6722 = vsel %vm4461, %v6270, %v6721
        %v6723 = vsel %vm4463, %v6274, %v6722
        %v6724 = vsel %vm4465, %v6278, %v6723
        %v6725 = vsel %vm4467, %v6282, %v6724
        %v6726 = vsel %vm4469, %v6286, %v6725
        %v6727 = vsel %vm4471, %v6290, %v6726
        %v6728 = vsel %vm4459, %v6298, %v6294
        %v6729 = vsel %vm4461, %v6302, %v6728
        %v6730 = vsel %vm4463, %v6306, %v6729
        %v6731 = vsel %vm4465, %v6310, %v6730
        %v6732 = vsel %vm4467, %v6314, %v6731
        %v6733 = vsel %vm4469, %v6318, %v6732
        %v6734 = vsel %vm4471, %v6322, %v6733
        %v6735 = vsel %vm4459, %v6330, %v6326
        %v6736 = vsel %vm4461, %v6334, %v6735
        %v6737 = vsel %vm4463, %v6338, %v6736
        %v6738 = vsel %vm4465, %v6342, %v6737
        %v6739 = vsel %vm4467, %v6346, %v6738
        %v6740 = vsel %vm4469, %v6350, %v6739
        %v6741 = vsel %vm4471, %v6354, %v6740
        %v6742 = vsel %vm4459, %v6362, %v6358
        %v6743 = vsel %vm4461, %v6366, %v6742
        %v6744 = vsel %vm4463, %v6370, %v6743
        %v6745 = vsel %vm4465, %v6374, %v6744
        %v6746 = vsel %vm4467, %v6378, %v6745
        %v6747 = vsel %vm4469, %v6382, %v6746
        %v6748 = vsel %vm4471, %v6386, %v6747
        %v6749 = vsel %vm4459, %v6394, %v6390
        %v6750 = vsel %vm4461, %v6398, %v6749
        %v6751 = vsel %vm4463, %v6402, %v6750
        %v6752 = vsel %vm4465, %v6406, %v6751
        %v6753 = vsel %vm4467, %v6410, %v6752
        %v6754 = vsel %vm4469, %v6414, %v6753
        %v6755 = vsel %vm4471, %v6418, %v6754
        %v6756 = vsel %vm4459, %v6426, %v6422
        %v6757 = vsel %vm4461, %v6430, %v6756
        %v6758 = vsel %vm4463, %v6434, %v6757
        %v6759 = vsel %vm4465, %v6438, %v6758
        %v6760 = vsel %vm4467, %v6442, %v6759
        %v6761 = vsel %vm4469, %v6446, %v6760
        %v6762 = vsel %vm4471, %v6450, %v6761
        %v6763 = vsel %vm4459, %v6458, %v6454
        %v6764 = vsel %vm4461, %v6462, %v6763
        %v6765 = vsel %vm4463, %v6466, %v6764
        %v6766 = vsel %vm4465, %v6470, %v6765
        %v6767 = vsel %vm4467, %v6474, %v6766
        %v6768 = vsel %vm4469, %v6478, %v6767
        %v6769 = vsel %vm4471, %v6482, %v6768
        %v6770 = vsel %vm4459, %v6490, %v6486
        %v6771 = vsel %vm4461, %v6494, %v6770
        %v6772 = vsel %vm4463, %v6498, %v6771
        %v6773 = vsel %vm4465, %v6502, %v6772
        %v6774 = vsel %vm4467, %v6506, %v6773
        %v6775 = vsel %vm4469, %v6510, %v6774
        %v6776 = vsel %vm4471, %v6514, %v6775
        %v6777 = vsel %vm4459, %v6522, %v6518
        %v6778 = vsel %vm4461, %v6526, %v6777
        %v6779 = vsel %vm4463, %v6530, %v6778
        %v6780 = vsel %vm4465, %v6534, %v6779
        %v6781 = vsel %vm4467, %v6538, %v6780
        %v6782 = vsel %vm4469, %v6542, %v6781
        %v6783 = vsel %vm4471, %v6546, %v6782
        %v6784 = vsel %vm4459, %v6554, %v6550
        %v6785 = vsel %vm4461, %v6558, %v6784
        %v6786 = vsel %vm4463, %v6562, %v6785
        %v6787 = vsel %vm4465, %v6566, %v6786
        %v6788 = vsel %vm4467, %v6570, %v6787
        %v6789 = vsel %vm4469, %v6574, %v6788
        %v6790 = vsel %vm4471, %v6578, %v6789
        %v6791 = vsel %vm4459, %v6586, %v6582
        %v6792 = vsel %vm4461, %v6590, %v6791
        %v6793 = vsel %vm4463, %v6594, %v6792
        %v6794 = vsel %vm4465, %v6598, %v6793
        %v6795 = vsel %vm4467, %v6602, %v6794
        %v6796 = vsel %vm4469, %v6606, %v6795
        %v6797 = vsel %vm4471, %v6610, %v6796
        %v6798 = vsel %vm4459, %v6618, %v6614
        %v6799 = vsel %vm4461, %v6622, %v6798
        %v6800 = vsel %vm4463, %v6626, %v6799
        %v6801 = vsel %vm4465, %v6630, %v6800
        %v6802 = vsel %vm4467, %v6634, %v6801
        %v6803 = vsel %vm4469, %v6638, %v6802
        %v6804 = vsel %vm4471, %v6642, %v6803
        %v6805 = vsel %vm4459, %v6650, %v6646
        %v6806 = vsel %vm4461, %v6654, %v6805
        %v6807 = vsel %vm4463, %v6658, %v6806
        %v6808 = vsel %vm4465, %v6662, %v6807
        %v6809 = vsel %vm4467, %v6666, %v6808
        %v6810 = vsel %vm4469, %v6670, %v6809
        %v6811 = vsel %vm4471, %v6674, %v6810
        %v6812 = vsel %vm4459, %v6682, %v6678
        %v6813 = vsel %vm4461, %v6686, %v6812
        %v6814 = vsel %vm4463, %v6690, %v6813
        %v6815 = vsel %vm4465, %v6694, %v6814
        %v6816 = vsel %vm4467, %v6698, %v6815
        %v6817 = vsel %vm4469, %v6702, %v6816
        %v6818 = vsel %vm4471, %v6706, %v6817
        %v6835 = vsel %vm4594, %v6713, 0.0
        %6836 = vadd.xlane.f32.xlu0 %v6835
        %v6837 = vpop.xlane.xlu0 %6836
        %v6838 = vsel %vm4594, %v6720, 0.0
        %6839 = vadd.xlane.f32.xlu0 %v6838
        %v6840 = vpop.xlane.xlu0 %6839
        %v6841 = vsel %vm4594, %v6727, 0.0
        %6842 = vadd.xlane.f32.xlu0 %v6841
        %v6843 = vpop.xlane.xlu0 %6842
        %v6844 = vsel %vm4594, %v6734, 0.0
        %6845 = vadd.xlane.f32.xlu0 %v6844
        %v6846 = vpop.xlane.xlu0 %6845
        %v6847 = vsel %vm4594, %v6741, 0.0
        %6848 = vadd.xlane.f32.xlu0 %v6847
        %v6849 = vpop.xlane.xlu0 %6848
        %v6850 = vsel %vm4594, %v6748, 0.0
        %6851 = vadd.xlane.f32.xlu0 %v6850
        %v6852 = vpop.xlane.xlu0 %6851
        %v6853 = vsel %vm4594, %v6755, 0.0
        %6854 = vadd.xlane.f32.xlu0 %v6853
        %v6855 = vpop.xlane.xlu0 %6854
        %v6856 = vsel %vm4594, %v6762, 0.0
        %6857 = vadd.xlane.f32.xlu0 %v6856
        %v6858 = vpop.xlane.xlu0 %6857
        %v6859 = vsel %vm4594, %v6769, 0.0
        %6860 = vadd.xlane.f32.xlu0 %v6859
        %v6861 = vpop.xlane.xlu0 %6860
        %v6862 = vsel %vm4594, %v6776, 0.0
        %6863 = vadd.xlane.f32.xlu0 %v6862
        %v6864 = vpop.xlane.xlu0 %6863
        %v6865 = vsel %vm4594, %v6783, 0.0
        %6866 = vadd.xlane.f32.xlu0 %v6865
        %v6867 = vpop.xlane.xlu0 %6866
        %v6868 = vsel %vm4594, %v6790, 0.0
        %6869 = vadd.xlane.f32.xlu0 %v6868
        %v6870 = vpop.xlane.xlu0 %6869
        %v6871 = vsel %vm4594, %v6797, 0.0
        %6872 = vadd.xlane.f32.xlu0 %v6871
        %v6873 = vpop.xlane.xlu0 %6872
        %v6874 = vsel %vm4594, %v6804, 0.0
        %6875 = vadd.xlane.f32.xlu0 %v6874
        %v6876 = vpop.xlane.xlu0 %6875
        %v6877 = vsel %vm4594, %v6811, 0.0
        %6878 = vadd.xlane.f32.xlu0 %v6877
        %v6879 = vpop.xlane.xlu0 %6878
        %v6880 = vsel %vm4594, %v6818, 0.0
        %6881 = vadd.xlane.f32.xlu0 %v6880
        %v6882 = vpop.xlane.xlu0 %6881
        %v6883 = vrcp.pop %v6837
        %v6884 = vrcp.pop %v6840
        %v6885 = vrcp.pop %v6843
        %v6886 = vrcp.pop %v6846
        %v6887 = vrcp.pop %v6849
        %v6888 = vrcp.pop %v6852
        %v6889 = vrcp.pop %v6855
        %v6890 = vrcp.pop %v6858
        %v6891 = vrcp.pop %v6861
        %v6892 = vrcp.pop %v6864
        %v6893 = vrcp.pop %v6867
        %v6894 = vrcp.pop %v6870
        %v6895 = vrcp.pop %v6873
        %v6896 = vrcp.pop %v6876
        %v6897 = vrcp.pop %v6879
        %v6898 = vrcp.pop %v6882
        %v6915 = vlaneseq
        %v6916 = vshrl.u32 %v6915, 7
        %v6917 = vsub.s32 0, %v6916
        %v6918 = vrot.slane %v6883, %v6917
        %v6919 = vlaneseq
        %v6920 = vshrl.u32 %v6919, 7
        %v6921 = vsub.s32 1, %v6920
        %v6922 = vrot.slane %v6883, %v6921
        %v6923 = vlaneseq
        %v6924 = vshrl.u32 %v6923, 7
        %v6925 = vsub.s32 2, %v6924
        %v6926 = vrot.slane %v6883, %v6925
        %v6927 = vlaneseq
        %v6928 = vshrl.u32 %v6927, 7
        %v6929 = vsub.s32 3, %v6928
        %v6930 = vrot.slane %v6883, %v6929
        %v6931 = vlaneseq
        %v6932 = vshrl.u32 %v6931, 7
        %v6933 = vsub.s32 4, %v6932
        %v6934 = vrot.slane %v6883, %v6933
        %v6935 = vlaneseq
        %v6936 = vshrl.u32 %v6935, 7
        %v6937 = vsub.s32 5, %v6936
        %v6938 = vrot.slane %v6883, %v6937
        %v6939 = vlaneseq
        %v6940 = vshrl.u32 %v6939, 7
        %v6941 = vsub.s32 6, %v6940
        %v6942 = vrot.slane %v6883, %v6941
        %v6943 = vlaneseq
        %v6944 = vshrl.u32 %v6943, 7
        %v6945 = vsub.s32 7, %v6944
        %v6946 = vrot.slane %v6883, %v6945
        %v6947 = vlaneseq
        %v6948 = vshrl.u32 %v6947, 7
        %v6949 = vsub.s32 0, %v6948
        %v6950 = vrot.slane %v6884, %v6949
        %v6951 = vlaneseq
        %v6952 = vshrl.u32 %v6951, 7
        %v6953 = vsub.s32 1, %v6952
        %v6954 = vrot.slane %v6884, %v6953
        %v6955 = vlaneseq
        %v6956 = vshrl.u32 %v6955, 7
        %v6957 = vsub.s32 2, %v6956
        %v6958 = vrot.slane %v6884, %v6957
        %v6959 = vlaneseq
        %v6960 = vshrl.u32 %v6959, 7
        %v6961 = vsub.s32 3, %v6960
        %v6962 = vrot.slane %v6884, %v6961
        %v6963 = vlaneseq
        %v6964 = vshrl.u32 %v6963, 7
        %v6965 = vsub.s32 4, %v6964
        %v6966 = vrot.slane %v6884, %v6965
        %v6967 = vlaneseq
        %v6968 = vshrl.u32 %v6967, 7
        %v6969 = vsub.s32 5, %v6968
        %v6970 = vrot.slane %v6884, %v6969
        %v6971 = vlaneseq
        %v6972 = vshrl.u32 %v6971, 7
        %v6973 = vsub.s32 6, %v6972
        %v6974 = vrot.slane %v6884, %v6973
        %v6975 = vlaneseq
        %v6976 = vshrl.u32 %v6975, 7
        %v6977 = vsub.s32 7, %v6976
        %v6978 = vrot.slane %v6884, %v6977
        %v6979 = vlaneseq
        %v6980 = vshrl.u32 %v6979, 7
        %v6981 = vsub.s32 0, %v6980
        %v6982 = vrot.slane %v6885, %v6981
        %v6983 = vlaneseq
        %v6984 = vshrl.u32 %v6983, 7
        %v6985 = vsub.s32 1, %v6984
        %v6986 = vrot.slane %v6885, %v6985
        %v6987 = vlaneseq
        %v6988 = vshrl.u32 %v6987, 7
        %v6989 = vsub.s32 2, %v6988
        %v6990 = vrot.slane %v6885, %v6989
        %v6991 = vlaneseq
        %v6992 = vshrl.u32 %v6991, 7
        %v6993 = vsub.s32 3, %v6992
        %v6994 = vrot.slane %v6885, %v6993
        %v6995 = vlaneseq
        %v6996 = vshrl.u32 %v6995, 7
        %v6997 = vsub.s32 4, %v6996
        %v6998 = vrot.slane %v6885, %v6997
        %v6999 = vlaneseq
        %v7000 = vshrl.u32 %v6999, 7
        %v7001 = vsub.s32 5, %v7000
        %v7002 = vrot.slane %v6885, %v7001
        %v7003 = vlaneseq
        %v7004 = vshrl.u32 %v7003, 7
        %v7005 = vsub.s32 6, %v7004
        %v7006 = vrot.slane %v6885, %v7005
        %v7007 = vlaneseq
        %v7008 = vshrl.u32 %v7007, 7
        %v7009 = vsub.s32 7, %v7008
        %v7010 = vrot.slane %v6885, %v7009
        %v7011 = vlaneseq
        %v7012 = vshrl.u32 %v7011, 7
        %v7013 = vsub.s32 0, %v7012
        %v7014 = vrot.slane %v6886, %v7013
        %v7015 = vlaneseq
        %v7016 = vshrl.u32 %v7015, 7
        %v7017 = vsub.s32 1, %v7016
        %v7018 = vrot.slane %v6886, %v7017
        %v7019 = vlaneseq
        %v7020 = vshrl.u32 %v7019, 7
        %v7021 = vsub.s32 2, %v7020
        %v7022 = vrot.slane %v6886, %v7021
        %v7023 = vlaneseq
        %v7024 = vshrl.u32 %v7023, 7
        %v7025 = vsub.s32 3, %v7024
        %v7026 = vrot.slane %v6886, %v7025
        %v7027 = vlaneseq
        %v7028 = vshrl.u32 %v7027, 7
        %v7029 = vsub.s32 4, %v7028
        %v7030 = vrot.slane %v6886, %v7029
        %v7031 = vlaneseq
        %v7032 = vshrl.u32 %v7031, 7
        %v7033 = vsub.s32 5, %v7032
        %v7034 = vrot.slane %v6886, %v7033
        %v7035 = vlaneseq
        %v7036 = vshrl.u32 %v7035, 7
        %v7037 = vsub.s32 6, %v7036
        %v7038 = vrot.slane %v6886, %v7037
        %v7039 = vlaneseq
        %v7040 = vshrl.u32 %v7039, 7
        %v7041 = vsub.s32 7, %v7040
        %v7042 = vrot.slane %v6886, %v7041
        %v7043 = vlaneseq
        %v7044 = vshrl.u32 %v7043, 7
        %v7045 = vsub.s32 0, %v7044
        %v7046 = vrot.slane %v6887, %v7045
        %v7047 = vlaneseq
        %v7048 = vshrl.u32 %v7047, 7
        %v7049 = vsub.s32 1, %v7048
        %v7050 = vrot.slane %v6887, %v7049
        %v7051 = vlaneseq
        %v7052 = vshrl.u32 %v7051, 7
        %v7053 = vsub.s32 2, %v7052
        %v7054 = vrot.slane %v6887, %v7053
        %v7055 = vlaneseq
        %v7056 = vshrl.u32 %v7055, 7
        %v7057 = vsub.s32 3, %v7056
        %v7058 = vrot.slane %v6887, %v7057
        %v7059 = vlaneseq
        %v7060 = vshrl.u32 %v7059, 7
        %v7061 = vsub.s32 4, %v7060
        %v7062 = vrot.slane %v6887, %v7061
        %v7063 = vlaneseq
        %v7064 = vshrl.u32 %v7063, 7
        %v7065 = vsub.s32 5, %v7064
        %v7066 = vrot.slane %v6887, %v7065
        %v7067 = vlaneseq
        %v7068 = vshrl.u32 %v7067, 7
        %v7069 = vsub.s32 6, %v7068
        %v7070 = vrot.slane %v6887, %v7069
        %v7071 = vlaneseq
        %v7072 = vshrl.u32 %v7071, 7
        %v7073 = vsub.s32 7, %v7072
        %v7074 = vrot.slane %v6887, %v7073
        %v7075 = vlaneseq
        %v7076 = vshrl.u32 %v7075, 7
        %v7077 = vsub.s32 0, %v7076
        %v7078 = vrot.slane %v6888, %v7077
        %v7079 = vlaneseq
        %v7080 = vshrl.u32 %v7079, 7
        %v7081 = vsub.s32 1, %v7080
        %v7082 = vrot.slane %v6888, %v7081
        %v7083 = vlaneseq
        %v7084 = vshrl.u32 %v7083, 7
        %v7085 = vsub.s32 2, %v7084
        %v7086 = vrot.slane %v6888, %v7085
        %v7087 = vlaneseq
        %v7088 = vshrl.u32 %v7087, 7
        %v7089 = vsub.s32 3, %v7088
        %v7090 = vrot.slane %v6888, %v7089
        %v7091 = vlaneseq
        %v7092 = vshrl.u32 %v7091, 7
        %v7093 = vsub.s32 4, %v7092
        %v7094 = vrot.slane %v6888, %v7093
        %v7095 = vlaneseq
        %v7096 = vshrl.u32 %v7095, 7
        %v7097 = vsub.s32 5, %v7096
        %v7098 = vrot.slane %v6888, %v7097
        %v7099 = vlaneseq
        %v7100 = vshrl.u32 %v7099, 7
        %v7101 = vsub.s32 6, %v7100
        %v7102 = vrot.slane %v6888, %v7101
        %v7103 = vlaneseq
        %v7104 = vshrl.u32 %v7103, 7
        %v7105 = vsub.s32 7, %v7104
        %v7106 = vrot.slane %v6888, %v7105
        %v7107 = vlaneseq
        %v7108 = vshrl.u32 %v7107, 7
        %v7109 = vsub.s32 0, %v7108
        %v7110 = vrot.slane %v6889, %v7109
        %v7111 = vlaneseq
        %v7112 = vshrl.u32 %v7111, 7
        %v7113 = vsub.s32 1, %v7112
        %v7114 = vrot.slane %v6889, %v7113
        %v7115 = vlaneseq
        %v7116 = vshrl.u32 %v7115, 7
        %v7117 = vsub.s32 2, %v7116
        %v7118 = vrot.slane %v6889, %v7117
        %v7119 = vlaneseq
        %v7120 = vshrl.u32 %v7119, 7
        %v7121 = vsub.s32 3, %v7120
        %v7122 = vrot.slane %v6889, %v7121
        %v7123 = vlaneseq
        %v7124 = vshrl.u32 %v7123, 7
        %v7125 = vsub.s32 4, %v7124
        %v7126 = vrot.slane %v6889, %v7125
        %v7127 = vlaneseq
        %v7128 = vshrl.u32 %v7127, 7
        %v7129 = vsub.s32 5, %v7128
        %v7130 = vrot.slane %v6889, %v7129
        %v7131 = vlaneseq
        %v7132 = vshrl.u32 %v7131, 7
        %v7133 = vsub.s32 6, %v7132
        %v7134 = vrot.slane %v6889, %v7133
        %v7135 = vlaneseq
        %v7136 = vshrl.u32 %v7135, 7
        %v7137 = vsub.s32 7, %v7136
        %v7138 = vrot.slane %v6889, %v7137
        %v7139 = vlaneseq
        %v7140 = vshrl.u32 %v7139, 7
        %v7141 = vsub.s32 0, %v7140
        %v7142 = vrot.slane %v6890, %v7141
        %v7143 = vlaneseq
        %v7144 = vshrl.u32 %v7143, 7
        %v7145 = vsub.s32 1, %v7144
        %v7146 = vrot.slane %v6890, %v7145
        %v7147 = vlaneseq
        %v7148 = vshrl.u32 %v7147, 7
        %v7149 = vsub.s32 2, %v7148
        %v7150 = vrot.slane %v6890, %v7149
        %v7151 = vlaneseq
        %v7152 = vshrl.u32 %v7151, 7
        %v7153 = vsub.s32 3, %v7152
        %v7154 = vrot.slane %v6890, %v7153
        %v7155 = vlaneseq
        %v7156 = vshrl.u32 %v7155, 7
        %v7157 = vsub.s32 4, %v7156
        %v7158 = vrot.slane %v6890, %v7157
        %v7159 = vlaneseq
        %v7160 = vshrl.u32 %v7159, 7
        %v7161 = vsub.s32 5, %v7160
        %v7162 = vrot.slane %v6890, %v7161
        %v7163 = vlaneseq
        %v7164 = vshrl.u32 %v7163, 7
        %v7165 = vsub.s32 6, %v7164
        %v7166 = vrot.slane %v6890, %v7165
        %v7167 = vlaneseq
        %v7168 = vshrl.u32 %v7167, 7
        %v7169 = vsub.s32 7, %v7168
        %v7170 = vrot.slane %v6890, %v7169
        %v7171 = vlaneseq
        %v7172 = vshrl.u32 %v7171, 7
        %v7173 = vsub.s32 0, %v7172
        %v7174 = vrot.slane %v6891, %v7173
        %v7175 = vlaneseq
        %v7176 = vshrl.u32 %v7175, 7
        %v7177 = vsub.s32 1, %v7176
        %v7178 = vrot.slane %v6891, %v7177
        %v7179 = vlaneseq
        %v7180 = vshrl.u32 %v7179, 7
        %v7181 = vsub.s32 2, %v7180
        %v7182 = vrot.slane %v6891, %v7181
        %v7183 = vlaneseq
        %v7184 = vshrl.u32 %v7183, 7
        %v7185 = vsub.s32 3, %v7184
        %v7186 = vrot.slane %v6891, %v7185
        %v7187 = vlaneseq
        %v7188 = vshrl.u32 %v7187, 7
        %v7189 = vsub.s32 4, %v7188
        %v7190 = vrot.slane %v6891, %v7189
        %v7191 = vlaneseq
        %v7192 = vshrl.u32 %v7191, 7
        %v7193 = vsub.s32 5, %v7192
        %v7194 = vrot.slane %v6891, %v7193
        %v7195 = vlaneseq
        %v7196 = vshrl.u32 %v7195, 7
        %v7197 = vsub.s32 6, %v7196
        %v7198 = vrot.slane %v6891, %v7197
        %v7199 = vlaneseq
        %v7200 = vshrl.u32 %v7199, 7
        %v7201 = vsub.s32 7, %v7200
        %v7202 = vrot.slane %v6891, %v7201
        %v7203 = vlaneseq
        %v7204 = vshrl.u32 %v7203, 7
        %v7205 = vsub.s32 0, %v7204
        %v7206 = vrot.slane %v6892, %v7205
        %v7207 = vlaneseq
        %v7208 = vshrl.u32 %v7207, 7
        %v7209 = vsub.s32 1, %v7208
        %v7210 = vrot.slane %v6892, %v7209
        %v7211 = vlaneseq
        %v7212 = vshrl.u32 %v7211, 7
        %v7213 = vsub.s32 2, %v7212
        %v7214 = vrot.slane %v6892, %v7213
        %v7215 = vlaneseq
        %v7216 = vshrl.u32 %v7215, 7
        %v7217 = vsub.s32 3, %v7216
        %v7218 = vrot.slane %v6892, %v7217
        %v7219 = vlaneseq
        %v7220 = vshrl.u32 %v7219, 7
        %v7221 = vsub.s32 4, %v7220
        %v7222 = vrot.slane %v6892, %v7221
        %v7223 = vlaneseq
        %v7224 = vshrl.u32 %v7223, 7
        %v7225 = vsub.s32 5, %v7224
        %v7226 = vrot.slane %v6892, %v7225
        %v7227 = vlaneseq
        %v7228 = vshrl.u32 %v7227, 7
        %v7229 = vsub.s32 6, %v7228
        %v7230 = vrot.slane %v6892, %v7229
        %v7231 = vlaneseq
        %v7232 = vshrl.u32 %v7231, 7
        %v7233 = vsub.s32 7, %v7232
        %v7234 = vrot.slane %v6892, %v7233
        %v7235 = vlaneseq
        %v7236 = vshrl.u32 %v7235, 7
        %v7237 = vsub.s32 0, %v7236
        %v7238 = vrot.slane %v6893, %v7237
        %v7239 = vlaneseq
        %v7240 = vshrl.u32 %v7239, 7
        %v7241 = vsub.s32 1, %v7240
        %v7242 = vrot.slane %v6893, %v7241
        %v7243 = vlaneseq
        %v7244 = vshrl.u32 %v7243, 7
        %v7245 = vsub.s32 2, %v7244
        %v7246 = vrot.slane %v6893, %v7245
        %v7247 = vlaneseq
        %v7248 = vshrl.u32 %v7247, 7
        %v7249 = vsub.s32 3, %v7248
        %v7250 = vrot.slane %v6893, %v7249
        %v7251 = vlaneseq
        %v7252 = vshrl.u32 %v7251, 7
        %v7253 = vsub.s32 4, %v7252
        %v7254 = vrot.slane %v6893, %v7253
        %v7255 = vlaneseq
        %v7256 = vshrl.u32 %v7255, 7
        %v7257 = vsub.s32 5, %v7256
        %v7258 = vrot.slane %v6893, %v7257
        %v7259 = vlaneseq
        %v7260 = vshrl.u32 %v7259, 7
        %v7261 = vsub.s32 6, %v7260
        %v7262 = vrot.slane %v6893, %v7261
        %v7263 = vlaneseq
        %v7264 = vshrl.u32 %v7263, 7
        %v7265 = vsub.s32 7, %v7264
        %v7266 = vrot.slane %v6893, %v7265
        %v7267 = vlaneseq
        %v7268 = vshrl.u32 %v7267, 7
        %v7269 = vsub.s32 0, %v7268
        %v7270 = vrot.slane %v6894, %v7269
        %v7271 = vlaneseq
        %v7272 = vshrl.u32 %v7271, 7
        %v7273 = vsub.s32 1, %v7272
        %v7274 = vrot.slane %v6894, %v7273
        %v7275 = vlaneseq
        %v7276 = vshrl.u32 %v7275, 7
        %v7277 = vsub.s32 2, %v7276
        %v7278 = vrot.slane %v6894, %v7277
        %v7279 = vlaneseq
        %v7280 = vshrl.u32 %v7279, 7
        %v7281 = vsub.s32 3, %v7280
        %v7282 = vrot.slane %v6894, %v7281
        %v7283 = vlaneseq
        %v7284 = vshrl.u32 %v7283, 7
        %v7285 = vsub.s32 4, %v7284
        %v7286 = vrot.slane %v6894, %v7285
        %v7287 = vlaneseq
        %v7288 = vshrl.u32 %v7287, 7
        %v7289 = vsub.s32 5, %v7288
        %v7290 = vrot.slane %v6894, %v7289
        %v7291 = vlaneseq
        %v7292 = vshrl.u32 %v7291, 7
        %v7293 = vsub.s32 6, %v7292
        %v7294 = vrot.slane %v6894, %v7293
        %v7295 = vlaneseq
        %v7296 = vshrl.u32 %v7295, 7
        %v7297 = vsub.s32 7, %v7296
        %v7298 = vrot.slane %v6894, %v7297
        %v7299 = vlaneseq
        %v7300 = vshrl.u32 %v7299, 7
        %v7301 = vsub.s32 0, %v7300
        %v7302 = vrot.slane %v6895, %v7301
        %v7303 = vlaneseq
        %v7304 = vshrl.u32 %v7303, 7
        %v7305 = vsub.s32 1, %v7304
        %v7306 = vrot.slane %v6895, %v7305
        %v7307 = vlaneseq
        %v7308 = vshrl.u32 %v7307, 7
        %v7309 = vsub.s32 2, %v7308
        %v7310 = vrot.slane %v6895, %v7309
        %v7311 = vlaneseq
        %v7312 = vshrl.u32 %v7311, 7
        %v7313 = vsub.s32 3, %v7312
        %v7314 = vrot.slane %v6895, %v7313
        %v7315 = vlaneseq
        %v7316 = vshrl.u32 %v7315, 7
        %v7317 = vsub.s32 4, %v7316
        %v7318 = vrot.slane %v6895, %v7317
        %v7319 = vlaneseq
        %v7320 = vshrl.u32 %v7319, 7
        %v7321 = vsub.s32 5, %v7320
        %v7322 = vrot.slane %v6895, %v7321
        %v7323 = vlaneseq
        %v7324 = vshrl.u32 %v7323, 7
        %v7325 = vsub.s32 6, %v7324
        %v7326 = vrot.slane %v6895, %v7325
        %v7327 = vlaneseq
        %v7328 = vshrl.u32 %v7327, 7
        %v7329 = vsub.s32 7, %v7328
        %v7330 = vrot.slane %v6895, %v7329
        %v7331 = vlaneseq
        %v7332 = vshrl.u32 %v7331, 7
        %v7333 = vsub.s32 0, %v7332
        %v7334 = vrot.slane %v6896, %v7333
        %v7335 = vlaneseq
        %v7336 = vshrl.u32 %v7335, 7
        %v7337 = vsub.s32 1, %v7336
        %v7338 = vrot.slane %v6896, %v7337
        %v7339 = vlaneseq
        %v7340 = vshrl.u32 %v7339, 7
        %v7341 = vsub.s32 2, %v7340
        %v7342 = vrot.slane %v6896, %v7341
        %v7343 = vlaneseq
        %v7344 = vshrl.u32 %v7343, 7
        %v7345 = vsub.s32 3, %v7344
        %v7346 = vrot.slane %v6896, %v7345
        %v7347 = vlaneseq
        %v7348 = vshrl.u32 %v7347, 7
        %v7349 = vsub.s32 4, %v7348
        %v7350 = vrot.slane %v6896, %v7349
        %v7351 = vlaneseq
        %v7352 = vshrl.u32 %v7351, 7
        %v7353 = vsub.s32 5, %v7352
        %v7354 = vrot.slane %v6896, %v7353
        %v7355 = vlaneseq
        %v7356 = vshrl.u32 %v7355, 7
        %v7357 = vsub.s32 6, %v7356
        %v7358 = vrot.slane %v6896, %v7357
        %v7359 = vlaneseq
        %v7360 = vshrl.u32 %v7359, 7
        %v7361 = vsub.s32 7, %v7360
        %v7362 = vrot.slane %v6896, %v7361
        %v7363 = vlaneseq
        %v7364 = vshrl.u32 %v7363, 7
        %v7365 = vsub.s32 0, %v7364
        %v7366 = vrot.slane %v6897, %v7365
        %v7367 = vlaneseq
        %v7368 = vshrl.u32 %v7367, 7
        %v7369 = vsub.s32 1, %v7368
        %v7370 = vrot.slane %v6897, %v7369
        %v7371 = vlaneseq
        %v7372 = vshrl.u32 %v7371, 7
        %v7373 = vsub.s32 2, %v7372
        %v7374 = vrot.slane %v6897, %v7373
        %v7375 = vlaneseq
        %v7376 = vshrl.u32 %v7375, 7
        %v7377 = vsub.s32 3, %v7376
        %v7378 = vrot.slane %v6897, %v7377
        %v7379 = vlaneseq
        %v7380 = vshrl.u32 %v7379, 7
        %v7381 = vsub.s32 4, %v7380
        %v7382 = vrot.slane %v6897, %v7381
        %v7383 = vlaneseq
        %v7384 = vshrl.u32 %v7383, 7
        %v7385 = vsub.s32 5, %v7384
        %v7386 = vrot.slane %v6897, %v7385
        %v7387 = vlaneseq
        %v7388 = vshrl.u32 %v7387, 7
        %v7389 = vsub.s32 6, %v7388
        %v7390 = vrot.slane %v6897, %v7389
        %v7391 = vlaneseq
        %v7392 = vshrl.u32 %v7391, 7
        %v7393 = vsub.s32 7, %v7392
        %v7394 = vrot.slane %v6897, %v7393
        %v7395 = vlaneseq
        %v7396 = vshrl.u32 %v7395, 7
        %v7397 = vsub.s32 0, %v7396
        %v7398 = vrot.slane %v6898, %v7397
        %v7399 = vlaneseq
        %v7400 = vshrl.u32 %v7399, 7
        %v7401 = vsub.s32 1, %v7400
        %v7402 = vrot.slane %v6898, %v7401
        %v7403 = vlaneseq
        %v7404 = vshrl.u32 %v7403, 7
        %v7405 = vsub.s32 2, %v7404
        %v7406 = vrot.slane %v6898, %v7405
        %v7407 = vlaneseq
        %v7408 = vshrl.u32 %v7407, 7
        %v7409 = vsub.s32 3, %v7408
        %v7410 = vrot.slane %v6898, %v7409
        %v7411 = vlaneseq
        %v7412 = vshrl.u32 %v7411, 7
        %v7413 = vsub.s32 4, %v7412
        %v7414 = vrot.slane %v6898, %v7413
        %v7415 = vlaneseq
        %v7416 = vshrl.u32 %v7415, 7
        %v7417 = vsub.s32 5, %v7416
        %v7418 = vrot.slane %v6898, %v7417
        %v7419 = vlaneseq
        %v7420 = vshrl.u32 %v7419, 7
        %v7421 = vsub.s32 6, %v7420
        %v7422 = vrot.slane %v6898, %v7421
        %v7423 = vlaneseq
        %v7424 = vshrl.u32 %v7423, 7
        %v7425 = vsub.s32 7, %v7424
        %v7426 = vrot.slane %v6898, %v7425
        %v7555 = vmul.f32 %v5428, %v6918
        %v7556 = vmul.f32 %v5430, %v6922
        %v7557 = vmul.f32 %v5432, %v6926
        %v7558 = vmul.f32 %v5434, %v6930
        %v7559 = vmul.f32 %v5436, %v6934
        %v7560 = vmul.f32 %v5438, %v6938
        %v7561 = vmul.f32 %v5440, %v6942
        %v7562 = vmul.f32 %v5442, %v6946
        %v7563 = vmul.f32 %v5444, %v6950
        %v7564 = vmul.f32 %v5446, %v6954
        %v7565 = vmul.f32 %v5448, %v6958
        %v7566 = vmul.f32 %v5450, %v6962
        %v7567 = vmul.f32 %v5452, %v6966
        %v7568 = vmul.f32 %v5454, %v6970
        %v7569 = vmul.f32 %v5456, %v6974
        %v7570 = vmul.f32 %v5458, %v6978
        %v7571 = vmul.f32 %v5460, %v6982
        %v7572 = vmul.f32 %v5462, %v6986
        %v7573 = vmul.f32 %v5464, %v6990
        %v7574 = vmul.f32 %v5466, %v6994
        %v7575 = vmul.f32 %v5468, %v6998
        %v7576 = vmul.f32 %v5470, %v7002
        %v7577 = vmul.f32 %v5472, %v7006
        %v7578 = vmul.f32 %v5474, %v7010
        %v7579 = vmul.f32 %v5476, %v7014
        %v7580 = vmul.f32 %v5478, %v7018
        %v7581 = vmul.f32 %v5480, %v7022
        %v7582 = vmul.f32 %v5482, %v7026
        %v7583 = vmul.f32 %v5484, %v7030
        %v7584 = vmul.f32 %v5486, %v7034
        %v7585 = vmul.f32 %v5488, %v7038
        %v7586 = vmul.f32 %v5490, %v7042
        %v7587 = vmul.f32 %v5492, %v7046
        %v7588 = vmul.f32 %v5494, %v7050
        %v7589 = vmul.f32 %v5496, %v7054
        %v7590 = vmul.f32 %v5498, %v7058
        %v7591 = vmul.f32 %v5500, %v7062
        %v7592 = vmul.f32 %v5502, %v7066
        %v7593 = vmul.f32 %v5504, %v7070
        %v7594 = vmul.f32 %v5506, %v7074
        %v7595 = vmul.f32 %v5508, %v7078
        %v7596 = vmul.f32 %v5510, %v7082
        %v7597 = vmul.f32 %v5512, %v7086
        %v7598 = vmul.f32 %v5514, %v7090
        %v7599 = vmul.f32 %v5516, %v7094
        %v7600 = vmul.f32 %v5518, %v7098
        %v7601 = vmul.f32 %v5520, %v7102
        %v7602 = vmul.f32 %v5522, %v7106
        %v7603 = vmul.f32 %v5524, %v7110
        %v7604 = vmul.f32 %v5526, %v7114
        %v7605 = vmul.f32 %v5528, %v7118
        %v7606 = vmul.f32 %v5530, %v7122
        %v7607 = vmul.f32 %v5532, %v7126
        %v7608 = vmul.f32 %v5534, %v7130
        %v7609 = vmul.f32 %v5536, %v7134
        %v7610 = vmul.f32 %v5538, %v7138
        %v7611 = vmul.f32 %v5540, %v7142
        %v7612 = vmul.f32 %v5542, %v7146
        %v7613 = vmul.f32 %v5544, %v7150
        %v7614 = vmul.f32 %v5546, %v7154
        %v7615 = vmul.f32 %v5548, %v7158
        %v7616 = vmul.f32 %v5550, %v7162
        %v7617 = vmul.f32 %v5552, %v7166
        %v7618 = vmul.f32 %v5554, %v7170
        %v7619 = vmul.f32 %v5556, %v7174
        %v7620 = vmul.f32 %v5558, %v7178
        %v7621 = vmul.f32 %v5560, %v7182
        %v7622 = vmul.f32 %v5562, %v7186
        %v7623 = vmul.f32 %v5564, %v7190
        %v7624 = vmul.f32 %v5566, %v7194
        %v7625 = vmul.f32 %v5568, %v7198
        %v7626 = vmul.f32 %v5570, %v7202
        %v7627 = vmul.f32 %v5572, %v7206
        %v7628 = vmul.f32 %v5574, %v7210
        %v7629 = vmul.f32 %v5576, %v7214
        %v7630 = vmul.f32 %v5578, %v7218
        %v7631 = vmul.f32 %v5580, %v7222
        %v7632 = vmul.f32 %v5582, %v7226
        %v7633 = vmul.f32 %v5584, %v7230
        %v7634 = vmul.f32 %v5586, %v7234
        %v7635 = vmul.f32 %v5588, %v7238
        %v7636 = vmul.f32 %v5590, %v7242
        %v7637 = vmul.f32 %v5592, %v7246
        %v7638 = vmul.f32 %v5594, %v7250
        %v7639 = vmul.f32 %v5596, %v7254
        %v7640 = vmul.f32 %v5598, %v7258
        %v7641 = vmul.f32 %v5600, %v7262
        %v7642 = vmul.f32 %v5602, %v7266
        %v7643 = vmul.f32 %v5604, %v7270
        %v7644 = vmul.f32 %v5606, %v7274
        %v7645 = vmul.f32 %v5608, %v7278
        %v7646 = vmul.f32 %v5610, %v7282
        %v7647 = vmul.f32 %v5612, %v7286
        %v7648 = vmul.f32 %v5614, %v7290
        %v7649 = vmul.f32 %v5616, %v7294
        %v7650 = vmul.f32 %v5618, %v7298
        %v7651 = vmul.f32 %v5620, %v7302
        %v7652 = vmul.f32 %v5622, %v7306
        %v7653 = vmul.f32 %v5624, %v7310
        %v7654 = vmul.f32 %v5626, %v7314
        %v7655 = vmul.f32 %v5628, %v7318
        %v7656 = vmul.f32 %v5630, %v7322
        %v7657 = vmul.f32 %v5632, %v7326
        %v7658 = vmul.f32 %v5634, %v7330
        %v7659 = vmul.f32 %v5636, %v7334
        %v7660 = vmul.f32 %v5638, %v7338
        %v7661 = vmul.f32 %v5640, %v7342
        %v7662 = vmul.f32 %v5642, %v7346
        %v7663 = vmul.f32 %v5644, %v7350
        %v7664 = vmul.f32 %v5646, %v7354
        %v7665 = vmul.f32 %v5648, %v7358
        %v7666 = vmul.f32 %v5650, %v7362
        %v7667 = vmul.f32 %v5652, %v7366
        %v7668 = vmul.f32 %v5654, %v7370
        %v7669 = vmul.f32 %v5656, %v7374
        %v7670 = vmul.f32 %v5658, %v7378
        %v7671 = vmul.f32 %v5660, %v7382
        %v7672 = vmul.f32 %v5662, %v7386
        %v7673 = vmul.f32 %v5664, %v7390
        %v7674 = vmul.f32 %v5666, %v7394
        %v7675 = vmul.f32 %v5668, %v7398
        %v7676 = vmul.f32 %v5670, %v7402
        %v7677 = vmul.f32 %v5672, %v7406
        %v7678 = vmul.f32 %v5674, %v7410
        %v7679 = vmul.f32 %v5676, %v7414
        %v7680 = vmul.f32 %v5678, %v7418
        %v7681 = vmul.f32 %v5680, %v7422
        %v7682 = vmul.f32 %v5682, %v7426
        %7684 = vset.pattern.permute.xlu0 0
        %7685 = vperm.xlu0 %7684, %v7555
        %v7686 = vpop.permute.xlu0 %7685
        %7689 = vset.pattern.permute.xlu0 0
        %7690 = vperm.xlu0 %7689, %v7556
        %v7691 = vpop.permute.xlu0 %7690
        %7694 = vset.pattern.permute.xlu0 0
        %7695 = vperm.xlu0 %7694, %v7557
        %v7696 = vpop.permute.xlu0 %7695
        %7699 = vset.pattern.permute.xlu0 0
        %7700 = vperm.xlu0 %7699, %v7558
        %v7701 = vpop.permute.xlu0 %7700
        %7704 = vset.pattern.permute.xlu0 0
        %7705 = vperm.xlu0 %7704, %v7559
        %v7706 = vpop.permute.xlu0 %7705
        %7709 = vset.pattern.permute.xlu0 0
        %7710 = vperm.xlu0 %7709, %v7560
        %v7711 = vpop.permute.xlu0 %7710
        %7714 = vset.pattern.permute.xlu0 0
        %7715 = vperm.xlu0 %7714, %v7561
        %v7716 = vpop.permute.xlu0 %7715
        %7719 = vset.pattern.permute.xlu0 0
        %7720 = vperm.xlu0 %7719, %v7562
        %v7721 = vpop.permute.xlu0 %7720
        %7724 = vset.pattern.permute.xlu0 0
        %7725 = vperm.xlu0 %7724, %v7563
        %v7726 = vpop.permute.xlu0 %7725
        %7729 = vset.pattern.permute.xlu0 0
        %7730 = vperm.xlu0 %7729, %v7564
        %v7731 = vpop.permute.xlu0 %7730
        %7734 = vset.pattern.permute.xlu0 0
        %7735 = vperm.xlu0 %7734, %v7565
        %v7736 = vpop.permute.xlu0 %7735
        %7739 = vset.pattern.permute.xlu0 0
        %7740 = vperm.xlu0 %7739, %v7566
        %v7741 = vpop.permute.xlu0 %7740
        %7744 = vset.pattern.permute.xlu0 0
        %7745 = vperm.xlu0 %7744, %v7567
        %v7746 = vpop.permute.xlu0 %7745
        %7749 = vset.pattern.permute.xlu0 0
        %7750 = vperm.xlu0 %7749, %v7568
        %v7751 = vpop.permute.xlu0 %7750
        %7754 = vset.pattern.permute.xlu0 0
        %7755 = vperm.xlu0 %7754, %v7569
        %v7756 = vpop.permute.xlu0 %7755
        %7759 = vset.pattern.permute.xlu0 0
        %7760 = vperm.xlu0 %7759, %v7570
        %v7761 = vpop.permute.xlu0 %7760
        %7764 = vset.pattern.permute.xlu0 0
        %7765 = vperm.xlu0 %7764, %v7571
        %v7766 = vpop.permute.xlu0 %7765
        %7769 = vset.pattern.permute.xlu0 0
        %7770 = vperm.xlu0 %7769, %v7572
        %v7771 = vpop.permute.xlu0 %7770
        %7774 = vset.pattern.permute.xlu0 0
        %7775 = vperm.xlu0 %7774, %v7573
        %v7776 = vpop.permute.xlu0 %7775
        %7779 = vset.pattern.permute.xlu0 0
        %7780 = vperm.xlu0 %7779, %v7574
        %v7781 = vpop.permute.xlu0 %7780
        %7784 = vset.pattern.permute.xlu0 0
        %7785 = vperm.xlu0 %7784, %v7575
        %v7786 = vpop.permute.xlu0 %7785
        %7789 = vset.pattern.permute.xlu0 0
        %7790 = vperm.xlu0 %7789, %v7576
        %v7791 = vpop.permute.xlu0 %7790
        %7794 = vset.pattern.permute.xlu0 0
        %7795 = vperm.xlu0 %7794, %v7577
        %v7796 = vpop.permute.xlu0 %7795
        %7799 = vset.pattern.permute.xlu0 0
        %7800 = vperm.xlu0 %7799, %v7578
        %v7801 = vpop.permute.xlu0 %7800
        %7804 = vset.pattern.permute.xlu0 0
        %7805 = vperm.xlu0 %7804, %v7579
        %v7806 = vpop.permute.xlu0 %7805
        %7809 = vset.pattern.permute.xlu0 0
        %7810 = vperm.xlu0 %7809, %v7580
        %v7811 = vpop.permute.xlu0 %7810
        %7814 = vset.pattern.permute.xlu0 0
        %7815 = vperm.xlu0 %7814, %v7581
        %v7816 = vpop.permute.xlu0 %7815
        %7819 = vset.pattern.permute.xlu0 0
        %7820 = vperm.xlu0 %7819, %v7582
        %v7821 = vpop.permute.xlu0 %7820
        %7824 = vset.pattern.permute.xlu0 0
        %7825 = vperm.xlu0 %7824, %v7583
        %v7826 = vpop.permute.xlu0 %7825
        %7829 = vset.pattern.permute.xlu0 0
        %7830 = vperm.xlu0 %7829, %v7584
        %v7831 = vpop.permute.xlu0 %7830
        %7834 = vset.pattern.permute.xlu0 0
        %7835 = vperm.xlu0 %7834, %v7585
        %v7836 = vpop.permute.xlu0 %7835
        %7839 = vset.pattern.permute.xlu0 0
        %7840 = vperm.xlu0 %7839, %v7586
        %v7841 = vpop.permute.xlu0 %7840
        %7844 = vset.pattern.permute.xlu0 0
        %7845 = vperm.xlu0 %7844, %v7587
        %v7846 = vpop.permute.xlu0 %7845
        %7849 = vset.pattern.permute.xlu0 0
        %7850 = vperm.xlu0 %7849, %v7588
        %v7851 = vpop.permute.xlu0 %7850
        %7854 = vset.pattern.permute.xlu0 0
        %7855 = vperm.xlu0 %7854, %v7589
        %v7856 = vpop.permute.xlu0 %7855
        %7859 = vset.pattern.permute.xlu0 0
        %7860 = vperm.xlu0 %7859, %v7590
        %v7861 = vpop.permute.xlu0 %7860
        %7864 = vset.pattern.permute.xlu0 0
        %7865 = vperm.xlu0 %7864, %v7591
        %v7866 = vpop.permute.xlu0 %7865
        %7869 = vset.pattern.permute.xlu0 0
        %7870 = vperm.xlu0 %7869, %v7592
        %v7871 = vpop.permute.xlu0 %7870
        %7874 = vset.pattern.permute.xlu0 0
        %7875 = vperm.xlu0 %7874, %v7593
        %v7876 = vpop.permute.xlu0 %7875
        %7879 = vset.pattern.permute.xlu0 0
        %7880 = vperm.xlu0 %7879, %v7594
        %v7881 = vpop.permute.xlu0 %7880
        %7884 = vset.pattern.permute.xlu0 0
        %7885 = vperm.xlu0 %7884, %v7595
        %v7886 = vpop.permute.xlu0 %7885
        %7889 = vset.pattern.permute.xlu0 0
        %7890 = vperm.xlu0 %7889, %v7596
        %v7891 = vpop.permute.xlu0 %7890
        %7894 = vset.pattern.permute.xlu0 0
        %7895 = vperm.xlu0 %7894, %v7597
        %v7896 = vpop.permute.xlu0 %7895
        %7899 = vset.pattern.permute.xlu0 0
        %7900 = vperm.xlu0 %7899, %v7598
        %v7901 = vpop.permute.xlu0 %7900
        %7904 = vset.pattern.permute.xlu0 0
        %7905 = vperm.xlu0 %7904, %v7599
        %v7906 = vpop.permute.xlu0 %7905
        %7909 = vset.pattern.permute.xlu0 0
        %7910 = vperm.xlu0 %7909, %v7600
        %v7911 = vpop.permute.xlu0 %7910
        %7914 = vset.pattern.permute.xlu0 0
        %7915 = vperm.xlu0 %7914, %v7601
        %v7916 = vpop.permute.xlu0 %7915
        %7919 = vset.pattern.permute.xlu0 0
        %7920 = vperm.xlu0 %7919, %v7602
        %v7921 = vpop.permute.xlu0 %7920
        %7924 = vset.pattern.permute.xlu0 0
        %7925 = vperm.xlu0 %7924, %v7603
        %v7926 = vpop.permute.xlu0 %7925
        %7929 = vset.pattern.permute.xlu0 0
        %7930 = vperm.xlu0 %7929, %v7604
        %v7931 = vpop.permute.xlu0 %7930
        %7934 = vset.pattern.permute.xlu0 0
        %7935 = vperm.xlu0 %7934, %v7605
        %v7936 = vpop.permute.xlu0 %7935
        %7939 = vset.pattern.permute.xlu0 0
        %7940 = vperm.xlu0 %7939, %v7606
        %v7941 = vpop.permute.xlu0 %7940
        %7944 = vset.pattern.permute.xlu0 0
        %7945 = vperm.xlu0 %7944, %v7607
        %v7946 = vpop.permute.xlu0 %7945
        %7949 = vset.pattern.permute.xlu0 0
        %7950 = vperm.xlu0 %7949, %v7608
        %v7951 = vpop.permute.xlu0 %7950
        %7954 = vset.pattern.permute.xlu0 0
        %7955 = vperm.xlu0 %7954, %v7609
        %v7956 = vpop.permute.xlu0 %7955
        %7959 = vset.pattern.permute.xlu0 0
        %7960 = vperm.xlu0 %7959, %v7610
        %v7961 = vpop.permute.xlu0 %7960
        %7964 = vset.pattern.permute.xlu0 0
        %7965 = vperm.xlu0 %7964, %v7611
        %v7966 = vpop.permute.xlu0 %7965
        %7969 = vset.pattern.permute.xlu0 0
        %7970 = vperm.xlu0 %7969, %v7612
        %v7971 = vpop.permute.xlu0 %7970
        %7974 = vset.pattern.permute.xlu0 0
        %7975 = vperm.xlu0 %7974, %v7613
        %v7976 = vpop.permute.xlu0 %7975
        %7979 = vset.pattern.permute.xlu0 0
        %7980 = vperm.xlu0 %7979, %v7614
        %v7981 = vpop.permute.xlu0 %7980
        %7984 = vset.pattern.permute.xlu0 0
        %7985 = vperm.xlu0 %7984, %v7615
        %v7986 = vpop.permute.xlu0 %7985
        %7989 = vset.pattern.permute.xlu0 0
        %7990 = vperm.xlu0 %7989, %v7616
        %v7991 = vpop.permute.xlu0 %7990
        %7994 = vset.pattern.permute.xlu0 0
        %7995 = vperm.xlu0 %7994, %v7617
        %v7996 = vpop.permute.xlu0 %7995
        %7999 = vset.pattern.permute.xlu0 0
        %8000 = vperm.xlu0 %7999, %v7618
        %v8001 = vpop.permute.xlu0 %8000
        %8004 = vset.pattern.permute.xlu0 0
        %8005 = vperm.xlu0 %8004, %v7619
        %v8006 = vpop.permute.xlu0 %8005
        %8009 = vset.pattern.permute.xlu0 0
        %8010 = vperm.xlu0 %8009, %v7620
        %v8011 = vpop.permute.xlu0 %8010
        %8014 = vset.pattern.permute.xlu0 0
        %8015 = vperm.xlu0 %8014, %v7621
        %v8016 = vpop.permute.xlu0 %8015
        %8019 = vset.pattern.permute.xlu0 0
        %8020 = vperm.xlu0 %8019, %v7622
        %v8021 = vpop.permute.xlu0 %8020
        %8024 = vset.pattern.permute.xlu0 0
        %8025 = vperm.xlu0 %8024, %v7623
        %v8026 = vpop.permute.xlu0 %8025
        %8029 = vset.pattern.permute.xlu0 0
        %8030 = vperm.xlu0 %8029, %v7624
        %v8031 = vpop.permute.xlu0 %8030
        %8034 = vset.pattern.permute.xlu0 0
        %8035 = vperm.xlu0 %8034, %v7625
        %v8036 = vpop.permute.xlu0 %8035
        %8039 = vset.pattern.permute.xlu0 0
        %8040 = vperm.xlu0 %8039, %v7626
        %v8041 = vpop.permute.xlu0 %8040
        %8044 = vset.pattern.permute.xlu0 0
        %8045 = vperm.xlu0 %8044, %v7627
        %v8046 = vpop.permute.xlu0 %8045
        %8049 = vset.pattern.permute.xlu0 0
        %8050 = vperm.xlu0 %8049, %v7628
        %v8051 = vpop.permute.xlu0 %8050
        %8054 = vset.pattern.permute.xlu0 0
        %8055 = vperm.xlu0 %8054, %v7629
        %v8056 = vpop.permute.xlu0 %8055
        %8059 = vset.pattern.permute.xlu0 0
        %8060 = vperm.xlu0 %8059, %v7630
        %v8061 = vpop.permute.xlu0 %8060
        %8064 = vset.pattern.permute.xlu0 0
        %8065 = vperm.xlu0 %8064, %v7631
        %v8066 = vpop.permute.xlu0 %8065
        %8069 = vset.pattern.permute.xlu0 0
        %8070 = vperm.xlu0 %8069, %v7632
        %v8071 = vpop.permute.xlu0 %8070
        %8074 = vset.pattern.permute.xlu0 0
        %8075 = vperm.xlu0 %8074, %v7633
        %v8076 = vpop.permute.xlu0 %8075
        %8079 = vset.pattern.permute.xlu0 0
        %8080 = vperm.xlu0 %8079, %v7634
        %v8081 = vpop.permute.xlu0 %8080
        %8084 = vset.pattern.permute.xlu0 0
        %8085 = vperm.xlu0 %8084, %v7635
        %v8086 = vpop.permute.xlu0 %8085
        %8089 = vset.pattern.permute.xlu0 0
        %8090 = vperm.xlu0 %8089, %v7636
        %v8091 = vpop.permute.xlu0 %8090
        %8094 = vset.pattern.permute.xlu0 0
        %8095 = vperm.xlu0 %8094, %v7637
        %v8096 = vpop.permute.xlu0 %8095
        %8099 = vset.pattern.permute.xlu0 0
        %8100 = vperm.xlu0 %8099, %v7638
        %v8101 = vpop.permute.xlu0 %8100
        %8104 = vset.pattern.permute.xlu0 0
        %8105 = vperm.xlu0 %8104, %v7639
        %v8106 = vpop.permute.xlu0 %8105
        %8109 = vset.pattern.permute.xlu0 0
        %8110 = vperm.xlu0 %8109, %v7640
        %v8111 = vpop.permute.xlu0 %8110
        %8114 = vset.pattern.permute.xlu0 0
        %8115 = vperm.xlu0 %8114, %v7641
        %v8116 = vpop.permute.xlu0 %8115
        %8119 = vset.pattern.permute.xlu0 0
        %8120 = vperm.xlu0 %8119, %v7642
        %v8121 = vpop.permute.xlu0 %8120
        %8124 = vset.pattern.permute.xlu0 0
        %8125 = vperm.xlu0 %8124, %v7643
        %v8126 = vpop.permute.xlu0 %8125
        %8129 = vset.pattern.permute.xlu0 0
        %8130 = vperm.xlu0 %8129, %v7644
        %v8131 = vpop.permute.xlu0 %8130
        %8134 = vset.pattern.permute.xlu0 0
        %8135 = vperm.xlu0 %8134, %v7645
        %v8136 = vpop.permute.xlu0 %8135
        %8139 = vset.pattern.permute.xlu0 0
        %8140 = vperm.xlu0 %8139, %v7646
        %v8141 = vpop.permute.xlu0 %8140
        %8144 = vset.pattern.permute.xlu0 0
        %8145 = vperm.xlu0 %8144, %v7647
        %v8146 = vpop.permute.xlu0 %8145
        %8149 = vset.pattern.permute.xlu0 0
        %8150 = vperm.xlu0 %8149, %v7648
        %v8151 = vpop.permute.xlu0 %8150
        %8154 = vset.pattern.permute.xlu0 0
        %8155 = vperm.xlu0 %8154, %v7649
        %v8156 = vpop.permute.xlu0 %8155
        %8159 = vset.pattern.permute.xlu0 0
        %8160 = vperm.xlu0 %8159, %v7650
        %v8161 = vpop.permute.xlu0 %8160
        %8164 = vset.pattern.permute.xlu0 0
        %8165 = vperm.xlu0 %8164, %v7651
        %v8166 = vpop.permute.xlu0 %8165
        %8169 = vset.pattern.permute.xlu0 0
        %8170 = vperm.xlu0 %8169, %v7652
        %v8171 = vpop.permute.xlu0 %8170
        %8174 = vset.pattern.permute.xlu0 0
        %8175 = vperm.xlu0 %8174, %v7653
        %v8176 = vpop.permute.xlu0 %8175
        %8179 = vset.pattern.permute.xlu0 0
        %8180 = vperm.xlu0 %8179, %v7654
        %v8181 = vpop.permute.xlu0 %8180
        %8184 = vset.pattern.permute.xlu0 0
        %8185 = vperm.xlu0 %8184, %v7655
        %v8186 = vpop.permute.xlu0 %8185
        %8189 = vset.pattern.permute.xlu0 0
        %8190 = vperm.xlu0 %8189, %v7656
        %v8191 = vpop.permute.xlu0 %8190
        %8194 = vset.pattern.permute.xlu0 0
        %8195 = vperm.xlu0 %8194, %v7657
        %v8196 = vpop.permute.xlu0 %8195
        %8199 = vset.pattern.permute.xlu0 0
        %8200 = vperm.xlu0 %8199, %v7658
        %v8201 = vpop.permute.xlu0 %8200
        %8204 = vset.pattern.permute.xlu0 0
        %8205 = vperm.xlu0 %8204, %v7659
        %v8206 = vpop.permute.xlu0 %8205
        %8209 = vset.pattern.permute.xlu0 0
        %8210 = vperm.xlu0 %8209, %v7660
        %v8211 = vpop.permute.xlu0 %8210
        %8214 = vset.pattern.permute.xlu0 0
        %8215 = vperm.xlu0 %8214, %v7661
        %v8216 = vpop.permute.xlu0 %8215
        %8219 = vset.pattern.permute.xlu0 0
        %8220 = vperm.xlu0 %8219, %v7662
        %v8221 = vpop.permute.xlu0 %8220
        %8224 = vset.pattern.permute.xlu0 0
        %8225 = vperm.xlu0 %8224, %v7663
        %v8226 = vpop.permute.xlu0 %8225
        %8229 = vset.pattern.permute.xlu0 0
        %8230 = vperm.xlu0 %8229, %v7664
        %v8231 = vpop.permute.xlu0 %8230
        %8234 = vset.pattern.permute.xlu0 0
        %8235 = vperm.xlu0 %8234, %v7665
        %v8236 = vpop.permute.xlu0 %8235
        %8239 = vset.pattern.permute.xlu0 0
        %8240 = vperm.xlu0 %8239, %v7666
        %v8241 = vpop.permute.xlu0 %8240
        %8244 = vset.pattern.permute.xlu0 0
        %8245 = vperm.xlu0 %8244, %v7667
        %v8246 = vpop.permute.xlu0 %8245
        %8249 = vset.pattern.permute.xlu0 0
        %8250 = vperm.xlu0 %8249, %v7668
        %v8251 = vpop.permute.xlu0 %8250
        %8254 = vset.pattern.permute.xlu0 0
        %8255 = vperm.xlu0 %8254, %v7669
        %v8256 = vpop.permute.xlu0 %8255
        %8259 = vset.pattern.permute.xlu0 0
        %8260 = vperm.xlu0 %8259, %v7670
        %v8261 = vpop.permute.xlu0 %8260
        %8264 = vset.pattern.permute.xlu0 0
        %8265 = vperm.xlu0 %8264, %v7671
        %v8266 = vpop.permute.xlu0 %8265
        %8269 = vset.pattern.permute.xlu0 0
        %8270 = vperm.xlu0 %8269, %v7672
        %v8271 = vpop.permute.xlu0 %8270
        %8274 = vset.pattern.permute.xlu0 0
        %8275 = vperm.xlu0 %8274, %v7673
        %v8276 = vpop.permute.xlu0 %8275
        %8279 = vset.pattern.permute.xlu0 0
        %8280 = vperm.xlu0 %8279, %v7674
        %v8281 = vpop.permute.xlu0 %8280
        %8284 = vset.pattern.permute.xlu0 0
        %8285 = vperm.xlu0 %8284, %v7675
        %v8286 = vpop.permute.xlu0 %8285
        %8289 = vset.pattern.permute.xlu0 0
        %8290 = vperm.xlu0 %8289, %v7676
        %v8291 = vpop.permute.xlu0 %8290
        %8294 = vset.pattern.permute.xlu0 0
        %8295 = vperm.xlu0 %8294, %v7677
        %v8296 = vpop.permute.xlu0 %8295
        %8299 = vset.pattern.permute.xlu0 0
        %8300 = vperm.xlu0 %8299, %v7678
        %v8301 = vpop.permute.xlu0 %8300
        %8304 = vset.pattern.permute.xlu0 0
        %8305 = vperm.xlu0 %8304, %v7679
        %v8306 = vpop.permute.xlu0 %8305
        %8309 = vset.pattern.permute.xlu0 0
        %8310 = vperm.xlu0 %8309, %v7680
        %v8311 = vpop.permute.xlu0 %8310
        %8314 = vset.pattern.permute.xlu0 0
        %8315 = vperm.xlu0 %8314, %v7681
        %v8316 = vpop.permute.xlu0 %8315
        %8319 = vset.pattern.permute.xlu0 0
        %8320 = vperm.xlu0 %8319, %v7682
        %v8321 = vpop.permute.xlu0 %8320
        %v8323 = vmul.f32 %v7686, %v1146
        %v8324 = vmul.f32 %v7691, %v1149
        %v8325 = vmul.f32 %v7696, %v1154
        %v8326 = vmul.f32 %v7701, %v1157
        %v8327 = vmul.f32 %v7706, %v1162
        %v8328 = vmul.f32 %v7711, %v1165
        %v8329 = vmul.f32 %v7716, %v1170
        %v8330 = vmul.f32 %v7721, %v1173
        %v8331 = vmul.f32 %v7726, %v1178
        %v8332 = vmul.f32 %v7731, %v1181
        %v8333 = vmul.f32 %v7736, %v1186
        %v8334 = vmul.f32 %v7741, %v1189
        %v8335 = vmul.f32 %v7746, %v1194
        %v8336 = vmul.f32 %v7751, %v1197
        %v8337 = vmul.f32 %v7756, %v1202
        %v8338 = vmul.f32 %v7761, %v1205
        %v8339 = vmul.f32 %v7766, %v1210
        %v8340 = vmul.f32 %v7771, %v1213
        %v8341 = vmul.f32 %v7776, %v1218
        %v8342 = vmul.f32 %v7781, %v1221
        %v8343 = vmul.f32 %v7786, %v1226
        %v8344 = vmul.f32 %v7791, %v1229
        %v8345 = vmul.f32 %v7796, %v1234
        %v8346 = vmul.f32 %v7801, %v1237
        %v8347 = vmul.f32 %v7806, %v1242
        %v8348 = vmul.f32 %v7811, %v1245
        %v8349 = vmul.f32 %v7816, %v1250
        %v8350 = vmul.f32 %v7821, %v1253
        %v8351 = vmul.f32 %v7826, %v1258
        %v8352 = vmul.f32 %v7831, %v1261
        %v8353 = vmul.f32 %v7836, %v1266
        %v8354 = vmul.f32 %v7841, %v1269
        %v8355 = vmul.f32 %v7846, %v1274
        %v8356 = vmul.f32 %v7851, %v1277
        %v8357 = vmul.f32 %v7856, %v1282
        %v8358 = vmul.f32 %v7861, %v1285
        %v8359 = vmul.f32 %v7866, %v1290
        %v8360 = vmul.f32 %v7871, %v1293
        %v8361 = vmul.f32 %v7876, %v1298
        %v8362 = vmul.f32 %v7881, %v1301
        %v8363 = vmul.f32 %v7886, %v1306
        %v8364 = vmul.f32 %v7891, %v1309
        %v8365 = vmul.f32 %v7896, %v1314
        %v8366 = vmul.f32 %v7901, %v1317
        %v8367 = vmul.f32 %v7906, %v1322
        %v8368 = vmul.f32 %v7911, %v1325
        %v8369 = vmul.f32 %v7916, %v1330
        %v8370 = vmul.f32 %v7921, %v1333
        %v8371 = vmul.f32 %v7926, %v1338
        %v8372 = vmul.f32 %v7931, %v1341
        %v8373 = vmul.f32 %v7936, %v1346
        %v8374 = vmul.f32 %v7941, %v1349
        %v8375 = vmul.f32 %v7946, %v1354
        %v8376 = vmul.f32 %v7951, %v1357
        %v8377 = vmul.f32 %v7956, %v1362
        %v8378 = vmul.f32 %v7961, %v1365
        %v8379 = vmul.f32 %v7966, %v1370
        %v8380 = vmul.f32 %v7971, %v1373
        %v8381 = vmul.f32 %v7976, %v1378
        %v8382 = vmul.f32 %v7981, %v1381
        %v8383 = vmul.f32 %v7986, %v1386
        %v8384 = vmul.f32 %v7991, %v1389
        %v8385 = vmul.f32 %v7996, %v1394
        %v8386 = vmul.f32 %v8001, %v1397
        %v8387 = vmul.f32 %v8006, %v1402
        %v8388 = vmul.f32 %v8011, %v1405
        %v8389 = vmul.f32 %v8016, %v1410
        %v8390 = vmul.f32 %v8021, %v1413
        %v8391 = vmul.f32 %v8026, %v1418
        %v8392 = vmul.f32 %v8031, %v1421
        %v8393 = vmul.f32 %v8036, %v1426
        %v8394 = vmul.f32 %v8041, %v1429
        %v8395 = vmul.f32 %v8046, %v1434
        %v8396 = vmul.f32 %v8051, %v1437
        %v8397 = vmul.f32 %v8056, %v1442
        %v8398 = vmul.f32 %v8061, %v1445
        %v8399 = vmul.f32 %v8066, %v1450
        %v8400 = vmul.f32 %v8071, %v1453
        %v8401 = vmul.f32 %v8076, %v1458
        %v8402 = vmul.f32 %v8081, %v1461
        %v8403 = vmul.f32 %v8086, %v1466
        %v8404 = vmul.f32 %v8091, %v1469
        %v8405 = vmul.f32 %v8096, %v1474
        %v8406 = vmul.f32 %v8101, %v1477
        %v8407 = vmul.f32 %v8106, %v1482
        %v8408 = vmul.f32 %v8111, %v1485
        %v8409 = vmul.f32 %v8116, %v1490
        %v8410 = vmul.f32 %v8121, %v1493
        %v8411 = vmul.f32 %v8126, %v1498
        %v8412 = vmul.f32 %v8131, %v1501
        %v8413 = vmul.f32 %v8136, %v1506
        %v8414 = vmul.f32 %v8141, %v1509
        %v8415 = vmul.f32 %v8146, %v1514
        %v8416 = vmul.f32 %v8151, %v1517
        %v8417 = vmul.f32 %v8156, %v1522
        %v8418 = vmul.f32 %v8161, %v1525
        %v8419 = vmul.f32 %v8166, %v1530
        %v8420 = vmul.f32 %v8171, %v1533
        %v8421 = vmul.f32 %v8176, %v1538
        %v8422 = vmul.f32 %v8181, %v1541
        %v8423 = vmul.f32 %v8186, %v1546
        %v8424 = vmul.f32 %v8191, %v1549
        %v8425 = vmul.f32 %v8196, %v1554
        %v8426 = vmul.f32 %v8201, %v1557
        %v8427 = vmul.f32 %v8206, %v1562
        %v8428 = vmul.f32 %v8211, %v1565
        %v8429 = vmul.f32 %v8216, %v1570
        %v8430 = vmul.f32 %v8221, %v1573
        %v8431 = vmul.f32 %v8226, %v1578
        %v8432 = vmul.f32 %v8231, %v1581
        %v8433 = vmul.f32 %v8236, %v1586
        %v8434 = vmul.f32 %v8241, %v1589
        %v8435 = vmul.f32 %v8246, %v1594
        %v8436 = vmul.f32 %v8251, %v1597
        %v8437 = vmul.f32 %v8256, %v1602
        %v8438 = vmul.f32 %v8261, %v1605
        %v8439 = vmul.f32 %v8266, %v1610
        %v8440 = vmul.f32 %v8271, %v1613
        %v8441 = vmul.f32 %v8276, %v1618
        %v8442 = vmul.f32 %v8281, %v1621
        %v8443 = vmul.f32 %v8286, %v1626
        %v8444 = vmul.f32 %v8291, %v1629
        %v8445 = vmul.f32 %v8296, %v1634
        %v8446 = vmul.f32 %v8301, %v1637
        %v8447 = vmul.f32 %v8306, %v1642
        %v8448 = vmul.f32 %v8311, %v1645
        %v8449 = vmul.f32 %v8316, %v1650
        %v8450 = vmul.f32 %v8321, %v1653
        %v8451 = vrot.slane %v8323, 4
        %v8452 = vadd.f32 %v8323, %v8451
        %v8453 = vrot.slane %v8452, 2
        %v8454 = vadd.f32 %v8452, %v8453
        %v8455 = vrot.slane %v8454, 1
        %v8456 = vadd.f32 %v8454, %v8455
        %v8457 = vrot.slane %v8324, 4
        %v8458 = vadd.f32 %v8324, %v8457
        %v8459 = vrot.slane %v8458, 2
        %v8460 = vadd.f32 %v8458, %v8459
        %v8461 = vrot.slane %v8460, 1
        %v8462 = vadd.f32 %v8460, %v8461
        %v8463 = vrot.slane %v8325, 4
        %v8464 = vadd.f32 %v8325, %v8463
        %v8465 = vrot.slane %v8464, 2
        %v8466 = vadd.f32 %v8464, %v8465
        %v8467 = vrot.slane %v8466, 1
        %v8468 = vadd.f32 %v8466, %v8467
        %v8469 = vrot.slane %v8326, 4
        %v8470 = vadd.f32 %v8326, %v8469
        %v8471 = vrot.slane %v8470, 2
        %v8472 = vadd.f32 %v8470, %v8471
        %v8473 = vrot.slane %v8472, 1
        %v8474 = vadd.f32 %v8472, %v8473
        %v8475 = vrot.slane %v8327, 4
        %v8476 = vadd.f32 %v8327, %v8475
        %v8477 = vrot.slane %v8476, 2
        %v8478 = vadd.f32 %v8476, %v8477
        %v8479 = vrot.slane %v8478, 1
        %v8480 = vadd.f32 %v8478, %v8479
        %v8481 = vrot.slane %v8328, 4
        %v8482 = vadd.f32 %v8328, %v8481
        %v8483 = vrot.slane %v8482, 2
        %v8484 = vadd.f32 %v8482, %v8483
        %v8485 = vrot.slane %v8484, 1
        %v8486 = vadd.f32 %v8484, %v8485
        %v8487 = vrot.slane %v8329, 4
        %v8488 = vadd.f32 %v8329, %v8487
        %v8489 = vrot.slane %v8488, 2
        %v8490 = vadd.f32 %v8488, %v8489
        %v8491 = vrot.slane %v8490, 1
        %v8492 = vadd.f32 %v8490, %v8491
        %v8493 = vrot.slane %v8330, 4
        %v8494 = vadd.f32 %v8330, %v8493
        %v8495 = vrot.slane %v8494, 2
        %v8496 = vadd.f32 %v8494, %v8495
        %v8497 = vrot.slane %v8496, 1
        %v8498 = vadd.f32 %v8496, %v8497
        %v8499 = vrot.slane %v8331, 4
        %v8500 = vadd.f32 %v8331, %v8499
        %v8501 = vrot.slane %v8500, 2
        %v8502 = vadd.f32 %v8500, %v8501
        %v8503 = vrot.slane %v8502, 1
        %v8504 = vadd.f32 %v8502, %v8503
        %v8505 = vrot.slane %v8332, 4
        %v8506 = vadd.f32 %v8332, %v8505
        %v8507 = vrot.slane %v8506, 2
        %v8508 = vadd.f32 %v8506, %v8507
        %v8509 = vrot.slane %v8508, 1
        %v8510 = vadd.f32 %v8508, %v8509
        %v8511 = vrot.slane %v8333, 4
        %v8512 = vadd.f32 %v8333, %v8511
        %v8513 = vrot.slane %v8512, 2
        %v8514 = vadd.f32 %v8512, %v8513
        %v8515 = vrot.slane %v8514, 1
        %v8516 = vadd.f32 %v8514, %v8515
        %v8517 = vrot.slane %v8334, 4
        %v8518 = vadd.f32 %v8334, %v8517
        %v8519 = vrot.slane %v8518, 2
        %v8520 = vadd.f32 %v8518, %v8519
        %v8521 = vrot.slane %v8520, 1
        %v8522 = vadd.f32 %v8520, %v8521
        %v8523 = vrot.slane %v8335, 4
        %v8524 = vadd.f32 %v8335, %v8523
        %v8525 = vrot.slane %v8524, 2
        %v8526 = vadd.f32 %v8524, %v8525
        %v8527 = vrot.slane %v8526, 1
        %v8528 = vadd.f32 %v8526, %v8527
        %v8529 = vrot.slane %v8336, 4
        %v8530 = vadd.f32 %v8336, %v8529
        %v8531 = vrot.slane %v8530, 2
        %v8532 = vadd.f32 %v8530, %v8531
        %v8533 = vrot.slane %v8532, 1
        %v8534 = vadd.f32 %v8532, %v8533
        %v8535 = vrot.slane %v8337, 4
        %v8536 = vadd.f32 %v8337, %v8535
        %v8537 = vrot.slane %v8536, 2
        %v8538 = vadd.f32 %v8536, %v8537
        %v8539 = vrot.slane %v8538, 1
        %v8540 = vadd.f32 %v8538, %v8539
        %v8541 = vrot.slane %v8338, 4
        %v8542 = vadd.f32 %v8338, %v8541
        %v8543 = vrot.slane %v8542, 2
        %v8544 = vadd.f32 %v8542, %v8543
        %v8545 = vrot.slane %v8544, 1
        %v8546 = vadd.f32 %v8544, %v8545
        %v8547 = vrot.slane %v8339, 4
        %v8548 = vadd.f32 %v8339, %v8547
        %v8549 = vrot.slane %v8548, 2
        %v8550 = vadd.f32 %v8548, %v8549
        %v8551 = vrot.slane %v8550, 1
        %v8552 = vadd.f32 %v8550, %v8551
        %v8553 = vrot.slane %v8340, 4
        %v8554 = vadd.f32 %v8340, %v8553
        %v8555 = vrot.slane %v8554, 2
        %v8556 = vadd.f32 %v8554, %v8555
        %v8557 = vrot.slane %v8556, 1
        %v8558 = vadd.f32 %v8556, %v8557
        %v8559 = vrot.slane %v8341, 4
        %v8560 = vadd.f32 %v8341, %v8559
        %v8561 = vrot.slane %v8560, 2
        %v8562 = vadd.f32 %v8560, %v8561
        %v8563 = vrot.slane %v8562, 1
        %v8564 = vadd.f32 %v8562, %v8563
        %v8565 = vrot.slane %v8342, 4
        %v8566 = vadd.f32 %v8342, %v8565
        %v8567 = vrot.slane %v8566, 2
        %v8568 = vadd.f32 %v8566, %v8567
        %v8569 = vrot.slane %v8568, 1
        %v8570 = vadd.f32 %v8568, %v8569
        %v8571 = vrot.slane %v8343, 4
        %v8572 = vadd.f32 %v8343, %v8571
        %v8573 = vrot.slane %v8572, 2
        %v8574 = vadd.f32 %v8572, %v8573
        %v8575 = vrot.slane %v8574, 1
        %v8576 = vadd.f32 %v8574, %v8575
        %v8577 = vrot.slane %v8344, 4
        %v8578 = vadd.f32 %v8344, %v8577
        %v8579 = vrot.slane %v8578, 2
        %v8580 = vadd.f32 %v8578, %v8579
        %v8581 = vrot.slane %v8580, 1
        %v8582 = vadd.f32 %v8580, %v8581
        %v8583 = vrot.slane %v8345, 4
        %v8584 = vadd.f32 %v8345, %v8583
        %v8585 = vrot.slane %v8584, 2
        %v8586 = vadd.f32 %v8584, %v8585
        %v8587 = vrot.slane %v8586, 1
        %v8588 = vadd.f32 %v8586, %v8587
        %v8589 = vrot.slane %v8346, 4
        %v8590 = vadd.f32 %v8346, %v8589
        %v8591 = vrot.slane %v8590, 2
        %v8592 = vadd.f32 %v8590, %v8591
        %v8593 = vrot.slane %v8592, 1
        %v8594 = vadd.f32 %v8592, %v8593
        %v8595 = vrot.slane %v8347, 4
        %v8596 = vadd.f32 %v8347, %v8595
        %v8597 = vrot.slane %v8596, 2
        %v8598 = vadd.f32 %v8596, %v8597
        %v8599 = vrot.slane %v8598, 1
        %v8600 = vadd.f32 %v8598, %v8599
        %v8601 = vrot.slane %v8348, 4
        %v8602 = vadd.f32 %v8348, %v8601
        %v8603 = vrot.slane %v8602, 2
        %v8604 = vadd.f32 %v8602, %v8603
        %v8605 = vrot.slane %v8604, 1
        %v8606 = vadd.f32 %v8604, %v8605
        %v8607 = vrot.slane %v8349, 4
        %v8608 = vadd.f32 %v8349, %v8607
        %v8609 = vrot.slane %v8608, 2
        %v8610 = vadd.f32 %v8608, %v8609
        %v8611 = vrot.slane %v8610, 1
        %v8612 = vadd.f32 %v8610, %v8611
        %v8613 = vrot.slane %v8350, 4
        %v8614 = vadd.f32 %v8350, %v8613
        %v8615 = vrot.slane %v8614, 2
        %v8616 = vadd.f32 %v8614, %v8615
        %v8617 = vrot.slane %v8616, 1
        %v8618 = vadd.f32 %v8616, %v8617
        %v8619 = vrot.slane %v8351, 4
        %v8620 = vadd.f32 %v8351, %v8619
        %v8621 = vrot.slane %v8620, 2
        %v8622 = vadd.f32 %v8620, %v8621
        %v8623 = vrot.slane %v8622, 1
        %v8624 = vadd.f32 %v8622, %v8623
        %v8625 = vrot.slane %v8352, 4
        %v8626 = vadd.f32 %v8352, %v8625
        %v8627 = vrot.slane %v8626, 2
        %v8628 = vadd.f32 %v8626, %v8627
        %v8629 = vrot.slane %v8628, 1
        %v8630 = vadd.f32 %v8628, %v8629
        %v8631 = vrot.slane %v8353, 4
        %v8632 = vadd.f32 %v8353, %v8631
        %v8633 = vrot.slane %v8632, 2
        %v8634 = vadd.f32 %v8632, %v8633
        %v8635 = vrot.slane %v8634, 1
        %v8636 = vadd.f32 %v8634, %v8635
        %v8637 = vrot.slane %v8354, 4
        %v8638 = vadd.f32 %v8354, %v8637
        %v8639 = vrot.slane %v8638, 2
        %v8640 = vadd.f32 %v8638, %v8639
        %v8641 = vrot.slane %v8640, 1
        %v8642 = vadd.f32 %v8640, %v8641
        %v8643 = vrot.slane %v8355, 4
        %v8644 = vadd.f32 %v8355, %v8643
        %v8645 = vrot.slane %v8644, 2
        %v8646 = vadd.f32 %v8644, %v8645
        %v8647 = vrot.slane %v8646, 1
        %v8648 = vadd.f32 %v8646, %v8647
        %v8649 = vrot.slane %v8356, 4
        %v8650 = vadd.f32 %v8356, %v8649
        %v8651 = vrot.slane %v8650, 2
        %v8652 = vadd.f32 %v8650, %v8651
        %v8653 = vrot.slane %v8652, 1
        %v8654 = vadd.f32 %v8652, %v8653
        %v8655 = vrot.slane %v8357, 4
        %v8656 = vadd.f32 %v8357, %v8655
        %v8657 = vrot.slane %v8656, 2
        %v8658 = vadd.f32 %v8656, %v8657
        %v8659 = vrot.slane %v8658, 1
        %v8660 = vadd.f32 %v8658, %v8659
        %v8661 = vrot.slane %v8358, 4
        %v8662 = vadd.f32 %v8358, %v8661
        %v8663 = vrot.slane %v8662, 2
        %v8664 = vadd.f32 %v8662, %v8663
        %v8665 = vrot.slane %v8664, 1
        %v8666 = vadd.f32 %v8664, %v8665
        %v8667 = vrot.slane %v8359, 4
        %v8668 = vadd.f32 %v8359, %v8667
        %v8669 = vrot.slane %v8668, 2
        %v8670 = vadd.f32 %v8668, %v8669
        %v8671 = vrot.slane %v8670, 1
        %v8672 = vadd.f32 %v8670, %v8671
        %v8673 = vrot.slane %v8360, 4
        %v8674 = vadd.f32 %v8360, %v8673
        %v8675 = vrot.slane %v8674, 2
        %v8676 = vadd.f32 %v8674, %v8675
        %v8677 = vrot.slane %v8676, 1
        %v8678 = vadd.f32 %v8676, %v8677
        %v8679 = vrot.slane %v8361, 4
        %v8680 = vadd.f32 %v8361, %v8679
        %v8681 = vrot.slane %v8680, 2
        %v8682 = vadd.f32 %v8680, %v8681
        %v8683 = vrot.slane %v8682, 1
        %v8684 = vadd.f32 %v8682, %v8683
        %v8685 = vrot.slane %v8362, 4
        %v8686 = vadd.f32 %v8362, %v8685
        %v8687 = vrot.slane %v8686, 2
        %v8688 = vadd.f32 %v8686, %v8687
        %v8689 = vrot.slane %v8688, 1
        %v8690 = vadd.f32 %v8688, %v8689
        %v8691 = vrot.slane %v8363, 4
        %v8692 = vadd.f32 %v8363, %v8691
        %v8693 = vrot.slane %v8692, 2
        %v8694 = vadd.f32 %v8692, %v8693
        %v8695 = vrot.slane %v8694, 1
        %v8696 = vadd.f32 %v8694, %v8695
        %v8697 = vrot.slane %v8364, 4
        %v8698 = vadd.f32 %v8364, %v8697
        %v8699 = vrot.slane %v8698, 2
        %v8700 = vadd.f32 %v8698, %v8699
        %v8701 = vrot.slane %v8700, 1
        %v8702 = vadd.f32 %v8700, %v8701
        %v8703 = vrot.slane %v8365, 4
        %v8704 = vadd.f32 %v8365, %v8703
        %v8705 = vrot.slane %v8704, 2
        %v8706 = vadd.f32 %v8704, %v8705
        %v8707 = vrot.slane %v8706, 1
        %v8708 = vadd.f32 %v8706, %v8707
        %v8709 = vrot.slane %v8366, 4
        %v8710 = vadd.f32 %v8366, %v8709
        %v8711 = vrot.slane %v8710, 2
        %v8712 = vadd.f32 %v8710, %v8711
        %v8713 = vrot.slane %v8712, 1
        %v8714 = vadd.f32 %v8712, %v8713
        %v8715 = vrot.slane %v8367, 4
        %v8716 = vadd.f32 %v8367, %v8715
        %v8717 = vrot.slane %v8716, 2
        %v8718 = vadd.f32 %v8716, %v8717
        %v8719 = vrot.slane %v8718, 1
        %v8720 = vadd.f32 %v8718, %v8719
        %v8721 = vrot.slane %v8368, 4
        %v8722 = vadd.f32 %v8368, %v8721
        %v8723 = vrot.slane %v8722, 2
        %v8724 = vadd.f32 %v8722, %v8723
        %v8725 = vrot.slane %v8724, 1
        %v8726 = vadd.f32 %v8724, %v8725
        %v8727 = vrot.slane %v8369, 4
        %v8728 = vadd.f32 %v8369, %v8727
        %v8729 = vrot.slane %v8728, 2
        %v8730 = vadd.f32 %v8728, %v8729
        %v8731 = vrot.slane %v8730, 1
        %v8732 = vadd.f32 %v8730, %v8731
        %v8733 = vrot.slane %v8370, 4
        %v8734 = vadd.f32 %v8370, %v8733
        %v8735 = vrot.slane %v8734, 2
        %v8736 = vadd.f32 %v8734, %v8735
        %v8737 = vrot.slane %v8736, 1
        %v8738 = vadd.f32 %v8736, %v8737
        %v8739 = vrot.slane %v8371, 4
        %v8740 = vadd.f32 %v8371, %v8739
        %v8741 = vrot.slane %v8740, 2
        %v8742 = vadd.f32 %v8740, %v8741
        %v8743 = vrot.slane %v8742, 1
        %v8744 = vadd.f32 %v8742, %v8743
        %v8745 = vrot.slane %v8372, 4
        %v8746 = vadd.f32 %v8372, %v8745
        %v8747 = vrot.slane %v8746, 2
        %v8748 = vadd.f32 %v8746, %v8747
        %v8749 = vrot.slane %v8748, 1
        %v8750 = vadd.f32 %v8748, %v8749
        %v8751 = vrot.slane %v8373, 4
        %v8752 = vadd.f32 %v8373, %v8751
        %v8753 = vrot.slane %v8752, 2
        %v8754 = vadd.f32 %v8752, %v8753
        %v8755 = vrot.slane %v8754, 1
        %v8756 = vadd.f32 %v8754, %v8755
        %v8757 = vrot.slane %v8374, 4
        %v8758 = vadd.f32 %v8374, %v8757
        %v8759 = vrot.slane %v8758, 2
        %v8760 = vadd.f32 %v8758, %v8759
        %v8761 = vrot.slane %v8760, 1
        %v8762 = vadd.f32 %v8760, %v8761
        %v8763 = vrot.slane %v8375, 4
        %v8764 = vadd.f32 %v8375, %v8763
        %v8765 = vrot.slane %v8764, 2
        %v8766 = vadd.f32 %v8764, %v8765
        %v8767 = vrot.slane %v8766, 1
        %v8768 = vadd.f32 %v8766, %v8767
        %v8769 = vrot.slane %v8376, 4
        %v8770 = vadd.f32 %v8376, %v8769
        %v8771 = vrot.slane %v8770, 2
        %v8772 = vadd.f32 %v8770, %v8771
        %v8773 = vrot.slane %v8772, 1
        %v8774 = vadd.f32 %v8772, %v8773
        %v8775 = vrot.slane %v8377, 4
        %v8776 = vadd.f32 %v8377, %v8775
        %v8777 = vrot.slane %v8776, 2
        %v8778 = vadd.f32 %v8776, %v8777
        %v8779 = vrot.slane %v8778, 1
        %v8780 = vadd.f32 %v8778, %v8779
        %v8781 = vrot.slane %v8378, 4
        %v8782 = vadd.f32 %v8378, %v8781
        %v8783 = vrot.slane %v8782, 2
        %v8784 = vadd.f32 %v8782, %v8783
        %v8785 = vrot.slane %v8784, 1
        %v8786 = vadd.f32 %v8784, %v8785
        %v8787 = vrot.slane %v8379, 4
        %v8788 = vadd.f32 %v8379, %v8787
        %v8789 = vrot.slane %v8788, 2
        %v8790 = vadd.f32 %v8788, %v8789
        %v8791 = vrot.slane %v8790, 1
        %v8792 = vadd.f32 %v8790, %v8791
        %v8793 = vrot.slane %v8380, 4
        %v8794 = vadd.f32 %v8380, %v8793
        %v8795 = vrot.slane %v8794, 2
        %v8796 = vadd.f32 %v8794, %v8795
        %v8797 = vrot.slane %v8796, 1
        %v8798 = vadd.f32 %v8796, %v8797
        %v8799 = vrot.slane %v8381, 4
        %v8800 = vadd.f32 %v8381, %v8799
        %v8801 = vrot.slane %v8800, 2
        %v8802 = vadd.f32 %v8800, %v8801
        %v8803 = vrot.slane %v8802, 1
        %v8804 = vadd.f32 %v8802, %v8803
        %v8805 = vrot.slane %v8382, 4
        %v8806 = vadd.f32 %v8382, %v8805
        %v8807 = vrot.slane %v8806, 2
        %v8808 = vadd.f32 %v8806, %v8807
        %v8809 = vrot.slane %v8808, 1
        %v8810 = vadd.f32 %v8808, %v8809
        %v8811 = vrot.slane %v8383, 4
        %v8812 = vadd.f32 %v8383, %v8811
        %v8813 = vrot.slane %v8812, 2
        %v8814 = vadd.f32 %v8812, %v8813
        %v8815 = vrot.slane %v8814, 1
        %v8816 = vadd.f32 %v8814, %v8815
        %v8817 = vrot.slane %v8384, 4
        %v8818 = vadd.f32 %v8384, %v8817
        %v8819 = vrot.slane %v8818, 2
        %v8820 = vadd.f32 %v8818, %v8819
        %v8821 = vrot.slane %v8820, 1
        %v8822 = vadd.f32 %v8820, %v8821
        %v8823 = vrot.slane %v8385, 4
        %v8824 = vadd.f32 %v8385, %v8823
        %v8825 = vrot.slane %v8824, 2
        %v8826 = vadd.f32 %v8824, %v8825
        %v8827 = vrot.slane %v8826, 1
        %v8828 = vadd.f32 %v8826, %v8827
        %v8829 = vrot.slane %v8386, 4
        %v8830 = vadd.f32 %v8386, %v8829
        %v8831 = vrot.slane %v8830, 2
        %v8832 = vadd.f32 %v8830, %v8831
        %v8833 = vrot.slane %v8832, 1
        %v8834 = vadd.f32 %v8832, %v8833
        %v8835 = vrot.slane %v8387, 4
        %v8836 = vadd.f32 %v8387, %v8835
        %v8837 = vrot.slane %v8836, 2
        %v8838 = vadd.f32 %v8836, %v8837
        %v8839 = vrot.slane %v8838, 1
        %v8840 = vadd.f32 %v8838, %v8839
        %v8841 = vrot.slane %v8388, 4
        %v8842 = vadd.f32 %v8388, %v8841
        %v8843 = vrot.slane %v8842, 2
        %v8844 = vadd.f32 %v8842, %v8843
        %v8845 = vrot.slane %v8844, 1
        %v8846 = vadd.f32 %v8844, %v8845
        %v8847 = vrot.slane %v8389, 4
        %v8848 = vadd.f32 %v8389, %v8847
        %v8849 = vrot.slane %v8848, 2
        %v8850 = vadd.f32 %v8848, %v8849
        %v8851 = vrot.slane %v8850, 1
        %v8852 = vadd.f32 %v8850, %v8851
        %v8853 = vrot.slane %v8390, 4
        %v8854 = vadd.f32 %v8390, %v8853
        %v8855 = vrot.slane %v8854, 2
        %v8856 = vadd.f32 %v8854, %v8855
        %v8857 = vrot.slane %v8856, 1
        %v8858 = vadd.f32 %v8856, %v8857
        %v8859 = vrot.slane %v8391, 4
        %v8860 = vadd.f32 %v8391, %v8859
        %v8861 = vrot.slane %v8860, 2
        %v8862 = vadd.f32 %v8860, %v8861
        %v8863 = vrot.slane %v8862, 1
        %v8864 = vadd.f32 %v8862, %v8863
        %v8865 = vrot.slane %v8392, 4
        %v8866 = vadd.f32 %v8392, %v8865
        %v8867 = vrot.slane %v8866, 2
        %v8868 = vadd.f32 %v8866, %v8867
        %v8869 = vrot.slane %v8868, 1
        %v8870 = vadd.f32 %v8868, %v8869
        %v8871 = vrot.slane %v8393, 4
        %v8872 = vadd.f32 %v8393, %v8871
        %v8873 = vrot.slane %v8872, 2
        %v8874 = vadd.f32 %v8872, %v8873
        %v8875 = vrot.slane %v8874, 1
        %v8876 = vadd.f32 %v8874, %v8875
        %v8877 = vrot.slane %v8394, 4
        %v8878 = vadd.f32 %v8394, %v8877
        %v8879 = vrot.slane %v8878, 2
        %v8880 = vadd.f32 %v8878, %v8879
        %v8881 = vrot.slane %v8880, 1
        %v8882 = vadd.f32 %v8880, %v8881
        %v8883 = vrot.slane %v8395, 4
        %v8884 = vadd.f32 %v8395, %v8883
        %v8885 = vrot.slane %v8884, 2
        %v8886 = vadd.f32 %v8884, %v8885
        %v8887 = vrot.slane %v8886, 1
        %v8888 = vadd.f32 %v8886, %v8887
        %v8889 = vrot.slane %v8396, 4
        %v8890 = vadd.f32 %v8396, %v8889
        %v8891 = vrot.slane %v8890, 2
        %v8892 = vadd.f32 %v8890, %v8891
        %v8893 = vrot.slane %v8892, 1
        %v8894 = vadd.f32 %v8892, %v8893
        %v8895 = vrot.slane %v8397, 4
        %v8896 = vadd.f32 %v8397, %v8895
        %v8897 = vrot.slane %v8896, 2
        %v8898 = vadd.f32 %v8896, %v8897
        %v8899 = vrot.slane %v8898, 1
        %v8900 = vadd.f32 %v8898, %v8899
        %v8901 = vrot.slane %v8398, 4
        %v8902 = vadd.f32 %v8398, %v8901
        %v8903 = vrot.slane %v8902, 2
        %v8904 = vadd.f32 %v8902, %v8903
        %v8905 = vrot.slane %v8904, 1
        %v8906 = vadd.f32 %v8904, %v8905
        %v8907 = vrot.slane %v8399, 4
        %v8908 = vadd.f32 %v8399, %v8907
        %v8909 = vrot.slane %v8908, 2
        %v8910 = vadd.f32 %v8908, %v8909
        %v8911 = vrot.slane %v8910, 1
        %v8912 = vadd.f32 %v8910, %v8911
        %v8913 = vrot.slane %v8400, 4
        %v8914 = vadd.f32 %v8400, %v8913
        %v8915 = vrot.slane %v8914, 2
        %v8916 = vadd.f32 %v8914, %v8915
        %v8917 = vrot.slane %v8916, 1
        %v8918 = vadd.f32 %v8916, %v8917
        %v8919 = vrot.slane %v8401, 4
        %v8920 = vadd.f32 %v8401, %v8919
        %v8921 = vrot.slane %v8920, 2
        %v8922 = vadd.f32 %v8920, %v8921
        %v8923 = vrot.slane %v8922, 1
        %v8924 = vadd.f32 %v8922, %v8923
        %v8925 = vrot.slane %v8402, 4
        %v8926 = vadd.f32 %v8402, %v8925
        %v8927 = vrot.slane %v8926, 2
        %v8928 = vadd.f32 %v8926, %v8927
        %v8929 = vrot.slane %v8928, 1
        %v8930 = vadd.f32 %v8928, %v8929
        %v8931 = vrot.slane %v8403, 4
        %v8932 = vadd.f32 %v8403, %v8931
        %v8933 = vrot.slane %v8932, 2
        %v8934 = vadd.f32 %v8932, %v8933
        %v8935 = vrot.slane %v8934, 1
        %v8936 = vadd.f32 %v8934, %v8935
        %v8937 = vrot.slane %v8404, 4
        %v8938 = vadd.f32 %v8404, %v8937
        %v8939 = vrot.slane %v8938, 2
        %v8940 = vadd.f32 %v8938, %v8939
        %v8941 = vrot.slane %v8940, 1
        %v8942 = vadd.f32 %v8940, %v8941
        %v8943 = vrot.slane %v8405, 4
        %v8944 = vadd.f32 %v8405, %v8943
        %v8945 = vrot.slane %v8944, 2
        %v8946 = vadd.f32 %v8944, %v8945
        %v8947 = vrot.slane %v8946, 1
        %v8948 = vadd.f32 %v8946, %v8947
        %v8949 = vrot.slane %v8406, 4
        %v8950 = vadd.f32 %v8406, %v8949
        %v8951 = vrot.slane %v8950, 2
        %v8952 = vadd.f32 %v8950, %v8951
        %v8953 = vrot.slane %v8952, 1
        %v8954 = vadd.f32 %v8952, %v8953
        %v8955 = vrot.slane %v8407, 4
        %v8956 = vadd.f32 %v8407, %v8955
        %v8957 = vrot.slane %v8956, 2
        %v8958 = vadd.f32 %v8956, %v8957
        %v8959 = vrot.slane %v8958, 1
        %v8960 = vadd.f32 %v8958, %v8959
        %v8961 = vrot.slane %v8408, 4
        %v8962 = vadd.f32 %v8408, %v8961
        %v8963 = vrot.slane %v8962, 2
        %v8964 = vadd.f32 %v8962, %v8963
        %v8965 = vrot.slane %v8964, 1
        %v8966 = vadd.f32 %v8964, %v8965
        %v8967 = vrot.slane %v8409, 4
        %v8968 = vadd.f32 %v8409, %v8967
        %v8969 = vrot.slane %v8968, 2
        %v8970 = vadd.f32 %v8968, %v8969
        %v8971 = vrot.slane %v8970, 1
        %v8972 = vadd.f32 %v8970, %v8971
        %v8973 = vrot.slane %v8410, 4
        %v8974 = vadd.f32 %v8410, %v8973
        %v8975 = vrot.slane %v8974, 2
        %v8976 = vadd.f32 %v8974, %v8975
        %v8977 = vrot.slane %v8976, 1
        %v8978 = vadd.f32 %v8976, %v8977
        %v8979 = vrot.slane %v8411, 4
        %v8980 = vadd.f32 %v8411, %v8979
        %v8981 = vrot.slane %v8980, 2
        %v8982 = vadd.f32 %v8980, %v8981
        %v8983 = vrot.slane %v8982, 1
        %v8984 = vadd.f32 %v8982, %v8983
        %v8985 = vrot.slane %v8412, 4
        %v8986 = vadd.f32 %v8412, %v8985
        %v8987 = vrot.slane %v8986, 2
        %v8988 = vadd.f32 %v8986, %v8987
        %v8989 = vrot.slane %v8988, 1
        %v8990 = vadd.f32 %v8988, %v8989
        %v8991 = vrot.slane %v8413, 4
        %v8992 = vadd.f32 %v8413, %v8991
        %v8993 = vrot.slane %v8992, 2
        %v8994 = vadd.f32 %v8992, %v8993
        %v8995 = vrot.slane %v8994, 1
        %v8996 = vadd.f32 %v8994, %v8995
        %v8997 = vrot.slane %v8414, 4
        %v8998 = vadd.f32 %v8414, %v8997
        %v8999 = vrot.slane %v8998, 2
        %v9000 = vadd.f32 %v8998, %v8999
        %v9001 = vrot.slane %v9000, 1
        %v9002 = vadd.f32 %v9000, %v9001
        %v9003 = vrot.slane %v8415, 4
        %v9004 = vadd.f32 %v8415, %v9003
        %v9005 = vrot.slane %v9004, 2
        %v9006 = vadd.f32 %v9004, %v9005
        %v9007 = vrot.slane %v9006, 1
        %v9008 = vadd.f32 %v9006, %v9007
        %v9009 = vrot.slane %v8416, 4
        %v9010 = vadd.f32 %v8416, %v9009
        %v9011 = vrot.slane %v9010, 2
        %v9012 = vadd.f32 %v9010, %v9011
        %v9013 = vrot.slane %v9012, 1
        %v9014 = vadd.f32 %v9012, %v9013
        %v9015 = vrot.slane %v8417, 4
        %v9016 = vadd.f32 %v8417, %v9015
        %v9017 = vrot.slane %v9016, 2
        %v9018 = vadd.f32 %v9016, %v9017
        %v9019 = vrot.slane %v9018, 1
        %v9020 = vadd.f32 %v9018, %v9019
        %v9021 = vrot.slane %v8418, 4
        %v9022 = vadd.f32 %v8418, %v9021
        %v9023 = vrot.slane %v9022, 2
        %v9024 = vadd.f32 %v9022, %v9023
        %v9025 = vrot.slane %v9024, 1
        %v9026 = vadd.f32 %v9024, %v9025
        %v9027 = vrot.slane %v8419, 4
        %v9028 = vadd.f32 %v8419, %v9027
        %v9029 = vrot.slane %v9028, 2
        %v9030 = vadd.f32 %v9028, %v9029
        %v9031 = vrot.slane %v9030, 1
        %v9032 = vadd.f32 %v9030, %v9031
        %v9033 = vrot.slane %v8420, 4
        %v9034 = vadd.f32 %v8420, %v9033
        %v9035 = vrot.slane %v9034, 2
        %v9036 = vadd.f32 %v9034, %v9035
        %v9037 = vrot.slane %v9036, 1
        %v9038 = vadd.f32 %v9036, %v9037
        %v9039 = vrot.slane %v8421, 4
        %v9040 = vadd.f32 %v8421, %v9039
        %v9041 = vrot.slane %v9040, 2
        %v9042 = vadd.f32 %v9040, %v9041
        %v9043 = vrot.slane %v9042, 1
        %v9044 = vadd.f32 %v9042, %v9043
        %v9045 = vrot.slane %v8422, 4
        %v9046 = vadd.f32 %v8422, %v9045
        %v9047 = vrot.slane %v9046, 2
        %v9048 = vadd.f32 %v9046, %v9047
        %v9049 = vrot.slane %v9048, 1
        %v9050 = vadd.f32 %v9048, %v9049
        %v9051 = vrot.slane %v8423, 4
        %v9052 = vadd.f32 %v8423, %v9051
        %v9053 = vrot.slane %v9052, 2
        %v9054 = vadd.f32 %v9052, %v9053
        %v9055 = vrot.slane %v9054, 1
        %v9056 = vadd.f32 %v9054, %v9055
        %v9057 = vrot.slane %v8424, 4
        %v9058 = vadd.f32 %v8424, %v9057
        %v9059 = vrot.slane %v9058, 2
        %v9060 = vadd.f32 %v9058, %v9059
        %v9061 = vrot.slane %v9060, 1
        %v9062 = vadd.f32 %v9060, %v9061
        %v9063 = vrot.slane %v8425, 4
        %v9064 = vadd.f32 %v8425, %v9063
        %v9065 = vrot.slane %v9064, 2
        %v9066 = vadd.f32 %v9064, %v9065
        %v9067 = vrot.slane %v9066, 1
        %v9068 = vadd.f32 %v9066, %v9067
        %v9069 = vrot.slane %v8426, 4
        %v9070 = vadd.f32 %v8426, %v9069
        %v9071 = vrot.slane %v9070, 2
        %v9072 = vadd.f32 %v9070, %v9071
        %v9073 = vrot.slane %v9072, 1
        %v9074 = vadd.f32 %v9072, %v9073
        %v9075 = vrot.slane %v8427, 4
        %v9076 = vadd.f32 %v8427, %v9075
        %v9077 = vrot.slane %v9076, 2
        %v9078 = vadd.f32 %v9076, %v9077
        %v9079 = vrot.slane %v9078, 1
        %v9080 = vadd.f32 %v9078, %v9079
        %v9081 = vrot.slane %v8428, 4
        %v9082 = vadd.f32 %v8428, %v9081
        %v9083 = vrot.slane %v9082, 2
        %v9084 = vadd.f32 %v9082, %v9083
        %v9085 = vrot.slane %v9084, 1
        %v9086 = vadd.f32 %v9084, %v9085
        %v9087 = vrot.slane %v8429, 4
        %v9088 = vadd.f32 %v8429, %v9087
        %v9089 = vrot.slane %v9088, 2
        %v9090 = vadd.f32 %v9088, %v9089
        %v9091 = vrot.slane %v9090, 1
        %v9092 = vadd.f32 %v9090, %v9091
        %v9093 = vrot.slane %v8430, 4
        %v9094 = vadd.f32 %v8430, %v9093
        %v9095 = vrot.slane %v9094, 2
        %v9096 = vadd.f32 %v9094, %v9095
        %v9097 = vrot.slane %v9096, 1
        %v9098 = vadd.f32 %v9096, %v9097
        %v9099 = vrot.slane %v8431, 4
        %v9100 = vadd.f32 %v8431, %v9099
        %v9101 = vrot.slane %v9100, 2
        %v9102 = vadd.f32 %v9100, %v9101
        %v9103 = vrot.slane %v9102, 1
        %v9104 = vadd.f32 %v9102, %v9103
        %v9105 = vrot.slane %v8432, 4
        %v9106 = vadd.f32 %v8432, %v9105
        %v9107 = vrot.slane %v9106, 2
        %v9108 = vadd.f32 %v9106, %v9107
        %v9109 = vrot.slane %v9108, 1
        %v9110 = vadd.f32 %v9108, %v9109
        %v9111 = vrot.slane %v8433, 4
        %v9112 = vadd.f32 %v8433, %v9111
        %v9113 = vrot.slane %v9112, 2
        %v9114 = vadd.f32 %v9112, %v9113
        %v9115 = vrot.slane %v9114, 1
        %v9116 = vadd.f32 %v9114, %v9115
        %v9117 = vrot.slane %v8434, 4
        %v9118 = vadd.f32 %v8434, %v9117
        %v9119 = vrot.slane %v9118, 2
        %v9120 = vadd.f32 %v9118, %v9119
        %v9121 = vrot.slane %v9120, 1
        %v9122 = vadd.f32 %v9120, %v9121
        %v9123 = vrot.slane %v8435, 4
        %v9124 = vadd.f32 %v8435, %v9123
        %v9125 = vrot.slane %v9124, 2
        %v9126 = vadd.f32 %v9124, %v9125
        %v9127 = vrot.slane %v9126, 1
        %v9128 = vadd.f32 %v9126, %v9127
        %v9129 = vrot.slane %v8436, 4
        %v9130 = vadd.f32 %v8436, %v9129
        %v9131 = vrot.slane %v9130, 2
        %v9132 = vadd.f32 %v9130, %v9131
        %v9133 = vrot.slane %v9132, 1
        %v9134 = vadd.f32 %v9132, %v9133
        %v9135 = vrot.slane %v8437, 4
        %v9136 = vadd.f32 %v8437, %v9135
        %v9137 = vrot.slane %v9136, 2
        %v9138 = vadd.f32 %v9136, %v9137
        %v9139 = vrot.slane %v9138, 1
        %v9140 = vadd.f32 %v9138, %v9139
        %v9141 = vrot.slane %v8438, 4
        %v9142 = vadd.f32 %v8438, %v9141
        %v9143 = vrot.slane %v9142, 2
        %v9144 = vadd.f32 %v9142, %v9143
        %v9145 = vrot.slane %v9144, 1
        %v9146 = vadd.f32 %v9144, %v9145
        %v9147 = vrot.slane %v8439, 4
        %v9148 = vadd.f32 %v8439, %v9147
        %v9149 = vrot.slane %v9148, 2
        %v9150 = vadd.f32 %v9148, %v9149
        %v9151 = vrot.slane %v9150, 1
        %v9152 = vadd.f32 %v9150, %v9151
        %v9153 = vrot.slane %v8440, 4
        %v9154 = vadd.f32 %v8440, %v9153
        %v9155 = vrot.slane %v9154, 2
        %v9156 = vadd.f32 %v9154, %v9155
        %v9157 = vrot.slane %v9156, 1
        %v9158 = vadd.f32 %v9156, %v9157
        %v9159 = vrot.slane %v8441, 4
        %v9160 = vadd.f32 %v8441, %v9159
        %v9161 = vrot.slane %v9160, 2
        %v9162 = vadd.f32 %v9160, %v9161
        %v9163 = vrot.slane %v9162, 1
        %v9164 = vadd.f32 %v9162, %v9163
        %v9165 = vrot.slane %v8442, 4
        %v9166 = vadd.f32 %v8442, %v9165
        %v9167 = vrot.slane %v9166, 2
        %v9168 = vadd.f32 %v9166, %v9167
        %v9169 = vrot.slane %v9168, 1
        %v9170 = vadd.f32 %v9168, %v9169
        %v9171 = vrot.slane %v8443, 4
        %v9172 = vadd.f32 %v8443, %v9171
        %v9173 = vrot.slane %v9172, 2
        %v9174 = vadd.f32 %v9172, %v9173
        %v9175 = vrot.slane %v9174, 1
        %v9176 = vadd.f32 %v9174, %v9175
        %v9177 = vrot.slane %v8444, 4
        %v9178 = vadd.f32 %v8444, %v9177
        %v9179 = vrot.slane %v9178, 2
        %v9180 = vadd.f32 %v9178, %v9179
        %v9181 = vrot.slane %v9180, 1
        %v9182 = vadd.f32 %v9180, %v9181
        %v9183 = vrot.slane %v8445, 4
        %v9184 = vadd.f32 %v8445, %v9183
        %v9185 = vrot.slane %v9184, 2
        %v9186 = vadd.f32 %v9184, %v9185
        %v9187 = vrot.slane %v9186, 1
        %v9188 = vadd.f32 %v9186, %v9187
        %v9189 = vrot.slane %v8446, 4
        %v9190 = vadd.f32 %v8446, %v9189
        %v9191 = vrot.slane %v9190, 2
        %v9192 = vadd.f32 %v9190, %v9191
        %v9193 = vrot.slane %v9192, 1
        %v9194 = vadd.f32 %v9192, %v9193
        %v9195 = vrot.slane %v8447, 4
        %v9196 = vadd.f32 %v8447, %v9195
        %v9197 = vrot.slane %v9196, 2
        %v9198 = vadd.f32 %v9196, %v9197
        %v9199 = vrot.slane %v9198, 1
        %v9200 = vadd.f32 %v9198, %v9199
        %v9201 = vrot.slane %v8448, 4
        %v9202 = vadd.f32 %v8448, %v9201
        %v9203 = vrot.slane %v9202, 2
        %v9204 = vadd.f32 %v9202, %v9203
        %v9205 = vrot.slane %v9204, 1
        %v9206 = vadd.f32 %v9204, %v9205
        %v9207 = vrot.slane %v8449, 4
        %v9208 = vadd.f32 %v8449, %v9207
        %v9209 = vrot.slane %v9208, 2
        %v9210 = vadd.f32 %v9208, %v9209
        %v9211 = vrot.slane %v9210, 1
        %v9212 = vadd.f32 %v9210, %v9211
        %v9213 = vrot.slane %v8450, 4
        %v9214 = vadd.f32 %v8450, %v9213
        %v9215 = vrot.slane %v9214, 2
        %v9216 = vadd.f32 %v9214, %v9215
        %v9217 = vrot.slane %v9216, 1
        %v9218 = vadd.f32 %v9216, %v9217
        %v9219 = vpack.c.bf16 %v8456, %v8456
        %v9220 = vpack.c.bf16 %v8462, %v8462
        %v9221 = vpack.c.bf16 %v8468, %v8468
        %v9222 = vpack.c.bf16 %v8474, %v8474
        %v9223 = vpack.c.bf16 %v8480, %v8480
        %v9224 = vpack.c.bf16 %v8486, %v8486
        %v9225 = vpack.c.bf16 %v8492, %v8492
        %v9226 = vpack.c.bf16 %v8498, %v8498
        %v9227 = vpack.c.bf16 %v8504, %v8504
        %v9228 = vpack.c.bf16 %v8510, %v8510
        %v9229 = vpack.c.bf16 %v8516, %v8516
        %v9230 = vpack.c.bf16 %v8522, %v8522
        %v9231 = vpack.c.bf16 %v8528, %v8528
        %v9232 = vpack.c.bf16 %v8534, %v8534
        %v9233 = vpack.c.bf16 %v8540, %v8540
        %v9234 = vpack.c.bf16 %v8546, %v8546
        %v9235 = vpack.c.bf16 %v8552, %v8552
        %v9236 = vpack.c.bf16 %v8558, %v8558
        %v9237 = vpack.c.bf16 %v8564, %v8564
        %v9238 = vpack.c.bf16 %v8570, %v8570
        %v9239 = vpack.c.bf16 %v8576, %v8576
        %v9240 = vpack.c.bf16 %v8582, %v8582
        %v9241 = vpack.c.bf16 %v8588, %v8588
        %v9242 = vpack.c.bf16 %v8594, %v8594
        %v9243 = vpack.c.bf16 %v8600, %v8600
        %v9244 = vpack.c.bf16 %v8606, %v8606
        %v9245 = vpack.c.bf16 %v8612, %v8612
        %v9246 = vpack.c.bf16 %v8618, %v8618
        %v9247 = vpack.c.bf16 %v8624, %v8624
        %v9248 = vpack.c.bf16 %v8630, %v8630
        %v9249 = vpack.c.bf16 %v8636, %v8636
        %v9250 = vpack.c.bf16 %v8642, %v8642
        %v9251 = vpack.c.bf16 %v8648, %v8648
        %v9252 = vpack.c.bf16 %v8654, %v8654
        %v9253 = vpack.c.bf16 %v8660, %v8660
        %v9254 = vpack.c.bf16 %v8666, %v8666
        %v9255 = vpack.c.bf16 %v8672, %v8672
        %v9256 = vpack.c.bf16 %v8678, %v8678
        %v9257 = vpack.c.bf16 %v8684, %v8684
        %v9258 = vpack.c.bf16 %v8690, %v8690
        %v9259 = vpack.c.bf16 %v8696, %v8696
        %v9260 = vpack.c.bf16 %v8702, %v8702
        %v9261 = vpack.c.bf16 %v8708, %v8708
        %v9262 = vpack.c.bf16 %v8714, %v8714
        %v9263 = vpack.c.bf16 %v8720, %v8720
        %v9264 = vpack.c.bf16 %v8726, %v8726
        %v9265 = vpack.c.bf16 %v8732, %v8732
        %v9266 = vpack.c.bf16 %v8738, %v8738
        %v9267 = vpack.c.bf16 %v8744, %v8744
        %v9268 = vpack.c.bf16 %v8750, %v8750
        %v9269 = vpack.c.bf16 %v8756, %v8756
        %v9270 = vpack.c.bf16 %v8762, %v8762
        %v9271 = vpack.c.bf16 %v8768, %v8768
        %v9272 = vpack.c.bf16 %v8774, %v8774
        %v9273 = vpack.c.bf16 %v8780, %v8780
        %v9274 = vpack.c.bf16 %v8786, %v8786
        %v9275 = vpack.c.bf16 %v8792, %v8792
        %v9276 = vpack.c.bf16 %v8798, %v8798
        %v9277 = vpack.c.bf16 %v8804, %v8804
        %v9278 = vpack.c.bf16 %v8810, %v8810
        %v9279 = vpack.c.bf16 %v8816, %v8816
        %v9280 = vpack.c.bf16 %v8822, %v8822
        %v9281 = vpack.c.bf16 %v8828, %v8828
        %v9282 = vpack.c.bf16 %v8834, %v8834
        %v9283 = vpack.c.bf16 %v8840, %v8840
        %v9284 = vpack.c.bf16 %v8846, %v8846
        %v9285 = vpack.c.bf16 %v8852, %v8852
        %v9286 = vpack.c.bf16 %v8858, %v8858
        %v9287 = vpack.c.bf16 %v8864, %v8864
        %v9288 = vpack.c.bf16 %v8870, %v8870
        %v9289 = vpack.c.bf16 %v8876, %v8876
        %v9290 = vpack.c.bf16 %v8882, %v8882
        %v9291 = vpack.c.bf16 %v8888, %v8888
        %v9292 = vpack.c.bf16 %v8894, %v8894
        %v9293 = vpack.c.bf16 %v8900, %v8900
        %v9294 = vpack.c.bf16 %v8906, %v8906
        %v9295 = vpack.c.bf16 %v8912, %v8912
        %v9296 = vpack.c.bf16 %v8918, %v8918
        %v9297 = vpack.c.bf16 %v8924, %v8924
        %v9298 = vpack.c.bf16 %v8930, %v8930
        %v9299 = vpack.c.bf16 %v8936, %v8936
        %v9300 = vpack.c.bf16 %v8942, %v8942
        %v9301 = vpack.c.bf16 %v8948, %v8948
        %v9302 = vpack.c.bf16 %v8954, %v8954
        %v9303 = vpack.c.bf16 %v8960, %v8960
        %v9304 = vpack.c.bf16 %v8966, %v8966
        %v9305 = vpack.c.bf16 %v8972, %v8972
        %v9306 = vpack.c.bf16 %v8978, %v8978
        %v9307 = vpack.c.bf16 %v8984, %v8984
        %v9308 = vpack.c.bf16 %v8990, %v8990
        %v9309 = vpack.c.bf16 %v8996, %v8996
        %v9310 = vpack.c.bf16 %v9002, %v9002
        %v9311 = vpack.c.bf16 %v9008, %v9008
        %v9312 = vpack.c.bf16 %v9014, %v9014
        %v9313 = vpack.c.bf16 %v9020, %v9020
        %v9314 = vpack.c.bf16 %v9026, %v9026
        %v9315 = vpack.c.bf16 %v9032, %v9032
        %v9316 = vpack.c.bf16 %v9038, %v9038
        %v9317 = vpack.c.bf16 %v9044, %v9044
        %v9318 = vpack.c.bf16 %v9050, %v9050
        %v9319 = vpack.c.bf16 %v9056, %v9056
        %v9320 = vpack.c.bf16 %v9062, %v9062
        %v9321 = vpack.c.bf16 %v9068, %v9068
        %v9322 = vpack.c.bf16 %v9074, %v9074
        %v9323 = vpack.c.bf16 %v9080, %v9080
        %v9324 = vpack.c.bf16 %v9086, %v9086
        %v9325 = vpack.c.bf16 %v9092, %v9092
        %v9326 = vpack.c.bf16 %v9098, %v9098
        %v9327 = vpack.c.bf16 %v9104, %v9104
        %v9328 = vpack.c.bf16 %v9110, %v9110
        %v9329 = vpack.c.bf16 %v9116, %v9116
        %v9330 = vpack.c.bf16 %v9122, %v9122
        %v9331 = vpack.c.bf16 %v9128, %v9128
        %v9332 = vpack.c.bf16 %v9134, %v9134
        %v9333 = vpack.c.bf16 %v9140, %v9140
        %v9334 = vpack.c.bf16 %v9146, %v9146
        %v9335 = vpack.c.bf16 %v9152, %v9152
        %v9336 = vpack.c.bf16 %v9158, %v9158
        %v9337 = vpack.c.bf16 %v9164, %v9164
        %v9338 = vpack.c.bf16 %v9170, %v9170
        %v9339 = vpack.c.bf16 %v9176, %v9176
        %v9340 = vpack.c.bf16 %v9182, %v9182
        %v9341 = vpack.c.bf16 %v9188, %v9188
        %v9342 = vpack.c.bf16 %v9194, %v9194
        %v9343 = vpack.c.bf16 %v9200, %v9200
        %v9344 = vpack.c.bf16 %v9206, %v9206
        %v9345 = vpack.c.bf16 %v9212, %v9212
        %v9346 = vpack.c.bf16 %v9218, %v9218
        %v9347 = vld [vmem:[%s4] sm:$0xf]
        %v9348 = vld [vmem:[%s4 + $0x4] sm:$0xf]
        %v9349 = vld [vmem:[%s4 + $0x8] sm:$0xf]
        %v9350 = vld [vmem:[%s4 + $0xc] sm:$0xf]
        %v9351 = vld [vmem:[%s4 + $0x10] sm:$0xf]
        %v9352 = vld [vmem:[%s4 + $0x14] sm:$0xf]
        %v9353 = vld [vmem:[%s4 + $0x18] sm:$0xf]
        %v9354 = vld [vmem:[%s4 + $0x1c] sm:$0xf]
        %v9355 = vld [vmem:[%s4 + $0x20] sm:$0xf]
        %v9356 = vld [vmem:[%s4 + $0x24] sm:$0xf]
        %v9357 = vld [vmem:[%s4 + $0x28] sm:$0xf]
        %v9358 = vld [vmem:[%s4 + $0x2c] sm:$0xf]
        %v9359 = vld [vmem:[%s4 + $0x30] sm:$0xf]
        %v9360 = vld [vmem:[%s4 + $0x34] sm:$0xf]
        %v9361 = vld [vmem:[%s4 + $0x38] sm:$0xf]
        %v9362 = vld [vmem:[%s4 + $0x3c] sm:$0xf]
        %v9363 = vld [vmem:[%s5] sm:$0x1]
        %v9365 = vlaneseq
        %v9366 = vshrl.u32 %v9365, 7
        %v9367 = vsub.s32 0, %v9366
        %v9368 = vrot.slane %v9363, %v9367
        %v9498 = vunpack.c.l.b16 %v9219
        %v9499 = vunpack.c.l.b16 %v9220
        %v9500 = vunpack.c.l.b16 %v9221
        %v9501 = vunpack.c.l.b16 %v9222
        %v9502 = vunpack.c.l.b16 %v9223
        %v9503 = vunpack.c.l.b16 %v9224
        %v9504 = vunpack.c.l.b16 %v9225
        %v9505 = vunpack.c.l.b16 %v9226
        %v9506 = vunpack.c.l.b16 %v9227
        %v9507 = vunpack.c.l.b16 %v9228
        %v9508 = vunpack.c.l.b16 %v9229
        %v9509 = vunpack.c.l.b16 %v9230
        %v9510 = vunpack.c.l.b16 %v9231
        %v9511 = vunpack.c.l.b16 %v9232
        %v9512 = vunpack.c.l.b16 %v9233
        %v9513 = vunpack.c.l.b16 %v9234
        %v9514 = vunpack.c.l.b16 %v9235
        %v9515 = vunpack.c.l.b16 %v9236
        %v9516 = vunpack.c.l.b16 %v9237
        %v9517 = vunpack.c.l.b16 %v9238
        %v9518 = vunpack.c.l.b16 %v9239
        %v9519 = vunpack.c.l.b16 %v9240
        %v9520 = vunpack.c.l.b16 %v9241
        %v9521 = vunpack.c.l.b16 %v9242
        %v9522 = vunpack.c.l.b16 %v9243
        %v9523 = vunpack.c.l.b16 %v9244
        %v9524 = vunpack.c.l.b16 %v9245
        %v9525 = vunpack.c.l.b16 %v9246
        %v9526 = vunpack.c.l.b16 %v9247
        %v9527 = vunpack.c.l.b16 %v9248
        %v9528 = vunpack.c.l.b16 %v9249
        %v9529 = vunpack.c.l.b16 %v9250
        %v9530 = vunpack.c.l.b16 %v9251
        %v9531 = vunpack.c.l.b16 %v9252
        %v9532 = vunpack.c.l.b16 %v9253
        %v9533 = vunpack.c.l.b16 %v9254
        %v9534 = vunpack.c.l.b16 %v9255
        %v9535 = vunpack.c.l.b16 %v9256
        %v9536 = vunpack.c.l.b16 %v9257
        %v9537 = vunpack.c.l.b16 %v9258
        %v9538 = vunpack.c.l.b16 %v9259
        %v9539 = vunpack.c.l.b16 %v9260
        %v9540 = vunpack.c.l.b16 %v9261
        %v9541 = vunpack.c.l.b16 %v9262
        %v9542 = vunpack.c.l.b16 %v9263
        %v9543 = vunpack.c.l.b16 %v9264
        %v9544 = vunpack.c.l.b16 %v9265
        %v9545 = vunpack.c.l.b16 %v9266
        %v9546 = vunpack.c.l.b16 %v9267
        %v9547 = vunpack.c.l.b16 %v9268
        %v9548 = vunpack.c.l.b16 %v9269
        %v9549 = vunpack.c.l.b16 %v9270
        %v9550 = vunpack.c.l.b16 %v9271
        %v9551 = vunpack.c.l.b16 %v9272
        %v9552 = vunpack.c.l.b16 %v9273
        %v9553 = vunpack.c.l.b16 %v9274
        %v9554 = vunpack.c.l.b16 %v9275
        %v9555 = vunpack.c.l.b16 %v9276
        %v9556 = vunpack.c.l.b16 %v9277
        %v9557 = vunpack.c.l.b16 %v9278
        %v9558 = vunpack.c.l.b16 %v9279
        %v9559 = vunpack.c.l.b16 %v9280
        %v9560 = vunpack.c.l.b16 %v9281
        %v9561 = vunpack.c.l.b16 %v9282
        %v9562 = vunpack.c.l.b16 %v9283
        %v9563 = vunpack.c.l.b16 %v9284
        %v9564 = vunpack.c.l.b16 %v9285
        %v9565 = vunpack.c.l.b16 %v9286
        %v9566 = vunpack.c.l.b16 %v9287
        %v9567 = vunpack.c.l.b16 %v9288
        %v9568 = vunpack.c.l.b16 %v9289
        %v9569 = vunpack.c.l.b16 %v9290
        %v9570 = vunpack.c.l.b16 %v9291
        %v9571 = vunpack.c.l.b16 %v9292
        %v9572 = vunpack.c.l.b16 %v9293
        %v9573 = vunpack.c.l.b16 %v9294
        %v9574 = vunpack.c.l.b16 %v9295
        %v9575 = vunpack.c.l.b16 %v9296
        %v9576 = vunpack.c.l.b16 %v9297
        %v9577 = vunpack.c.l.b16 %v9298
        %v9578 = vunpack.c.l.b16 %v9299
        %v9579 = vunpack.c.l.b16 %v9300
        %v9580 = vunpack.c.l.b16 %v9301
        %v9581 = vunpack.c.l.b16 %v9302
        %v9582 = vunpack.c.l.b16 %v9303
        %v9583 = vunpack.c.l.b16 %v9304
        %v9584 = vunpack.c.l.b16 %v9305
        %v9585 = vunpack.c.l.b16 %v9306
        %v9586 = vunpack.c.l.b16 %v9307
        %v9587 = vunpack.c.l.b16 %v9308
        %v9588 = vunpack.c.l.b16 %v9309
        %v9589 = vunpack.c.l.b16 %v9310
        %v9590 = vunpack.c.l.b16 %v9311
        %v9591 = vunpack.c.l.b16 %v9312
        %v9592 = vunpack.c.l.b16 %v9313
        %v9593 = vunpack.c.l.b16 %v9314
        %v9594 = vunpack.c.l.b16 %v9315
        %v9595 = vunpack.c.l.b16 %v9316
        %v9596 = vunpack.c.l.b16 %v9317
        %v9597 = vunpack.c.l.b16 %v9318
        %v9598 = vunpack.c.l.b16 %v9319
        %v9599 = vunpack.c.l.b16 %v9320
        %v9600 = vunpack.c.l.b16 %v9321
        %v9601 = vunpack.c.l.b16 %v9322
        %v9602 = vunpack.c.l.b16 %v9323
        %v9603 = vunpack.c.l.b16 %v9324
        %v9604 = vunpack.c.l.b16 %v9325
        %v9605 = vunpack.c.l.b16 %v9326
        %v9606 = vunpack.c.l.b16 %v9327
        %v9607 = vunpack.c.l.b16 %v9328
        %v9608 = vunpack.c.l.b16 %v9329
        %v9609 = vunpack.c.l.b16 %v9330
        %v9610 = vunpack.c.l.b16 %v9331
        %v9611 = vunpack.c.l.b16 %v9332
        %v9612 = vunpack.c.l.b16 %v9333
        %v9613 = vunpack.c.l.b16 %v9334
        %v9614 = vunpack.c.l.b16 %v9335
        %v9615 = vunpack.c.l.b16 %v9336
        %v9616 = vunpack.c.l.b16 %v9337
        %v9617 = vunpack.c.l.b16 %v9338
        %v9618 = vunpack.c.l.b16 %v9339
        %v9619 = vunpack.c.l.b16 %v9340
        %v9620 = vunpack.c.l.b16 %v9341
        %v9621 = vunpack.c.l.b16 %v9342
        %v9622 = vunpack.c.l.b16 %v9343
        %v9623 = vunpack.c.l.b16 %v9344
        %v9624 = vunpack.c.l.b16 %v9345
        %v9625 = vunpack.c.l.b16 %v9346
        %v9626 = vsel %vm4459, %v9499, %v9498
        %v9627 = vsel %vm4461, %v9500, %v9626
        %v9628 = vsel %vm4463, %v9501, %v9627
        %v9629 = vsel %vm4465, %v9502, %v9628
        %v9630 = vsel %vm4467, %v9503, %v9629
        %v9631 = vsel %vm4469, %v9504, %v9630
        %v9632 = vsel %vm4471, %v9505, %v9631
        %v9633 = vsel %vm4459, %v9507, %v9506
        %v9634 = vsel %vm4461, %v9508, %v9633
        %v9635 = vsel %vm4463, %v9509, %v9634
        %v9636 = vsel %vm4465, %v9510, %v9635
        %v9637 = vsel %vm4467, %v9511, %v9636
        %v9638 = vsel %vm4469, %v9512, %v9637
        %v9639 = vsel %vm4471, %v9513, %v9638
        %v9640 = vsel %vm4459, %v9515, %v9514
        %v9641 = vsel %vm4461, %v9516, %v9640
        %v9642 = vsel %vm4463, %v9517, %v9641
        %v9643 = vsel %vm4465, %v9518, %v9642
        %v9644 = vsel %vm4467, %v9519, %v9643
        %v9645 = vsel %vm4469, %v9520, %v9644
        %v9646 = vsel %vm4471, %v9521, %v9645
        %v9647 = vsel %vm4459, %v9523, %v9522
        %v9648 = vsel %vm4461, %v9524, %v9647
        %v9649 = vsel %vm4463, %v9525, %v9648
        %v9650 = vsel %vm4465, %v9526, %v9649
        %v9651 = vsel %vm4467, %v9527, %v9650
        %v9652 = vsel %vm4469, %v9528, %v9651
        %v9653 = vsel %vm4471, %v9529, %v9652
        %v9654 = vsel %vm4459, %v9531, %v9530
        %v9655 = vsel %vm4461, %v9532, %v9654
        %v9656 = vsel %vm4463, %v9533, %v9655
        %v9657 = vsel %vm4465, %v9534, %v9656
        %v9658 = vsel %vm4467, %v9535, %v9657
        %v9659 = vsel %vm4469, %v9536, %v9658
        %v9660 = vsel %vm4471, %v9537, %v9659
        %v9661 = vsel %vm4459, %v9539, %v9538
        %v9662 = vsel %vm4461, %v9540, %v9661
        %v9663 = vsel %vm4463, %v9541, %v9662
        %v9664 = vsel %vm4465, %v9542, %v9663
        %v9665 = vsel %vm4467, %v9543, %v9664
        %v9666 = vsel %vm4469, %v9544, %v9665
        %v9667 = vsel %vm4471, %v9545, %v9666
        %v9668 = vsel %vm4459, %v9547, %v9546
        %v9669 = vsel %vm4461, %v9548, %v9668
        %v9670 = vsel %vm4463, %v9549, %v9669
        %v9671 = vsel %vm4465, %v9550, %v9670
        %v9672 = vsel %vm4467, %v9551, %v9671
        %v9673 = vsel %vm4469, %v9552, %v9672
        %v9674 = vsel %vm4471, %v9553, %v9673
        %v9675 = vsel %vm4459, %v9555, %v9554
        %v9676 = vsel %vm4461, %v9556, %v9675
        %v9677 = vsel %vm4463, %v9557, %v9676
        %v9678 = vsel %vm4465, %v9558, %v9677
        %v9679 = vsel %vm4467, %v9559, %v9678
        %v9680 = vsel %vm4469, %v9560, %v9679
        %v9681 = vsel %vm4471, %v9561, %v9680
        %v9682 = vsel %vm4459, %v9563, %v9562
        %v9683 = vsel %vm4461, %v9564, %v9682
        %v9684 = vsel %vm4463, %v9565, %v9683
        %v9685 = vsel %vm4465, %v9566, %v9684
        %v9686 = vsel %vm4467, %v9567, %v9685
        %v9687 = vsel %vm4469, %v9568, %v9686
        %v9688 = vsel %vm4471, %v9569, %v9687
        %v9689 = vsel %vm4459, %v9571, %v9570
        %v9690 = vsel %vm4461, %v9572, %v9689
        %v9691 = vsel %vm4463, %v9573, %v9690
        %v9692 = vsel %vm4465, %v9574, %v9691
        %v9693 = vsel %vm4467, %v9575, %v9692
        %v9694 = vsel %vm4469, %v9576, %v9693
        %v9695 = vsel %vm4471, %v9577, %v9694
        %v9696 = vsel %vm4459, %v9579, %v9578
        %v9697 = vsel %vm4461, %v9580, %v9696
        %v9698 = vsel %vm4463, %v9581, %v9697
        %v9699 = vsel %vm4465, %v9582, %v9698
        %v9700 = vsel %vm4467, %v9583, %v9699
        %v9701 = vsel %vm4469, %v9584, %v9700
        %v9702 = vsel %vm4471, %v9585, %v9701
        %v9703 = vsel %vm4459, %v9587, %v9586
        %v9704 = vsel %vm4461, %v9588, %v9703
        %v9705 = vsel %vm4463, %v9589, %v9704
        %v9706 = vsel %vm4465, %v9590, %v9705
        %v9707 = vsel %vm4467, %v9591, %v9706
        %v9708 = vsel %vm4469, %v9592, %v9707
        %v9709 = vsel %vm4471, %v9593, %v9708
        %v9710 = vsel %vm4459, %v9595, %v9594
        %v9711 = vsel %vm4461, %v9596, %v9710
        %v9712 = vsel %vm4463, %v9597, %v9711
        %v9713 = vsel %vm4465, %v9598, %v9712
        %v9714 = vsel %vm4467, %v9599, %v9713
        %v9715 = vsel %vm4469, %v9600, %v9714
        %v9716 = vsel %vm4471, %v9601, %v9715
        %v9717 = vsel %vm4459, %v9603, %v9602
        %v9718 = vsel %vm4461, %v9604, %v9717
        %v9719 = vsel %vm4463, %v9605, %v9718
        %v9720 = vsel %vm4465, %v9606, %v9719
        %v9721 = vsel %vm4467, %v9607, %v9720
        %v9722 = vsel %vm4469, %v9608, %v9721
        %v9723 = vsel %vm4471, %v9609, %v9722
        %v9724 = vsel %vm4459, %v9611, %v9610
        %v9725 = vsel %vm4461, %v9612, %v9724
        %v9726 = vsel %vm4463, %v9613, %v9725
        %v9727 = vsel %vm4465, %v9614, %v9726
        %v9728 = vsel %vm4467, %v9615, %v9727
        %v9729 = vsel %vm4469, %v9616, %v9728
        %v9730 = vsel %vm4471, %v9617, %v9729
        %v9731 = vsel %vm4459, %v9619, %v9618
        %v9732 = vsel %vm4461, %v9620, %v9731
        %v9733 = vsel %vm4463, %v9621, %v9732
        %v9734 = vsel %vm4465, %v9622, %v9733
        %v9735 = vsel %vm4467, %v9623, %v9734
        %v9736 = vsel %vm4469, %v9624, %v9735
        %v9737 = vsel %vm4471, %v9625, %v9736
        %v9738 = vpack.c.b16 %v9639, %v9632
        %v9739 = vpack.c.b16 %v9653, %v9646
        %v9740 = vpack.c.b16 %v9667, %v9660
        %v9741 = vpack.c.b16 %v9681, %v9674
        %v9742 = vpack.c.b16 %v9695, %v9688
        %v9743 = vpack.c.b16 %v9709, %v9702
        %v9744 = vpack.c.b16 %v9723, %v9716
        %v9745 = vpack.c.b16 %v9737, %v9730
        %v9770 = vunpack.c.l.b16 %v9347
        %v9771 = vunpack.c.l.b16 %v9348
        %v9772 = vunpack.c.l.b16 %v9349
        %v9773 = vunpack.c.l.b16 %v9350
        %v9774 = vunpack.c.l.b16 %v9351
        %v9775 = vunpack.c.l.b16 %v9352
        %v9776 = vunpack.c.l.b16 %v9353
        %v9777 = vunpack.c.l.b16 %v9354
        %v9778 = vunpack.c.l.b16 %v9355
        %v9779 = vunpack.c.l.b16 %v9356
        %v9780 = vunpack.c.l.b16 %v9357
        %v9781 = vunpack.c.l.b16 %v9358
        %v9782 = vunpack.c.l.b16 %v9359
        %v9783 = vunpack.c.l.b16 %v9360
        %v9784 = vunpack.c.l.b16 %v9361
        %v9785 = vunpack.c.l.b16 %v9362
        %v9786 = vpack.c.b16 %v9771, %v9770
        %v9787 = vpack.c.b16 %v9773, %v9772
        %v9788 = vpack.c.b16 %v9775, %v9774
        %v9789 = vpack.c.b16 %v9777, %v9776
        %v9790 = vpack.c.b16 %v9779, %v9778
        %v9791 = vpack.c.b16 %v9781, %v9780
        %v9792 = vpack.c.b16 %v9783, %v9782
        %v9793 = vpack.c.b16 %v9785, %v9784
        %9802 = vmatprep.subr.bf16.mxu0 0
        %9803 = vmatpush1.bf16.msra.mxu0 %v9793
        %9804 = vmatprep.subr.bf16.mxu0 0
        %9805 = vmatpush1.bf16.msra.mxu0 %v9792
        %9806 = vmatprep.subr.bf16.mxu0 0
        %9807 = vmatpush1.bf16.msra.mxu0 %v9791
        %9808 = vmatprep.subr.bf16.mxu0 0
        %9809 = vmatpush1.bf16.msra.mxu0 %v9790
        %9810 = vmatprep.subr.bf16.mxu0 0
        %9811 = vmatpush1.bf16.msra.mxu0 %v9789
        %9812 = vmatprep.subr.bf16.mxu0 0
        %9813 = vmatpush1.bf16.msra.mxu0 %v9788
        %9814 = vmatprep.subr.bf16.mxu0 0
        %9815 = vmatpush1.bf16.msra.mxu0 %v9787
        %9816 = vmatprep.subr.bf16.mxu0 0
        %9817 = vmatpush1.bf16.msra.mxu0 %v9786
        %9818 = vmatprep.subr.bf16.mxu0 0
        %9819 = vmatpush2.bf16.msra.mxu0 0
        %9820 = vmatprep.subr.bf16.mxu0 0
        %9821 = vmatpush2.bf16.msra.mxu0 0
        %9822 = vmatprep.subr.bf16.mxu0 0
        %9823 = vmatpush2.bf16.msra.mxu0 0
        %9824 = vmatprep.subr.bf16.mxu0 0
        %9825 = vmatpush2.bf16.msra.mxu0 0
        %9826 = vmatprep.subr.bf16.mxu0 0
        %9827 = vmatpush2.bf16.msra.mxu0 0
        %9828 = vmatprep.subr.bf16.mxu0 0
        %9829 = vmatpush2.bf16.msra.mxu0 0
        %9830 = vmatprep.subr.bf16.mxu0 0
        %9831 = vmatpush2.bf16.msra.mxu0 0
        %9832 = vmatprep.subr.bf16.mxu0 0
        %9833 = vmatpush2.bf16.msra.mxu0 0
        %9834 = vmatprep.mubr.bf16.mxu0 0
        %9835 = vmatmul.mubr.bf16.gmra.mxu0 %v9738
        %v9836 = vpop.f32.mrf.mxu0
        %v9837 = vadd.f32 %v9368, %v9836
        %v9838 = vpop.f32.mrf.mxu0
        %v9839 = vpop.f32.mrf.mxu0
        %v9840 = vadd.f32 %v9368, %v9839
        %v9841 = vpop.f32.mrf.mxu0
        %9842 = vmatprep.mubr.bf16.mxu0 0
        %9843 = vmatmul.mubr.bf16.gmra.mxu0 %v9739
        %v9844 = vpop.f32.mrf.mxu0
        %v9845 = vadd.f32 %v9368, %v9844
        %v9846 = vpop.f32.mrf.mxu0
        %v9847 = vpop.f32.mrf.mxu0
        %v9848 = vadd.f32 %v9368, %v9847
        %v9849 = vpop.f32.mrf.mxu0
        %9850 = vmatprep.mubr.bf16.mxu0 0
        %9851 = vmatmul.mubr.bf16.gmra.mxu0 %v9740
        %v9852 = vpop.f32.mrf.mxu0
        %v9853 = vadd.f32 %v9368, %v9852
        %v9854 = vpop.f32.mrf.mxu0
        %v9855 = vpop.f32.mrf.mxu0
        %v9856 = vadd.f32 %v9368, %v9855
        %v9857 = vpop.f32.mrf.mxu0
        %9858 = vmatprep.mubr.bf16.mxu0 0
        %9859 = vmatmul.mubr.bf16.gmra.mxu0 %v9741
        %v9860 = vpop.f32.mrf.mxu0
        %v9861 = vadd.f32 %v9368, %v9860
        %v9862 = vpop.f32.mrf.mxu0
        %v9863 = vpop.f32.mrf.mxu0
        %v9864 = vadd.f32 %v9368, %v9863
        %v9865 = vpop.f32.mrf.mxu0
        %9866 = vmatprep.mubr.bf16.mxu0 0
        %9867 = vmatmul.mubr.bf16.gmra.mxu0 %v9742
        %v9868 = vpop.f32.mrf.mxu0
        %v9869 = vadd.f32 %v9368, %v9868
        %v9870 = vpop.f32.mrf.mxu0
        %v9871 = vpop.f32.mrf.mxu0
        %v9872 = vadd.f32 %v9368, %v9871
        %v9873 = vpop.f32.mrf.mxu0
        %9874 = vmatprep.mubr.bf16.mxu0 0
        %9875 = vmatmul.mubr.bf16.gmra.mxu0 %v9743
        %v9876 = vpop.f32.mrf.mxu0
        %v9877 = vadd.f32 %v9368, %v9876
        %v9878 = vpop.f32.mrf.mxu0
        %v9879 = vpop.f32.mrf.mxu0
        %v9880 = vadd.f32 %v9368, %v9879
        %v9881 = vpop.f32.mrf.mxu0
        %9882 = vmatprep.mubr.bf16.mxu0 0
        %9883 = vmatmul.mubr.bf16.gmra.mxu0 %v9744
        %v9884 = vpop.f32.mrf.mxu0
        %v9885 = vadd.f32 %v9368, %v9884
        %v9886 = vpop.f32.mrf.mxu0
        %v9887 = vpop.f32.mrf.mxu0
        %v9888 = vadd.f32 %v9368, %v9887
        %v9889 = vpop.f32.mrf.mxu0
        %9890 = vmatprep.mubr.bf16.mxu0 0
        %9891 = vmatmul.mubr.bf16.gmra.mxu0 %v9745
        %v9892 = vpop.f32.mrf.mxu0
        %v9893 = vadd.f32 %v9368, %v9892
        %v9894 = vpop.f32.mrf.mxu0
        %v9895 = vpop.f32.mrf.mxu0
        %v9896 = vadd.f32 %v9368, %v9895
        %v9897 = vpop.f32.mrf.mxu0
        %9898 = vdwg.mxu0
        %v9899 = vadd.f32 %v9837, %v1656
        %v9900 = vadd.f32 %v9840, %v1657
        %v9901 = vadd.f32 %v9845, %v1658
        %v9902 = vadd.f32 %v9848, %v1659
        %v9903 = vadd.f32 %v9853, %v1660
        %v9904 = vadd.f32 %v9856, %v1661
        %v9905 = vadd.f32 %v9861, %v1662
        %v9906 = vadd.f32 %v9864, %v1663
        %v9907 = vadd.f32 %v9869, %v1664
        %v9908 = vadd.f32 %v9872, %v1665
        %v9909 = vadd.f32 %v9877, %v1666
        %v9910 = vadd.f32 %v9880, %v1667
        %v9911 = vadd.f32 %v9885, %v1668
        %v9912 = vadd.f32 %v9888, %v1669
        %v9913 = vadd.f32 %v9893, %v1670
        %v9914 = vadd.f32 %v9896, %v1671
        %v9915 = vsel %vm918, %v9899, 0.0
        %9916 = vadd.xlane.f32.xlu0 %v9915
        %v9917 = vpop.xlane.xlu0 %9916
        %v9918 = vsel %vm918, %v9900, 0.0
        %9919 = vadd.xlane.f32.xlu0 %v9918
        %v9920 = vpop.xlane.xlu0 %9919
        %v9921 = vsel %vm918, %v9901, 0.0
        %9922 = vadd.xlane.f32.xlu0 %v9921
        %v9923 = vpop.xlane.xlu0 %9922
        %v9924 = vsel %vm918, %v9902, 0.0
        %9925 = vadd.xlane.f32.xlu0 %v9924
        %v9926 = vpop.xlane.xlu0 %9925
        %v9927 = vsel %vm918, %v9903, 0.0
        %9928 = vadd.xlane.f32.xlu0 %v9927
        %v9929 = vpop.xlane.xlu0 %9928
        %v9930 = vsel %vm918, %v9904, 0.0
        %9931 = vadd.xlane.f32.xlu0 %v9930
        %v9932 = vpop.xlane.xlu0 %9931
        %v9933 = vsel %vm918, %v9905, 0.0
        %9934 = vadd.xlane.f32.xlu0 %v9933
        %v9935 = vpop.xlane.xlu0 %9934
        %v9936 = vsel %vm918, %v9906, 0.0
        %9937 = vadd.xlane.f32.xlu0 %v9936
        %v9938 = vpop.xlane.xlu0 %9937
        %v9939 = vsel %vm918, %v9907, 0.0
        %9940 = vadd.xlane.f32.xlu0 %v9939
        %v9941 = vpop.xlane.xlu0 %9940
        %v9942 = vsel %vm918, %v9908, 0.0
        %9943 = vadd.xlane.f32.xlu0 %v9942
        %v9944 = vpop.xlane.xlu0 %9943
        %v9945 = vsel %vm918, %v9909, 0.0
        %9946 = vadd.xlane.f32.xlu0 %v9945
        %v9947 = vpop.xlane.xlu0 %9946
        %v9948 = vsel %vm918, %v9910, 0.0
        %9949 = vadd.xlane.f32.xlu0 %v9948
        %v9950 = vpop.xlane.xlu0 %9949
        %v9951 = vsel %vm918, %v9911, 0.0
        %9952 = vadd.xlane.f32.xlu0 %v9951
        %v9953 = vpop.xlane.xlu0 %9952
        %v9954 = vsel %vm918, %v9912, 0.0
        %9955 = vadd.xlane.f32.xlu0 %v9954
        %v9956 = vpop.xlane.xlu0 %9955
        %v9957 = vsel %vm918, %v9913, 0.0
        %9958 = vadd.xlane.f32.xlu0 %v9957
        %v9959 = vpop.xlane.xlu0 %9958
        %v9960 = vsel %vm918, %v9914, 0.0
        %9961 = vadd.xlane.f32.xlu0 %v9960
        %v9962 = vpop.xlane.xlu0 %9961
        %v9963 = vrcp.pop 64.0
        %v9964 = vmul.f32 %v9917, %v9963
        %v9965 = vmul.f32 %v9920, %v9963
        %v9966 = vmul.f32 %v9923, %v9963
        %v9967 = vmul.f32 %v9926, %v9963
        %v9968 = vmul.f32 %v9929, %v9963
        %v9969 = vmul.f32 %v9932, %v9963
        %v9970 = vmul.f32 %v9935, %v9963
        %v9971 = vmul.f32 %v9938, %v9963
        %v9972 = vmul.f32 %v9941, %v9963
        %v9973 = vmul.f32 %v9944, %v9963
        %v9974 = vmul.f32 %v9947, %v9963
        %v9975 = vmul.f32 %v9950, %v9963
        %v9976 = vmul.f32 %v9953, %v9963
        %v9977 = vmul.f32 %v9956, %v9963
        %v9978 = vmul.f32 %v9959, %v9963
        %v9979 = vmul.f32 %v9962, %v9963
        %v9980 = vsub.f32 %v9899, %v9964
        %v9981 = vsub.f32 %v9900, %v9965
        %v9982 = vsub.f32 %v9901, %v9966
        %v9983 = vsub.f32 %v9902, %v9967
        %v9984 = vsub.f32 %v9903, %v9968
        %v9985 = vsub.f32 %v9904, %v9969
        %v9986 = vsub.f32 %v9905, %v9970
        %v9987 = vsub.f32 %v9906, %v9971
        %v9988 = vsub.f32 %v9907, %v9972
        %v9989 = vsub.f32 %v9908, %v9973
        %v9990 = vsub.f32 %v9909, %v9974
        %v9991 = vsub.f32 %v9910, %v9975
        %v9992 = vsub.f32 %v9911, %v9976
        %v9993 = vsub.f32 %v9912, %v9977
        %v9994 = vsub.f32 %v9913, %v9978
        %v9995 = vsub.f32 %v9914, %v9979
        %v9996 = vmul.f32 %v9980, %v9980
        %v9997 = vmul.f32 %v9981, %v9981
        %v9998 = vmul.f32 %v9982, %v9982
        %v9999 = vmul.f32 %v9983, %v9983
        %v10000 = vmul.f32 %v9984, %v9984
        %v10001 = vmul.f32 %v9985, %v9985
        %v10002 = vmul.f32 %v9986, %v9986
        %v10003 = vmul.f32 %v9987, %v9987
        %v10004 = vmul.f32 %v9988, %v9988
        %v10005 = vmul.f32 %v9989, %v9989
        %v10006 = vmul.f32 %v9990, %v9990
        %v10007 = vmul.f32 %v9991, %v9991
        %v10008 = vmul.f32 %v9992, %v9992
        %v10009 = vmul.f32 %v9993, %v9993
        %v10010 = vmul.f32 %v9994, %v9994
        %v10011 = vmul.f32 %v9995, %v9995
        %v10012 = vsel %vm918, %v9996, 0.0
        %10013 = vadd.xlane.f32.xlu0 %v10012
        %v10014 = vpop.xlane.xlu0 %10013
        %v10015 = vsel %vm918, %v9997, 0.0
        %10016 = vadd.xlane.f32.xlu0 %v10015
        %v10017 = vpop.xlane.xlu0 %10016
        %v10018 = vsel %vm918, %v9998, 0.0
        %10019 = vadd.xlane.f32.xlu0 %v10018
        %v10020 = vpop.xlane.xlu0 %10019
        %v10021 = vsel %vm918, %v9999, 0.0
        %10022 = vadd.xlane.f32.xlu0 %v10021
        %v10023 = vpop.xlane.xlu0 %10022
        %v10024 = vsel %vm918, %v10000, 0.0
        %10025 = vadd.xlane.f32.xlu0 %v10024
        %v10026 = vpop.xlane.xlu0 %10025
        %v10027 = vsel %vm918, %v10001, 0.0
        %10028 = vadd.xlane.f32.xlu0 %v10027
        %v10029 = vpop.xlane.xlu0 %10028
        %v10030 = vsel %vm918, %v10002, 0.0
        %10031 = vadd.xlane.f32.xlu0 %v10030
        %v10032 = vpop.xlane.xlu0 %10031
        %v10033 = vsel %vm918, %v10003, 0.0
        %10034 = vadd.xlane.f32.xlu0 %v10033
        %v10035 = vpop.xlane.xlu0 %10034
        %v10036 = vsel %vm918, %v10004, 0.0
        %10037 = vadd.xlane.f32.xlu0 %v10036
        %v10038 = vpop.xlane.xlu0 %10037
        %v10039 = vsel %vm918, %v10005, 0.0
        %10040 = vadd.xlane.f32.xlu0 %v10039
        %v10041 = vpop.xlane.xlu0 %10040
        %v10042 = vsel %vm918, %v10006, 0.0
        %10043 = vadd.xlane.f32.xlu0 %v10042
        %v10044 = vpop.xlane.xlu0 %10043
        %v10045 = vsel %vm918, %v10007, 0.0
        %10046 = vadd.xlane.f32.xlu0 %v10045
        %v10047 = vpop.xlane.xlu0 %10046
        %v10048 = vsel %vm918, %v10008, 0.0
        %10049 = vadd.xlane.f32.xlu0 %v10048
        %v10050 = vpop.xlane.xlu0 %10049
        %v10051 = vsel %vm918, %v10009, 0.0
        %10052 = vadd.xlane.f32.xlu0 %v10051
        %v10053 = vpop.xlane.xlu0 %10052
        %v10054 = vsel %vm918, %v10010, 0.0
        %10055 = vadd.xlane.f32.xlu0 %v10054
        %v10056 = vpop.xlane.xlu0 %10055
        %v10057 = vsel %vm918, %v10011, 0.0
        %10058 = vadd.xlane.f32.xlu0 %v10057
        %v10059 = vpop.xlane.xlu0 %10058
        %v10060 = vmul.f32 %v10014, %v9963
        %v10061 = vmul.f32 %v10017, %v9963
        %v10062 = vmul.f32 %v10020, %v9963
        %v10063 = vmul.f32 %v10023, %v9963
        %v10064 = vmul.f32 %v10026, %v9963
        %v10065 = vmul.f32 %v10029, %v9963
        %v10066 = vmul.f32 %v10032, %v9963
        %v10067 = vmul.f32 %v10035, %v9963
        %v10068 = vmul.f32 %v10038, %v9963
        %v10069 = vmul.f32 %v10041, %v9963
        %v10070 = vmul.f32 %v10044, %v9963
        %v10071 = vmul.f32 %v10047, %v9963
        %v10072 = vmul.f32 %v10050, %v9963
        %v10073 = vmul.f32 %v10053, %v9963
        %v10074 = vmul.f32 %v10056, %v9963
        %v10075 = vmul.f32 %v10059, %v9963
        %v10076 = vadd.f32 %v10060, 1e-05
        %v10077 = vadd.f32 %v10061, 1e-05
        %v10078 = vadd.f32 %v10062, 1e-05
        %v10079 = vadd.f32 %v10063, 1e-05
        %v10080 = vadd.f32 %v10064, 1e-05
        %v10081 = vadd.f32 %v10065, 1e-05
        %v10082 = vadd.f32 %v10066, 1e-05
        %v10083 = vadd.f32 %v10067, 1e-05
        %v10084 = vadd.f32 %v10068, 1e-05
        %v10085 = vadd.f32 %v10069, 1e-05
        %v10086 = vadd.f32 %v10070, 1e-05
        %v10087 = vadd.f32 %v10071, 1e-05
        %v10088 = vadd.f32 %v10072, 1e-05
        %v10089 = vadd.f32 %v10073, 1e-05
        %v10090 = vadd.f32 %v10074, 1e-05
        %v10091 = vadd.f32 %v10075, 1e-05
        %v10092 = vrsqrt.pop %v10076
        %v10093 = vrsqrt.pop %v10077
        %v10094 = vrsqrt.pop %v10078
        %v10095 = vrsqrt.pop %v10079
        %v10096 = vrsqrt.pop %v10080
        %v10097 = vrsqrt.pop %v10081
        %v10098 = vrsqrt.pop %v10082
        %v10099 = vrsqrt.pop %v10083
        %v10100 = vrsqrt.pop %v10084
        %v10101 = vrsqrt.pop %v10085
        %v10102 = vrsqrt.pop %v10086
        %v10103 = vrsqrt.pop %v10087
        %v10104 = vrsqrt.pop %v10088
        %v10105 = vrsqrt.pop %v10089
        %v10106 = vrsqrt.pop %v10090
        %v10107 = vrsqrt.pop %v10091
        %v10108 = vmul.f32 %v9980, %v10092
        %v10109 = vmul.f32 %v9981, %v10093
        %v10110 = vmul.f32 %v9982, %v10094
        %v10111 = vmul.f32 %v9983, %v10095
        %v10112 = vmul.f32 %v9984, %v10096
        %v10113 = vmul.f32 %v9985, %v10097
        %v10114 = vmul.f32 %v9986, %v10098
        %v10115 = vmul.f32 %v9987, %v10099
        %v10116 = vmul.f32 %v9988, %v10100
        %v10117 = vmul.f32 %v9989, %v10101
        %v10118 = vmul.f32 %v9990, %v10102
        %v10119 = vmul.f32 %v9991, %v10103
        %v10120 = vmul.f32 %v9992, %v10104
        %v10121 = vmul.f32 %v9993, %v10105
        %v10122 = vmul.f32 %v9994, %v10106
        %v10123 = vmul.f32 %v9995, %v10107
        %v10124 = vld [vmem:[%s6] sm:$0x1]
        %v10126 = vlaneseq
        %v10127 = vshrl.u32 %v10126, 7
        %v10128 = vsub.s32 0, %v10127
        %v10129 = vrot.slane %v10124, %v10128
        %v10131 = vmul.f32 %v10108, %v10129
        %v10132 = vmul.f32 %v10109, %v10129
        %v10133 = vmul.f32 %v10110, %v10129
        %v10134 = vmul.f32 %v10111, %v10129
        %v10135 = vmul.f32 %v10112, %v10129
        %v10136 = vmul.f32 %v10113, %v10129
        %v10137 = vmul.f32 %v10114, %v10129
        %v10138 = vmul.f32 %v10115, %v10129
        %v10139 = vmul.f32 %v10116, %v10129
        %v10140 = vmul.f32 %v10117, %v10129
        %v10141 = vmul.f32 %v10118, %v10129
        %v10142 = vmul.f32 %v10119, %v10129
        %v10143 = vmul.f32 %v10120, %v10129
        %v10144 = vmul.f32 %v10121, %v10129
        %v10145 = vmul.f32 %v10122, %v10129
        %v10146 = vmul.f32 %v10123, %v10129
        %v10147 = vld [vmem:[%s7] sm:$0x1]
        %v10149 = vlaneseq
        %v10150 = vshrl.u32 %v10149, 7
        %v10151 = vsub.s32 0, %v10150
        %v10152 = vrot.slane %v10147, %v10151
        %v10154 = vadd.f32 %v10131, %v10152
        %v10155 = vadd.f32 %v10132, %v10152
        %v10156 = vadd.f32 %v10133, %v10152
        %v10157 = vadd.f32 %v10134, %v10152
        %v10158 = vadd.f32 %v10135, %v10152
        %v10159 = vadd.f32 %v10136, %v10152
        %v10160 = vadd.f32 %v10137, %v10152
        %v10161 = vadd.f32 %v10138, %v10152
        %v10162 = vadd.f32 %v10139, %v10152
        %v10163 = vadd.f32 %v10140, %v10152
        %v10164 = vadd.f32 %v10141, %v10152
        %v10165 = vadd.f32 %v10142, %v10152
        %v10166 = vadd.f32 %v10143, %v10152
        %v10167 = vadd.f32 %v10144, %v10152
        %v10168 = vadd.f32 %v10145, %v10152
        %v10169 = vadd.f32 %v10146, %v10152
        %v10170 = vpack.c.bf16 %v10155, %v10154
        %v10171 = vpack.c.bf16 %v10157, %v10156
        %v10172 = vpack.c.bf16 %v10159, %v10158
        %v10173 = vpack.c.bf16 %v10161, %v10160
        %v10174 = vpack.c.bf16 %v10163, %v10162
        %v10175 = vpack.c.bf16 %v10165, %v10164
        %v10176 = vpack.c.bf16 %v10167, %v10166
        %v10177 = vpack.c.bf16 %v10169, %v10168
        %v10178 = vld [vmem:[%s8] sm:$0xf]
        %v10179 = vld [vmem:[%s8 + $0x4] sm:$0xf]
        %v10180 = vld [vmem:[%s8 + $0x8] sm:$0xf]
        %v10181 = vld [vmem:[%s8 + $0xc] sm:$0xf]
        %v10182 = vld [vmem:[%s8 + $0x10] sm:$0xf]
        %v10183 = vld [vmem:[%s8 + $0x14] sm:$0xf]
        %v10184 = vld [vmem:[%s8 + $0x18] sm:$0xf]
        %v10185 = vld [vmem:[%s8 + $0x1c] sm:$0xf]
        %v10194 = vunpack.c.l.b16 %v10178
        %v10195 = vunpack.c.l.b16 %v10179
        %v10196 = vunpack.c.l.b16 %v10180
        %v10197 = vunpack.c.l.b16 %v10181
        %v10198 = vunpack.c.l.b16 %v10182
        %v10199 = vunpack.c.l.b16 %v10183
        %v10200 = vunpack.c.l.b16 %v10184
        %v10201 = vunpack.c.l.b16 %v10185
        %v10202 = vpack.c.b16 %v10195, %v10194
        %v10203 = vpack.c.b16 %v10197, %v10196
        %v10204 = vpack.c.b16 %v10199, %v10198
        %v10205 = vpack.c.b16 %v10201, %v10200
        %v10211 = vsel %vm918, %v10170, 0
        %v10214 = vsel %vm918, %v10171, 0
        %v10217 = vsel %vm918, %v10172, 0
        %v10220 = vsel %vm918, %v10173, 0
        %v10223 = vsel %vm918, %v10174, 0
        %v10226 = vsel %vm918, %v10175, 0
        %v10229 = vsel %vm918, %v10176, 0
        %v10232 = vsel %vm918, %v10177, 0
        %10234 = vmatprep.subr.bf16.mxu0 0
        %10235 = vmatpush1.bf16.msra.mxu0 0
        %10236 = vmatprep.subr.bf16.mxu0 0
        %10237 = vmatpush1.bf16.msra.mxu0 0
        %10238 = vmatprep.subr.bf16.mxu0 0
        %10239 = vmatpush1.bf16.msra.mxu0 0
        %10240 = vmatprep.subr.bf16.mxu0 0
        %10241 = vmatpush1.bf16.msra.mxu0 0
        %10242 = vmatprep.subr.bf16.mxu0 0
        %10243 = vmatpush1.bf16.msra.mxu0 %v10205
        %10244 = vmatprep.subr.bf16.mxu0 0
        %10245 = vmatpush1.bf16.msra.mxu0 %v10204
        %10246 = vmatprep.subr.bf16.mxu0 0
        %10247 = vmatpush1.bf16.msra.mxu0 %v10203
        %10248 = vmatprep.subr.bf16.mxu0 0
        %10249 = vmatpush1.bf16.msra.mxu0 %v10202
        %10250 = vmatprep.subr.bf16.mxu0 0
        %10251 = vmatpush2.bf16.msra.mxu0 0
        %10252 = vmatprep.subr.bf16.mxu0 0
        %10253 = vmatpush2.bf16.msra.mxu0 0
        %10254 = vmatprep.subr.bf16.mxu0 0
        %10255 = vmatpush2.bf16.msra.mxu0 0
        %10256 = vmatprep.subr.bf16.mxu0 0
        %10257 = vmatpush2.bf16.msra.mxu0 0
        %10258 = vmatprep.subr.bf16.mxu0 0
        %10259 = vmatpush2.bf16.msra.mxu0 0
        %10260 = vmatprep.subr.bf16.mxu0 0
        %10261 = vmatpush2.bf16.msra.mxu0 0
        %10262 = vmatprep.subr.bf16.mxu0 0
        %10263 = vmatpush2.bf16.msra.mxu0 0
        %10264 = vmatprep.subr.bf16.mxu0 0
        %10265 = vmatpush2.bf16.msra.mxu0 0
        %10266 = vmatprep.mubr.bf16.mxu0 0
        %10267 = vmatmul.mubr.bf16.gmra.mxu0 %v10211
        %v10268 = vpop.f32.mrf.mxu0
        %v10269 = vadd.f32 %v1789, %v10268
        %v10270 = vpop.f32.mrf.mxu0
        %v10271 = vpop.f32.mrf.mxu0
        %v10272 = vadd.f32 %v1793, %v10271
        %v10273 = vpop.f32.mrf.mxu0
        %10274 = vmatprep.mubr.bf16.mxu0 0
        %10275 = vmatmul.mubr.bf16.gmra.mxu0 %v10214
        %v10276 = vpop.f32.mrf.mxu0
        %v10277 = vadd.f32 %v1799, %v10276
        %v10278 = vpop.f32.mrf.mxu0
        %v10279 = vpop.f32.mrf.mxu0
        %v10280 = vadd.f32 %v1803, %v10279
        %v10281 = vpop.f32.mrf.mxu0
        %10282 = vmatprep.mubr.bf16.mxu0 0
        %10283 = vmatmul.mubr.bf16.gmra.mxu0 %v10217
        %v10284 = vpop.f32.mrf.mxu0
        %v10285 = vadd.f32 %v1809, %v10284
        %v10286 = vpop.f32.mrf.mxu0
        %v10287 = vpop.f32.mrf.mxu0
        %v10288 = vadd.f32 %v1813, %v10287
        %v10289 = vpop.f32.mrf.mxu0
        %10290 = vmatprep.mubr.bf16.mxu0 0
        %10291 = vmatmul.mubr.bf16.gmra.mxu0 %v10220
        %v10292 = vpop.f32.mrf.mxu0
        %v10293 = vadd.f32 %v1819, %v10292
        %v10294 = vpop.f32.mrf.mxu0
        %v10295 = vpop.f32.mrf.mxu0
        %v10296 = vadd.f32 %v1823, %v10295
        %v10297 = vpop.f32.mrf.mxu0
        %10298 = vmatprep.mubr.bf16.mxu0 0
        %10299 = vmatmul.mubr.bf16.gmra.mxu0 %v10223
        %v10300 = vpop.f32.mrf.mxu0
        %v10301 = vadd.f32 %v1829, %v10300
        %v10302 = vpop.f32.mrf.mxu0
        %v10303 = vpop.f32.mrf.mxu0
        %v10304 = vadd.f32 %v1833, %v10303
        %v10305 = vpop.f32.mrf.mxu0
        %10306 = vmatprep.mubr.bf16.mxu0 0
        %10307 = vmatmul.mubr.bf16.gmra.mxu0 %v10226
        %v10308 = vpop.f32.mrf.mxu0
        %v10309 = vadd.f32 %v1839, %v10308
        %v10310 = vpop.f32.mrf.mxu0
        %v10311 = vpop.f32.mrf.mxu0
        %v10312 = vadd.f32 %v1843, %v10311
        %v10313 = vpop.f32.mrf.mxu0
        %10314 = vmatprep.mubr.bf16.mxu0 0
        %10315 = vmatmul.mubr.bf16.gmra.mxu0 %v10229
        %v10316 = vpop.f32.mrf.mxu0
        %v10317 = vadd.f32 %v1849, %v10316
        %v10318 = vpop.f32.mrf.mxu0
        %v10319 = vpop.f32.mrf.mxu0
        %v10320 = vadd.f32 %v1853, %v10319
        %v10321 = vpop.f32.mrf.mxu0
        %10322 = vmatprep.mubr.bf16.mxu0 0
        %10323 = vmatmul.mubr.bf16.gmra.mxu0 %v10232
        %v10324 = vpop.f32.mrf.mxu0
        %v10325 = vadd.f32 %v1859, %v10324
        %v10326 = vpop.f32.mrf.mxu0
        %v10327 = vpop.f32.mrf.mxu0
        %v10328 = vadd.f32 %v1863, %v10327
        %v10329 = vpop.f32.mrf.mxu0
        %10330 = vdwg.mxu0
        %v10331 = vld [vmem:[%s9] sm:$0x1]
        %v10333 = vlaneseq
        %v10334 = vshrl.u32 %v10333, 7
        %v10335 = vsub.s32 0, %v10334
        %v10336 = vrot.slane %v10331, %v10335
        %v10338 = vadd.f32 %v10269, %v10336
        %v10339 = vadd.f32 %v10272, %v10336
        %v10340 = vadd.f32 %v10277, %v10336
        %v10341 = vadd.f32 %v10280, %v10336
        %v10342 = vadd.f32 %v10285, %v10336
        %v10343 = vadd.f32 %v10288, %v10336
        %v10344 = vadd.f32 %v10293, %v10336
        %v10345 = vadd.f32 %v10296, %v10336
        %v10346 = vadd.f32 %v10301, %v10336
        %v10347 = vadd.f32 %v10304, %v10336
        %v10348 = vadd.f32 %v10309, %v10336
        %v10349 = vadd.f32 %v10312, %v10336
        %v10350 = vadd.f32 %v10317, %v10336
        %v10351 = vadd.f32 %v10320, %v10336
        %v10352 = vadd.f32 %v10325, %v10336
        %v10353 = vadd.f32 %v10328, %v10336
        %v10354 = vmax.f32 %v10338, 0.0
        %v10355 = vmax.f32 %v10339, 0.0
        %v10356 = vmax.f32 %v10340, 0.0
        %v10357 = vmax.f32 %v10341, 0.0
        %v10358 = vmax.f32 %v10342, 0.0
        %v10359 = vmax.f32 %v10343, 0.0
        %v10360 = vmax.f32 %v10344, 0.0
        %v10361 = vmax.f32 %v10345, 0.0
        %v10362 = vmax.f32 %v10346, 0.0
        %v10363 = vmax.f32 %v10347, 0.0
        %v10364 = vmax.f32 %v10348, 0.0
        %v10365 = vmax.f32 %v10349, 0.0
        %v10366 = vmax.f32 %v10350, 0.0
        %v10367 = vmax.f32 %v10351, 0.0
        %v10368 = vmax.f32 %v10352, 0.0
        %v10369 = vmax.f32 %v10353, 0.0
        %v10370 = vpack.c.bf16 %v10355, %v10354
        %v10371 = vpack.c.bf16 %v10357, %v10356
        %v10372 = vpack.c.bf16 %v10359, %v10358
        %v10373 = vpack.c.bf16 %v10361, %v10360
        %v10374 = vpack.c.bf16 %v10363, %v10362
        %v10375 = vpack.c.bf16 %v10365, %v10364
        %v10376 = vpack.c.bf16 %v10367, %v10366
        %v10377 = vpack.c.bf16 %v10369, %v10368
        %v10378 = vld [vmem:[%s10] sm:$0xf]
        %v10379 = vld [vmem:[%s10 + $0x4] sm:$0xf]
        %v10380 = vld [vmem:[%s10 + $0x8] sm:$0xf]
        %v10381 = vld [vmem:[%s10 + $0xc] sm:$0xf]
        %v10382 = vld [vmem:[%s11] sm:$0x1]
        %v10384 = vlaneseq
        %v10385 = vshrl.u32 %v10384, 7
        %v10386 = vsub.s32 0, %v10385
        %v10387 = vrot.slane %v10382, %v10386
        %v10393 = vunpack.c.l.b16 %v10378
        %v10394 = vunpack.c.l.b16 %v10379
        %v10395 = vunpack.c.l.b16 %v10380
        %v10396 = vunpack.c.l.b16 %v10381
        %v10397 = vpack.c.b16 %v10394, %v10393
        %v10398 = vpack.c.b16 %v10396, %v10395
        %vm10401 = vcmask 261120
        %v10403 = vsel %vm10401, %v10370, 0
        %v10406 = vsel %vm10401, %v10371, 0
        %v10409 = vsel %vm10401, %v10372, 0
        %v10412 = vsel %vm10401, %v10373, 0
        %v10415 = vsel %vm10401, %v10374, 0
        %v10418 = vsel %vm10401, %v10375, 0
        %v10421 = vsel %vm10401, %v10376, 0
        %v10424 = vsel %vm10401, %v10377, 0
        %10426 = vmatprep.subr.bf16.mxu0 0
        %10427 = vmatpush1.bf16.msra.mxu0 0
        %10428 = vmatprep.subr.bf16.mxu0 0
        %10429 = vmatpush1.bf16.msra.mxu0 0
        %10430 = vmatprep.subr.bf16.mxu0 0
        %10431 = vmatpush1.bf16.msra.mxu0 0
        %10432 = vmatprep.subr.bf16.mxu0 0
        %10433 = vmatpush1.bf16.msra.mxu0 0
        %10434 = vmatprep.subr.bf16.mxu0 0
        %10435 = vmatpush1.bf16.msra.mxu0 0
        %10436 = vmatprep.subr.bf16.mxu0 0
        %10437 = vmatpush1.bf16.msra.mxu0 0
        %10438 = vmatprep.subr.bf16.mxu0 0
        %10439 = vmatpush1.bf16.msra.mxu0 %v10398
        %10440 = vmatprep.subr.bf16.mxu0 0
        %10441 = vmatpush1.bf16.msra.mxu0 %v10397
        %10442 = vmatprep.subr.bf16.mxu0 0
        %10443 = vmatpush2.bf16.msra.mxu0 0
        %10444 = vmatprep.subr.bf16.mxu0 0
        %10445 = vmatpush2.bf16.msra.mxu0 0
        %10446 = vmatprep.subr.bf16.mxu0 0
        %10447 = vmatpush2.bf16.msra.mxu0 0
        %10448 = vmatprep.subr.bf16.mxu0 0
        %10449 = vmatpush2.bf16.msra.mxu0 0
        %10450 = vmatprep.subr.bf16.mxu0 0
        %10451 = vmatpush2.bf16.msra.mxu0 0
        %10452 = vmatprep.subr.bf16.mxu0 0
        %10453 = vmatpush2.bf16.msra.mxu0 0
        %10454 = vmatprep.subr.bf16.mxu0 0
        %10455 = vmatpush2.bf16.msra.mxu0 0
        %10456 = vmatprep.subr.bf16.mxu0 0
        %10457 = vmatpush2.bf16.msra.mxu0 0
        %10458 = vmatprep.mubr.bf16.mxu0 0
        %10459 = vmatmul.mubr.bf16.gmra.mxu0 %v10403
        %v10460 = vpop.f32.mrf.mxu0
        %v10461 = vadd.f32 %v10387, %v10460
        %v10462 = vpop.f32.mrf.mxu0
        %v10463 = vpop.f32.mrf.mxu0
        %v10464 = vadd.f32 %v10387, %v10463
        %v10465 = vpop.f32.mrf.mxu0
        %10466 = vmatprep.mubr.bf16.mxu0 0
        %10467 = vmatmul.mubr.bf16.gmra.mxu0 %v10406
        %v10468 = vpop.f32.mrf.mxu0
        %v10469 = vadd.f32 %v10387, %v10468
        %v10470 = vpop.f32.mrf.mxu0
        %v10471 = vpop.f32.mrf.mxu0
        %v10472 = vadd.f32 %v10387, %v10471
        %v10473 = vpop.f32.mrf.mxu0
        %10474 = vmatprep.mubr.bf16.mxu0 0
        %10475 = vmatmul.mubr.bf16.gmra.mxu0 %v10409
        %v10476 = vpop.f32.mrf.mxu0
        %v10477 = vadd.f32 %v10387, %v10476
        %v10478 = vpop.f32.mrf.mxu0
        %v10479 = vpop.f32.mrf.mxu0
        %v10480 = vadd.f32 %v10387, %v10479
        %v10481 = vpop.f32.mrf.mxu0
        %10482 = vmatprep.mubr.bf16.mxu0 0
        %10483 = vmatmul.mubr.bf16.gmra.mxu0 %v10412
        %v10484 = vpop.f32.mrf.mxu0
        %v10485 = vadd.f32 %v10387, %v10484
        %v10486 = vpop.f32.mrf.mxu0
        %v10487 = vpop.f32.mrf.mxu0
        %v10488 = vadd.f32 %v10387, %v10487
        %v10489 = vpop.f32.mrf.mxu0
        %10490 = vmatprep.mubr.bf16.mxu0 0
        %10491 = vmatmul.mubr.bf16.gmra.mxu0 %v10415
        %v10492 = vpop.f32.mrf.mxu0
        %v10493 = vadd.f32 %v10387, %v10492
        %v10494 = vpop.f32.mrf.mxu0
        %v10495 = vpop.f32.mrf.mxu0
        %v10496 = vadd.f32 %v10387, %v10495
        %v10497 = vpop.f32.mrf.mxu0
        %10498 = vmatprep.mubr.bf16.mxu0 0
        %10499 = vmatmul.mubr.bf16.gmra.mxu0 %v10418
        %v10500 = vpop.f32.mrf.mxu0
        %v10501 = vadd.f32 %v10387, %v10500
        %v10502 = vpop.f32.mrf.mxu0
        %v10503 = vpop.f32.mrf.mxu0
        %v10504 = vadd.f32 %v10387, %v10503
        %v10505 = vpop.f32.mrf.mxu0
        %10506 = vmatprep.mubr.bf16.mxu0 0
        %10507 = vmatmul.mubr.bf16.gmra.mxu0 %v10421
        %v10508 = vpop.f32.mrf.mxu0
        %v10509 = vadd.f32 %v10387, %v10508
        %v10510 = vpop.f32.mrf.mxu0
        %v10511 = vpop.f32.mrf.mxu0
        %v10512 = vadd.f32 %v10387, %v10511
        %v10513 = vpop.f32.mrf.mxu0
        %10514 = vmatprep.mubr.bf16.mxu0 0
        %10515 = vmatmul.mubr.bf16.gmra.mxu0 %v10424
        %v10516 = vpop.f32.mrf.mxu0
        %v10517 = vadd.f32 %v10387, %v10516
        %v10518 = vpop.f32.mrf.mxu0
        %v10519 = vpop.f32.mrf.mxu0
        %v10520 = vadd.f32 %v10387, %v10519
        %v10521 = vpop.f32.mrf.mxu0
        %10522 = vdwg.mxu0
        %10523 = vst [vmem:[%s423] sm:$0xff] %v10461
        %10524 = vst [vmem:[%s423 + $0x8] sm:$0xff] %v10464
        %10525 = vst [vmem:[%s423 + $0x10] sm:$0xff] %v10469
        %10526 = vst [vmem:[%s423 + $0x18] sm:$0xff] %v10472
        %10527 = vst [vmem:[%s423 + $0x20] sm:$0xff] %v10477
        %10528 = vst [vmem:[%s423 + $0x28] sm:$0xff] %v10480
        %10529 = vst [vmem:[%s423 + $0x30] sm:$0xff] %v10485
        %10530 = vst [vmem:[%s423 + $0x38] sm:$0xff] %v10488
        %10531 = vst [vmem:[%s423 + $0x40] sm:$0xff] %v10493
        %10532 = vst [vmem:[%s423 + $0x48] sm:$0xff] %v10496
        %10533 = vst [vmem:[%s423 + $0x50] sm:$0xff] %v10501
        %10534 = vst [vmem:[%s423 + $0x58] sm:$0xff] %v10504
        %10535 = vst [vmem:[%s423 + $0x60] sm:$0xff] %v10509
        %10536 = vst [vmem:[%s423 + $0x68] sm:$0xff] %v10512
        %10537 = vst [vmem:[%s423 + $0x70] sm:$0xff] %v10517
        %10538 = vst [vmem:[%s423 + $0x78] sm:$0xff] %v10520
        %s10539 = sand.u32 %s296, 1
        %s10540 = scalar_lea.sflag [#allocation3], %s10539
        %s10541 = sand.u32 %s296, 1
        %s10542 = smul.addr %s10541, 128
        %s10543 = scalar_lea.vmem [#allocation2], %s10542
        // Predicated region
        $region69: #{tpu_custom_call.1} parent=67 // pred_check
          %p10544 = pneg %p306
        $region70: #{tpu_custom_call.1} parent=67 // pred_check_branch
          %10546 = sbr.rel (%p10544) target = $region72
        $region71: #{tpu_custom_call.1} parent=67 // pred_region
          %s10547 = smul.u32 16, %s26
          %s10549 = ssub.s32 2048, 2048
          %10550 = vsyncadd %s10540, %s10549
          %s10551 = smul.addr %s10547, 128
          %s10552 = scalar_lea.hbm %s12, %s10551
          %s10553 = sshll.u32 %s10543, 4
          %s10554 = int_to_ptr.vmem [resolvable:$true] %s10553
          %10559 = dma.vmem_to_hbm [thread:$0]  %s10554, 2048, %s10552, %s10540, 128, 128, 8
        $region72: #{tpu_custom_call.1} parent=67 // pred_fallthru
          _
      $region68: #{tpu_custom_call.1} parent=5 // pred_fallthru
        _
      %p10560 = scmp.le.s32.totalorder 2, %s21
      // Predicated region
      $region73: #{tpu_custom_call.1} parent=5 // pred_check
        %p10561 = pneg %p10560
      $region74: #{tpu_custom_call.1} parent=5 // pred_check_branch
        %10563 = sbr.rel (%p10561) target = $region76
      $region75: #{tpu_custom_call.1} parent=5 // pred_region
        %s10564 = ssub.s32 %s21, 2
        // Predicated region
        $region77: #{tpu_custom_call.1} parent=75 // pred_check
          %p10565 = pneg %p312
        $region78: #{tpu_custom_call.1} parent=75 // pred_check_branch
          %10567 = sbr.rel (%p10565) target = $region80
        $region79: #{tpu_custom_call.1} parent=75 // pred_region
          %s10568 = sand.u32 %s297, 1
          %s10569 = scalar_lea.sflag [#allocation3], %s10568
          %s10570 = sand.u32 %s297, 1
          %s10571 = smul.addr %s10570, 128
          %s10572 = scalar_lea.vmem [#allocation2], %s10571
          %10573 = dma.done %s10569, 2048
        $region80: #{tpu_custom_call.1} parent=75 // pred_fallthru
          _
      $region76: #{tpu_custom_call.1} parent=5 // pred_fallthru
        _
    $region6: #{tpu_custom_call.1} parent=1 // loop_footer
      %s25 = sadd.s32 1, %s21
    $region7: #{tpu_custom_call.1} parent=1 // loop_footer_branch
      %20 = sbr.rel target = $region3
    $region8: #{tpu_custom_call.1} parent=1 // loop_exit
      _
    %10574 = vsyncpa [#allocation3], 1
    %s10575 = scalar_lea.sflag [#allocation3], 1
    %10576 = vsyncpa %s10575, 1

</llo_original>
